<compile_context>
chip_gen: v5e
topology: v5e:2x2
jax: 0.10.0
libtpu: 0.0.40
codegen_flags: <defaults>
</compile_context>

<pallas_src>
import functools

import jax
import jax.numpy as jnp
import numpy as np
from jax.experimental import pallas as pl
from jax.experimental.pallas import tpu as pltpu

_LAYER_DEFS = [  # (cout, cin, k) for each conv in one net
    (2, 3, 3),
    (1, 2, 3),
    (1, 1, 5),
]
# Shared (h, d) halo width.  The circular lane roll is only correct because
# HALO equals the maximum conv padding and all halo lanes/rows are kept zero.
HALO = max(k // 2 for _, _, k in _LAYER_DEFS)
assert HALO == max(k // 2 for _, _, k in _LAYER_DEFS) == 2
W_OFF = 8  # interior W rows start on a sublane-tile boundary (aligned stores)
assert W_OFF % 8 == 0 and W_OFF >= HALO


def _round_up(x, m):
    return (x + m - 1) // m * m


def _param_offsets():
    offs, off = [], 0
    for cout, cin, k in _LAYER_DEFS:
        w_off = off
        off += cout * cin * k * k * k
        b_off = off
        off += cout
        offs.append((w_off, b_off))
    return offs, off


_PARAM_OFFSETS, _PARAMS_PER_NET = _param_offsets()


# ----------------------------------------------------------------------------
# Fused kernel: one grid step = one net (Conv3 -> ReLU -> Conv3 -> ReLU -> Conv5)
# ----------------------------------------------------------------------------
def _displacenet_kernel(w_ref, x_ref, mask_ref, o_ref, a1_ref, a2_ref,
                        *, W, D, L_pad):
    """w_ref   : (3, P)            SMEM  packed weights+biases, one row per net
       x_ref   : (3, W_pad, L_pad) VMEM  zero-haloed, lane-flattened coords
       mask_ref: (1, L_pad)        VMEM  1.0 on interior (h,d) lanes, else 0.0
       o_ref   : (1, W, L_pad)     VMEM  this net's scalar field (interior rows)
       a1_ref  : (2, W_pad, L_pad) VMEM  layer-1 activations (zero halo rows)
       a2_ref  : (1, W_pad, L_pad) VMEM  layer-2 activations (zero halo rows)"""
    net = pl.program_id(0)
    D4 = D + 2 * HALO

    # Hoist the sublane broadcast of the lane-only mask (JAX does not CSE
    # broadcast_in_dim, so do it exactly once per step).
    mask = jnp.broadcast_to(mask_ref[...], (W, L_pad))

    # Zero ONLY the halo sublane rows the following layers read.  Interior rows
    # are fully overwritten (with mask-zeroed non-interior lanes) and rows
    # beyond +/-HALO of the interior are never read.
    z1 = jnp.zeros((a1_ref.shape[0], HALO, L_pad), jnp.float32)
    a1_ref[:, W_OFF - HALO:W_OFF, :] = z1
    a1_ref[:, W_OFF + W:W_OFF + W + HALO, :] = z1
    z2 = jnp.zeros((1, HALO, L_pad), jnp.float32)
    a2_ref[:, W_OFF - HALO:W_OFF, :] = z2
    a2_ref[:, W_OFF + W:W_OFF + W + HALO, :] = z2

    def conv3d(load_win, cin, cout, k, w_off, b_off, relu):
        p = k // 2
        # Per-output-channel accumulators over the INTERIOR W rows only.
        accs = [jnp.full((W, L_pad), w_ref[net, b_off + co], dtype=jnp.float32)
                for co in range(cout)]
        for ci in range(cin):
            xc = load_win(ci, p)                  # (W + 2p, L_pad), zero halo
            for dh in range(-p, p + 1):
                for dd in range(-p, p + 1):
                    dl = dh * D4 + dd
                    sh = (-dl) % L_pad
                    # One rolled view live at a time; XLU work stays k^2 / ci.
                    v = xc if sh == 0 else pltpu.roll(xc, shift=sh, axis=1)
                    for dw in range(-p, p + 1):
                        win = v[dw + p:dw + p + W, :]          # (W, L_pad)
                        for co in range(cout):
                            t = ((((co * cin + ci) * k + (dw + p)) * k
                                  + (dh + p)) * k + (dd + p))
                            # Lazy scalar read at point of use (SMEM sld is
                            # hidden under the VPU chain; no sreg spills).
                            accs[co] = accs[co] + win * w_ref[net, w_off + t]
        if relu:
            accs = [jnp.maximum(a, 0.0) for a in accs]
        return accs

    (l1w, l1b), (l2w, l2b), (l3w, l3b) = _PARAM_OFFSETS

    def win_from(ref):
        # (W + 2p) interior+halo rows of channel ci, lanes fully loaded.
        return lambda ci, p: ref[ci, W_OFF - p:W_OFF + W + p, :]

    # Layer 1: Conv3d(3 -> 2, k=3, pad=1) + ReLU, from the shared input.
    y1 = conv3d(win_from(x_ref), 3, 2, 3, l1w, l1b, relu=True)
    for co in range(2):
        a1_ref[co, W_OFF:W_OFF + W, :] = y1[co] * mask   # aligned full store
    # Layer 2: Conv3d(2 -> 1, k=3, pad=1) + ReLU.
    y2 = conv3d(win_from(a1_ref), 2, 1, 3, l2w, l2b, relu=True)
    a2_ref[0, W_OFF:W_OFF + W, :] = y2[0] * mask
    # Layer 3: Conv3d(1 -> 1, k=5, pad=2), no ReLU.  Non-interior lanes of the
    # output hold bias-contaminated don't-care values; the wrapper crops them,
    # so the store stays a full unmasked lane-dense slab.
    y3 = conv3d(win_from(a2_ref), 1, 1, 5, l3w, l3b, relu=False)
    o_ref[0] = y3[0]


# ----------------------------------------------------------------------------
# Parameter construction / packing (mirrors the torch module + weights_init)
# ----------------------------------------------------------------------------
def _init_layer(key, cout, cin, k):
    fan_in = cin * k * k * k
    # weights_init applies nn.init.kaiming_uniform_(weight) with a=0:
    #   bound = sqrt(2) * sqrt(3 / fan_in) = sqrt(6 / fan_in).
    kw_bound = float(np.sqrt(6.0 / fan_in))
    # Bias keeps torch Conv3d's default init: U(-1/sqrt(fan_in), 1/sqrt(fan_in)).
    b_bound = float(1.0 / np.sqrt(fan_in))
    k1, k2 = jax.random.split(key)
    w = jax.random.uniform(k1, (cout, cin, k, k, k), jnp.float32,
                           minval=-kw_bound, maxval=kw_bound)
    b = jax.random.uniform(k2, (cout,), jnp.float32, minval=-b_bound, maxval=b_bound)
    return w, b


def init_displacenet_params(key):
    params = []
    for _ in range(3):  # net1, net2, net3
        layers = []
        for (cout, cin, k) in _LAYER_DEFS:
            key, sub = jax.random.split(key)
            layers.append(_init_layer(sub, cout, cin, k))
        params.append(layers)
    return params


def pack_displacenet_params(params):
    """list[net][layer] = (w, b)  ->  (3, P) f32, one packed row per net."""
    rows = []
    for net in params:
        flat = []
        for (w, b) in net:
            flat.append(jnp.asarray(w, jnp.float32).reshape(-1))
            flat.append(jnp.asarray(b, jnp.float32).reshape(-1))
        rows.append(jnp.concatenate(flat))
    return jnp.stack(rows)


# ----------------------------------------------------------------------------
# Forward pass (matches DisplaceNet.forward semantics)
# ----------------------------------------------------------------------------
def displacenet_forward(coords, params):
    """coords: (W, H, D, 3) -> (W, H, D, 3) = stack(dis_z, dis_y, dis_x)."""
    W, H, D, _ = coords.shape
    H4, D4 = H + 2 * HALO, D + 2 * HALO
    L_real = H4 * D4
    L_pad = _round_up(L_real, 128)
    W_pad = W_OFF + _round_up(W + HALO, 8)

    # One-time layout plumbing in XLA: (W,H,D,3) -> zero-haloed, lane-flattened
    # (3, W_pad, L_pad); interior rows start at the aligned sublane row W_OFF.
    x = jnp.transpose(coords, (3, 0, 1, 2)).astype(jnp.float32)
    xp = jnp.pad(x, ((0, 0), (W_OFF, W_pad - W - W_OFF), (HALO, HALO), (HALO, HALO)))
    xp = xp.reshape(3, W_pad, L_real)
    xp = jnp.pad(xp, ((0, 0), (0, 0), (0, L_pad - L_real)))

    # Interior-lane mask as a single (1, L_pad) row (lane-only predicate).
    lane = np.arange(L_pad)
    h_idx, d_idx = lane // D4, lane % D4
    interior = ((lane < L_real)
                & (h_idx >= HALO) & (h_idx < HALO + H)
                & (d_idx >= HALO) & (d_idx < HALO + D))
    mask_row = jnp.asarray(interior.astype(np.float32))[None, :]

    w_all = pack_displacenet_params(params)   # (3, P) -> SMEM

    # Raise the scoped-VMEM limit only when the working set needs it
    # (double-buffered input/mask/output blocks + activation scratch + slack).
    vmem_needed = 4 * (2 * 3 * W_pad * L_pad + 3 * W_pad * L_pad
                       + 2 * W * L_pad + 2 * L_pad) + (2 << 20)
    vmem_limit = int(min(vmem_needed, 96 << 20)) if vmem_needed > (16 << 20) else None

    kernel = functools.partial(_displacenet_kernel, W=W, D=D, L_pad=L_pad)
    out = pl.pallas_call(
        kernel,
        grid=(3,),                                                  # one step per net
        out_shape=jax.ShapeDtypeStruct((3, W, L_pad), jnp.float32),
        in_specs=[
            pl.BlockSpec(memory_space=pltpu.MemorySpace.SMEM),      # packed weights
            pl.BlockSpec((3, W_pad, L_pad), lambda n: (0, 0, 0)),   # shared input
            pl.BlockSpec((1, L_pad), lambda n: (0, 0)),             # interior-lane mask
        ],
        out_specs=pl.BlockSpec((1, W, L_pad), lambda n: (n, 0, 0)),
        scratch_shapes=[
            pltpu.VMEM((2, W_pad, L_pad), jnp.float32),   # layer-1 activations
            pltpu.VMEM((1, W_pad, L_pad), jnp.float32),   # layer-2 activations
        ],
        compiler_params=pltpu.CompilerParams(
            dimension_semantics=("parallel",),            # nets across TCs
            vmem_limit_bytes=vmem_limit),
    )(w_all, xp, mask_row)

    # Un-flatten the lane axis and crop the halo.
    fields = out[:, :, :L_real].reshape(3, W, H4, D4)[:, :, HALO:HALO + H,
                                                      HALO:HALO + D]
    dis_x, dis_y, dis_z = fields[0], fields[1], fields[2]  # net1, net2, net3
    return jnp.stack((dis_z, dis_y, dis_x), axis=3)


# ----------------------------------------------------------------------------
# Pure-JAX reference (correctness check)
# ----------------------------------------------------------------------------
def _conv3d_ref(x, w, b, relu):
    pad = w.shape[2] // 2
    out = jax.lax.conv_general_dilated(
        x[None], w, window_strides=(1, 1, 1),
        padding=[(pad, pad)] * 3,
        dimension_numbers=("NCDHW", "OIDHW", "NCDHW"),
    )[0] + b[:, None, None, None]
    return jnp.maximum(out, 0.0) if relu else out


def displacenet_forward_ref(coords, params):
    x = jnp.transpose(coords, (3, 0, 1, 2)).astype(jnp.float32)
    outs = []
    for net in params:
        h = x
        h = _conv3d_ref(h, net[0][0], net[0][1], True)
        h = _conv3d_ref(h, net[1][0], net[1][1], True)
        h = _conv3d_ref(h, net[2][0], net[2][1], False)
        outs.append(h[0])
    dis_x, dis_y, dis_z = outs
    return jnp.stack((dis_z, dis_y, dis_x), axis=3)


# ----------------------------------------------------------------------------
if __name__ == "__main__":
    key = jax.random.PRNGKey(0)
    pkey, xkey = jax.random.split(key)
    params = init_displacenet_params(pkey)

    W = H = D = 8  # small coordinate grid
    coords = jax.random.normal(xkey, (W, H, D, 3), jnp.float32)

    out = jax.block_until_ready(displacenet_forward(coords, params))
    assert out.shape == (W, H, D, 3), out.shape

    ref = jax.block_until_ready(displacenet_forward_ref(coords, params))
    np.testing.assert_allclose(np.asarray(out), np.asarray(ref), rtol=1e-4, atol=1e-4)

    print("KERNEL_OK")
</pallas_src>

<mosaic_0001>
module attributes {stable_mosaic.version = 11 : i64} {
  func.func @_displacenet_kernel(%arg0: i32, %arg1: memref<3x345xf32, #tpu.memory_space<smem>>, %arg2: memref<3x24x256xf32, #tpu.memory_space<vmem>>, %arg3: memref<1x256xf32, #tpu.memory_space<vmem>>, %arg4: memref<1x8x256xf32, #tpu.memory_space<vmem>>, %arg5: memref<2x24x256xf32, #tpu.memory_space<vmem>>, %arg6: memref<1x24x256xf32, #tpu.memory_space<vmem>>) attributes {dimension_semantics = [#tpu.dimension_semantics<parallel>], iteration_bounds = array<i64: 3>, scalar_prefetch = 0 : i64, scratch_operands = 2 : i64, tpu.core_type = #tpu.core_type<tc>, window_params = [{transform_indices = @transform_0, window_bounds = array<i64: 3, 345>}, {pipeline_mode = #tpu.pipeline_mode<synchronous>, transform_indices = @transform_1, window_bounds = array<i64: 3, 24, 256>}, {pipeline_mode = #tpu.pipeline_mode<synchronous>, transform_indices = @transform_2, window_bounds = array<i64: 1, 256>}, {transform_indices = @transform_3, window_bounds = array<i64: 1, 8, 256>}]} {
    %c0 = arith.constant 0 : index
    %c0_0 = arith.constant 0 : index
    %0 = vector.load %arg3[%c0, %c0_0] : memref<1x256xf32, #tpu.memory_space<vmem>>, vector<1x256xf32>
    %1 = vector.shape_cast %0 : vector<1x256xf32> to vector<1x256xf32>
    %2 = vector.broadcast %1 : vector<1x256xf32> to vector<8x256xf32>
    %cst = arith.constant 0.000000e+00 : f32
    %3 = vector.broadcast %cst : f32 to vector<2x2x256xf32>
    %c0_1 = arith.constant 0 : index
    %c6 = arith.constant 6 : index
    %c0_2 = arith.constant 0 : index
    %4 = vector.load %arg5[%c0_1, %c6, %c0_2] : memref<2x24x256xf32, #tpu.memory_space<vmem>>, vector<2x2x256xf32>
    tpu.vector_store %arg5[%c0_1, %c6, %c0_2], %3 {strides = array<i32>} : memref<2x24x256xf32, #tpu.memory_space<vmem>>, vector<2x2x256xf32>,
    %c0_3 = arith.constant 0 : index
    %c16 = arith.constant 16 : index
    %c0_4 = arith.constant 0 : index
    %5 = vector.load %arg5[%c0_3, %c16, %c0_4] : memref<2x24x256xf32, #tpu.memory_space<vmem>>, vector<2x2x256xf32>
    tpu.vector_store %arg5[%c0_3, %c16, %c0_4], %3 {strides = array<i32>} : memref<2x24x256xf32, #tpu.memory_space<vmem>>, vector<2x2x256xf32>,
    %cst_5 = arith.constant 0.000000e+00 : f32
    %6 = vector.broadcast %cst_5 : f32 to vector<1x2x256xf32>
    %c0_6 = arith.constant 0 : index
    %c6_7 = arith.constant 6 : index
    %c0_8 = arith.constant 0 : index
    %7 = vector.load %arg6[%c0_6, %c6_7, %c0_8] : memref<1x24x256xf32, #tpu.memory_space<vmem>>, vector<1x2x256xf32>
    tpu.vector_store %arg6[%c0_6, %c6_7, %c0_8], %6 {strides = array<i32>} : memref<1x24x256xf32, #tpu.memory_space<vmem>>, vector<1x2x256xf32>,
    %c0_9 = arith.constant 0 : index
    %c16_10 = arith.constant 16 : index
    %c0_11 = arith.constant 0 : index
    %8 = vector.load %arg6[%c0_9, %c16_10, %c0_11] : memref<1x24x256xf32, #tpu.memory_space<vmem>>, vector<1x2x256xf32>
    tpu.vector_store %arg6[%c0_9, %c16_10, %c0_11], %6 {strides = array<i32>} : memref<1x24x256xf32, #tpu.memory_space<vmem>>, vector<1x2x256xf32>,
    %9 = arith.index_cast %arg0 : i32 to index
    %c162 = arith.constant 162 : index
    %10 = memref.load %arg1[%9, %c162] : memref<3x345xf32, #tpu.memory_space<smem>>
    %11 = vector.broadcast %10 : f32 to vector<8x256xf32>
    %12 = arith.index_cast %arg0 : i32 to index
    %c163 = arith.constant 163 : index
    %13 = memref.load %arg1[%12, %c163] : memref<3x345xf32, #tpu.memory_space<smem>>
    %14 = vector.broadcast %13 : f32 to vector<8x256xf32>
    %c0_12 = arith.constant 0 : index
    %c7 = arith.constant 7 : index
    %c0_13 = arith.constant 0 : index
    %15 = vector.load %arg2[%c0_12, %c7, %c0_13] : memref<3x24x256xf32, #tpu.memory_space<vmem>>, vector<1x10x256xf32>
    %16 = vector.shape_cast %15 : vector<1x10x256xf32> to vector<10x256xf32>
    %c13_i32 = arith.constant 13 : i32
    %17 = tpu.dynamic_rotate %16 by %c13_i32 dim 1 : vector<10x256xf32>, i32 -> vector<10x256xf32>
    %18 = vector.extract_strided_slice %17 {offsets = [0, 0], sizes = [8, 256], strides = [1, 1]} : vector<10x256xf32> to vector<8x256xf32>
    %19 = arith.index_cast %arg0 : i32 to index
    %c0_14 = arith.constant 0 : index
    %20 = memref.load %arg1[%19, %c0_14] : memref<3x345xf32, #tpu.memory_space<smem>>
    %21 = vector.broadcast %20 : f32 to vector<8x256xf32>
    %22 = arith.mulf %18, %21 : vector<8x256xf32>
    %23 = arith.addf %11, %22 : vector<8x256xf32>
    %24 = arith.index_cast %arg0 : i32 to index
    %c81 = arith.constant 81 : index
    %25 = memref.load %arg1[%24, %c81] : memref<3x345xf32, #tpu.memory_space<smem>>
    %26 = vector.broadcast %25 : f32 to vector<8x256xf32>
    %27 = arith.mulf %18, %26 : vector<8x256xf32>
    %28 = arith.addf %14, %27 : vector<8x256xf32>
    %29 = vector.extract_strided_slice %17 {offsets = [1, 0], sizes = [8, 256], strides = [1, 1]} : vector<10x256xf32> to vector<8x256xf32>
    %30 = arith.index_cast %arg0 : i32 to index
    %c9 = arith.constant 9 : index
    %31 = memref.load %arg1[%30, %c9] : memref<3x345xf32, #tpu.memory_space<smem>>
    %32 = vector.broadcast %31 : f32 to vector<8x256xf32>
    %33 = arith.mulf %29, %32 : vector<8x256xf32>
    %34 = arith.addf %23, %33 : vector<8x256xf32>
    %35 = arith.index_cast %arg0 : i32 to index
    %c90 = arith.constant 90 : index
    %36 = memref.load %arg1[%35, %c90] : memref<3x345xf32, #tpu.memory_space<smem>>
    %37 = vector.broadcast %36 : f32 to vector<8x256xf32>
    %38 = arith.mulf %29, %37 : vector<8x256xf32>
    %39 = arith.addf %28, %38 : vector<8x256xf32>
    %40 = vector.extract_strided_slice %17 {offsets = [2, 0], sizes = [8, 256], strides = [1, 1]} : vector<10x256xf32> to vector<8x256xf32>
    %41 = arith.index_cast %arg0 : i32 to index
    %c18 = arith.constant 18 : index
    %42 = memref.load %arg1[%41, %c18] : memref<3x345xf32, #tpu.memory_space<smem>>
    %43 = vector.broadcast %42 : f32 to vector<8x256xf32>
    %44 = arith.mulf %40, %43 : vector<8x256xf32>
    %45 = arith.addf %34, %44 : vector<8x256xf32>
    %46 = arith.index_cast %arg0 : i32 to index
    %c99 = arith.constant 99 : index
    %47 = memref.load %arg1[%46, %c99] : memref<3x345xf32, #tpu.memory_space<smem>>
    %48 = vector.broadcast %47 : f32 to vector<8x256xf32>
    %49 = arith.mulf %40, %48 : vector<8x256xf32>
    %50 = arith.addf %39, %49 : vector<8x256xf32>
    %c12_i32 = arith.constant 12 : i32
    %51 = tpu.dynamic_rotate %16 by %c12_i32 dim 1 : vector<10x256xf32>, i32 -> vector<10x256xf32>
    %52 = vector.extract_strided_slice %51 {offsets = [0, 0], sizes = [8, 256], strides = [1, 1]} : vector<10x256xf32> to vector<8x256xf32>
    %53 = arith.index_cast %arg0 : i32 to index
    %c1 = arith.constant 1 : index
    %54 = memref.load %arg1[%53, %c1] : memref<3x345xf32, #tpu.memory_space<smem>>
    %55 = vector.broadcast %54 : f32 to vector<8x256xf32>
    %56 = arith.mulf %52, %55 : vector<8x256xf32>
    %57 = arith.addf %45, %56 : vector<8x256xf32>
    %58 = arith.index_cast %arg0 : i32 to index
    %c82 = arith.constant 82 : index
    %59 = memref.load %arg1[%58, %c82] : memref<3x345xf32, #tpu.memory_space<smem>>
    %60 = vector.broadcast %59 : f32 to vector<8x256xf32>
    %61 = arith.mulf %52, %60 : vector<8x256xf32>
    %62 = arith.addf %50, %61 : vector<8x256xf32>
    %63 = vector.extract_strided_slice %51 {offsets = [1, 0], sizes = [8, 256], strides = [1, 1]} : vector<10x256xf32> to vector<8x256xf32>
    %64 = arith.index_cast %arg0 : i32 to index
    %c10 = arith.constant 10 : index
    %65 = memref.load %arg1[%64, %c10] : memref<3x345xf32, #tpu.memory_space<smem>>
    %66 = vector.broadcast %65 : f32 to vector<8x256xf32>
    %67 = arith.mulf %63, %66 : vector<8x256xf32>
    %68 = arith.addf %57, %67 : vector<8x256xf32>
    %69 = arith.index_cast %arg0 : i32 to index
    %c91 = arith.constant 91 : index
    %70 = memref.load %arg1[%69, %c91] : memref<3x345xf32, #tpu.memory_space<smem>>
    %71 = vector.broadcast %70 : f32 to vector<8x256xf32>
    %72 = arith.mulf %63, %71 : vector<8x256xf32>
    %73 = arith.addf %62, %72 : vector<8x256xf32>
    %74 = vector.extract_strided_slice %51 {offsets = [2, 0], sizes = [8, 256], strides = [1, 1]} : vector<10x256xf32> to vector<8x256xf32>
    %75 = arith.index_cast %arg0 : i32 to index
    %c19 = arith.constant 19 : index
    %76 = memref.load %arg1[%75, %c19] : memref<3x345xf32, #tpu.memory_space<smem>>
    %77 = vector.broadcast %76 : f32 to vector<8x256xf32>
    %78 = arith.mulf %74, %77 : vector<8x256xf32>
    %79 = arith.addf %68, %78 : vector<8x256xf32>
    %80 = arith.index_cast %arg0 : i32 to index
    %c100 = arith.constant 100 : index
    %81 = memref.load %arg1[%80, %c100] : memref<3x345xf32, #tpu.memory_space<smem>>
    %82 = vector.broadcast %81 : f32 to vector<8x256xf32>
    %83 = arith.mulf %74, %82 : vector<8x256xf32>
    %84 = arith.addf %73, %83 : vector<8x256xf32>
    %c11_i32 = arith.constant 11 : i32
    %85 = tpu.dynamic_rotate %16 by %c11_i32 dim 1 : vector<10x256xf32>, i32 -> vector<10x256xf32>
    %86 = vector.extract_strided_slice %85 {offsets = [0, 0], sizes = [8, 256], strides = [1, 1]} : vector<10x256xf32> to vector<8x256xf32>
    %87 = arith.index_cast %arg0 : i32 to index
    %c2 = arith.constant 2 : index
    %88 = memref.load %arg1[%87, %c2] : memref<3x345xf32, #tpu.memory_space<smem>>
    %89 = vector.broadcast %88 : f32 to vector<8x256xf32>
    %90 = arith.mulf %86, %89 : vector<8x256xf32>
    %91 = arith.addf %79, %90 : vector<8x256xf32>
    %92 = arith.index_cast %arg0 : i32 to index
    %c83 = arith.constant 83 : index
    %93 = memref.load %arg1[%92, %c83] : memref<3x345xf32, #tpu.memory_space<smem>>
    %94 = vector.broadcast %93 : f32 to vector<8x256xf32>
    %95 = arith.mulf %86, %94 : vector<8x256xf32>
    %96 = arith.addf %84, %95 : vector<8x256xf32>
    %97 = vector.extract_strided_slice %85 {offsets = [1, 0], sizes = [8, 256], strides = [1, 1]} : vector<10x256xf32> to vector<8x256xf32>
    %98 = arith.index_cast %arg0 : i32 to index
    %c11 = arith.constant 11 : index
    %99 = memref.load %arg1[%98, %c11] : memref<3x345xf32, #tpu.memory_space<smem>>
    %100 = vector.broadcast %99 : f32 to vector<8x256xf32>
    %101 = arith.mulf %97, %100 : vector<8x256xf32>
    %102 = arith.addf %91, %101 : vector<8x256xf32>
    %103 = arith.index_cast %arg0 : i32 to index
    %c92 = arith.constant 92 : index
    %104 = memref.load %arg1[%103, %c92] : memref<3x345xf32, #tpu.memory_space<smem>>
    %105 = vector.broadcast %104 : f32 to vector<8x256xf32>
    %106 = arith.mulf %97, %105 : vector<8x256xf32>
    %107 = arith.addf %96, %106 : vector<8x256xf32>
    %108 = vector.extract_strided_slice %85 {offsets = [2, 0], sizes = [8, 256], strides = [1, 1]} : vector<10x256xf32> to vector<8x256xf32>
    %109 = arith.index_cast %arg0 : i32 to index
    %c20 = arith.constant 20 : index
    %110 = memref.load %arg1[%109, %c20] : memref<3x345xf32, #tpu.memory_space<smem>>
    %111 = vector.broadcast %110 : f32 to vector<8x256xf32>
    %112 = arith.mulf %108, %111 : vector<8x256xf32>
    %113 = arith.addf %102, %112 : vector<8x256xf32>
    %114 = arith.index_cast %arg0 : i32 to index
    %c101 = arith.constant 101 : index
    %115 = memref.load %arg1[%114, %c101] : memref<3x345xf32, #tpu.memory_space<smem>>
    %116 = vector.broadcast %115 : f32 to vector<8x256xf32>
    %117 = arith.mulf %108, %116 : vector<8x256xf32>
    %118 = arith.addf %107, %117 : vector<8x256xf32>
    %c1_i32 = arith.constant 1 : i32
    %119 = tpu.dynamic_rotate %16 by %c1_i32 dim 1 : vector<10x256xf32>, i32 -> vector<10x256xf32>
    %120 = vector.extract_strided_slice %119 {offsets = [0, 0], sizes = [8, 256], strides = [1, 1]} : vector<10x256xf32> to vector<8x256xf32>
    %121 = arith.index_cast %arg0 : i32 to index
    %c3 = arith.constant 3 : index
    %122 = memref.load %arg1[%121, %c3] : memref<3x345xf32, #tpu.memory_space<smem>>
    %123 = vector.broadcast %122 : f32 to vector<8x256xf32>
    %124 = arith.mulf %120, %123 : vector<8x256xf32>
    %125 = arith.addf %113, %124 : vector<8x256xf32>
    %126 = arith.index_cast %arg0 : i32 to index
    %c84 = arith.constant 84 : index
    %127 = memref.load %arg1[%126, %c84] : memref<3x345xf32, #tpu.memory_space<smem>>
    %128 = vector.broadcast %127 : f32 to vector<8x256xf32>
    %129 = arith.mulf %120, %128 : vector<8x256xf32>
    %130 = arith.addf %118, %129 : vector<8x256xf32>
    %131 = vector.extract_strided_slice %119 {offsets = [1, 0], sizes = [8, 256], strides = [1, 1]} : vector<10x256xf32> to vector<8x256xf32>
    %132 = arith.index_cast %arg0 : i32 to index
    %c12 = arith.constant 12 : index
    %133 = memref.load %arg1[%132, %c12] : memref<3x345xf32, #tpu.memory_space<smem>>
    %134 = vector.broadcast %133 : f32 to vector<8x256xf32>
    %135 = arith.mulf %131, %134 : vector<8x256xf32>
    %136 = arith.addf %125, %135 : vector<8x256xf32>
    %137 = arith.index_cast %arg0 : i32 to index
    %c93 = arith.constant 93 : index
    %138 = memref.load %arg1[%137, %c93] : memref<3x345xf32, #tpu.memory_space<smem>>
    %139 = vector.broadcast %138 : f32 to vector<8x256xf32>
    %140 = arith.mulf %131, %139 : vector<8x256xf32>
    %141 = arith.addf %130, %140 : vector<8x256xf32>
    %142 = vector.extract_strided_slice %119 {offsets = [2, 0], sizes = [8, 256], strides = [1, 1]} : vector<10x256xf32> to vector<8x256xf32>
    %143 = arith.index_cast %arg0 : i32 to index
    %c21 = arith.constant 21 : index
    %144 = memref.load %arg1[%143, %c21] : memref<3x345xf32, #tpu.memory_space<smem>>
    %145 = vector.broadcast %144 : f32 to vector<8x256xf32>
    %146 = arith.mulf %142, %145 : vector<8x256xf32>
    %147 = arith.addf %136, %146 : vector<8x256xf32>
    %148 = arith.index_cast %arg0 : i32 to index
    %c102 = arith.constant 102 : index
    %149 = memref.load %arg1[%148, %c102] : memref<3x345xf32, #tpu.memory_space<smem>>
    %150 = vector.broadcast %149 : f32 to vector<8x256xf32>
    %151 = arith.mulf %142, %150 : vector<8x256xf32>
    %152 = arith.addf %141, %151 : vector<8x256xf32>
    %153 = vector.extract_strided_slice %16 {offsets = [0, 0], sizes = [8, 256], strides = [1, 1]} : vector<10x256xf32> to vector<8x256xf32>
    %154 = arith.index_cast %arg0 : i32 to index
    %c4 = arith.constant 4 : index
    %155 = memref.load %arg1[%154, %c4] : memref<3x345xf32, #tpu.memory_space<smem>>
    %156 = vector.broadcast %155 : f32 to vector<8x256xf32>
    %157 = arith.mulf %153, %156 : vector<8x256xf32>
    %158 = arith.addf %147, %157 : vector<8x256xf32>
    %159 = arith.index_cast %arg0 : i32 to index
    %c85 = arith.constant 85 : index
    %160 = memref.load %arg1[%159, %c85] : memref<3x345xf32, #tpu.memory_space<smem>>
    %161 = vector.broadcast %160 : f32 to vector<8x256xf32>
    %162 = arith.mulf %153, %161 : vector<8x256xf32>
    %163 = arith.addf %152, %162 : vector<8x256xf32>
    %164 = vector.extract_strided_slice %16 {offsets = [1, 0], sizes = [8, 256], strides = [1, 1]} : vector<10x256xf32> to vector<8x256xf32>
    %165 = arith.index_cast %arg0 : i32 to index
    %c13 = arith.constant 13 : index
    %166 = memref.load %arg1[%165, %c13] : memref<3x345xf32, #tpu.memory_space<smem>>
    %167 = vector.broadcast %166 : f32 to vector<8x256xf32>
    %168 = arith.mulf %164, %167 : vector<8x256xf32>
    %169 = arith.addf %158, %168 : vector<8x256xf32>
    %170 = arith.index_cast %arg0 : i32 to index
    %c94 = arith.constant 94 : index
    %171 = memref.load %arg1[%170, %c94] : memref<3x345xf32, #tpu.memory_space<smem>>
    %172 = vector.broadcast %171 : f32 to vector<8x256xf32>
    %173 = arith.mulf %164, %172 : vector<8x256xf32>
    %174 = arith.addf %163, %173 : vector<8x256xf32>
    %175 = vector.extract_strided_slice %16 {offsets = [2, 0], sizes = [8, 256], strides = [1, 1]} : vector<10x256xf32> to vector<8x256xf32>
    %176 = arith.index_cast %arg0 : i32 to index
    %c22 = arith.constant 22 : index
    %177 = memref.load %arg1[%176, %c22] : memref<3x345xf32, #tpu.memory_space<smem>>
    %178 = vector.broadcast %177 : f32 to vector<8x256xf32>
    %179 = arith.mulf %175, %178 : vector<8x256xf32>
    %180 = arith.addf %169, %179 : vector<8x256xf32>
    %181 = arith.index_cast %arg0 : i32 to index
    %c103 = arith.constant 103 : index
    %182 = memref.load %arg1[%181, %c103] : memref<3x345xf32, #tpu.memory_space<smem>>
    %183 = vector.broadcast %182 : f32 to vector<8x256xf32>
    %184 = arith.mulf %175, %183 : vector<8x256xf32>
    %185 = arith.addf %174, %184 : vector<8x256xf32>
    %c255_i32 = arith.constant 255 : i32
    %186 = tpu.dynamic_rotate %16 by %c255_i32 dim 1 : vector<10x256xf32>, i32 -> vector<10x256xf32>
    %187 = vector.extract_strided_slice %186 {offsets = [0, 0], sizes = [8, 256], strides = [1, 1]} : vector<10x256xf32> to vector<8x256xf32>
    %188 = arith.index_cast %arg0 : i32 to index
    %c5 = arith.constant 5 : index
    %189 = memref.load %arg1[%188, %c5] : memref<3x345xf32, #tpu.memory_space<smem>>
    %190 = vector.broadcast %189 : f32 to vector<8x256xf32>
    %191 = arith.mulf %187, %190 : vector<8x256xf32>
    %192 = arith.addf %180, %191 : vector<8x256xf32>
    %193 = arith.index_cast %arg0 : i32 to index
    %c86 = arith.constant 86 : index
    %194 = memref.load %arg1[%193, %c86] : memref<3x345xf32, #tpu.memory_space<smem>>
    %195 = vector.broadcast %194 : f32 to vector<8x256xf32>
    %196 = arith.mulf %187, %195 : vector<8x256xf32>
    %197 = arith.addf %185, %196 : vector<8x256xf32>
    %198 = vector.extract_strided_slice %186 {offsets = [1, 0], sizes = [8, 256], strides = [1, 1]} : vector<10x256xf32> to vector<8x256xf32>
    %199 = arith.index_cast %arg0 : i32 to index
    %c14 = arith.constant 14 : index
    %200 = memref.load %arg1[%199, %c14] : memref<3x345xf32, #tpu.memory_space<smem>>
    %201 = vector.broadcast %200 : f32 to vector<8x256xf32>
    %202 = arith.mulf %198, %201 : vector<8x256xf32>
    %203 = arith.addf %192, %202 : vector<8x256xf32>
    %204 = arith.index_cast %arg0 : i32 to index
    %c95 = arith.constant 95 : index
    %205 = memref.load %arg1[%204, %c95] : memref<3x345xf32, #tpu.memory_space<smem>>
    %206 = vector.broadcast %205 : f32 to vector<8x256xf32>
    %207 = arith.mulf %198, %206 : vector<8x256xf32>
    %208 = arith.addf %197, %207 : vector<8x256xf32>
    %209 = vector.extract_strided_slice %186 {offsets = [2, 0], sizes = [8, 256], strides = [1, 1]} : vector<10x256xf32> to vector<8x256xf32>
    %210 = arith.index_cast %arg0 : i32 to index
    %c23 = arith.constant 23 : index
    %211 = memref.load %arg1[%210, %c23] : memref<3x345xf32, #tpu.memory_space<smem>>
    %212 = vector.broadcast %211 : f32 to vector<8x256xf32>
    %213 = arith.mulf %209, %212 : vector<8x256xf32>
    %214 = arith.addf %203, %213 : vector<8x256xf32>
    %215 = arith.index_cast %arg0 : i32 to index
    %c104 = arith.constant 104 : index
    %216 = memref.load %arg1[%215, %c104] : memref<3x345xf32, #tpu.memory_space<smem>>
    %217 = vector.broadcast %216 : f32 to vector<8x256xf32>
    %218 = arith.mulf %209, %217 : vector<8x256xf32>
    %219 = arith.addf %208, %218 : vector<8x256xf32>
    %c245_i32 = arith.constant 245 : i32
    %220 = tpu.dynamic_rotate %16 by %c245_i32 dim 1 : vector<10x256xf32>, i32 -> vector<10x256xf32>
    %221 = vector.extract_strided_slice %220 {offsets = [0, 0], sizes = [8, 256], strides = [1, 1]} : vector<10x256xf32> to vector<8x256xf32>
    %222 = arith.index_cast %arg0 : i32 to index
    %c6_15 = arith.constant 6 : index
    %223 = memref.load %arg1[%222, %c6_15] : memref<3x345xf32, #tpu.memory_space<smem>>
    %224 = vector.broadcast %223 : f32 to vector<8x256xf32>
    %225 = arith.mulf %221, %224 : vector<8x256xf32>
    %226 = arith.addf %214, %225 : vector<8x256xf32>
    %227 = arith.index_cast %arg0 : i32 to index
    %c87 = arith.constant 87 : index
    %228 = memref.load %arg1[%227, %c87] : memref<3x345xf32, #tpu.memory_space<smem>>
    %229 = vector.broadcast %228 : f32 to vector<8x256xf32>
    %230 = arith.mulf %221, %229 : vector<8x256xf32>
    %231 = arith.addf %219, %230 : vector<8x256xf32>
    %232 = vector.extract_strided_slice %220 {offsets = [1, 0], sizes = [8, 256], strides = [1, 1]} : vector<10x256xf32> to vector<8x256xf32>
    %233 = arith.index_cast %arg0 : i32 to index
    %c15 = arith.constant 15 : index
    %234 = memref.load %arg1[%233, %c15] : memref<3x345xf32, #tpu.memory_space<smem>>
    %235 = vector.broadcast %234 : f32 to vector<8x256xf32>
    %236 = arith.mulf %232, %235 : vector<8x256xf32>
    %237 = arith.addf %226, %236 : vector<8x256xf32>
    %238 = arith.index_cast %arg0 : i32 to index
    %c96 = arith.constant 96 : index
    %239 = memref.load %arg1[%238, %c96] : memref<3x345xf32, #tpu.memory_space<smem>>
    %240 = vector.broadcast %239 : f32 to vector<8x256xf32>
    %241 = arith.mulf %232, %240 : vector<8x256xf32>
    %242 = arith.addf %231, %241 : vector<8x256xf32>
    %243 = vector.extract_strided_slice %220 {offsets = [2, 0], sizes = [8, 256], strides = [1, 1]} : vector<10x256xf32> to vector<8x256xf32>
    %244 = arith.index_cast %arg0 : i32 to index
    %c24 = arith.constant 24 : index
    %245 = memref.load %arg1[%244, %c24] : memref<3x345xf32, #tpu.memory_space<smem>>
    %246 = vector.broadcast %245 : f32 to vector<8x256xf32>
    %247 = arith.mulf %243, %246 : vector<8x256xf32>
    %248 = arith.addf %237, %247 : vector<8x256xf32>
    %249 = arith.index_cast %arg0 : i32 to index
    %c105 = arith.constant 105 : index
    %250 = memref.load %arg1[%249, %c105] : memref<3x345xf32, #tpu.memory_space<smem>>
    %251 = vector.broadcast %250 : f32 to vector<8x256xf32>
    %252 = arith.mulf %243, %251 : vector<8x256xf32>
    %253 = arith.addf %242, %252 : vector<8x256xf32>
    %c244_i32 = arith.constant 244 : i32
    %254 = tpu.dynamic_rotate %16 by %c244_i32 dim 1 : vector<10x256xf32>, i32 -> vector<10x256xf32>
    %255 = vector.extract_strided_slice %254 {offsets = [0, 0], sizes = [8, 256], strides = [1, 1]} : vector<10x256xf32> to vector<8x256xf32>
    %256 = arith.index_cast %arg0 : i32 to index
    %c7_16 = arith.constant 7 : index
    %257 = memref.load %arg1[%256, %c7_16] : memref<3x345xf32, #tpu.memory_space<smem>>
    %258 = vector.broadcast %257 : f32 to vector<8x256xf32>
    %259 = arith.mulf %255, %258 : vector<8x256xf32>
    %260 = arith.addf %248, %259 : vector<8x256xf32>
    %261 = arith.index_cast %arg0 : i32 to index
    %c88 = arith.constant 88 : index
    %262 = memref.load %arg1[%261, %c88] : memref<3x345xf32, #tpu.memory_space<smem>>
    %263 = vector.broadcast %262 : f32 to vector<8x256xf32>
    %264 = arith.mulf %255, %263 : vector<8x256xf32>
    %265 = arith.addf %253, %264 : vector<8x256xf32>
    %266 = vector.extract_strided_slice %254 {offsets = [1, 0], sizes = [8, 256], strides = [1, 1]} : vector<10x256xf32> to vector<8x256xf32>
    %267 = arith.index_cast %arg0 : i32 to index
    %c16_17 = arith.constant 16 : index
    %268 = memref.load %arg1[%267, %c16_17] : memref<3x345xf32, #tpu.memory_space<smem>>
    %269 = vector.broadcast %268 : f32 to vector<8x256xf32>
    %270 = arith.mulf %266, %269 : vector<8x256xf32>
    %271 = arith.addf %260, %270 : vector<8x256xf32>
    %272 = arith.index_cast %arg0 : i32 to index
    %c97 = arith.constant 97 : index
    %273 = memref.load %arg1[%272, %c97] : memref<3x345xf32, #tpu.memory_space<smem>>
    %274 = vector.broadcast %273 : f32 to vector<8x256xf32>
    %275 = arith.mulf %266, %274 : vector<8x256xf32>
    %276 = arith.addf %265, %275 : vector<8x256xf32>
    %277 = vector.extract_strided_slice %254 {offsets = [2, 0], sizes = [8, 256], strides = [1, 1]} : vector<10x256xf32> to vector<8x256xf32>
    %278 = arith.index_cast %arg0 : i32 to index
    %c25 = arith.constant 25 : index
    %279 = memref.load %arg1[%278, %c25] : memref<3x345xf32, #tpu.memory_space<smem>>
    %280 = vector.broadcast %279 : f32 to vector<8x256xf32>
    %281 = arith.mulf %277, %280 : vector<8x256xf32>
    %282 = arith.addf %271, %281 : vector<8x256xf32>
    %283 = arith.index_cast %arg0 : i32 to index
    %c106 = arith.constant 106 : index
    %284 = memref.load %arg1[%283, %c106] : memref<3x345xf32, #tpu.memory_space<smem>>
    %285 = vector.broadcast %284 : f32 to vector<8x256xf32>
    %286 = arith.mulf %277, %285 : vector<8x256xf32>
    %287 = arith.addf %276, %286 : vector<8x256xf32>
    %c243_i32 = arith.constant 243 : i32
    %288 = tpu.dynamic_rotate %16 by %c243_i32 dim 1 : vector<10x256xf32>, i32 -> vector<10x256xf32>
    %289 = vector.extract_strided_slice %288 {offsets = [0, 0], sizes = [8, 256], strides = [1, 1]} : vector<10x256xf32> to vector<8x256xf32>
    %290 = arith.index_cast %arg0 : i32 to index
    %c8 = arith.constant 8 : index
    %291 = memref.load %arg1[%290, %c8] : memref<3x345xf32, #tpu.memory_space<smem>>
    %292 = vector.broadcast %291 : f32 to vector<8x256xf32>
    %293 = arith.mulf %289, %292 : vector<8x256xf32>
    %294 = arith.addf %282, %293 : vector<8x256xf32>
    %295 = arith.index_cast %arg0 : i32 to index
    %c89 = arith.constant 89 : index
    %296 = memref.load %arg1[%295, %c89] : memref<3x345xf32, #tpu.memory_space<smem>>
    %297 = vector.broadcast %296 : f32 to vector<8x256xf32>
    %298 = arith.mulf %289, %297 : vector<8x256xf32>
    %299 = arith.addf %287, %298 : vector<8x256xf32>
    %300 = vector.extract_strided_slice %288 {offsets = [1, 0], sizes = [8, 256], strides = [1, 1]} : vector<10x256xf32> to vector<8x256xf32>
    %301 = arith.index_cast %arg0 : i32 to index
    %c17 = arith.constant 17 : index
    %302 = memref.load %arg1[%301, %c17] : memref<3x345xf32, #tpu.memory_space<smem>>
    %303 = vector.broadcast %302 : f32 to vector<8x256xf32>
    %304 = arith.mulf %300, %303 : vector<8x256xf32>
    %305 = arith.addf %294, %304 : vector<8x256xf32>
    %306 = arith.index_cast %arg0 : i32 to index
    %c98 = arith.constant 98 : index
    %307 = memref.load %arg1[%306, %c98] : memref<3x345xf32, #tpu.memory_space<smem>>
    %308 = vector.broadcast %307 : f32 to vector<8x256xf32>
    %309 = arith.mulf %300, %308 : vector<8x256xf32>
    %310 = arith.addf %299, %309 : vector<8x256xf32>
    %311 = vector.extract_strided_slice %288 {offsets = [2, 0], sizes = [8, 256], strides = [1, 1]} : vector<10x256xf32> to vector<8x256xf32>
    %312 = arith.index_cast %arg0 : i32 to index
    %c26 = arith.constant 26 : index
    %313 = memref.load %arg1[%312, %c26] : memref<3x345xf32, #tpu.memory_space<smem>>
    %314 = vector.broadcast %313 : f32 to vector<8x256xf32>
    %315 = arith.mulf %311, %314 : vector<8x256xf32>
    %316 = arith.addf %305, %315 : vector<8x256xf32>
    %317 = arith.index_cast %arg0 : i32 to index
    %c107 = arith.constant 107 : index
    %318 = memref.load %arg1[%317, %c107] : memref<3x345xf32, #tpu.memory_space<smem>>
    %319 = vector.broadcast %318 : f32 to vector<8x256xf32>
    %320 = arith.mulf %311, %319 : vector<8x256xf32>
    %321 = arith.addf %310, %320 : vector<8x256xf32>
    %c1_18 = arith.constant 1 : index
    %c7_19 = arith.constant 7 : index
    %c0_20 = arith.constant 0 : index
    %322 = vector.load %arg2[%c1_18, %c7_19, %c0_20] : memref<3x24x256xf32, #tpu.memory_space<vmem>>, vector<1x10x256xf32>
    %323 = vector.shape_cast %322 : vector<1x10x256xf32> to vector<10x256xf32>
    %c13_i32_21 = arith.constant 13 : i32
    %324 = tpu.dynamic_rotate %323 by %c13_i32_21 dim 1 : vector<10x256xf32>, i32 -> vector<10x256xf32>
    %325 = vector.extract_strided_slice %324 {offsets = [0, 0], sizes = [8, 256], strides = [1, 1]} : vector<10x256xf32> to vector<8x256xf32>
    %326 = arith.index_cast %arg0 : i32 to index
    %c27 = arith.constant 27 : index
    %327 = memref.load %arg1[%326, %c27] : memref<3x345xf32, #tpu.memory_space<smem>>
    %328 = vector.broadcast %327 : f32 to vector<8x256xf32>
    %329 = arith.mulf %325, %328 : vector<8x256xf32>
    %330 = arith.addf %316, %329 : vector<8x256xf32>
    %331 = arith.index_cast %arg0 : i32 to index
    %c108 = arith.constant 108 : index
    %332 = memref.load %arg1[%331, %c108] : memref<3x345xf32, #tpu.memory_space<smem>>
    %333 = vector.broadcast %332 : f32 to vector<8x256xf32>
    %334 = arith.mulf %325, %333 : vector<8x256xf32>
    %335 = arith.addf %321, %334 : vector<8x256xf32>
    %336 = vector.extract_strided_slice %324 {offsets = [1, 0], sizes = [8, 256], strides = [1, 1]} : vector<10x256xf32> to vector<8x256xf32>
    %337 = arith.index_cast %arg0 : i32 to index
    %c36 = arith.constant 36 : index
    %338 = memref.load %arg1[%337, %c36] : memref<3x345xf32, #tpu.memory_space<smem>>
    %339 = vector.broadcast %338 : f32 to vector<8x256xf32>
    %340 = arith.mulf %336, %339 : vector<8x256xf32>
    %341 = arith.addf %330, %340 : vector<8x256xf32>
    %342 = arith.index_cast %arg0 : i32 to index
    %c117 = arith.constant 117 : index
    %343 = memref.load %arg1[%342, %c117] : memref<3x345xf32, #tpu.memory_space<smem>>
    %344 = vector.broadcast %343 : f32 to vector<8x256xf32>
    %345 = arith.mulf %336, %344 : vector<8x256xf32>
    %346 = arith.addf %335, %345 : vector<8x256xf32>
    %347 = vector.extract_strided_slice %324 {offsets = [2, 0], sizes = [8, 256], strides = [1, 1]} : vector<10x256xf32> to vector<8x256xf32>
    %348 = arith.index_cast %arg0 : i32 to index
    %c45 = arith.constant 45 : index
    %349 = memref.load %arg1[%348, %c45] : memref<3x345xf32, #tpu.memory_space<smem>>
    %350 = vector.broadcast %349 : f32 to vector<8x256xf32>
    %351 = arith.mulf %347, %350 : vector<8x256xf32>
    %352 = arith.addf %341, %351 : vector<8x256xf32>
    %353 = arith.index_cast %arg0 : i32 to index
    %c126 = arith.constant 126 : index
    %354 = memref.load %arg1[%353, %c126] : memref<3x345xf32, #tpu.memory_space<smem>>
    %355 = vector.broadcast %354 : f32 to vector<8x256xf32>
    %356 = arith.mulf %347, %355 : vector<8x256xf32>
    %357 = arith.addf %346, %356 : vector<8x256xf32>
    %c12_i32_22 = arith.constant 12 : i32
    %358 = tpu.dynamic_rotate %323 by %c12_i32_22 dim 1 : vector<10x256xf32>, i32 -> vector<10x256xf32>
    %359 = vector.extract_strided_slice %358 {offsets = [0, 0], sizes = [8, 256], strides = [1, 1]} : vector<10x256xf32> to vector<8x256xf32>
    %360 = arith.index_cast %arg0 : i32 to index
    %c28 = arith.constant 28 : index
    %361 = memref.load %arg1[%360, %c28] : memref<3x345xf32, #tpu.memory_space<smem>>
    %362 = vector.broadcast %361 : f32 to vector<8x256xf32>
    %363 = arith.mulf %359, %362 : vector<8x256xf32>
    %364 = arith.addf %352, %363 : vector<8x256xf32>
    %365 = arith.index_cast %arg0 : i32 to index
    %c109 = arith.constant 109 : index
    %366 = memref.load %arg1[%365, %c109] : memref<3x345xf32, #tpu.memory_space<smem>>
    %367 = vector.broadcast %366 : f32 to vector<8x256xf32>
    %368 = arith.mulf %359, %367 : vector<8x256xf32>
    %369 = arith.addf %357, %368 : vector<8x256xf32>
    %370 = vector.extract_strided_slice %358 {offsets = [1, 0], sizes = [8, 256], strides = [1, 1]} : vector<10x256xf32> to vector<8x256xf32>
    %371 = arith.index_cast %arg0 : i32 to index
    %c37 = arith.constant 37 : index
    %372 = memref.load %arg1[%371, %c37] : memref<3x345xf32, #tpu.memory_space<smem>>
    %373 = vector.broadcast %372 : f32 to vector<8x256xf32>
    %374 = arith.mulf %370, %373 : vector<8x256xf32>
    %375 = arith.addf %364, %374 : vector<8x256xf32>
    %376 = arith.index_cast %arg0 : i32 to index
    %c118 = arith.constant 118 : index
    %377 = memref.load %arg1[%376, %c118] : memref<3x345xf32, #tpu.memory_space<smem>>
    %378 = vector.broadcast %377 : f32 to vector<8x256xf32>
    %379 = arith.mulf %370, %378 : vector<8x256xf32>
    %380 = arith.addf %369, %379 : vector<8x256xf32>
    %381 = vector.extract_strided_slice %358 {offsets = [2, 0], sizes = [8, 256], strides = [1, 1]} : vector<10x256xf32> to vector<8x256xf32>
    %382 = arith.index_cast %arg0 : i32 to index
    %c46 = arith.constant 46 : index
    %383 = memref.load %arg1[%382, %c46] : memref<3x345xf32, #tpu.memory_space<smem>>
    %384 = vector.broadcast %383 : f32 to vector<8x256xf32>
    %385 = arith.mulf %381, %384 : vector<8x256xf32>
    %386 = arith.addf %375, %385 : vector<8x256xf32>
    %387 = arith.index_cast %arg0 : i32 to index
    %c127 = arith.constant 127 : index
    %388 = memref.load %arg1[%387, %c127] : memref<3x345xf32, #tpu.memory_space<smem>>
    %389 = vector.broadcast %388 : f32 to vector<8x256xf32>
    %390 = arith.mulf %381, %389 : vector<8x256xf32>
    %391 = arith.addf %380, %390 : vector<8x256xf32>
    %c11_i32_23 = arith.constant 11 : i32
    %392 = tpu.dynamic_rotate %323 by %c11_i32_23 dim 1 : vector<10x256xf32>, i32 -> vector<10x256xf32>
    %393 = vector.extract_strided_slice %392 {offsets = [0, 0], sizes = [8, 256], strides = [1, 1]} : vector<10x256xf32> to vector<8x256xf32>
    %394 = arith.index_cast %arg0 : i32 to index
    %c29 = arith.constant 29 : index
    %395 = memref.load %arg1[%394, %c29] : memref<3x345xf32, #tpu.memory_space<smem>>
    %396 = vector.broadcast %395 : f32 to vector<8x256xf32>
    %397 = arith.mulf %393, %396 : vector<8x256xf32>
    %398 = arith.addf %386, %397 : vector<8x256xf32>
    %399 = arith.index_cast %arg0 : i32 to index
    %c110 = arith.constant 110 : index
    %400 = memref.load %arg1[%399, %c110] : memref<3x345xf32, #tpu.memory_space<smem>>
    %401 = vector.broadcast %400 : f32 to vector<8x256xf32>
    %402 = arith.mulf %393, %401 : vector<8x256xf32>
    %403 = arith.addf %391, %402 : vector<8x256xf32>
    %404 = vector.extract_strided_slice %392 {offsets = [1, 0], sizes = [8, 256], strides = [1, 1]} : vector<10x256xf32> to vector<8x256xf32>
    %405 = arith.index_cast %arg0 : i32 to index
    %c38 = arith.constant 38 : index
    %406 = memref.load %arg1[%405, %c38] : memref<3x345xf32, #tpu.memory_space<smem>>
    %407 = vector.broadcast %406 : f32 to vector<8x256xf32>
    %408 = arith.mulf %404, %407 : vector<8x256xf32>
    %409 = arith.addf %398, %408 : vector<8x256xf32>
    %410 = arith.index_cast %arg0 : i32 to index
    %c119 = arith.constant 119 : index
    %411 = memref.load %arg1[%410, %c119] : memref<3x345xf32, #tpu.memory_space<smem>>
    %412 = vector.broadcast %411 : f32 to vector<8x256xf32>
    %413 = arith.mulf %404, %412 : vector<8x256xf32>
    %414 = arith.addf %403, %413 : vector<8x256xf32>
    %415 = vector.extract_strided_slice %392 {offsets = [2, 0], sizes = [8, 256], strides = [1, 1]} : vector<10x256xf32> to vector<8x256xf32>
    %416 = arith.index_cast %arg0 : i32 to index
    %c47 = arith.constant 47 : index
    %417 = memref.load %arg1[%416, %c47] : memref<3x345xf32, #tpu.memory_space<smem>>
    %418 = vector.broadcast %417 : f32 to vector<8x256xf32>
    %419 = arith.mulf %415, %418 : vector<8x256xf32>
    %420 = arith.addf %409, %419 : vector<8x256xf32>
    %421 = arith.index_cast %arg0 : i32 to index
    %c128 = arith.constant 128 : index
    %422 = memref.load %arg1[%421, %c128] : memref<3x345xf32, #tpu.memory_space<smem>>
    %423 = vector.broadcast %422 : f32 to vector<8x256xf32>
    %424 = arith.mulf %415, %423 : vector<8x256xf32>
    %425 = arith.addf %414, %424 : vector<8x256xf32>
    %c1_i32_24 = arith.constant 1 : i32
    %426 = tpu.dynamic_rotate %323 by %c1_i32_24 dim 1 : vector<10x256xf32>, i32 -> vector<10x256xf32>
    %427 = vector.extract_strided_slice %426 {offsets = [0, 0], sizes = [8, 256], strides = [1, 1]} : vector<10x256xf32> to vector<8x256xf32>
    %428 = arith.index_cast %arg0 : i32 to index
    %c30 = arith.constant 30 : index
    %429 = memref.load %arg1[%428, %c30] : memref<3x345xf32, #tpu.memory_space<smem>>
    %430 = vector.broadcast %429 : f32 to vector<8x256xf32>
    %431 = arith.mulf %427, %430 : vector<8x256xf32>
    %432 = arith.addf %420, %431 : vector<8x256xf32>
    %433 = arith.index_cast %arg0 : i32 to index
    %c111 = arith.constant 111 : index
    %434 = memref.load %arg1[%433, %c111] : memref<3x345xf32, #tpu.memory_space<smem>>
    %435 = vector.broadcast %434 : f32 to vector<8x256xf32>
    %436 = arith.mulf %427, %435 : vector<8x256xf32>
    %437 = arith.addf %425, %436 : vector<8x256xf32>
    %438 = vector.extract_strided_slice %426 {offsets = [1, 0], sizes = [8, 256], strides = [1, 1]} : vector<10x256xf32> to vector<8x256xf32>
    %439 = arith.index_cast %arg0 : i32 to index
    %c39 = arith.constant 39 : index
    %440 = memref.load %arg1[%439, %c39] : memref<3x345xf32, #tpu.memory_space<smem>>
    %441 = vector.broadcast %440 : f32 to vector<8x256xf32>
    %442 = arith.mulf %438, %441 : vector<8x256xf32>
    %443 = arith.addf %432, %442 : vector<8x256xf32>
    %444 = arith.index_cast %arg0 : i32 to index
    %c120 = arith.constant 120 : index
    %445 = memref.load %arg1[%444, %c120] : memref<3x345xf32, #tpu.memory_space<smem>>
    %446 = vector.broadcast %445 : f32 to vector<8x256xf32>
    %447 = arith.mulf %438, %446 : vector<8x256xf32>
    %448 = arith.addf %437, %447 : vector<8x256xf32>
    %449 = vector.extract_strided_slice %426 {offsets = [2, 0], sizes = [8, 256], strides = [1, 1]} : vector<10x256xf32> to vector<8x256xf32>
    %450 = arith.index_cast %arg0 : i32 to index
    %c48 = arith.constant 48 : index
    %451 = memref.load %arg1[%450, %c48] : memref<3x345xf32, #tpu.memory_space<smem>>
    %452 = vector.broadcast %451 : f32 to vector<8x256xf32>
    %453 = arith.mulf %449, %452 : vector<8x256xf32>
    %454 = arith.addf %443, %453 : vector<8x256xf32>
    %455 = arith.index_cast %arg0 : i32 to index
    %c129 = arith.constant 129 : index
    %456 = memref.load %arg1[%455, %c129] : memref<3x345xf32, #tpu.memory_space<smem>>
    %457 = vector.broadcast %456 : f32 to vector<8x256xf32>
    %458 = arith.mulf %449, %457 : vector<8x256xf32>
    %459 = arith.addf %448, %458 : vector<8x256xf32>
    %460 = vector.extract_strided_slice %323 {offsets = [0, 0], sizes = [8, 256], strides = [1, 1]} : vector<10x256xf32> to vector<8x256xf32>
    %461 = arith.index_cast %arg0 : i32 to index
    %c31 = arith.constant 31 : index
    %462 = memref.load %arg1[%461, %c31] : memref<3x345xf32, #tpu.memory_space<smem>>
    %463 = vector.broadcast %462 : f32 to vector<8x256xf32>
    %464 = arith.mulf %460, %463 : vector<8x256xf32>
    %465 = arith.addf %454, %464 : vector<8x256xf32>
    %466 = arith.index_cast %arg0 : i32 to index
    %c112 = arith.constant 112 : index
    %467 = memref.load %arg1[%466, %c112] : memref<3x345xf32, #tpu.memory_space<smem>>
    %468 = vector.broadcast %467 : f32 to vector<8x256xf32>
    %469 = arith.mulf %460, %468 : vector<8x256xf32>
    %470 = arith.addf %459, %469 : vector<8x256xf32>
    %471 = vector.extract_strided_slice %323 {offsets = [1, 0], sizes = [8, 256], strides = [1, 1]} : vector<10x256xf32> to vector<8x256xf32>
    %472 = arith.index_cast %arg0 : i32 to index
    %c40 = arith.constant 40 : index
    %473 = memref.load %arg1[%472, %c40] : memref<3x345xf32, #tpu.memory_space<smem>>
    %474 = vector.broadcast %473 : f32 to vector<8x256xf32>
    %475 = arith.mulf %471, %474 : vector<8x256xf32>
    %476 = arith.addf %465, %475 : vector<8x256xf32>
    %477 = arith.index_cast %arg0 : i32 to index
    %c121 = arith.constant 121 : index
    %478 = memref.load %arg1[%477, %c121] : memref<3x345xf32, #tpu.memory_space<smem>>
    %479 = vector.broadcast %478 : f32 to vector<8x256xf32>
    %480 = arith.mulf %471, %479 : vector<8x256xf32>
    %481 = arith.addf %470, %480 : vector<8x256xf32>
    %482 = vector.extract_strided_slice %323 {offsets = [2, 0], sizes = [8, 256], strides = [1, 1]} : vector<10x256xf32> to vector<8x256xf32>
    %483 = arith.index_cast %arg0 : i32 to index
    %c49 = arith.constant 49 : index
    %484 = memref.load %arg1[%483, %c49] : memref<3x345xf32, #tpu.memory_space<smem>>
    %485 = vector.broadcast %484 : f32 to vector<8x256xf32>
    %486 = arith.mulf %482, %485 : vector<8x256xf32>
    %487 = arith.addf %476, %486 : vector<8x256xf32>
    %488 = arith.index_cast %arg0 : i32 to index
    %c130 = arith.constant 130 : index
    %489 = memref.load %arg1[%488, %c130] : memref<3x345xf32, #tpu.memory_space<smem>>
    %490 = vector.broadcast %489 : f32 to vector<8x256xf32>
    %491 = arith.mulf %482, %490 : vector<8x256xf32>
    %492 = arith.addf %481, %491 : vector<8x256xf32>
    %c255_i32_25 = arith.constant 255 : i32
    %493 = tpu.dynamic_rotate %323 by %c255_i32_25 dim 1 : vector<10x256xf32>, i32 -> vector<10x256xf32>
    %494 = vector.extract_strided_slice %493 {offsets = [0, 0], sizes = [8, 256], strides = [1, 1]} : vector<10x256xf32> to vector<8x256xf32>
    %495 = arith.index_cast %arg0 : i32 to index
    %c32 = arith.constant 32 : index
    %496 = memref.load %arg1[%495, %c32] : memref<3x345xf32, #tpu.memory_space<smem>>
    %497 = vector.broadcast %496 : f32 to vector<8x256xf32>
    %498 = arith.mulf %494, %497 : vector<8x256xf32>
    %499 = arith.addf %487, %498 : vector<8x256xf32>
    %500 = arith.index_cast %arg0 : i32 to index
    %c113 = arith.constant 113 : index
    %501 = memref.load %arg1[%500, %c113] : memref<3x345xf32, #tpu.memory_space<smem>>
    %502 = vector.broadcast %501 : f32 to vector<8x256xf32>
    %503 = arith.mulf %494, %502 : vector<8x256xf32>
    %504 = arith.addf %492, %503 : vector<8x256xf32>
    %505 = vector.extract_strided_slice %493 {offsets = [1, 0], sizes = [8, 256], strides = [1, 1]} : vector<10x256xf32> to vector<8x256xf32>
    %506 = arith.index_cast %arg0 : i32 to index
    %c41 = arith.constant 41 : index
    %507 = memref.load %arg1[%506, %c41] : memref<3x345xf32, #tpu.memory_space<smem>>
    %508 = vector.broadcast %507 : f32 to vector<8x256xf32>
    %509 = arith.mulf %505, %508 : vector<8x256xf32>
    %510 = arith.addf %499, %509 : vector<8x256xf32>
    %511 = arith.index_cast %arg0 : i32 to index
    %c122 = arith.constant 122 : index
    %512 = memref.load %arg1[%511, %c122] : memref<3x345xf32, #tpu.memory_space<smem>>
    %513 = vector.broadcast %512 : f32 to vector<8x256xf32>
    %514 = arith.mulf %505, %513 : vector<8x256xf32>
    %515 = arith.addf %504, %514 : vector<8x256xf32>
    %516 = vector.extract_strided_slice %493 {offsets = [2, 0], sizes = [8, 256], strides = [1, 1]} : vector<10x256xf32> to vector<8x256xf32>
    %517 = arith.index_cast %arg0 : i32 to index
    %c50 = arith.constant 50 : index
    %518 = memref.load %arg1[%517, %c50] : memref<3x345xf32, #tpu.memory_space<smem>>
    %519 = vector.broadcast %518 : f32 to vector<8x256xf32>
    %520 = arith.mulf %516, %519 : vector<8x256xf32>
    %521 = arith.addf %510, %520 : vector<8x256xf32>
    %522 = arith.index_cast %arg0 : i32 to index
    %c131 = arith.constant 131 : index
    %523 = memref.load %arg1[%522, %c131] : memref<3x345xf32, #tpu.memory_space<smem>>
    %524 = vector.broadcast %523 : f32 to vector<8x256xf32>
    %525 = arith.mulf %516, %524 : vector<8x256xf32>
    %526 = arith.addf %515, %525 : vector<8x256xf32>
    %c245_i32_26 = arith.constant 245 : i32
    %527 = tpu.dynamic_rotate %323 by %c245_i32_26 dim 1 : vector<10x256xf32>, i32 -> vector<10x256xf32>
    %528 = vector.extract_strided_slice %527 {offsets = [0, 0], sizes = [8, 256], strides = [1, 1]} : vector<10x256xf32> to vector<8x256xf32>
    %529 = arith.index_cast %arg0 : i32 to index
    %c33 = arith.constant 33 : index
    %530 = memref.load %arg1[%529, %c33] : memref<3x345xf32, #tpu.memory_space<smem>>
    %531 = vector.broadcast %530 : f32 to vector<8x256xf32>
    %532 = arith.mulf %528, %531 : vector<8x256xf32>
    %533 = arith.addf %521, %532 : vector<8x256xf32>
    %534 = arith.index_cast %arg0 : i32 to index
    %c114 = arith.constant 114 : index
    %535 = memref.load %arg1[%534, %c114] : memref<3x345xf32, #tpu.memory_space<smem>>
    %536 = vector.broadcast %535 : f32 to vector<8x256xf32>
    %537 = arith.mulf %528, %536 : vector<8x256xf32>
    %538 = arith.addf %526, %537 : vector<8x256xf32>
    %539 = vector.extract_strided_slice %527 {offsets = [1, 0], sizes = [8, 256], strides = [1, 1]} : vector<10x256xf32> to vector<8x256xf32>
    %540 = arith.index_cast %arg0 : i32 to index
    %c42 = arith.constant 42 : index
    %541 = memref.load %arg1[%540, %c42] : memref<3x345xf32, #tpu.memory_space<smem>>
    %542 = vector.broadcast %541 : f32 to vector<8x256xf32>
    %543 = arith.mulf %539, %542 : vector<8x256xf32>
    %544 = arith.addf %533, %543 : vector<8x256xf32>
    %545 = arith.index_cast %arg0 : i32 to index
    %c123 = arith.constant 123 : index
    %546 = memref.load %arg1[%545, %c123] : memref<3x345xf32, #tpu.memory_space<smem>>
    %547 = vector.broadcast %546 : f32 to vector<8x256xf32>
    %548 = arith.mulf %539, %547 : vector<8x256xf32>
    %549 = arith.addf %538, %548 : vector<8x256xf32>
    %550 = vector.extract_strided_slice %527 {offsets = [2, 0], sizes = [8, 256], strides = [1, 1]} : vector<10x256xf32> to vector<8x256xf32>
    %551 = arith.index_cast %arg0 : i32 to index
    %c51 = arith.constant 51 : index
    %552 = memref.load %arg1[%551, %c51] : memref<3x345xf32, #tpu.memory_space<smem>>
    %553 = vector.broadcast %552 : f32 to vector<8x256xf32>
    %554 = arith.mulf %550, %553 : vector<8x256xf32>
    %555 = arith.addf %544, %554 : vector<8x256xf32>
    %556 = arith.index_cast %arg0 : i32 to index
    %c132 = arith.constant 132 : index
    %557 = memref.load %arg1[%556, %c132] : memref<3x345xf32, #tpu.memory_space<smem>>
    %558 = vector.broadcast %557 : f32 to vector<8x256xf32>
    %559 = arith.mulf %550, %558 : vector<8x256xf32>
    %560 = arith.addf %549, %559 : vector<8x256xf32>
    %c244_i32_27 = arith.constant 244 : i32
    %561 = tpu.dynamic_rotate %323 by %c244_i32_27 dim 1 : vector<10x256xf32>, i32 -> vector<10x256xf32>
    %562 = vector.extract_strided_slice %561 {offsets = [0, 0], sizes = [8, 256], strides = [1, 1]} : vector<10x256xf32> to vector<8x256xf32>
    %563 = arith.index_cast %arg0 : i32 to index
    %c34 = arith.constant 34 : index
    %564 = memref.load %arg1[%563, %c34] : memref<3x345xf32, #tpu.memory_space<smem>>
    %565 = vector.broadcast %564 : f32 to vector<8x256xf32>
    %566 = arith.mulf %562, %565 : vector<8x256xf32>
    %567 = arith.addf %555, %566 : vector<8x256xf32>
    %568 = arith.index_cast %arg0 : i32 to index
    %c115 = arith.constant 115 : index
    %569 = memref.load %arg1[%568, %c115] : memref<3x345xf32, #tpu.memory_space<smem>>
    %570 = vector.broadcast %569 : f32 to vector<8x256xf32>
    %571 = arith.mulf %562, %570 : vector<8x256xf32>
    %572 = arith.addf %560, %571 : vector<8x256xf32>
    %573 = vector.extract_strided_slice %561 {offsets = [1, 0], sizes = [8, 256], strides = [1, 1]} : vector<10x256xf32> to vector<8x256xf32>
    %574 = arith.index_cast %arg0 : i32 to index
    %c43 = arith.constant 43 : index
    %575 = memref.load %arg1[%574, %c43] : memref<3x345xf32, #tpu.memory_space<smem>>
    %576 = vector.broadcast %575 : f32 to vector<8x256xf32>
    %577 = arith.mulf %573, %576 : vector<8x256xf32>
    %578 = arith.addf %567, %577 : vector<8x256xf32>
    %579 = arith.index_cast %arg0 : i32 to index
    %c124 = arith.constant 124 : index
    %580 = memref.load %arg1[%579, %c124] : memref<3x345xf32, #tpu.memory_space<smem>>
    %581 = vector.broadcast %580 : f32 to vector<8x256xf32>
    %582 = arith.mulf %573, %581 : vector<8x256xf32>
    %583 = arith.addf %572, %582 : vector<8x256xf32>
    %584 = vector.extract_strided_slice %561 {offsets = [2, 0], sizes = [8, 256], strides = [1, 1]} : vector<10x256xf32> to vector<8x256xf32>
    %585 = arith.index_cast %arg0 : i32 to index
    %c52 = arith.constant 52 : index
    %586 = memref.load %arg1[%585, %c52] : memref<3x345xf32, #tpu.memory_space<smem>>
    %587 = vector.broadcast %586 : f32 to vector<8x256xf32>
    %588 = arith.mulf %584, %587 : vector<8x256xf32>
    %589 = arith.addf %578, %588 : vector<8x256xf32>
    %590 = arith.index_cast %arg0 : i32 to index
    %c133 = arith.constant 133 : index
    %591 = memref.load %arg1[%590, %c133] : memref<3x345xf32, #tpu.memory_space<smem>>
    %592 = vector.broadcast %591 : f32 to vector<8x256xf32>
    %593 = arith.mulf %584, %592 : vector<8x256xf32>
    %594 = arith.addf %583, %593 : vector<8x256xf32>
    %c243_i32_28 = arith.constant 243 : i32
    %595 = tpu.dynamic_rotate %323 by %c243_i32_28 dim 1 : vector<10x256xf32>, i32 -> vector<10x256xf32>
    %596 = vector.extract_strided_slice %595 {offsets = [0, 0], sizes = [8, 256], strides = [1, 1]} : vector<10x256xf32> to vector<8x256xf32>
    %597 = arith.index_cast %arg0 : i32 to index
    %c35 = arith.constant 35 : index
    %598 = memref.load %arg1[%597, %c35] : memref<3x345xf32, #tpu.memory_space<smem>>
    %599 = vector.broadcast %598 : f32 to vector<8x256xf32>
    %600 = arith.mulf %596, %599 : vector<8x256xf32>
    %601 = arith.addf %589, %600 : vector<8x256xf32>
    %602 = arith.index_cast %arg0 : i32 to index
    %c116 = arith.constant 116 : index
    %603 = memref.load %arg1[%602, %c116] : memref<3x345xf32, #tpu.memory_space<smem>>
    %604 = vector.broadcast %603 : f32 to vector<8x256xf32>
    %605 = arith.mulf %596, %604 : vector<8x256xf32>
    %606 = arith.addf %594, %605 : vector<8x256xf32>
    %607 = vector.extract_strided_slice %595 {offsets = [1, 0], sizes = [8, 256], strides = [1, 1]} : vector<10x256xf32> to vector<8x256xf32>
    %608 = arith.index_cast %arg0 : i32 to index
    %c44 = arith.constant 44 : index
    %609 = memref.load %arg1[%608, %c44] : memref<3x345xf32, #tpu.memory_space<smem>>
    %610 = vector.broadcast %609 : f32 to vector<8x256xf32>
    %611 = arith.mulf %607, %610 : vector<8x256xf32>
    %612 = arith.addf %601, %611 : vector<8x256xf32>
    %613 = arith.index_cast %arg0 : i32 to index
    %c125 = arith.constant 125 : index
    %614 = memref.load %arg1[%613, %c125] : memref<3x345xf32, #tpu.memory_space<smem>>
    %615 = vector.broadcast %614 : f32 to vector<8x256xf32>
    %616 = arith.mulf %607, %615 : vector<8x256xf32>
    %617 = arith.addf %606, %616 : vector<8x256xf32>
    %618 = vector.extract_strided_slice %595 {offsets = [2, 0], sizes = [8, 256], strides = [1, 1]} : vector<10x256xf32> to vector<8x256xf32>
    %619 = arith.index_cast %arg0 : i32 to index
    %c53 = arith.constant 53 : index
    %620 = memref.load %arg1[%619, %c53] : memref<3x345xf32, #tpu.memory_space<smem>>
    %621 = vector.broadcast %620 : f32 to vector<8x256xf32>
    %622 = arith.mulf %618, %621 : vector<8x256xf32>
    %623 = arith.addf %612, %622 : vector<8x256xf32>
    %624 = arith.index_cast %arg0 : i32 to index
    %c134 = arith.constant 134 : index
    %625 = memref.load %arg1[%624, %c134] : memref<3x345xf32, #tpu.memory_space<smem>>
    %626 = vector.broadcast %625 : f32 to vector<8x256xf32>
    %627 = arith.mulf %618, %626 : vector<8x256xf32>
    %628 = arith.addf %617, %627 : vector<8x256xf32>
    %c2_29 = arith.constant 2 : index
    %c7_30 = arith.constant 7 : index
    %c0_31 = arith.constant 0 : index
    %629 = vector.load %arg2[%c2_29, %c7_30, %c0_31] : memref<3x24x256xf32, #tpu.memory_space<vmem>>, vector<1x10x256xf32>
    %630 = vector.shape_cast %629 : vector<1x10x256xf32> to vector<10x256xf32>
    %c13_i32_32 = arith.constant 13 : i32
    %631 = tpu.dynamic_rotate %630 by %c13_i32_32 dim 1 : vector<10x256xf32>, i32 -> vector<10x256xf32>
    %632 = vector.extract_strided_slice %631 {offsets = [0, 0], sizes = [8, 256], strides = [1, 1]} : vector<10x256xf32> to vector<8x256xf32>
    %633 = arith.index_cast %arg0 : i32 to index
    %c54 = arith.constant 54 : index
    %634 = memref.load %arg1[%633, %c54] : memref<3x345xf32, #tpu.memory_space<smem>>
    %635 = vector.broadcast %634 : f32 to vector<8x256xf32>
    %636 = arith.mulf %632, %635 : vector<8x256xf32>
    %637 = arith.addf %623, %636 : vector<8x256xf32>
    %638 = arith.index_cast %arg0 : i32 to index
    %c135 = arith.constant 135 : index
    %639 = memref.load %arg1[%638, %c135] : memref<3x345xf32, #tpu.memory_space<smem>>
    %640 = vector.broadcast %639 : f32 to vector<8x256xf32>
    %641 = arith.mulf %632, %640 : vector<8x256xf32>
    %642 = arith.addf %628, %641 : vector<8x256xf32>
    %643 = vector.extract_strided_slice %631 {offsets = [1, 0], sizes = [8, 256], strides = [1, 1]} : vector<10x256xf32> to vector<8x256xf32>
    %644 = arith.index_cast %arg0 : i32 to index
    %c63 = arith.constant 63 : index
    %645 = memref.load %arg1[%644, %c63] : memref<3x345xf32, #tpu.memory_space<smem>>
    %646 = vector.broadcast %645 : f32 to vector<8x256xf32>
    %647 = arith.mulf %643, %646 : vector<8x256xf32>
    %648 = arith.addf %637, %647 : vector<8x256xf32>
    %649 = arith.index_cast %arg0 : i32 to index
    %c144 = arith.constant 144 : index
    %650 = memref.load %arg1[%649, %c144] : memref<3x345xf32, #tpu.memory_space<smem>>
    %651 = vector.broadcast %650 : f32 to vector<8x256xf32>
    %652 = arith.mulf %643, %651 : vector<8x256xf32>
    %653 = arith.addf %642, %652 : vector<8x256xf32>
    %654 = vector.extract_strided_slice %631 {offsets = [2, 0], sizes = [8, 256], strides = [1, 1]} : vector<10x256xf32> to vector<8x256xf32>
    %655 = arith.index_cast %arg0 : i32 to index
    %c72 = arith.constant 72 : index
    %656 = memref.load %arg1[%655, %c72] : memref<3x345xf32, #tpu.memory_space<smem>>
    %657 = vector.broadcast %656 : f32 to vector<8x256xf32>
    %658 = arith.mulf %654, %657 : vector<8x256xf32>
    %659 = arith.addf %648, %658 : vector<8x256xf32>
    %660 = arith.index_cast %arg0 : i32 to index
    %c153 = arith.constant 153 : index
    %661 = memref.load %arg1[%660, %c153] : memref<3x345xf32, #tpu.memory_space<smem>>
    %662 = vector.broadcast %661 : f32 to vector<8x256xf32>
    %663 = arith.mulf %654, %662 : vector<8x256xf32>
    %664 = arith.addf %653, %663 : vector<8x256xf32>
    %c12_i32_33 = arith.constant 12 : i32
    %665 = tpu.dynamic_rotate %630 by %c12_i32_33 dim 1 : vector<10x256xf32>, i32 -> vector<10x256xf32>
    %666 = vector.extract_strided_slice %665 {offsets = [0, 0], sizes = [8, 256], strides = [1, 1]} : vector<10x256xf32> to vector<8x256xf32>
    %667 = arith.index_cast %arg0 : i32 to index
    %c55 = arith.constant 55 : index
    %668 = memref.load %arg1[%667, %c55] : memref<3x345xf32, #tpu.memory_space<smem>>
    %669 = vector.broadcast %668 : f32 to vector<8x256xf32>
    %670 = arith.mulf %666, %669 : vector<8x256xf32>
    %671 = arith.addf %659, %670 : vector<8x256xf32>
    %672 = arith.index_cast %arg0 : i32 to index
    %c136 = arith.constant 136 : index
    %673 = memref.load %arg1[%672, %c136] : memref<3x345xf32, #tpu.memory_space<smem>>
    %674 = vector.broadcast %673 : f32 to vector<8x256xf32>
    %675 = arith.mulf %666, %674 : vector<8x256xf32>
    %676 = arith.addf %664, %675 : vector<8x256xf32>
    %677 = vector.extract_strided_slice %665 {offsets = [1, 0], sizes = [8, 256], strides = [1, 1]} : vector<10x256xf32> to vector<8x256xf32>
    %678 = arith.index_cast %arg0 : i32 to index
    %c64 = arith.constant 64 : index
    %679 = memref.load %arg1[%678, %c64] : memref<3x345xf32, #tpu.memory_space<smem>>
    %680 = vector.broadcast %679 : f32 to vector<8x256xf32>
    %681 = arith.mulf %677, %680 : vector<8x256xf32>
    %682 = arith.addf %671, %681 : vector<8x256xf32>
    %683 = arith.index_cast %arg0 : i32 to index
    %c145 = arith.constant 145 : index
    %684 = memref.load %arg1[%683, %c145] : memref<3x345xf32, #tpu.memory_space<smem>>
    %685 = vector.broadcast %684 : f32 to vector<8x256xf32>
    %686 = arith.mulf %677, %685 : vector<8x256xf32>
    %687 = arith.addf %676, %686 : vector<8x256xf32>
    %688 = vector.extract_strided_slice %665 {offsets = [2, 0], sizes = [8, 256], strides = [1, 1]} : vector<10x256xf32> to vector<8x256xf32>
    %689 = arith.index_cast %arg0 : i32 to index
    %c73 = arith.constant 73 : index
    %690 = memref.load %arg1[%689, %c73] : memref<3x345xf32, #tpu.memory_space<smem>>
    %691 = vector.broadcast %690 : f32 to vector<8x256xf32>
    %692 = arith.mulf %688, %691 : vector<8x256xf32>
    %693 = arith.addf %682, %692 : vector<8x256xf32>
    %694 = arith.index_cast %arg0 : i32 to index
    %c154 = arith.constant 154 : index
    %695 = memref.load %arg1[%694, %c154] : memref<3x345xf32, #tpu.memory_space<smem>>
    %696 = vector.broadcast %695 : f32 to vector<8x256xf32>
    %697 = arith.mulf %688, %696 : vector<8x256xf32>
    %698 = arith.addf %687, %697 : vector<8x256xf32>
    %c11_i32_34 = arith.constant 11 : i32
    %699 = tpu.dynamic_rotate %630 by %c11_i32_34 dim 1 : vector<10x256xf32>, i32 -> vector<10x256xf32>
    %700 = vector.extract_strided_slice %699 {offsets = [0, 0], sizes = [8, 256], strides = [1, 1]} : vector<10x256xf32> to vector<8x256xf32>
    %701 = arith.index_cast %arg0 : i32 to index
    %c56 = arith.constant 56 : index
    %702 = memref.load %arg1[%701, %c56] : memref<3x345xf32, #tpu.memory_space<smem>>
    %703 = vector.broadcast %702 : f32 to vector<8x256xf32>
    %704 = arith.mulf %700, %703 : vector<8x256xf32>
    %705 = arith.addf %693, %704 : vector<8x256xf32>
    %706 = arith.index_cast %arg0 : i32 to index
    %c137 = arith.constant 137 : index
    %707 = memref.load %arg1[%706, %c137] : memref<3x345xf32, #tpu.memory_space<smem>>
    %708 = vector.broadcast %707 : f32 to vector<8x256xf32>
    %709 = arith.mulf %700, %708 : vector<8x256xf32>
    %710 = arith.addf %698, %709 : vector<8x256xf32>
    %711 = vector.extract_strided_slice %699 {offsets = [1, 0], sizes = [8, 256], strides = [1, 1]} : vector<10x256xf32> to vector<8x256xf32>
    %712 = arith.index_cast %arg0 : i32 to index
    %c65 = arith.constant 65 : index
    %713 = memref.load %arg1[%712, %c65] : memref<3x345xf32, #tpu.memory_space<smem>>
    %714 = vector.broadcast %713 : f32 to vector<8x256xf32>
    %715 = arith.mulf %711, %714 : vector<8x256xf32>
    %716 = arith.addf %705, %715 : vector<8x256xf32>
    %717 = arith.index_cast %arg0 : i32 to index
    %c146 = arith.constant 146 : index
    %718 = memref.load %arg1[%717, %c146] : memref<3x345xf32, #tpu.memory_space<smem>>
    %719 = vector.broadcast %718 : f32 to vector<8x256xf32>
    %720 = arith.mulf %711, %719 : vector<8x256xf32>
    %721 = arith.addf %710, %720 : vector<8x256xf32>
    %722 = vector.extract_strided_slice %699 {offsets = [2, 0], sizes = [8, 256], strides = [1, 1]} : vector<10x256xf32> to vector<8x256xf32>
    %723 = arith.index_cast %arg0 : i32 to index
    %c74 = arith.constant 74 : index
    %724 = memref.load %arg1[%723, %c74] : memref<3x345xf32, #tpu.memory_space<smem>>
    %725 = vector.broadcast %724 : f32 to vector<8x256xf32>
    %726 = arith.mulf %722, %725 : vector<8x256xf32>
    %727 = arith.addf %716, %726 : vector<8x256xf32>
    %728 = arith.index_cast %arg0 : i32 to index
    %c155 = arith.constant 155 : index
    %729 = memref.load %arg1[%728, %c155] : memref<3x345xf32, #tpu.memory_space<smem>>
    %730 = vector.broadcast %729 : f32 to vector<8x256xf32>
    %731 = arith.mulf %722, %730 : vector<8x256xf32>
    %732 = arith.addf %721, %731 : vector<8x256xf32>
    %c1_i32_35 = arith.constant 1 : i32
    %733 = tpu.dynamic_rotate %630 by %c1_i32_35 dim 1 : vector<10x256xf32>, i32 -> vector<10x256xf32>
    %734 = vector.extract_strided_slice %733 {offsets = [0, 0], sizes = [8, 256], strides = [1, 1]} : vector<10x256xf32> to vector<8x256xf32>
    %735 = arith.index_cast %arg0 : i32 to index
    %c57 = arith.constant 57 : index
    %736 = memref.load %arg1[%735, %c57] : memref<3x345xf32, #tpu.memory_space<smem>>
    %737 = vector.broadcast %736 : f32 to vector<8x256xf32>
    %738 = arith.mulf %734, %737 : vector<8x256xf32>
    %739 = arith.addf %727, %738 : vector<8x256xf32>
    %740 = arith.index_cast %arg0 : i32 to index
    %c138 = arith.constant 138 : index
    %741 = memref.load %arg1[%740, %c138] : memref<3x345xf32, #tpu.memory_space<smem>>
    %742 = vector.broadcast %741 : f32 to vector<8x256xf32>
    %743 = arith.mulf %734, %742 : vector<8x256xf32>
    %744 = arith.addf %732, %743 : vector<8x256xf32>
    %745 = vector.extract_strided_slice %733 {offsets = [1, 0], sizes = [8, 256], strides = [1, 1]} : vector<10x256xf32> to vector<8x256xf32>
    %746 = arith.index_cast %arg0 : i32 to index
    %c66 = arith.constant 66 : index
    %747 = memref.load %arg1[%746, %c66] : memref<3x345xf32, #tpu.memory_space<smem>>
    %748 = vector.broadcast %747 : f32 to vector<8x256xf32>
    %749 = arith.mulf %745, %748 : vector<8x256xf32>
    %750 = arith.addf %739, %749 : vector<8x256xf32>
    %751 = arith.index_cast %arg0 : i32 to index
    %c147 = arith.constant 147 : index
    %752 = memref.load %arg1[%751, %c147] : memref<3x345xf32, #tpu.memory_space<smem>>
    %753 = vector.broadcast %752 : f32 to vector<8x256xf32>
    %754 = arith.mulf %745, %753 : vector<8x256xf32>
    %755 = arith.addf %744, %754 : vector<8x256xf32>
    %756 = vector.extract_strided_slice %733 {offsets = [2, 0], sizes = [8, 256], strides = [1, 1]} : vector<10x256xf32> to vector<8x256xf32>
    %757 = arith.index_cast %arg0 : i32 to index
    %c75 = arith.constant 75 : index
    %758 = memref.load %arg1[%757, %c75] : memref<3x345xf32, #tpu.memory_space<smem>>
    %759 = vector.broadcast %758 : f32 to vector<8x256xf32>
    %760 = arith.mulf %756, %759 : vector<8x256xf32>
    %761 = arith.addf %750, %760 : vector<8x256xf32>
    %762 = arith.index_cast %arg0 : i32 to index
    %c156 = arith.constant 156 : index
    %763 = memref.load %arg1[%762, %c156] : memref<3x345xf32, #tpu.memory_space<smem>>
    %764 = vector.broadcast %763 : f32 to vector<8x256xf32>
    %765 = arith.mulf %756, %764 : vector<8x256xf32>
    %766 = arith.addf %755, %765 : vector<8x256xf32>
    %767 = vector.extract_strided_slice %630 {offsets = [0, 0], sizes = [8, 256], strides = [1, 1]} : vector<10x256xf32> to vector<8x256xf32>
    %768 = arith.index_cast %arg0 : i32 to index
    %c58 = arith.constant 58 : index
    %769 = memref.load %arg1[%768, %c58] : memref<3x345xf32, #tpu.memory_space<smem>>
    %770 = vector.broadcast %769 : f32 to vector<8x256xf32>
    %771 = arith.mulf %767, %770 : vector<8x256xf32>
    %772 = arith.addf %761, %771 : vector<8x256xf32>
    %773 = arith.index_cast %arg0 : i32 to index
    %c139 = arith.constant 139 : index
    %774 = memref.load %arg1[%773, %c139] : memref<3x345xf32, #tpu.memory_space<smem>>
    %775 = vector.broadcast %774 : f32 to vector<8x256xf32>
    %776 = arith.mulf %767, %775 : vector<8x256xf32>
    %777 = arith.addf %766, %776 : vector<8x256xf32>
    %778 = vector.extract_strided_slice %630 {offsets = [1, 0], sizes = [8, 256], strides = [1, 1]} : vector<10x256xf32> to vector<8x256xf32>
    %779 = arith.index_cast %arg0 : i32 to index
    %c67 = arith.constant 67 : index
    %780 = memref.load %arg1[%779, %c67] : memref<3x345xf32, #tpu.memory_space<smem>>
    %781 = vector.broadcast %780 : f32 to vector<8x256xf32>
    %782 = arith.mulf %778, %781 : vector<8x256xf32>
    %783 = arith.addf %772, %782 : vector<8x256xf32>
    %784 = arith.index_cast %arg0 : i32 to index
    %c148 = arith.constant 148 : index
    %785 = memref.load %arg1[%784, %c148] : memref<3x345xf32, #tpu.memory_space<smem>>
    %786 = vector.broadcast %785 : f32 to vector<8x256xf32>
    %787 = arith.mulf %778, %786 : vector<8x256xf32>
    %788 = arith.addf %777, %787 : vector<8x256xf32>
    %789 = vector.extract_strided_slice %630 {offsets = [2, 0], sizes = [8, 256], strides = [1, 1]} : vector<10x256xf32> to vector<8x256xf32>
    %790 = arith.index_cast %arg0 : i32 to index
    %c76 = arith.constant 76 : index
    %791 = memref.load %arg1[%790, %c76] : memref<3x345xf32, #tpu.memory_space<smem>>
    %792 = vector.broadcast %791 : f32 to vector<8x256xf32>
    %793 = arith.mulf %789, %792 : vector<8x256xf32>
    %794 = arith.addf %783, %793 : vector<8x256xf32>
    %795 = arith.index_cast %arg0 : i32 to index
    %c157 = arith.constant 157 : index
    %796 = memref.load %arg1[%795, %c157] : memref<3x345xf32, #tpu.memory_space<smem>>
    %797 = vector.broadcast %796 : f32 to vector<8x256xf32>
    %798 = arith.mulf %789, %797 : vector<8x256xf32>
    %799 = arith.addf %788, %798 : vector<8x256xf32>
    %c255_i32_36 = arith.constant 255 : i32
    %800 = tpu.dynamic_rotate %630 by %c255_i32_36 dim 1 : vector<10x256xf32>, i32 -> vector<10x256xf32>
    %801 = vector.extract_strided_slice %800 {offsets = [0, 0], sizes = [8, 256], strides = [1, 1]} : vector<10x256xf32> to vector<8x256xf32>
    %802 = arith.index_cast %arg0 : i32 to index
    %c59 = arith.constant 59 : index
    %803 = memref.load %arg1[%802, %c59] : memref<3x345xf32, #tpu.memory_space<smem>>
    %804 = vector.broadcast %803 : f32 to vector<8x256xf32>
    %805 = arith.mulf %801, %804 : vector<8x256xf32>
    %806 = arith.addf %794, %805 : vector<8x256xf32>
    %807 = arith.index_cast %arg0 : i32 to index
    %c140 = arith.constant 140 : index
    %808 = memref.load %arg1[%807, %c140] : memref<3x345xf32, #tpu.memory_space<smem>>
    %809 = vector.broadcast %808 : f32 to vector<8x256xf32>
    %810 = arith.mulf %801, %809 : vector<8x256xf32>
    %811 = arith.addf %799, %810 : vector<8x256xf32>
    %812 = vector.extract_strided_slice %800 {offsets = [1, 0], sizes = [8, 256], strides = [1, 1]} : vector<10x256xf32> to vector<8x256xf32>
    %813 = arith.index_cast %arg0 : i32 to index
    %c68 = arith.constant 68 : index
    %814 = memref.load %arg1[%813, %c68] : memref<3x345xf32, #tpu.memory_space<smem>>
    %815 = vector.broadcast %814 : f32 to vector<8x256xf32>
    %816 = arith.mulf %812, %815 : vector<8x256xf32>
    %817 = arith.addf %806, %816 : vector<8x256xf32>
    %818 = arith.index_cast %arg0 : i32 to index
    %c149 = arith.constant 149 : index
    %819 = memref.load %arg1[%818, %c149] : memref<3x345xf32, #tpu.memory_space<smem>>
    %820 = vector.broadcast %819 : f32 to vector<8x256xf32>
    %821 = arith.mulf %812, %820 : vector<8x256xf32>
    %822 = arith.addf %811, %821 : vector<8x256xf32>
    %823 = vector.extract_strided_slice %800 {offsets = [2, 0], sizes = [8, 256], strides = [1, 1]} : vector<10x256xf32> to vector<8x256xf32>
    %824 = arith.index_cast %arg0 : i32 to index
    %c77 = arith.constant 77 : index
    %825 = memref.load %arg1[%824, %c77] : memref<3x345xf32, #tpu.memory_space<smem>>
    %826 = vector.broadcast %825 : f32 to vector<8x256xf32>
    %827 = arith.mulf %823, %826 : vector<8x256xf32>
    %828 = arith.addf %817, %827 : vector<8x256xf32>
    %829 = arith.index_cast %arg0 : i32 to index
    %c158 = arith.constant 158 : index
    %830 = memref.load %arg1[%829, %c158] : memref<3x345xf32, #tpu.memory_space<smem>>
    %831 = vector.broadcast %830 : f32 to vector<8x256xf32>
    %832 = arith.mulf %823, %831 : vector<8x256xf32>
    %833 = arith.addf %822, %832 : vector<8x256xf32>
    %c245_i32_37 = arith.constant 245 : i32
    %834 = tpu.dynamic_rotate %630 by %c245_i32_37 dim 1 : vector<10x256xf32>, i32 -> vector<10x256xf32>
    %835 = vector.extract_strided_slice %834 {offsets = [0, 0], sizes = [8, 256], strides = [1, 1]} : vector<10x256xf32> to vector<8x256xf32>
    %836 = arith.index_cast %arg0 : i32 to index
    %c60 = arith.constant 60 : index
    %837 = memref.load %arg1[%836, %c60] : memref<3x345xf32, #tpu.memory_space<smem>>
    %838 = vector.broadcast %837 : f32 to vector<8x256xf32>
    %839 = arith.mulf %835, %838 : vector<8x256xf32>
    %840 = arith.addf %828, %839 : vector<8x256xf32>
    %841 = arith.index_cast %arg0 : i32 to index
    %c141 = arith.constant 141 : index
    %842 = memref.load %arg1[%841, %c141] : memref<3x345xf32, #tpu.memory_space<smem>>
    %843 = vector.broadcast %842 : f32 to vector<8x256xf32>
    %844 = arith.mulf %835, %843 : vector<8x256xf32>
    %845 = arith.addf %833, %844 : vector<8x256xf32>
    %846 = vector.extract_strided_slice %834 {offsets = [1, 0], sizes = [8, 256], strides = [1, 1]} : vector<10x256xf32> to vector<8x256xf32>
    %847 = arith.index_cast %arg0 : i32 to index
    %c69 = arith.constant 69 : index
    %848 = memref.load %arg1[%847, %c69] : memref<3x345xf32, #tpu.memory_space<smem>>
    %849 = vector.broadcast %848 : f32 to vector<8x256xf32>
    %850 = arith.mulf %846, %849 : vector<8x256xf32>
    %851 = arith.addf %840, %850 : vector<8x256xf32>
    %852 = arith.index_cast %arg0 : i32 to index
    %c150 = arith.constant 150 : index
    %853 = memref.load %arg1[%852, %c150] : memref<3x345xf32, #tpu.memory_space<smem>>
    %854 = vector.broadcast %853 : f32 to vector<8x256xf32>
    %855 = arith.mulf %846, %854 : vector<8x256xf32>
    %856 = arith.addf %845, %855 : vector<8x256xf32>
    %857 = vector.extract_strided_slice %834 {offsets = [2, 0], sizes = [8, 256], strides = [1, 1]} : vector<10x256xf32> to vector<8x256xf32>
    %858 = arith.index_cast %arg0 : i32 to index
    %c78 = arith.constant 78 : index
    %859 = memref.load %arg1[%858, %c78] : memref<3x345xf32, #tpu.memory_space<smem>>
    %860 = vector.broadcast %859 : f32 to vector<8x256xf32>
    %861 = arith.mulf %857, %860 : vector<8x256xf32>
    %862 = arith.addf %851, %861 : vector<8x256xf32>
    %863 = arith.index_cast %arg0 : i32 to index
    %c159 = arith.constant 159 : index
    %864 = memref.load %arg1[%863, %c159] : memref<3x345xf32, #tpu.memory_space<smem>>
    %865 = vector.broadcast %864 : f32 to vector<8x256xf32>
    %866 = arith.mulf %857, %865 : vector<8x256xf32>
    %867 = arith.addf %856, %866 : vector<8x256xf32>
    %c244_i32_38 = arith.constant 244 : i32
    %868 = tpu.dynamic_rotate %630 by %c244_i32_38 dim 1 : vector<10x256xf32>, i32 -> vector<10x256xf32>
    %869 = vector.extract_strided_slice %868 {offsets = [0, 0], sizes = [8, 256], strides = [1, 1]} : vector<10x256xf32> to vector<8x256xf32>
    %870 = arith.index_cast %arg0 : i32 to index
    %c61 = arith.constant 61 : index
    %871 = memref.load %arg1[%870, %c61] : memref<3x345xf32, #tpu.memory_space<smem>>
    %872 = vector.broadcast %871 : f32 to vector<8x256xf32>
    %873 = arith.mulf %869, %872 : vector<8x256xf32>
    %874 = arith.addf %862, %873 : vector<8x256xf32>
    %875 = arith.index_cast %arg0 : i32 to index
    %c142 = arith.constant 142 : index
    %876 = memref.load %arg1[%875, %c142] : memref<3x345xf32, #tpu.memory_space<smem>>
    %877 = vector.broadcast %876 : f32 to vector<8x256xf32>
    %878 = arith.mulf %869, %877 : vector<8x256xf32>
    %879 = arith.addf %867, %878 : vector<8x256xf32>
    %880 = vector.extract_strided_slice %868 {offsets = [1, 0], sizes = [8, 256], strides = [1, 1]} : vector<10x256xf32> to vector<8x256xf32>
    %881 = arith.index_cast %arg0 : i32 to index
    %c70 = arith.constant 70 : index
    %882 = memref.load %arg1[%881, %c70] : memref<3x345xf32, #tpu.memory_space<smem>>
    %883 = vector.broadcast %882 : f32 to vector<8x256xf32>
    %884 = arith.mulf %880, %883 : vector<8x256xf32>
    %885 = arith.addf %874, %884 : vector<8x256xf32>
    %886 = arith.index_cast %arg0 : i32 to index
    %c151 = arith.constant 151 : index
    %887 = memref.load %arg1[%886, %c151] : memref<3x345xf32, #tpu.memory_space<smem>>
    %888 = vector.broadcast %887 : f32 to vector<8x256xf32>
    %889 = arith.mulf %880, %888 : vector<8x256xf32>
    %890 = arith.addf %879, %889 : vector<8x256xf32>
    %891 = vector.extract_strided_slice %868 {offsets = [2, 0], sizes = [8, 256], strides = [1, 1]} : vector<10x256xf32> to vector<8x256xf32>
    %892 = arith.index_cast %arg0 : i32 to index
    %c79 = arith.constant 79 : index
    %893 = memref.load %arg1[%892, %c79] : memref<3x345xf32, #tpu.memory_space<smem>>
    %894 = vector.broadcast %893 : f32 to vector<8x256xf32>
    %895 = arith.mulf %891, %894 : vector<8x256xf32>
    %896 = arith.addf %885, %895 : vector<8x256xf32>
    %897 = arith.index_cast %arg0 : i32 to index
    %c160 = arith.constant 160 : index
    %898 = memref.load %arg1[%897, %c160] : memref<3x345xf32, #tpu.memory_space<smem>>
    %899 = vector.broadcast %898 : f32 to vector<8x256xf32>
    %900 = arith.mulf %891, %899 : vector<8x256xf32>
    %901 = arith.addf %890, %900 : vector<8x256xf32>
    %c243_i32_39 = arith.constant 243 : i32
    %902 = tpu.dynamic_rotate %630 by %c243_i32_39 dim 1 : vector<10x256xf32>, i32 -> vector<10x256xf32>
    %903 = vector.extract_strided_slice %902 {offsets = [0, 0], sizes = [8, 256], strides = [1, 1]} : vector<10x256xf32> to vector<8x256xf32>
    %904 = arith.index_cast %arg0 : i32 to index
    %c62 = arith.constant 62 : index
    %905 = memref.load %arg1[%904, %c62] : memref<3x345xf32, #tpu.memory_space<smem>>
    %906 = vector.broadcast %905 : f32 to vector<8x256xf32>
    %907 = arith.mulf %903, %906 : vector<8x256xf32>
    %908 = arith.addf %896, %907 : vector<8x256xf32>
    %909 = arith.index_cast %arg0 : i32 to index
    %c143 = arith.constant 143 : index
    %910 = memref.load %arg1[%909, %c143] : memref<3x345xf32, #tpu.memory_space<smem>>
    %911 = vector.broadcast %910 : f32 to vector<8x256xf32>
    %912 = arith.mulf %903, %911 : vector<8x256xf32>
    %913 = arith.addf %901, %912 : vector<8x256xf32>
    %914 = vector.extract_strided_slice %902 {offsets = [1, 0], sizes = [8, 256], strides = [1, 1]} : vector<10x256xf32> to vector<8x256xf32>
    %915 = arith.index_cast %arg0 : i32 to index
    %c71 = arith.constant 71 : index
    %916 = memref.load %arg1[%915, %c71] : memref<3x345xf32, #tpu.memory_space<smem>>
    %917 = vector.broadcast %916 : f32 to vector<8x256xf32>
    %918 = arith.mulf %914, %917 : vector<8x256xf32>
    %919 = arith.addf %908, %918 : vector<8x256xf32>
    %920 = arith.index_cast %arg0 : i32 to index
    %c152 = arith.constant 152 : index
    %921 = memref.load %arg1[%920, %c152] : memref<3x345xf32, #tpu.memory_space<smem>>
    %922 = vector.broadcast %921 : f32 to vector<8x256xf32>
    %923 = arith.mulf %914, %922 : vector<8x256xf32>
    %924 = arith.addf %913, %923 : vector<8x256xf32>
    %925 = vector.extract_strided_slice %902 {offsets = [2, 0], sizes = [8, 256], strides = [1, 1]} : vector<10x256xf32> to vector<8x256xf32>
    %926 = arith.index_cast %arg0 : i32 to index
    %c80 = arith.constant 80 : index
    %927 = memref.load %arg1[%926, %c80] : memref<3x345xf32, #tpu.memory_space<smem>>
    %928 = vector.broadcast %927 : f32 to vector<8x256xf32>
    %929 = arith.mulf %925, %928 : vector<8x256xf32>
    %930 = arith.addf %919, %929 : vector<8x256xf32>
    %931 = arith.index_cast %arg0 : i32 to index
    %c161 = arith.constant 161 : index
    %932 = memref.load %arg1[%931, %c161] : memref<3x345xf32, #tpu.memory_space<smem>>
    %933 = vector.broadcast %932 : f32 to vector<8x256xf32>
    %934 = arith.mulf %925, %933 : vector<8x256xf32>
    %935 = arith.addf %924, %934 : vector<8x256xf32>
    %cst_40 = arith.constant 0.000000e+00 : f32
    %936 = vector.broadcast %cst_40 : f32 to vector<8x256xf32>
    %937 = arith.maximumf %930, %936 : vector<8x256xf32>
    %cst_41 = arith.constant 0.000000e+00 : f32
    %938 = vector.broadcast %cst_41 : f32 to vector<8x256xf32>
    %939 = arith.maximumf %935, %938 : vector<8x256xf32>
    %940 = arith.mulf %937, %2 : vector<8x256xf32>
    %c0_42 = arith.constant 0 : index
    %c8_43 = arith.constant 8 : index
    %c0_44 = arith.constant 0 : index
    %941 = vector.load %arg5[%c0_42, %c8_43, %c0_44] : memref<2x24x256xf32, #tpu.memory_space<vmem>>, vector<1x8x256xf32>
    %942 = vector.shape_cast %941 : vector<1x8x256xf32> to vector<8x256xf32>
    %943 = vector.shape_cast %940 : vector<8x256xf32> to vector<1x8x256xf32>
    tpu.vector_store %arg5[%c0_42, %c8_43, %c0_44], %943 {strides = array<i32>} : memref<2x24x256xf32, #tpu.memory_space<vmem>>, vector<1x8x256xf32>,
    %944 = arith.mulf %939, %2 : vector<8x256xf32>
    %c1_45 = arith.constant 1 : index
    %c8_46 = arith.constant 8 : index
    %c0_47 = arith.constant 0 : index
    %945 = vector.load %arg5[%c1_45, %c8_46, %c0_47] : memref<2x24x256xf32, #tpu.memory_space<vmem>>, vector<1x8x256xf32>
    %946 = vector.shape_cast %945 : vector<1x8x256xf32> to vector<8x256xf32>
    %947 = vector.shape_cast %944 : vector<8x256xf32> to vector<1x8x256xf32>
    tpu.vector_store %arg5[%c1_45, %c8_46, %c0_47], %947 {strides = array<i32>} : memref<2x24x256xf32, #tpu.memory_space<vmem>>, vector<1x8x256xf32>,
    %948 = arith.index_cast %arg0 : i32 to index
    %c218 = arith.constant 218 : index
    %949 = memref.load %arg1[%948, %c218] : memref<3x345xf32, #tpu.memory_space<smem>>
    %950 = vector.broadcast %949 : f32 to vector<8x256xf32>
    %c0_48 = arith.constant 0 : index
    %c7_49 = arith.constant 7 : index
    %c0_50 = arith.constant 0 : index
    %951 = vector.load %arg5[%c0_48, %c7_49, %c0_50] : memref<2x24x256xf32, #tpu.memory_space<vmem>>, vector<1x10x256xf32>
    %952 = vector.shape_cast %951 : vector<1x10x256xf32> to vector<10x256xf32>
    %c13_i32_51 = arith.constant 13 : i32
    %953 = tpu.dynamic_rotate %952 by %c13_i32_51 dim 1 : vector<10x256xf32>, i32 -> vector<10x256xf32>
    %954 = vector.extract_strided_slice %953 {offsets = [0, 0], sizes = [8, 256], strides = [1, 1]} : vector<10x256xf32> to vector<8x256xf32>
    %955 = arith.index_cast %arg0 : i32 to index
    %c164 = arith.constant 164 : index
    %956 = memref.load %arg1[%955, %c164] : memref<3x345xf32, #tpu.memory_space<smem>>
    %957 = vector.broadcast %956 : f32 to vector<8x256xf32>
    %958 = arith.mulf %954, %957 : vector<8x256xf32>
    %959 = arith.addf %950, %958 : vector<8x256xf32>
    %960 = vector.extract_strided_slice %953 {offsets = [1, 0], sizes = [8, 256], strides = [1, 1]} : vector<10x256xf32> to vector<8x256xf32>
    %961 = arith.index_cast %arg0 : i32 to index
    %c173 = arith.constant 173 : index
    %962 = memref.load %arg1[%961, %c173] : memref<3x345xf32, #tpu.memory_space<smem>>
    %963 = vector.broadcast %962 : f32 to vector<8x256xf32>
    %964 = arith.mulf %960, %963 : vector<8x256xf32>
    %965 = arith.addf %959, %964 : vector<8x256xf32>
    %966 = vector.extract_strided_slice %953 {offsets = [2, 0], sizes = [8, 256], strides = [1, 1]} : vector<10x256xf32> to vector<8x256xf32>
    %967 = arith.index_cast %arg0 : i32 to index
    %c182 = arith.constant 182 : index
    %968 = memref.load %arg1[%967, %c182] : memref<3x345xf32, #tpu.memory_space<smem>>
    %969 = vector.broadcast %968 : f32 to vector<8x256xf32>
    %970 = arith.mulf %966, %969 : vector<8x256xf32>
    %971 = arith.addf %965, %970 : vector<8x256xf32>
    %c12_i32_52 = arith.constant 12 : i32
    %972 = tpu.dynamic_rotate %952 by %c12_i32_52 dim 1 : vector<10x256xf32>, i32 -> vector<10x256xf32>
    %973 = vector.extract_strided_slice %972 {offsets = [0, 0], sizes = [8, 256], strides = [1, 1]} : vector<10x256xf32> to vector<8x256xf32>
    %974 = arith.index_cast %arg0 : i32 to index
    %c165 = arith.constant 165 : index
    %975 = memref.load %arg1[%974, %c165] : memref<3x345xf32, #tpu.memory_space<smem>>
    %976 = vector.broadcast %975 : f32 to vector<8x256xf32>
    %977 = arith.mulf %973, %976 : vector<8x256xf32>
    %978 = arith.addf %971, %977 : vector<8x256xf32>
    %979 = vector.extract_strided_slice %972 {offsets = [1, 0], sizes = [8, 256], strides = [1, 1]} : vector<10x256xf32> to vector<8x256xf32>
    %980 = arith.index_cast %arg0 : i32 to index
    %c174 = arith.constant 174 : index
    %981 = memref.load %arg1[%980, %c174] : memref<3x345xf32, #tpu.memory_space<smem>>
    %982 = vector.broadcast %981 : f32 to vector<8x256xf32>
    %983 = arith.mulf %979, %982 : vector<8x256xf32>
    %984 = arith.addf %978, %983 : vector<8x256xf32>
    %985 = vector.extract_strided_slice %972 {offsets = [2, 0], sizes = [8, 256], strides = [1, 1]} : vector<10x256xf32> to vector<8x256xf32>
    %986 = arith.index_cast %arg0 : i32 to index
    %c183 = arith.constant 183 : index
    %987 = memref.load %arg1[%986, %c183] : memref<3x345xf32, #tpu.memory_space<smem>>
    %988 = vector.broadcast %987 : f32 to vector<8x256xf32>
    %989 = arith.mulf %985, %988 : vector<8x256xf32>
    %990 = arith.addf %984, %989 : vector<8x256xf32>
    %c11_i32_53 = arith.constant 11 : i32
    %991 = tpu.dynamic_rotate %952 by %c11_i32_53 dim 1 : vector<10x256xf32>, i32 -> vector<10x256xf32>
    %992 = vector.extract_strided_slice %991 {offsets = [0, 0], sizes = [8, 256], strides = [1, 1]} : vector<10x256xf32> to vector<8x256xf32>
    %993 = arith.index_cast %arg0 : i32 to index
    %c166 = arith.constant 166 : index
    %994 = memref.load %arg1[%993, %c166] : memref<3x345xf32, #tpu.memory_space<smem>>
    %995 = vector.broadcast %994 : f32 to vector<8x256xf32>
    %996 = arith.mulf %992, %995 : vector<8x256xf32>
    %997 = arith.addf %990, %996 : vector<8x256xf32>
    %998 = vector.extract_strided_slice %991 {offsets = [1, 0], sizes = [8, 256], strides = [1, 1]} : vector<10x256xf32> to vector<8x256xf32>
    %999 = arith.index_cast %arg0 : i32 to index
    %c175 = arith.constant 175 : index
    %1000 = memref.load %arg1[%999, %c175] : memref<3x345xf32, #tpu.memory_space<smem>>
    %1001 = vector.broadcast %1000 : f32 to vector<8x256xf32>
    %1002 = arith.mulf %998, %1001 : vector<8x256xf32>
    %1003 = arith.addf %997, %1002 : vector<8x256xf32>
    %1004 = vector.extract_strided_slice %991 {offsets = [2, 0], sizes = [8, 256], strides = [1, 1]} : vector<10x256xf32> to vector<8x256xf32>
    %1005 = arith.index_cast %arg0 : i32 to index
    %c184 = arith.constant 184 : index
    %1006 = memref.load %arg1[%1005, %c184] : memref<3x345xf32, #tpu.memory_space<smem>>
    %1007 = vector.broadcast %1006 : f32 to vector<8x256xf32>
    %1008 = arith.mulf %1004, %1007 : vector<8x256xf32>
    %1009 = arith.addf %1003, %1008 : vector<8x256xf32>
    %c1_i32_54 = arith.constant 1 : i32
    %1010 = tpu.dynamic_rotate %952 by %c1_i32_54 dim 1 : vector<10x256xf32>, i32 -> vector<10x256xf32>
    %1011 = vector.extract_strided_slice %1010 {offsets = [0, 0], sizes = [8, 256], strides = [1, 1]} : vector<10x256xf32> to vector<8x256xf32>
    %1012 = arith.index_cast %arg0 : i32 to index
    %c167 = arith.constant 167 : index
    %1013 = memref.load %arg1[%1012, %c167] : memref<3x345xf32, #tpu.memory_space<smem>>
    %1014 = vector.broadcast %1013 : f32 to vector<8x256xf32>
    %1015 = arith.mulf %1011, %1014 : vector<8x256xf32>
    %1016 = arith.addf %1009, %1015 : vector<8x256xf32>
    %1017 = vector.extract_strided_slice %1010 {offsets = [1, 0], sizes = [8, 256], strides = [1, 1]} : vector<10x256xf32> to vector<8x256xf32>
    %1018 = arith.index_cast %arg0 : i32 to index
    %c176 = arith.constant 176 : index
    %1019 = memref.load %arg1[%1018, %c176] : memref<3x345xf32, #tpu.memory_space<smem>>
    %1020 = vector.broadcast %1019 : f32 to vector<8x256xf32>
    %1021 = arith.mulf %1017, %1020 : vector<8x256xf32>
    %1022 = arith.addf %1016, %1021 : vector<8x256xf32>
    %1023 = vector.extract_strided_slice %1010 {offsets = [2, 0], sizes = [8, 256], strides = [1, 1]} : vector<10x256xf32> to vector<8x256xf32>
    %1024 = arith.index_cast %arg0 : i32 to index
    %c185 = arith.constant 185 : index
    %1025 = memref.load %arg1[%1024, %c185] : memref<3x345xf32, #tpu.memory_space<smem>>
    %1026 = vector.broadcast %1025 : f32 to vector<8x256xf32>
    %1027 = arith.mulf %1023, %1026 : vector<8x256xf32>
    %1028 = arith.addf %1022, %1027 : vector<8x256xf32>
    %1029 = vector.extract_strided_slice %952 {offsets = [0, 0], sizes = [8, 256], strides = [1, 1]} : vector<10x256xf32> to vector<8x256xf32>
    %1030 = arith.index_cast %arg0 : i32 to index
    %c168 = arith.constant 168 : index
    %1031 = memref.load %arg1[%1030, %c168] : memref<3x345xf32, #tpu.memory_space<smem>>
    %1032 = vector.broadcast %1031 : f32 to vector<8x256xf32>
    %1033 = arith.mulf %1029, %1032 : vector<8x256xf32>
    %1034 = arith.addf %1028, %1033 : vector<8x256xf32>
    %1035 = vector.extract_strided_slice %952 {offsets = [1, 0], sizes = [8, 256], strides = [1, 1]} : vector<10x256xf32> to vector<8x256xf32>
    %1036 = arith.index_cast %arg0 : i32 to index
    %c177 = arith.constant 177 : index
    %1037 = memref.load %arg1[%1036, %c177] : memref<3x345xf32, #tpu.memory_space<smem>>
    %1038 = vector.broadcast %1037 : f32 to vector<8x256xf32>
    %1039 = arith.mulf %1035, %1038 : vector<8x256xf32>
    %1040 = arith.addf %1034, %1039 : vector<8x256xf32>
    %1041 = vector.extract_strided_slice %952 {offsets = [2, 0], sizes = [8, 256], strides = [1, 1]} : vector<10x256xf32> to vector<8x256xf32>
    %1042 = arith.index_cast %arg0 : i32 to index
    %c186 = arith.constant 186 : index
    %1043 = memref.load %arg1[%1042, %c186] : memref<3x345xf32, #tpu.memory_space<smem>>
    %1044 = vector.broadcast %1043 : f32 to vector<8x256xf32>
    %1045 = arith.mulf %1041, %1044 : vector<8x256xf32>
    %1046 = arith.addf %1040, %1045 : vector<8x256xf32>
    %c255_i32_55 = arith.constant 255 : i32
    %1047 = tpu.dynamic_rotate %952 by %c255_i32_55 dim 1 : vector<10x256xf32>, i32 -> vector<10x256xf32>
    %1048 = vector.extract_strided_slice %1047 {offsets = [0, 0], sizes = [8, 256], strides = [1, 1]} : vector<10x256xf32> to vector<8x256xf32>
    %1049 = arith.index_cast %arg0 : i32 to index
    %c169 = arith.constant 169 : index
    %1050 = memref.load %arg1[%1049, %c169] : memref<3x345xf32, #tpu.memory_space<smem>>
    %1051 = vector.broadcast %1050 : f32 to vector<8x256xf32>
    %1052 = arith.mulf %1048, %1051 : vector<8x256xf32>
    %1053 = arith.addf %1046, %1052 : vector<8x256xf32>
    %1054 = vector.extract_strided_slice %1047 {offsets = [1, 0], sizes = [8, 256], strides = [1, 1]} : vector<10x256xf32> to vector<8x256xf32>
    %1055 = arith.index_cast %arg0 : i32 to index
    %c178 = arith.constant 178 : index
    %1056 = memref.load %arg1[%1055, %c178] : memref<3x345xf32, #tpu.memory_space<smem>>
    %1057 = vector.broadcast %1056 : f32 to vector<8x256xf32>
    %1058 = arith.mulf %1054, %1057 : vector<8x256xf32>
    %1059 = arith.addf %1053, %1058 : vector<8x256xf32>
    %1060 = vector.extract_strided_slice %1047 {offsets = [2, 0], sizes = [8, 256], strides = [1, 1]} : vector<10x256xf32> to vector<8x256xf32>
    %1061 = arith.index_cast %arg0 : i32 to index
    %c187 = arith.constant 187 : index
    %1062 = memref.load %arg1[%1061, %c187] : memref<3x345xf32, #tpu.memory_space<smem>>
    %1063 = vector.broadcast %1062 : f32 to vector<8x256xf32>
    %1064 = arith.mulf %1060, %1063 : vector<8x256xf32>
    %1065 = arith.addf %1059, %1064 : vector<8x256xf32>
    %c245_i32_56 = arith.constant 245 : i32
    %1066 = tpu.dynamic_rotate %952 by %c245_i32_56 dim 1 : vector<10x256xf32>, i32 -> vector<10x256xf32>
    %1067 = vector.extract_strided_slice %1066 {offsets = [0, 0], sizes = [8, 256], strides = [1, 1]} : vector<10x256xf32> to vector<8x256xf32>
    %1068 = arith.index_cast %arg0 : i32 to index
    %c170 = arith.constant 170 : index
    %1069 = memref.load %arg1[%1068, %c170] : memref<3x345xf32, #tpu.memory_space<smem>>
    %1070 = vector.broadcast %1069 : f32 to vector<8x256xf32>
    %1071 = arith.mulf %1067, %1070 : vector<8x256xf32>
    %1072 = arith.addf %1065, %1071 : vector<8x256xf32>
    %1073 = vector.extract_strided_slice %1066 {offsets = [1, 0], sizes = [8, 256], strides = [1, 1]} : vector<10x256xf32> to vector<8x256xf32>
    %1074 = arith.index_cast %arg0 : i32 to index
    %c179 = arith.constant 179 : index
    %1075 = memref.load %arg1[%1074, %c179] : memref<3x345xf32, #tpu.memory_space<smem>>
    %1076 = vector.broadcast %1075 : f32 to vector<8x256xf32>
    %1077 = arith.mulf %1073, %1076 : vector<8x256xf32>
    %1078 = arith.addf %1072, %1077 : vector<8x256xf32>
    %1079 = vector.extract_strided_slice %1066 {offsets = [2, 0], sizes = [8, 256], strides = [1, 1]} : vector<10x256xf32> to vector<8x256xf32>
    %1080 = arith.index_cast %arg0 : i32 to index
    %c188 = arith.constant 188 : index
    %1081 = memref.load %arg1[%1080, %c188] : memref<3x345xf32, #tpu.memory_space<smem>>
    %1082 = vector.broadcast %1081 : f32 to vector<8x256xf32>
    %1083 = arith.mulf %1079, %1082 : vector<8x256xf32>
    %1084 = arith.addf %1078, %1083 : vector<8x256xf32>
    %c244_i32_57 = arith.constant 244 : i32
    %1085 = tpu.dynamic_rotate %952 by %c244_i32_57 dim 1 : vector<10x256xf32>, i32 -> vector<10x256xf32>
    %1086 = vector.extract_strided_slice %1085 {offsets = [0, 0], sizes = [8, 256], strides = [1, 1]} : vector<10x256xf32> to vector<8x256xf32>
    %1087 = arith.index_cast %arg0 : i32 to index
    %c171 = arith.constant 171 : index
    %1088 = memref.load %arg1[%1087, %c171] : memref<3x345xf32, #tpu.memory_space<smem>>
    %1089 = vector.broadcast %1088 : f32 to vector<8x256xf32>
    %1090 = arith.mulf %1086, %1089 : vector<8x256xf32>
    %1091 = arith.addf %1084, %1090 : vector<8x256xf32>
    %1092 = vector.extract_strided_slice %1085 {offsets = [1, 0], sizes = [8, 256], strides = [1, 1]} : vector<10x256xf32> to vector<8x256xf32>
    %1093 = arith.index_cast %arg0 : i32 to index
    %c180 = arith.constant 180 : index
    %1094 = memref.load %arg1[%1093, %c180] : memref<3x345xf32, #tpu.memory_space<smem>>
    %1095 = vector.broadcast %1094 : f32 to vector<8x256xf32>
    %1096 = arith.mulf %1092, %1095 : vector<8x256xf32>
    %1097 = arith.addf %1091, %1096 : vector<8x256xf32>
    %1098 = vector.extract_strided_slice %1085 {offsets = [2, 0], sizes = [8, 256], strides = [1, 1]} : vector<10x256xf32> to vector<8x256xf32>
    %1099 = arith.index_cast %arg0 : i32 to index
    %c189 = arith.constant 189 : index
    %1100 = memref.load %arg1[%1099, %c189] : memref<3x345xf32, #tpu.memory_space<smem>>
    %1101 = vector.broadcast %1100 : f32 to vector<8x256xf32>
    %1102 = arith.mulf %1098, %1101 : vector<8x256xf32>
    %1103 = arith.addf %1097, %1102 : vector<8x256xf32>
    %c243_i32_58 = arith.constant 243 : i32
    %1104 = tpu.dynamic_rotate %952 by %c243_i32_58 dim 1 : vector<10x256xf32>, i32 -> vector<10x256xf32>
    %1105 = vector.extract_strided_slice %1104 {offsets = [0, 0], sizes = [8, 256], strides = [1, 1]} : vector<10x256xf32> to vector<8x256xf32>
    %1106 = arith.index_cast %arg0 : i32 to index
    %c172 = arith.constant 172 : index
    %1107 = memref.load %arg1[%1106, %c172] : memref<3x345xf32, #tpu.memory_space<smem>>
    %1108 = vector.broadcast %1107 : f32 to vector<8x256xf32>
    %1109 = arith.mulf %1105, %1108 : vector<8x256xf32>
    %1110 = arith.addf %1103, %1109 : vector<8x256xf32>
    %1111 = vector.extract_strided_slice %1104 {offsets = [1, 0], sizes = [8, 256], strides = [1, 1]} : vector<10x256xf32> to vector<8x256xf32>
    %1112 = arith.index_cast %arg0 : i32 to index
    %c181 = arith.constant 181 : index
    %1113 = memref.load %arg1[%1112, %c181] : memref<3x345xf32, #tpu.memory_space<smem>>
    %1114 = vector.broadcast %1113 : f32 to vector<8x256xf32>
    %1115 = arith.mulf %1111, %1114 : vector<8x256xf32>
    %1116 = arith.addf %1110, %1115 : vector<8x256xf32>
    %1117 = vector.extract_strided_slice %1104 {offsets = [2, 0], sizes = [8, 256], strides = [1, 1]} : vector<10x256xf32> to vector<8x256xf32>
    %1118 = arith.index_cast %arg0 : i32 to index
    %c190 = arith.constant 190 : index
    %1119 = memref.load %arg1[%1118, %c190] : memref<3x345xf32, #tpu.memory_space<smem>>
    %1120 = vector.broadcast %1119 : f32 to vector<8x256xf32>
    %1121 = arith.mulf %1117, %1120 : vector<8x256xf32>
    %1122 = arith.addf %1116, %1121 : vector<8x256xf32>
    %c1_59 = arith.constant 1 : index
    %c7_60 = arith.constant 7 : index
    %c0_61 = arith.constant 0 : index
    %1123 = vector.load %arg5[%c1_59, %c7_60, %c0_61] : memref<2x24x256xf32, #tpu.memory_space<vmem>>, vector<1x10x256xf32>
    %1124 = vector.shape_cast %1123 : vector<1x10x256xf32> to vector<10x256xf32>
    %c13_i32_62 = arith.constant 13 : i32
    %1125 = tpu.dynamic_rotate %1124 by %c13_i32_62 dim 1 : vector<10x256xf32>, i32 -> vector<10x256xf32>
    %1126 = vector.extract_strided_slice %1125 {offsets = [0, 0], sizes = [8, 256], strides = [1, 1]} : vector<10x256xf32> to vector<8x256xf32>
    %1127 = arith.index_cast %arg0 : i32 to index
    %c191 = arith.constant 191 : index
    %1128 = memref.load %arg1[%1127, %c191] : memref<3x345xf32, #tpu.memory_space<smem>>
    %1129 = vector.broadcast %1128 : f32 to vector<8x256xf32>
    %1130 = arith.mulf %1126, %1129 : vector<8x256xf32>
    %1131 = arith.addf %1122, %1130 : vector<8x256xf32>
    %1132 = vector.extract_strided_slice %1125 {offsets = [1, 0], sizes = [8, 256], strides = [1, 1]} : vector<10x256xf32> to vector<8x256xf32>
    %1133 = arith.index_cast %arg0 : i32 to index
    %c200 = arith.constant 200 : index
    %1134 = memref.load %arg1[%1133, %c200] : memref<3x345xf32, #tpu.memory_space<smem>>
    %1135 = vector.broadcast %1134 : f32 to vector<8x256xf32>
    %1136 = arith.mulf %1132, %1135 : vector<8x256xf32>
    %1137 = arith.addf %1131, %1136 : vector<8x256xf32>
    %1138 = vector.extract_strided_slice %1125 {offsets = [2, 0], sizes = [8, 256], strides = [1, 1]} : vector<10x256xf32> to vector<8x256xf32>
    %1139 = arith.index_cast %arg0 : i32 to index
    %c209 = arith.constant 209 : index
    %1140 = memref.load %arg1[%1139, %c209] : memref<3x345xf32, #tpu.memory_space<smem>>
    %1141 = vector.broadcast %1140 : f32 to vector<8x256xf32>
    %1142 = arith.mulf %1138, %1141 : vector<8x256xf32>
    %1143 = arith.addf %1137, %1142 : vector<8x256xf32>
    %c12_i32_63 = arith.constant 12 : i32
    %1144 = tpu.dynamic_rotate %1124 by %c12_i32_63 dim 1 : vector<10x256xf32>, i32 -> vector<10x256xf32>
    %1145 = vector.extract_strided_slice %1144 {offsets = [0, 0], sizes = [8, 256], strides = [1, 1]} : vector<10x256xf32> to vector<8x256xf32>
    %1146 = arith.index_cast %arg0 : i32 to index
    %c192 = arith.constant 192 : index
    %1147 = memref.load %arg1[%1146, %c192] : memref<3x345xf32, #tpu.memory_space<smem>>
    %1148 = vector.broadcast %1147 : f32 to vector<8x256xf32>
    %1149 = arith.mulf %1145, %1148 : vector<8x256xf32>
    %1150 = arith.addf %1143, %1149 : vector<8x256xf32>
    %1151 = vector.extract_strided_slice %1144 {offsets = [1, 0], sizes = [8, 256], strides = [1, 1]} : vector<10x256xf32> to vector<8x256xf32>
    %1152 = arith.index_cast %arg0 : i32 to index
    %c201 = arith.constant 201 : index
    %1153 = memref.load %arg1[%1152, %c201] : memref<3x345xf32, #tpu.memory_space<smem>>
    %1154 = vector.broadcast %1153 : f32 to vector<8x256xf32>
    %1155 = arith.mulf %1151, %1154 : vector<8x256xf32>
    %1156 = arith.addf %1150, %1155 : vector<8x256xf32>
    %1157 = vector.extract_strided_slice %1144 {offsets = [2, 0], sizes = [8, 256], strides = [1, 1]} : vector<10x256xf32> to vector<8x256xf32>
    %1158 = arith.index_cast %arg0 : i32 to index
    %c210 = arith.constant 210 : index
    %1159 = memref.load %arg1[%1158, %c210] : memref<3x345xf32, #tpu.memory_space<smem>>
    %1160 = vector.broadcast %1159 : f32 to vector<8x256xf32>
    %1161 = arith.mulf %1157, %1160 : vector<8x256xf32>
    %1162 = arith.addf %1156, %1161 : vector<8x256xf32>
    %c11_i32_64 = arith.constant 11 : i32
    %1163 = tpu.dynamic_rotate %1124 by %c11_i32_64 dim 1 : vector<10x256xf32>, i32 -> vector<10x256xf32>
    %1164 = vector.extract_strided_slice %1163 {offsets = [0, 0], sizes = [8, 256], strides = [1, 1]} : vector<10x256xf32> to vector<8x256xf32>
    %1165 = arith.index_cast %arg0 : i32 to index
    %c193 = arith.constant 193 : index
    %1166 = memref.load %arg1[%1165, %c193] : memref<3x345xf32, #tpu.memory_space<smem>>
    %1167 = vector.broadcast %1166 : f32 to vector<8x256xf32>
    %1168 = arith.mulf %1164, %1167 : vector<8x256xf32>
    %1169 = arith.addf %1162, %1168 : vector<8x256xf32>
    %1170 = vector.extract_strided_slice %1163 {offsets = [1, 0], sizes = [8, 256], strides = [1, 1]} : vector<10x256xf32> to vector<8x256xf32>
    %1171 = arith.index_cast %arg0 : i32 to index
    %c202 = arith.constant 202 : index
    %1172 = memref.load %arg1[%1171, %c202] : memref<3x345xf32, #tpu.memory_space<smem>>
    %1173 = vector.broadcast %1172 : f32 to vector<8x256xf32>
    %1174 = arith.mulf %1170, %1173 : vector<8x256xf32>
    %1175 = arith.addf %1169, %1174 : vector<8x256xf32>
    %1176 = vector.extract_strided_slice %1163 {offsets = [2, 0], sizes = [8, 256], strides = [1, 1]} : vector<10x256xf32> to vector<8x256xf32>
    %1177 = arith.index_cast %arg0 : i32 to index
    %c211 = arith.constant 211 : index
    %1178 = memref.load %arg1[%1177, %c211] : memref<3x345xf32, #tpu.memory_space<smem>>
    %1179 = vector.broadcast %1178 : f32 to vector<8x256xf32>
    %1180 = arith.mulf %1176, %1179 : vector<8x256xf32>
    %1181 = arith.addf %1175, %1180 : vector<8x256xf32>
    %c1_i32_65 = arith.constant 1 : i32
    %1182 = tpu.dynamic_rotate %1124 by %c1_i32_65 dim 1 : vector<10x256xf32>, i32 -> vector<10x256xf32>
    %1183 = vector.extract_strided_slice %1182 {offsets = [0, 0], sizes = [8, 256], strides = [1, 1]} : vector<10x256xf32> to vector<8x256xf32>
    %1184 = arith.index_cast %arg0 : i32 to index
    %c194 = arith.constant 194 : index
    %1185 = memref.load %arg1[%1184, %c194] : memref<3x345xf32, #tpu.memory_space<smem>>
    %1186 = vector.broadcast %1185 : f32 to vector<8x256xf32>
    %1187 = arith.mulf %1183, %1186 : vector<8x256xf32>
    %1188 = arith.addf %1181, %1187 : vector<8x256xf32>
    %1189 = vector.extract_strided_slice %1182 {offsets = [1, 0], sizes = [8, 256], strides = [1, 1]} : vector<10x256xf32> to vector<8x256xf32>
    %1190 = arith.index_cast %arg0 : i32 to index
    %c203 = arith.constant 203 : index
    %1191 = memref.load %arg1[%1190, %c203] : memref<3x345xf32, #tpu.memory_space<smem>>
    %1192 = vector.broadcast %1191 : f32 to vector<8x256xf32>
    %1193 = arith.mulf %1189, %1192 : vector<8x256xf32>
    %1194 = arith.addf %1188, %1193 : vector<8x256xf32>
    %1195 = vector.extract_strided_slice %1182 {offsets = [2, 0], sizes = [8, 256], strides = [1, 1]} : vector<10x256xf32> to vector<8x256xf32>
    %1196 = arith.index_cast %arg0 : i32 to index
    %c212 = arith.constant 212 : index
    %1197 = memref.load %arg1[%1196, %c212] : memref<3x345xf32, #tpu.memory_space<smem>>
    %1198 = vector.broadcast %1197 : f32 to vector<8x256xf32>
    %1199 = arith.mulf %1195, %1198 : vector<8x256xf32>
    %1200 = arith.addf %1194, %1199 : vector<8x256xf32>
    %1201 = vector.extract_strided_slice %1124 {offsets = [0, 0], sizes = [8, 256], strides = [1, 1]} : vector<10x256xf32> to vector<8x256xf32>
    %1202 = arith.index_cast %arg0 : i32 to index
    %c195 = arith.constant 195 : index
    %1203 = memref.load %arg1[%1202, %c195] : memref<3x345xf32, #tpu.memory_space<smem>>
    %1204 = vector.broadcast %1203 : f32 to vector<8x256xf32>
    %1205 = arith.mulf %1201, %1204 : vector<8x256xf32>
    %1206 = arith.addf %1200, %1205 : vector<8x256xf32>
    %1207 = vector.extract_strided_slice %1124 {offsets = [1, 0], sizes = [8, 256], strides = [1, 1]} : vector<10x256xf32> to vector<8x256xf32>
    %1208 = arith.index_cast %arg0 : i32 to index
    %c204 = arith.constant 204 : index
    %1209 = memref.load %arg1[%1208, %c204] : memref<3x345xf32, #tpu.memory_space<smem>>
    %1210 = vector.broadcast %1209 : f32 to vector<8x256xf32>
    %1211 = arith.mulf %1207, %1210 : vector<8x256xf32>
    %1212 = arith.addf %1206, %1211 : vector<8x256xf32>
    %1213 = vector.extract_strided_slice %1124 {offsets = [2, 0], sizes = [8, 256], strides = [1, 1]} : vector<10x256xf32> to vector<8x256xf32>
    %1214 = arith.index_cast %arg0 : i32 to index
    %c213 = arith.constant 213 : index
    %1215 = memref.load %arg1[%1214, %c213] : memref<3x345xf32, #tpu.memory_space<smem>>
    %1216 = vector.broadcast %1215 : f32 to vector<8x256xf32>
    %1217 = arith.mulf %1213, %1216 : vector<8x256xf32>
    %1218 = arith.addf %1212, %1217 : vector<8x256xf32>
    %c255_i32_66 = arith.constant 255 : i32
    %1219 = tpu.dynamic_rotate %1124 by %c255_i32_66 dim 1 : vector<10x256xf32>, i32 -> vector<10x256xf32>
    %1220 = vector.extract_strided_slice %1219 {offsets = [0, 0], sizes = [8, 256], strides = [1, 1]} : vector<10x256xf32> to vector<8x256xf32>
    %1221 = arith.index_cast %arg0 : i32 to index
    %c196 = arith.constant 196 : index
    %1222 = memref.load %arg1[%1221, %c196] : memref<3x345xf32, #tpu.memory_space<smem>>
    %1223 = vector.broadcast %1222 : f32 to vector<8x256xf32>
    %1224 = arith.mulf %1220, %1223 : vector<8x256xf32>
    %1225 = arith.addf %1218, %1224 : vector<8x256xf32>
    %1226 = vector.extract_strided_slice %1219 {offsets = [1, 0], sizes = [8, 256], strides = [1, 1]} : vector<10x256xf32> to vector<8x256xf32>
    %1227 = arith.index_cast %arg0 : i32 to index
    %c205 = arith.constant 205 : index
    %1228 = memref.load %arg1[%1227, %c205] : memref<3x345xf32, #tpu.memory_space<smem>>
    %1229 = vector.broadcast %1228 : f32 to vector<8x256xf32>
    %1230 = arith.mulf %1226, %1229 : vector<8x256xf32>
    %1231 = arith.addf %1225, %1230 : vector<8x256xf32>
    %1232 = vector.extract_strided_slice %1219 {offsets = [2, 0], sizes = [8, 256], strides = [1, 1]} : vector<10x256xf32> to vector<8x256xf32>
    %1233 = arith.index_cast %arg0 : i32 to index
    %c214 = arith.constant 214 : index
    %1234 = memref.load %arg1[%1233, %c214] : memref<3x345xf32, #tpu.memory_space<smem>>
    %1235 = vector.broadcast %1234 : f32 to vector<8x256xf32>
    %1236 = arith.mulf %1232, %1235 : vector<8x256xf32>
    %1237 = arith.addf %1231, %1236 : vector<8x256xf32>
    %c245_i32_67 = arith.constant 245 : i32
    %1238 = tpu.dynamic_rotate %1124 by %c245_i32_67 dim 1 : vector<10x256xf32>, i32 -> vector<10x256xf32>
    %1239 = vector.extract_strided_slice %1238 {offsets = [0, 0], sizes = [8, 256], strides = [1, 1]} : vector<10x256xf32> to vector<8x256xf32>
    %1240 = arith.index_cast %arg0 : i32 to index
    %c197 = arith.constant 197 : index
    %1241 = memref.load %arg1[%1240, %c197] : memref<3x345xf32, #tpu.memory_space<smem>>
    %1242 = vector.broadcast %1241 : f32 to vector<8x256xf32>
    %1243 = arith.mulf %1239, %1242 : vector<8x256xf32>
    %1244 = arith.addf %1237, %1243 : vector<8x256xf32>
    %1245 = vector.extract_strided_slice %1238 {offsets = [1, 0], sizes = [8, 256], strides = [1, 1]} : vector<10x256xf32> to vector<8x256xf32>
    %1246 = arith.index_cast %arg0 : i32 to index
    %c206 = arith.constant 206 : index
    %1247 = memref.load %arg1[%1246, %c206] : memref<3x345xf32, #tpu.memory_space<smem>>
    %1248 = vector.broadcast %1247 : f32 to vector<8x256xf32>
    %1249 = arith.mulf %1245, %1248 : vector<8x256xf32>
    %1250 = arith.addf %1244, %1249 : vector<8x256xf32>
    %1251 = vector.extract_strided_slice %1238 {offsets = [2, 0], sizes = [8, 256], strides = [1, 1]} : vector<10x256xf32> to vector<8x256xf32>
    %1252 = arith.index_cast %arg0 : i32 to index
    %c215 = arith.constant 215 : index
    %1253 = memref.load %arg1[%1252, %c215] : memref<3x345xf32, #tpu.memory_space<smem>>
    %1254 = vector.broadcast %1253 : f32 to vector<8x256xf32>
    %1255 = arith.mulf %1251, %1254 : vector<8x256xf32>
    %1256 = arith.addf %1250, %1255 : vector<8x256xf32>
    %c244_i32_68 = arith.constant 244 : i32
    %1257 = tpu.dynamic_rotate %1124 by %c244_i32_68 dim 1 : vector<10x256xf32>, i32 -> vector<10x256xf32>
    %1258 = vector.extract_strided_slice %1257 {offsets = [0, 0], sizes = [8, 256], strides = [1, 1]} : vector<10x256xf32> to vector<8x256xf32>
    %1259 = arith.index_cast %arg0 : i32 to index
    %c198 = arith.constant 198 : index
    %1260 = memref.load %arg1[%1259, %c198] : memref<3x345xf32, #tpu.memory_space<smem>>
    %1261 = vector.broadcast %1260 : f32 to vector<8x256xf32>
    %1262 = arith.mulf %1258, %1261 : vector<8x256xf32>
    %1263 = arith.addf %1256, %1262 : vector<8x256xf32>
    %1264 = vector.extract_strided_slice %1257 {offsets = [1, 0], sizes = [8, 256], strides = [1, 1]} : vector<10x256xf32> to vector<8x256xf32>
    %1265 = arith.index_cast %arg0 : i32 to index
    %c207 = arith.constant 207 : index
    %1266 = memref.load %arg1[%1265, %c207] : memref<3x345xf32, #tpu.memory_space<smem>>
    %1267 = vector.broadcast %1266 : f32 to vector<8x256xf32>
    %1268 = arith.mulf %1264, %1267 : vector<8x256xf32>
    %1269 = arith.addf %1263, %1268 : vector<8x256xf32>
    %1270 = vector.extract_strided_slice %1257 {offsets = [2, 0], sizes = [8, 256], strides = [1, 1]} : vector<10x256xf32> to vector<8x256xf32>
    %1271 = arith.index_cast %arg0 : i32 to index
    %c216 = arith.constant 216 : index
    %1272 = memref.load %arg1[%1271, %c216] : memref<3x345xf32, #tpu.memory_space<smem>>
    %1273 = vector.broadcast %1272 : f32 to vector<8x256xf32>
    %1274 = arith.mulf %1270, %1273 : vector<8x256xf32>
    %1275 = arith.addf %1269, %1274 : vector<8x256xf32>
    %c243_i32_69 = arith.constant 243 : i32
    %1276 = tpu.dynamic_rotate %1124 by %c243_i32_69 dim 1 : vector<10x256xf32>, i32 -> vector<10x256xf32>
    %1277 = vector.extract_strided_slice %1276 {offsets = [0, 0], sizes = [8, 256], strides = [1, 1]} : vector<10x256xf32> to vector<8x256xf32>
    %1278 = arith.index_cast %arg0 : i32 to index
    %c199 = arith.constant 199 : index
    %1279 = memref.load %arg1[%1278, %c199] : memref<3x345xf32, #tpu.memory_space<smem>>
    %1280 = vector.broadcast %1279 : f32 to vector<8x256xf32>
    %1281 = arith.mulf %1277, %1280 : vector<8x256xf32>
    %1282 = arith.addf %1275, %1281 : vector<8x256xf32>
    %1283 = vector.extract_strided_slice %1276 {offsets = [1, 0], sizes = [8, 256], strides = [1, 1]} : vector<10x256xf32> to vector<8x256xf32>
    %1284 = arith.index_cast %arg0 : i32 to index
    %c208 = arith.constant 208 : index
    %1285 = memref.load %arg1[%1284, %c208] : memref<3x345xf32, #tpu.memory_space<smem>>
    %1286 = vector.broadcast %1285 : f32 to vector<8x256xf32>
    %1287 = arith.mulf %1283, %1286 : vector<8x256xf32>
    %1288 = arith.addf %1282, %1287 : vector<8x256xf32>
    %1289 = vector.extract_strided_slice %1276 {offsets = [2, 0], sizes = [8, 256], strides = [1, 1]} : vector<10x256xf32> to vector<8x256xf32>
    %1290 = arith.index_cast %arg0 : i32 to index
    %c217 = arith.constant 217 : index
    %1291 = memref.load %arg1[%1290, %c217] : memref<3x345xf32, #tpu.memory_space<smem>>
    %1292 = vector.broadcast %1291 : f32 to vector<8x256xf32>
    %1293 = arith.mulf %1289, %1292 : vector<8x256xf32>
    %1294 = arith.addf %1288, %1293 : vector<8x256xf32>
    %cst_70 = arith.constant 0.000000e+00 : f32
    %1295 = vector.broadcast %cst_70 : f32 to vector<8x256xf32>
    %1296 = arith.maximumf %1294, %1295 : vector<8x256xf32>
    %1297 = arith.mulf %1296, %2 : vector<8x256xf32>
    %c0_71 = arith.constant 0 : index
    %c8_72 = arith.constant 8 : index
    %c0_73 = arith.constant 0 : index
    %1298 = vector.load %arg6[%c0_71, %c8_72, %c0_73] : memref<1x24x256xf32, #tpu.memory_space<vmem>>, vector<1x8x256xf32>
    %1299 = vector.shape_cast %1298 : vector<1x8x256xf32> to vector<8x256xf32>
    %1300 = vector.shape_cast %1297 : vector<8x256xf32> to vector<1x8x256xf32>
    tpu.vector_store %arg6[%c0_71, %c8_72, %c0_73], %1300 {strides = array<i32>} : memref<1x24x256xf32, #tpu.memory_space<vmem>>, vector<1x8x256xf32>,
    %1301 = arith.index_cast %arg0 : i32 to index
    %c344 = arith.constant 344 : index
    %1302 = memref.load %arg1[%1301, %c344] : memref<3x345xf32, #tpu.memory_space<smem>>
    %1303 = vector.broadcast %1302 : f32 to vector<8x256xf32>
    %c0_74 = arith.constant 0 : index
    %c6_75 = arith.constant 6 : index
    %c0_76 = arith.constant 0 : index
    %1304 = vector.load %arg6[%c0_74, %c6_75, %c0_76] : memref<1x24x256xf32, #tpu.memory_space<vmem>>, vector<1x12x256xf32>
    %1305 = vector.shape_cast %1304 : vector<1x12x256xf32> to vector<12x256xf32>
    %c26_i32 = arith.constant 26 : i32
    %1306 = tpu.dynamic_rotate %1305 by %c26_i32 dim 1 : vector<12x256xf32>, i32 -> vector<12x256xf32>
    %1307 = vector.extract_strided_slice %1306 {offsets = [0, 0], sizes = [8, 256], strides = [1, 1]} : vector<12x256xf32> to vector<8x256xf32>
    %1308 = arith.index_cast %arg0 : i32 to index
    %c219 = arith.constant 219 : index
    %1309 = memref.load %arg1[%1308, %c219] : memref<3x345xf32, #tpu.memory_space<smem>>
    %1310 = vector.broadcast %1309 : f32 to vector<8x256xf32>
    %1311 = arith.mulf %1307, %1310 : vector<8x256xf32>
    %1312 = arith.addf %1303, %1311 : vector<8x256xf32>
    %1313 = vector.extract_strided_slice %1306 {offsets = [1, 0], sizes = [8, 256], strides = [1, 1]} : vector<12x256xf32> to vector<8x256xf32>
    %1314 = arith.index_cast %arg0 : i32 to index
    %c244 = arith.constant 244 : index
    %1315 = memref.load %arg1[%1314, %c244] : memref<3x345xf32, #tpu.memory_space<smem>>
    %1316 = vector.broadcast %1315 : f32 to vector<8x256xf32>
    %1317 = arith.mulf %1313, %1316 : vector<8x256xf32>
    %1318 = arith.addf %1312, %1317 : vector<8x256xf32>
    %1319 = vector.extract_strided_slice %1306 {offsets = [2, 0], sizes = [8, 256], strides = [1, 1]} : vector<12x256xf32> to vector<8x256xf32>
    %1320 = arith.index_cast %arg0 : i32 to index
    %c269 = arith.constant 269 : index
    %1321 = memref.load %arg1[%1320, %c269] : memref<3x345xf32, #tpu.memory_space<smem>>
    %1322 = vector.broadcast %1321 : f32 to vector<8x256xf32>
    %1323 = arith.mulf %1319, %1322 : vector<8x256xf32>
    %1324 = arith.addf %1318, %1323 : vector<8x256xf32>
    %1325 = vector.extract_strided_slice %1306 {offsets = [3, 0], sizes = [8, 256], strides = [1, 1]} : vector<12x256xf32> to vector<8x256xf32>
    %1326 = arith.index_cast %arg0 : i32 to index
    %c294 = arith.constant 294 : index
    %1327 = memref.load %arg1[%1326, %c294] : memref<3x345xf32, #tpu.memory_space<smem>>
    %1328 = vector.broadcast %1327 : f32 to vector<8x256xf32>
    %1329 = arith.mulf %1325, %1328 : vector<8x256xf32>
    %1330 = arith.addf %1324, %1329 : vector<8x256xf32>
    %1331 = vector.extract_strided_slice %1306 {offsets = [4, 0], sizes = [8, 256], strides = [1, 1]} : vector<12x256xf32> to vector<8x256xf32>
    %1332 = arith.index_cast %arg0 : i32 to index
    %c319 = arith.constant 319 : index
    %1333 = memref.load %arg1[%1332, %c319] : memref<3x345xf32, #tpu.memory_space<smem>>
    %1334 = vector.broadcast %1333 : f32 to vector<8x256xf32>
    %1335 = arith.mulf %1331, %1334 : vector<8x256xf32>
    %1336 = arith.addf %1330, %1335 : vector<8x256xf32>
    %c25_i32 = arith.constant 25 : i32
    %1337 = tpu.dynamic_rotate %1305 by %c25_i32 dim 1 : vector<12x256xf32>, i32 -> vector<12x256xf32>
    %1338 = vector.extract_strided_slice %1337 {offsets = [0, 0], sizes = [8, 256], strides = [1, 1]} : vector<12x256xf32> to vector<8x256xf32>
    %1339 = arith.index_cast %arg0 : i32 to index
    %c220 = arith.constant 220 : index
    %1340 = memref.load %arg1[%1339, %c220] : memref<3x345xf32, #tpu.memory_space<smem>>
    %1341 = vector.broadcast %1340 : f32 to vector<8x256xf32>
    %1342 = arith.mulf %1338, %1341 : vector<8x256xf32>
    %1343 = arith.addf %1336, %1342 : vector<8x256xf32>
    %1344 = vector.extract_strided_slice %1337 {offsets = [1, 0], sizes = [8, 256], strides = [1, 1]} : vector<12x256xf32> to vector<8x256xf32>
    %1345 = arith.index_cast %arg0 : i32 to index
    %c245 = arith.constant 245 : index
    %1346 = memref.load %arg1[%1345, %c245] : memref<3x345xf32, #tpu.memory_space<smem>>
    %1347 = vector.broadcast %1346 : f32 to vector<8x256xf32>
    %1348 = arith.mulf %1344, %1347 : vector<8x256xf32>
    %1349 = arith.addf %1343, %1348 : vector<8x256xf32>
    %1350 = vector.extract_strided_slice %1337 {offsets = [2, 0], sizes = [8, 256], strides = [1, 1]} : vector<12x256xf32> to vector<8x256xf32>
    %1351 = arith.index_cast %arg0 : i32 to index
    %c270 = arith.constant 270 : index
    %1352 = memref.load %arg1[%1351, %c270] : memref<3x345xf32, #tpu.memory_space<smem>>
    %1353 = vector.broadcast %1352 : f32 to vector<8x256xf32>
    %1354 = arith.mulf %1350, %1353 : vector<8x256xf32>
    %1355 = arith.addf %1349, %1354 : vector<8x256xf32>
    %1356 = vector.extract_strided_slice %1337 {offsets = [3, 0], sizes = [8, 256], strides = [1, 1]} : vector<12x256xf32> to vector<8x256xf32>
    %1357 = arith.index_cast %arg0 : i32 to index
    %c295 = arith.constant 295 : index
    %1358 = memref.load %arg1[%1357, %c295] : memref<3x345xf32, #tpu.memory_space<smem>>
    %1359 = vector.broadcast %1358 : f32 to vector<8x256xf32>
    %1360 = arith.mulf %1356, %1359 : vector<8x256xf32>
    %1361 = arith.addf %1355, %1360 : vector<8x256xf32>
    %1362 = vector.extract_strided_slice %1337 {offsets = [4, 0], sizes = [8, 256], strides = [1, 1]} : vector<12x256xf32> to vector<8x256xf32>
    %1363 = arith.index_cast %arg0 : i32 to index
    %c320 = arith.constant 320 : index
    %1364 = memref.load %arg1[%1363, %c320] : memref<3x345xf32, #tpu.memory_space<smem>>
    %1365 = vector.broadcast %1364 : f32 to vector<8x256xf32>
    %1366 = arith.mulf %1362, %1365 : vector<8x256xf32>
    %1367 = arith.addf %1361, %1366 : vector<8x256xf32>
    %c24_i32 = arith.constant 24 : i32
    %1368 = tpu.dynamic_rotate %1305 by %c24_i32 dim 1 : vector<12x256xf32>, i32 -> vector<12x256xf32>
    %1369 = vector.extract_strided_slice %1368 {offsets = [0, 0], sizes = [8, 256], strides = [1, 1]} : vector<12x256xf32> to vector<8x256xf32>
    %1370 = arith.index_cast %arg0 : i32 to index
    %c221 = arith.constant 221 : index
    %1371 = memref.load %arg1[%1370, %c221] : memref<3x345xf32, #tpu.memory_space<smem>>
    %1372 = vector.broadcast %1371 : f32 to vector<8x256xf32>
    %1373 = arith.mulf %1369, %1372 : vector<8x256xf32>
    %1374 = arith.addf %1367, %1373 : vector<8x256xf32>
    %1375 = vector.extract_strided_slice %1368 {offsets = [1, 0], sizes = [8, 256], strides = [1, 1]} : vector<12x256xf32> to vector<8x256xf32>
    %1376 = arith.index_cast %arg0 : i32 to index
    %c246 = arith.constant 246 : index
    %1377 = memref.load %arg1[%1376, %c246] : memref<3x345xf32, #tpu.memory_space<smem>>
    %1378 = vector.broadcast %1377 : f32 to vector<8x256xf32>
    %1379 = arith.mulf %1375, %1378 : vector<8x256xf32>
    %1380 = arith.addf %1374, %1379 : vector<8x256xf32>
    %1381 = vector.extract_strided_slice %1368 {offsets = [2, 0], sizes = [8, 256], strides = [1, 1]} : vector<12x256xf32> to vector<8x256xf32>
    %1382 = arith.index_cast %arg0 : i32 to index
    %c271 = arith.constant 271 : index
    %1383 = memref.load %arg1[%1382, %c271] : memref<3x345xf32, #tpu.memory_space<smem>>
    %1384 = vector.broadcast %1383 : f32 to vector<8x256xf32>
    %1385 = arith.mulf %1381, %1384 : vector<8x256xf32>
    %1386 = arith.addf %1380, %1385 : vector<8x256xf32>
    %1387 = vector.extract_strided_slice %1368 {offsets = [3, 0], sizes = [8, 256], strides = [1, 1]} : vector<12x256xf32> to vector<8x256xf32>
    %1388 = arith.index_cast %arg0 : i32 to index
    %c296 = arith.constant 296 : index
    %1389 = memref.load %arg1[%1388, %c296] : memref<3x345xf32, #tpu.memory_space<smem>>
    %1390 = vector.broadcast %1389 : f32 to vector<8x256xf32>
    %1391 = arith.mulf %1387, %1390 : vector<8x256xf32>
    %1392 = arith.addf %1386, %1391 : vector<8x256xf32>
    %1393 = vector.extract_strided_slice %1368 {offsets = [4, 0], sizes = [8, 256], strides = [1, 1]} : vector<12x256xf32> to vector<8x256xf32>
    %1394 = arith.index_cast %arg0 : i32 to index
    %c321 = arith.constant 321 : index
    %1395 = memref.load %arg1[%1394, %c321] : memref<3x345xf32, #tpu.memory_space<smem>>
    %1396 = vector.broadcast %1395 : f32 to vector<8x256xf32>
    %1397 = arith.mulf %1393, %1396 : vector<8x256xf32>
    %1398 = arith.addf %1392, %1397 : vector<8x256xf32>
    %c23_i32 = arith.constant 23 : i32
    %1399 = tpu.dynamic_rotate %1305 by %c23_i32 dim 1 : vector<12x256xf32>, i32 -> vector<12x256xf32>
    %1400 = vector.extract_strided_slice %1399 {offsets = [0, 0], sizes = [8, 256], strides = [1, 1]} : vector<12x256xf32> to vector<8x256xf32>
    %1401 = arith.index_cast %arg0 : i32 to index
    %c222 = arith.constant 222 : index
    %1402 = memref.load %arg1[%1401, %c222] : memref<3x345xf32, #tpu.memory_space<smem>>
    %1403 = vector.broadcast %1402 : f32 to vector<8x256xf32>
    %1404 = arith.mulf %1400, %1403 : vector<8x256xf32>
    %1405 = arith.addf %1398, %1404 : vector<8x256xf32>
    %1406 = vector.extract_strided_slice %1399 {offsets = [1, 0], sizes = [8, 256], strides = [1, 1]} : vector<12x256xf32> to vector<8x256xf32>
    %1407 = arith.index_cast %arg0 : i32 to index
    %c247 = arith.constant 247 : index
    %1408 = memref.load %arg1[%1407, %c247] : memref<3x345xf32, #tpu.memory_space<smem>>
    %1409 = vector.broadcast %1408 : f32 to vector<8x256xf32>
    %1410 = arith.mulf %1406, %1409 : vector<8x256xf32>
    %1411 = arith.addf %1405, %1410 : vector<8x256xf32>
    %1412 = vector.extract_strided_slice %1399 {offsets = [2, 0], sizes = [8, 256], strides = [1, 1]} : vector<12x256xf32> to vector<8x256xf32>
    %1413 = arith.index_cast %arg0 : i32 to index
    %c272 = arith.constant 272 : index
    %1414 = memref.load %arg1[%1413, %c272] : memref<3x345xf32, #tpu.memory_space<smem>>
    %1415 = vector.broadcast %1414 : f32 to vector<8x256xf32>
    %1416 = arith.mulf %1412, %1415 : vector<8x256xf32>
    %1417 = arith.addf %1411, %1416 : vector<8x256xf32>
    %1418 = vector.extract_strided_slice %1399 {offsets = [3, 0], sizes = [8, 256], strides = [1, 1]} : vector<12x256xf32> to vector<8x256xf32>
    %1419 = arith.index_cast %arg0 : i32 to index
    %c297 = arith.constant 297 : index
    %1420 = memref.load %arg1[%1419, %c297] : memref<3x345xf32, #tpu.memory_space<smem>>
    %1421 = vector.broadcast %1420 : f32 to vector<8x256xf32>
    %1422 = arith.mulf %1418, %1421 : vector<8x256xf32>
    %1423 = arith.addf %1417, %1422 : vector<8x256xf32>
    %1424 = vector.extract_strided_slice %1399 {offsets = [4, 0], sizes = [8, 256], strides = [1, 1]} : vector<12x256xf32> to vector<8x256xf32>
    %1425 = arith.index_cast %arg0 : i32 to index
    %c322 = arith.constant 322 : index
    %1426 = memref.load %arg1[%1425, %c322] : memref<3x345xf32, #tpu.memory_space<smem>>
    %1427 = vector.broadcast %1426 : f32 to vector<8x256xf32>
    %1428 = arith.mulf %1424, %1427 : vector<8x256xf32>
    %1429 = arith.addf %1423, %1428 : vector<8x256xf32>
    %c22_i32 = arith.constant 22 : i32
    %1430 = tpu.dynamic_rotate %1305 by %c22_i32 dim 1 : vector<12x256xf32>, i32 -> vector<12x256xf32>
    %1431 = vector.extract_strided_slice %1430 {offsets = [0, 0], sizes = [8, 256], strides = [1, 1]} : vector<12x256xf32> to vector<8x256xf32>
    %1432 = arith.index_cast %arg0 : i32 to index
    %c223 = arith.constant 223 : index
    %1433 = memref.load %arg1[%1432, %c223] : memref<3x345xf32, #tpu.memory_space<smem>>
    %1434 = vector.broadcast %1433 : f32 to vector<8x256xf32>
    %1435 = arith.mulf %1431, %1434 : vector<8x256xf32>
    %1436 = arith.addf %1429, %1435 : vector<8x256xf32>
    %1437 = vector.extract_strided_slice %1430 {offsets = [1, 0], sizes = [8, 256], strides = [1, 1]} : vector<12x256xf32> to vector<8x256xf32>
    %1438 = arith.index_cast %arg0 : i32 to index
    %c248 = arith.constant 248 : index
    %1439 = memref.load %arg1[%1438, %c248] : memref<3x345xf32, #tpu.memory_space<smem>>
    %1440 = vector.broadcast %1439 : f32 to vector<8x256xf32>
    %1441 = arith.mulf %1437, %1440 : vector<8x256xf32>
    %1442 = arith.addf %1436, %1441 : vector<8x256xf32>
    %1443 = vector.extract_strided_slice %1430 {offsets = [2, 0], sizes = [8, 256], strides = [1, 1]} : vector<12x256xf32> to vector<8x256xf32>
    %1444 = arith.index_cast %arg0 : i32 to index
    %c273 = arith.constant 273 : index
    %1445 = memref.load %arg1[%1444, %c273] : memref<3x345xf32, #tpu.memory_space<smem>>
    %1446 = vector.broadcast %1445 : f32 to vector<8x256xf32>
    %1447 = arith.mulf %1443, %1446 : vector<8x256xf32>
    %1448 = arith.addf %1442, %1447 : vector<8x256xf32>
    %1449 = vector.extract_strided_slice %1430 {offsets = [3, 0], sizes = [8, 256], strides = [1, 1]} : vector<12x256xf32> to vector<8x256xf32>
    %1450 = arith.index_cast %arg0 : i32 to index
    %c298 = arith.constant 298 : index
    %1451 = memref.load %arg1[%1450, %c298] : memref<3x345xf32, #tpu.memory_space<smem>>
    %1452 = vector.broadcast %1451 : f32 to vector<8x256xf32>
    %1453 = arith.mulf %1449, %1452 : vector<8x256xf32>
    %1454 = arith.addf %1448, %1453 : vector<8x256xf32>
    %1455 = vector.extract_strided_slice %1430 {offsets = [4, 0], sizes = [8, 256], strides = [1, 1]} : vector<12x256xf32> to vector<8x256xf32>
    %1456 = arith.index_cast %arg0 : i32 to index
    %c323 = arith.constant 323 : index
    %1457 = memref.load %arg1[%1456, %c323] : memref<3x345xf32, #tpu.memory_space<smem>>
    %1458 = vector.broadcast %1457 : f32 to vector<8x256xf32>
    %1459 = arith.mulf %1455, %1458 : vector<8x256xf32>
    %1460 = arith.addf %1454, %1459 : vector<8x256xf32>
    %c14_i32 = arith.constant 14 : i32
    %1461 = tpu.dynamic_rotate %1305 by %c14_i32 dim 1 : vector<12x256xf32>, i32 -> vector<12x256xf32>
    %1462 = vector.extract_strided_slice %1461 {offsets = [0, 0], sizes = [8, 256], strides = [1, 1]} : vector<12x256xf32> to vector<8x256xf32>
    %1463 = arith.index_cast %arg0 : i32 to index
    %c224 = arith.constant 224 : index
    %1464 = memref.load %arg1[%1463, %c224] : memref<3x345xf32, #tpu.memory_space<smem>>
    %1465 = vector.broadcast %1464 : f32 to vector<8x256xf32>
    %1466 = arith.mulf %1462, %1465 : vector<8x256xf32>
    %1467 = arith.addf %1460, %1466 : vector<8x256xf32>
    %1468 = vector.extract_strided_slice %1461 {offsets = [1, 0], sizes = [8, 256], strides = [1, 1]} : vector<12x256xf32> to vector<8x256xf32>
    %1469 = arith.index_cast %arg0 : i32 to index
    %c249 = arith.constant 249 : index
    %1470 = memref.load %arg1[%1469, %c249] : memref<3x345xf32, #tpu.memory_space<smem>>
    %1471 = vector.broadcast %1470 : f32 to vector<8x256xf32>
    %1472 = arith.mulf %1468, %1471 : vector<8x256xf32>
    %1473 = arith.addf %1467, %1472 : vector<8x256xf32>
    %1474 = vector.extract_strided_slice %1461 {offsets = [2, 0], sizes = [8, 256], strides = [1, 1]} : vector<12x256xf32> to vector<8x256xf32>
    %1475 = arith.index_cast %arg0 : i32 to index
    %c274 = arith.constant 274 : index
    %1476 = memref.load %arg1[%1475, %c274] : memref<3x345xf32, #tpu.memory_space<smem>>
    %1477 = vector.broadcast %1476 : f32 to vector<8x256xf32>
    %1478 = arith.mulf %1474, %1477 : vector<8x256xf32>
    %1479 = arith.addf %1473, %1478 : vector<8x256xf32>
    %1480 = vector.extract_strided_slice %1461 {offsets = [3, 0], sizes = [8, 256], strides = [1, 1]} : vector<12x256xf32> to vector<8x256xf32>
    %1481 = arith.index_cast %arg0 : i32 to index
    %c299 = arith.constant 299 : index
    %1482 = memref.load %arg1[%1481, %c299] : memref<3x345xf32, #tpu.memory_space<smem>>
    %1483 = vector.broadcast %1482 : f32 to vector<8x256xf32>
    %1484 = arith.mulf %1480, %1483 : vector<8x256xf32>
    %1485 = arith.addf %1479, %1484 : vector<8x256xf32>
    %1486 = vector.extract_strided_slice %1461 {offsets = [4, 0], sizes = [8, 256], strides = [1, 1]} : vector<12x256xf32> to vector<8x256xf32>
    %1487 = arith.index_cast %arg0 : i32 to index
    %c324 = arith.constant 324 : index
    %1488 = memref.load %arg1[%1487, %c324] : memref<3x345xf32, #tpu.memory_space<smem>>
    %1489 = vector.broadcast %1488 : f32 to vector<8x256xf32>
    %1490 = arith.mulf %1486, %1489 : vector<8x256xf32>
    %1491 = arith.addf %1485, %1490 : vector<8x256xf32>
    %c13_i32_77 = arith.constant 13 : i32
    %1492 = tpu.dynamic_rotate %1305 by %c13_i32_77 dim 1 : vector<12x256xf32>, i32 -> vector<12x256xf32>
    %1493 = vector.extract_strided_slice %1492 {offsets = [0, 0], sizes = [8, 256], strides = [1, 1]} : vector<12x256xf32> to vector<8x256xf32>
    %1494 = arith.index_cast %arg0 : i32 to index
    %c225 = arith.constant 225 : index
    %1495 = memref.load %arg1[%1494, %c225] : memref<3x345xf32, #tpu.memory_space<smem>>
    %1496 = vector.broadcast %1495 : f32 to vector<8x256xf32>
    %1497 = arith.mulf %1493, %1496 : vector<8x256xf32>
    %1498 = arith.addf %1491, %1497 : vector<8x256xf32>
    %1499 = vector.extract_strided_slice %1492 {offsets = [1, 0], sizes = [8, 256], strides = [1, 1]} : vector<12x256xf32> to vector<8x256xf32>
    %1500 = arith.index_cast %arg0 : i32 to index
    %c250 = arith.constant 250 : index
    %1501 = memref.load %arg1[%1500, %c250] : memref<3x345xf32, #tpu.memory_space<smem>>
    %1502 = vector.broadcast %1501 : f32 to vector<8x256xf32>
    %1503 = arith.mulf %1499, %1502 : vector<8x256xf32>
    %1504 = arith.addf %1498, %1503 : vector<8x256xf32>
    %1505 = vector.extract_strided_slice %1492 {offsets = [2, 0], sizes = [8, 256], strides = [1, 1]} : vector<12x256xf32> to vector<8x256xf32>
    %1506 = arith.index_cast %arg0 : i32 to index
    %c275 = arith.constant 275 : index
    %1507 = memref.load %arg1[%1506, %c275] : memref<3x345xf32, #tpu.memory_space<smem>>
    %1508 = vector.broadcast %1507 : f32 to vector<8x256xf32>
    %1509 = arith.mulf %1505, %1508 : vector<8x256xf32>
    %1510 = arith.addf %1504, %1509 : vector<8x256xf32>
    %1511 = vector.extract_strided_slice %1492 {offsets = [3, 0], sizes = [8, 256], strides = [1, 1]} : vector<12x256xf32> to vector<8x256xf32>
    %1512 = arith.index_cast %arg0 : i32 to index
    %c300 = arith.constant 300 : index
    %1513 = memref.load %arg1[%1512, %c300] : memref<3x345xf32, #tpu.memory_space<smem>>
    %1514 = vector.broadcast %1513 : f32 to vector<8x256xf32>
    %1515 = arith.mulf %1511, %1514 : vector<8x256xf32>
    %1516 = arith.addf %1510, %1515 : vector<8x256xf32>
    %1517 = vector.extract_strided_slice %1492 {offsets = [4, 0], sizes = [8, 256], strides = [1, 1]} : vector<12x256xf32> to vector<8x256xf32>
    %1518 = arith.index_cast %arg0 : i32 to index
    %c325 = arith.constant 325 : index
    %1519 = memref.load %arg1[%1518, %c325] : memref<3x345xf32, #tpu.memory_space<smem>>
    %1520 = vector.broadcast %1519 : f32 to vector<8x256xf32>
    %1521 = arith.mulf %1517, %1520 : vector<8x256xf32>
    %1522 = arith.addf %1516, %1521 : vector<8x256xf32>
    %c12_i32_78 = arith.constant 12 : i32
    %1523 = tpu.dynamic_rotate %1305 by %c12_i32_78 dim 1 : vector<12x256xf32>, i32 -> vector<12x256xf32>
    %1524 = vector.extract_strided_slice %1523 {offsets = [0, 0], sizes = [8, 256], strides = [1, 1]} : vector<12x256xf32> to vector<8x256xf32>
    %1525 = arith.index_cast %arg0 : i32 to index
    %c226 = arith.constant 226 : index
    %1526 = memref.load %arg1[%1525, %c226] : memref<3x345xf32, #tpu.memory_space<smem>>
    %1527 = vector.broadcast %1526 : f32 to vector<8x256xf32>
    %1528 = arith.mulf %1524, %1527 : vector<8x256xf32>
    %1529 = arith.addf %1522, %1528 : vector<8x256xf32>
    %1530 = vector.extract_strided_slice %1523 {offsets = [1, 0], sizes = [8, 256], strides = [1, 1]} : vector<12x256xf32> to vector<8x256xf32>
    %1531 = arith.index_cast %arg0 : i32 to index
    %c251 = arith.constant 251 : index
    %1532 = memref.load %arg1[%1531, %c251] : memref<3x345xf32, #tpu.memory_space<smem>>
    %1533 = vector.broadcast %1532 : f32 to vector<8x256xf32>
    %1534 = arith.mulf %1530, %1533 : vector<8x256xf32>
    %1535 = arith.addf %1529, %1534 : vector<8x256xf32>
    %1536 = vector.extract_strided_slice %1523 {offsets = [2, 0], sizes = [8, 256], strides = [1, 1]} : vector<12x256xf32> to vector<8x256xf32>
    %1537 = arith.index_cast %arg0 : i32 to index
    %c276 = arith.constant 276 : index
    %1538 = memref.load %arg1[%1537, %c276] : memref<3x345xf32, #tpu.memory_space<smem>>
    %1539 = vector.broadcast %1538 : f32 to vector<8x256xf32>
    %1540 = arith.mulf %1536, %1539 : vector<8x256xf32>
    %1541 = arith.addf %1535, %1540 : vector<8x256xf32>
    %1542 = vector.extract_strided_slice %1523 {offsets = [3, 0], sizes = [8, 256], strides = [1, 1]} : vector<12x256xf32> to vector<8x256xf32>
    %1543 = arith.index_cast %arg0 : i32 to index
    %c301 = arith.constant 301 : index
    %1544 = memref.load %arg1[%1543, %c301] : memref<3x345xf32, #tpu.memory_space<smem>>
    %1545 = vector.broadcast %1544 : f32 to vector<8x256xf32>
    %1546 = arith.mulf %1542, %1545 : vector<8x256xf32>
    %1547 = arith.addf %1541, %1546 : vector<8x256xf32>
    %1548 = vector.extract_strided_slice %1523 {offsets = [4, 0], sizes = [8, 256], strides = [1, 1]} : vector<12x256xf32> to vector<8x256xf32>
    %1549 = arith.index_cast %arg0 : i32 to index
    %c326 = arith.constant 326 : index
    %1550 = memref.load %arg1[%1549, %c326] : memref<3x345xf32, #tpu.memory_space<smem>>
    %1551 = vector.broadcast %1550 : f32 to vector<8x256xf32>
    %1552 = arith.mulf %1548, %1551 : vector<8x256xf32>
    %1553 = arith.addf %1547, %1552 : vector<8x256xf32>
    %c11_i32_79 = arith.constant 11 : i32
    %1554 = tpu.dynamic_rotate %1305 by %c11_i32_79 dim 1 : vector<12x256xf32>, i32 -> vector<12x256xf32>
    %1555 = vector.extract_strided_slice %1554 {offsets = [0, 0], sizes = [8, 256], strides = [1, 1]} : vector<12x256xf32> to vector<8x256xf32>
    %1556 = arith.index_cast %arg0 : i32 to index
    %c227 = arith.constant 227 : index
    %1557 = memref.load %arg1[%1556, %c227] : memref<3x345xf32, #tpu.memory_space<smem>>
    %1558 = vector.broadcast %1557 : f32 to vector<8x256xf32>
    %1559 = arith.mulf %1555, %1558 : vector<8x256xf32>
    %1560 = arith.addf %1553, %1559 : vector<8x256xf32>
    %1561 = vector.extract_strided_slice %1554 {offsets = [1, 0], sizes = [8, 256], strides = [1, 1]} : vector<12x256xf32> to vector<8x256xf32>
    %1562 = arith.index_cast %arg0 : i32 to index
    %c252 = arith.constant 252 : index
    %1563 = memref.load %arg1[%1562, %c252] : memref<3x345xf32, #tpu.memory_space<smem>>
    %1564 = vector.broadcast %1563 : f32 to vector<8x256xf32>
    %1565 = arith.mulf %1561, %1564 : vector<8x256xf32>
    %1566 = arith.addf %1560, %1565 : vector<8x256xf32>
    %1567 = vector.extract_strided_slice %1554 {offsets = [2, 0], sizes = [8, 256], strides = [1, 1]} : vector<12x256xf32> to vector<8x256xf32>
    %1568 = arith.index_cast %arg0 : i32 to index
    %c277 = arith.constant 277 : index
    %1569 = memref.load %arg1[%1568, %c277] : memref<3x345xf32, #tpu.memory_space<smem>>
    %1570 = vector.broadcast %1569 : f32 to vector<8x256xf32>
    %1571 = arith.mulf %1567, %1570 : vector<8x256xf32>
    %1572 = arith.addf %1566, %1571 : vector<8x256xf32>
    %1573 = vector.extract_strided_slice %1554 {offsets = [3, 0], sizes = [8, 256], strides = [1, 1]} : vector<12x256xf32> to vector<8x256xf32>
    %1574 = arith.index_cast %arg0 : i32 to index
    %c302 = arith.constant 302 : index
    %1575 = memref.load %arg1[%1574, %c302] : memref<3x345xf32, #tpu.memory_space<smem>>
    %1576 = vector.broadcast %1575 : f32 to vector<8x256xf32>
    %1577 = arith.mulf %1573, %1576 : vector<8x256xf32>
    %1578 = arith.addf %1572, %1577 : vector<8x256xf32>
    %1579 = vector.extract_strided_slice %1554 {offsets = [4, 0], sizes = [8, 256], strides = [1, 1]} : vector<12x256xf32> to vector<8x256xf32>
    %1580 = arith.index_cast %arg0 : i32 to index
    %c327 = arith.constant 327 : index
    %1581 = memref.load %arg1[%1580, %c327] : memref<3x345xf32, #tpu.memory_space<smem>>
    %1582 = vector.broadcast %1581 : f32 to vector<8x256xf32>
    %1583 = arith.mulf %1579, %1582 : vector<8x256xf32>
    %1584 = arith.addf %1578, %1583 : vector<8x256xf32>
    %c10_i32 = arith.constant 10 : i32
    %1585 = tpu.dynamic_rotate %1305 by %c10_i32 dim 1 : vector<12x256xf32>, i32 -> vector<12x256xf32>
    %1586 = vector.extract_strided_slice %1585 {offsets = [0, 0], sizes = [8, 256], strides = [1, 1]} : vector<12x256xf32> to vector<8x256xf32>
    %1587 = arith.index_cast %arg0 : i32 to index
    %c228 = arith.constant 228 : index
    %1588 = memref.load %arg1[%1587, %c228] : memref<3x345xf32, #tpu.memory_space<smem>>
    %1589 = vector.broadcast %1588 : f32 to vector<8x256xf32>
    %1590 = arith.mulf %1586, %1589 : vector<8x256xf32>
    %1591 = arith.addf %1584, %1590 : vector<8x256xf32>
    %1592 = vector.extract_strided_slice %1585 {offsets = [1, 0], sizes = [8, 256], strides = [1, 1]} : vector<12x256xf32> to vector<8x256xf32>
    %1593 = arith.index_cast %arg0 : i32 to index
    %c253 = arith.constant 253 : index
    %1594 = memref.load %arg1[%1593, %c253] : memref<3x345xf32, #tpu.memory_space<smem>>
    %1595 = vector.broadcast %1594 : f32 to vector<8x256xf32>
    %1596 = arith.mulf %1592, %1595 : vector<8x256xf32>
    %1597 = arith.addf %1591, %1596 : vector<8x256xf32>
    %1598 = vector.extract_strided_slice %1585 {offsets = [2, 0], sizes = [8, 256], strides = [1, 1]} : vector<12x256xf32> to vector<8x256xf32>
    %1599 = arith.index_cast %arg0 : i32 to index
    %c278 = arith.constant 278 : index
    %1600 = memref.load %arg1[%1599, %c278] : memref<3x345xf32, #tpu.memory_space<smem>>
    %1601 = vector.broadcast %1600 : f32 to vector<8x256xf32>
    %1602 = arith.mulf %1598, %1601 : vector<8x256xf32>
    %1603 = arith.addf %1597, %1602 : vector<8x256xf32>
    %1604 = vector.extract_strided_slice %1585 {offsets = [3, 0], sizes = [8, 256], strides = [1, 1]} : vector<12x256xf32> to vector<8x256xf32>
    %1605 = arith.index_cast %arg0 : i32 to index
    %c303 = arith.constant 303 : index
    %1606 = memref.load %arg1[%1605, %c303] : memref<3x345xf32, #tpu.memory_space<smem>>
    %1607 = vector.broadcast %1606 : f32 to vector<8x256xf32>
    %1608 = arith.mulf %1604, %1607 : vector<8x256xf32>
    %1609 = arith.addf %1603, %1608 : vector<8x256xf32>
    %1610 = vector.extract_strided_slice %1585 {offsets = [4, 0], sizes = [8, 256], strides = [1, 1]} : vector<12x256xf32> to vector<8x256xf32>
    %1611 = arith.index_cast %arg0 : i32 to index
    %c328 = arith.constant 328 : index
    %1612 = memref.load %arg1[%1611, %c328] : memref<3x345xf32, #tpu.memory_space<smem>>
    %1613 = vector.broadcast %1612 : f32 to vector<8x256xf32>
    %1614 = arith.mulf %1610, %1613 : vector<8x256xf32>
    %1615 = arith.addf %1609, %1614 : vector<8x256xf32>
    %c2_i32 = arith.constant 2 : i32
    %1616 = tpu.dynamic_rotate %1305 by %c2_i32 dim 1 : vector<12x256xf32>, i32 -> vector<12x256xf32>
    %1617 = vector.extract_strided_slice %1616 {offsets = [0, 0], sizes = [8, 256], strides = [1, 1]} : vector<12x256xf32> to vector<8x256xf32>
    %1618 = arith.index_cast %arg0 : i32 to index
    %c229 = arith.constant 229 : index
    %1619 = memref.load %arg1[%1618, %c229] : memref<3x345xf32, #tpu.memory_space<smem>>
    %1620 = vector.broadcast %1619 : f32 to vector<8x256xf32>
    %1621 = arith.mulf %1617, %1620 : vector<8x256xf32>
    %1622 = arith.addf %1615, %1621 : vector<8x256xf32>
    %1623 = vector.extract_strided_slice %1616 {offsets = [1, 0], sizes = [8, 256], strides = [1, 1]} : vector<12x256xf32> to vector<8x256xf32>
    %1624 = arith.index_cast %arg0 : i32 to index
    %c254 = arith.constant 254 : index
    %1625 = memref.load %arg1[%1624, %c254] : memref<3x345xf32, #tpu.memory_space<smem>>
    %1626 = vector.broadcast %1625 : f32 to vector<8x256xf32>
    %1627 = arith.mulf %1623, %1626 : vector<8x256xf32>
    %1628 = arith.addf %1622, %1627 : vector<8x256xf32>
    %1629 = vector.extract_strided_slice %1616 {offsets = [2, 0], sizes = [8, 256], strides = [1, 1]} : vector<12x256xf32> to vector<8x256xf32>
    %1630 = arith.index_cast %arg0 : i32 to index
    %c279 = arith.constant 279 : index
    %1631 = memref.load %arg1[%1630, %c279] : memref<3x345xf32, #tpu.memory_space<smem>>
    %1632 = vector.broadcast %1631 : f32 to vector<8x256xf32>
    %1633 = arith.mulf %1629, %1632 : vector<8x256xf32>
    %1634 = arith.addf %1628, %1633 : vector<8x256xf32>
    %1635 = vector.extract_strided_slice %1616 {offsets = [3, 0], sizes = [8, 256], strides = [1, 1]} : vector<12x256xf32> to vector<8x256xf32>
    %1636 = arith.index_cast %arg0 : i32 to index
    %c304 = arith.constant 304 : index
    %1637 = memref.load %arg1[%1636, %c304] : memref<3x345xf32, #tpu.memory_space<smem>>
    %1638 = vector.broadcast %1637 : f32 to vector<8x256xf32>
    %1639 = arith.mulf %1635, %1638 : vector<8x256xf32>
    %1640 = arith.addf %1634, %1639 : vector<8x256xf32>
    %1641 = vector.extract_strided_slice %1616 {offsets = [4, 0], sizes = [8, 256], strides = [1, 1]} : vector<12x256xf32> to vector<8x256xf32>
    %1642 = arith.index_cast %arg0 : i32 to index
    %c329 = arith.constant 329 : index
    %1643 = memref.load %arg1[%1642, %c329] : memref<3x345xf32, #tpu.memory_space<smem>>
    %1644 = vector.broadcast %1643 : f32 to vector<8x256xf32>
    %1645 = arith.mulf %1641, %1644 : vector<8x256xf32>
    %1646 = arith.addf %1640, %1645 : vector<8x256xf32>
    %c1_i32_80 = arith.constant 1 : i32
    %1647 = tpu.dynamic_rotate %1305 by %c1_i32_80 dim 1 : vector<12x256xf32>, i32 -> vector<12x256xf32>
    %1648 = vector.extract_strided_slice %1647 {offsets = [0, 0], sizes = [8, 256], strides = [1, 1]} : vector<12x256xf32> to vector<8x256xf32>
    %1649 = arith.index_cast %arg0 : i32 to index
    %c230 = arith.constant 230 : index
    %1650 = memref.load %arg1[%1649, %c230] : memref<3x345xf32, #tpu.memory_space<smem>>
    %1651 = vector.broadcast %1650 : f32 to vector<8x256xf32>
    %1652 = arith.mulf %1648, %1651 : vector<8x256xf32>
    %1653 = arith.addf %1646, %1652 : vector<8x256xf32>
    %1654 = vector.extract_strided_slice %1647 {offsets = [1, 0], sizes = [8, 256], strides = [1, 1]} : vector<12x256xf32> to vector<8x256xf32>
    %1655 = arith.index_cast %arg0 : i32 to index
    %c255 = arith.constant 255 : index
    %1656 = memref.load %arg1[%1655, %c255] : memref<3x345xf32, #tpu.memory_space<smem>>
    %1657 = vector.broadcast %1656 : f32 to vector<8x256xf32>
    %1658 = arith.mulf %1654, %1657 : vector<8x256xf32>
    %1659 = arith.addf %1653, %1658 : vector<8x256xf32>
    %1660 = vector.extract_strided_slice %1647 {offsets = [2, 0], sizes = [8, 256], strides = [1, 1]} : vector<12x256xf32> to vector<8x256xf32>
    %1661 = arith.index_cast %arg0 : i32 to index
    %c280 = arith.constant 280 : index
    %1662 = memref.load %arg1[%1661, %c280] : memref<3x345xf32, #tpu.memory_space<smem>>
    %1663 = vector.broadcast %1662 : f32 to vector<8x256xf32>
    %1664 = arith.mulf %1660, %1663 : vector<8x256xf32>
    %1665 = arith.addf %1659, %1664 : vector<8x256xf32>
    %1666 = vector.extract_strided_slice %1647 {offsets = [3, 0], sizes = [8, 256], strides = [1, 1]} : vector<12x256xf32> to vector<8x256xf32>
    %1667 = arith.index_cast %arg0 : i32 to index
    %c305 = arith.constant 305 : index
    %1668 = memref.load %arg1[%1667, %c305] : memref<3x345xf32, #tpu.memory_space<smem>>
    %1669 = vector.broadcast %1668 : f32 to vector<8x256xf32>
    %1670 = arith.mulf %1666, %1669 : vector<8x256xf32>
    %1671 = arith.addf %1665, %1670 : vector<8x256xf32>
    %1672 = vector.extract_strided_slice %1647 {offsets = [4, 0], sizes = [8, 256], strides = [1, 1]} : vector<12x256xf32> to vector<8x256xf32>
    %1673 = arith.index_cast %arg0 : i32 to index
    %c330 = arith.constant 330 : index
    %1674 = memref.load %arg1[%1673, %c330] : memref<3x345xf32, #tpu.memory_space<smem>>
    %1675 = vector.broadcast %1674 : f32 to vector<8x256xf32>
    %1676 = arith.mulf %1672, %1675 : vector<8x256xf32>
    %1677 = arith.addf %1671, %1676 : vector<8x256xf32>
    %1678 = vector.extract_strided_slice %1305 {offsets = [0, 0], sizes = [8, 256], strides = [1, 1]} : vector<12x256xf32> to vector<8x256xf32>
    %1679 = arith.index_cast %arg0 : i32 to index
    %c231 = arith.constant 231 : index
    %1680 = memref.load %arg1[%1679, %c231] : memref<3x345xf32, #tpu.memory_space<smem>>
    %1681 = vector.broadcast %1680 : f32 to vector<8x256xf32>
    %1682 = arith.mulf %1678, %1681 : vector<8x256xf32>
    %1683 = arith.addf %1677, %1682 : vector<8x256xf32>
    %1684 = vector.extract_strided_slice %1305 {offsets = [1, 0], sizes = [8, 256], strides = [1, 1]} : vector<12x256xf32> to vector<8x256xf32>
    %1685 = arith.index_cast %arg0 : i32 to index
    %c256 = arith.constant 256 : index
    %1686 = memref.load %arg1[%1685, %c256] : memref<3x345xf32, #tpu.memory_space<smem>>
    %1687 = vector.broadcast %1686 : f32 to vector<8x256xf32>
    %1688 = arith.mulf %1684, %1687 : vector<8x256xf32>
    %1689 = arith.addf %1683, %1688 : vector<8x256xf32>
    %1690 = vector.extract_strided_slice %1305 {offsets = [2, 0], sizes = [8, 256], strides = [1, 1]} : vector<12x256xf32> to vector<8x256xf32>
    %1691 = arith.index_cast %arg0 : i32 to index
    %c281 = arith.constant 281 : index
    %1692 = memref.load %arg1[%1691, %c281] : memref<3x345xf32, #tpu.memory_space<smem>>
    %1693 = vector.broadcast %1692 : f32 to vector<8x256xf32>
    %1694 = arith.mulf %1690, %1693 : vector<8x256xf32>
    %1695 = arith.addf %1689, %1694 : vector<8x256xf32>
    %1696 = vector.extract_strided_slice %1305 {offsets = [3, 0], sizes = [8, 256], strides = [1, 1]} : vector<12x256xf32> to vector<8x256xf32>
    %1697 = arith.index_cast %arg0 : i32 to index
    %c306 = arith.constant 306 : index
    %1698 = memref.load %arg1[%1697, %c306] : memref<3x345xf32, #tpu.memory_space<smem>>
    %1699 = vector.broadcast %1698 : f32 to vector<8x256xf32>
    %1700 = arith.mulf %1696, %1699 : vector<8x256xf32>
    %1701 = arith.addf %1695, %1700 : vector<8x256xf32>
    %1702 = vector.extract_strided_slice %1305 {offsets = [4, 0], sizes = [8, 256], strides = [1, 1]} : vector<12x256xf32> to vector<8x256xf32>
    %1703 = arith.index_cast %arg0 : i32 to index
    %c331 = arith.constant 331 : index
    %1704 = memref.load %arg1[%1703, %c331] : memref<3x345xf32, #tpu.memory_space<smem>>
    %1705 = vector.broadcast %1704 : f32 to vector<8x256xf32>
    %1706 = arith.mulf %1702, %1705 : vector<8x256xf32>
    %1707 = arith.addf %1701, %1706 : vector<8x256xf32>
    %c255_i32_81 = arith.constant 255 : i32
    %1708 = tpu.dynamic_rotate %1305 by %c255_i32_81 dim 1 : vector<12x256xf32>, i32 -> vector<12x256xf32>
    %1709 = vector.extract_strided_slice %1708 {offsets = [0, 0], sizes = [8, 256], strides = [1, 1]} : vector<12x256xf32> to vector<8x256xf32>
    %1710 = arith.index_cast %arg0 : i32 to index
    %c232 = arith.constant 232 : index
    %1711 = memref.load %arg1[%1710, %c232] : memref<3x345xf32, #tpu.memory_space<smem>>
    %1712 = vector.broadcast %1711 : f32 to vector<8x256xf32>
    %1713 = arith.mulf %1709, %1712 : vector<8x256xf32>
    %1714 = arith.addf %1707, %1713 : vector<8x256xf32>
    %1715 = vector.extract_strided_slice %1708 {offsets = [1, 0], sizes = [8, 256], strides = [1, 1]} : vector<12x256xf32> to vector<8x256xf32>
    %1716 = arith.index_cast %arg0 : i32 to index
    %c257 = arith.constant 257 : index
    %1717 = memref.load %arg1[%1716, %c257] : memref<3x345xf32, #tpu.memory_space<smem>>
    %1718 = vector.broadcast %1717 : f32 to vector<8x256xf32>
    %1719 = arith.mulf %1715, %1718 : vector<8x256xf32>
    %1720 = arith.addf %1714, %1719 : vector<8x256xf32>
    %1721 = vector.extract_strided_slice %1708 {offsets = [2, 0], sizes = [8, 256], strides = [1, 1]} : vector<12x256xf32> to vector<8x256xf32>
    %1722 = arith.index_cast %arg0 : i32 to index
    %c282 = arith.constant 282 : index
    %1723 = memref.load %arg1[%1722, %c282] : memref<3x345xf32, #tpu.memory_space<smem>>
    %1724 = vector.broadcast %1723 : f32 to vector<8x256xf32>
    %1725 = arith.mulf %1721, %1724 : vector<8x256xf32>
    %1726 = arith.addf %1720, %1725 : vector<8x256xf32>
    %1727 = vector.extract_strided_slice %1708 {offsets = [3, 0], sizes = [8, 256], strides = [1, 1]} : vector<12x256xf32> to vector<8x256xf32>
    %1728 = arith.index_cast %arg0 : i32 to index
    %c307 = arith.constant 307 : index
    %1729 = memref.load %arg1[%1728, %c307] : memref<3x345xf32, #tpu.memory_space<smem>>
    %1730 = vector.broadcast %1729 : f32 to vector<8x256xf32>
    %1731 = arith.mulf %1727, %1730 : vector<8x256xf32>
    %1732 = arith.addf %1726, %1731 : vector<8x256xf32>
    %1733 = vector.extract_strided_slice %1708 {offsets = [4, 0], sizes = [8, 256], strides = [1, 1]} : vector<12x256xf32> to vector<8x256xf32>
    %1734 = arith.index_cast %arg0 : i32 to index
    %c332 = arith.constant 332 : index
    %1735 = memref.load %arg1[%1734, %c332] : memref<3x345xf32, #tpu.memory_space<smem>>
    %1736 = vector.broadcast %1735 : f32 to vector<8x256xf32>
    %1737 = arith.mulf %1733, %1736 : vector<8x256xf32>
    %1738 = arith.addf %1732, %1737 : vector<8x256xf32>
    %c254_i32 = arith.constant 254 : i32
    %1739 = tpu.dynamic_rotate %1305 by %c254_i32 dim 1 : vector<12x256xf32>, i32 -> vector<12x256xf32>
    %1740 = vector.extract_strided_slice %1739 {offsets = [0, 0], sizes = [8, 256], strides = [1, 1]} : vector<12x256xf32> to vector<8x256xf32>
    %1741 = arith.index_cast %arg0 : i32 to index
    %c233 = arith.constant 233 : index
    %1742 = memref.load %arg1[%1741, %c233] : memref<3x345xf32, #tpu.memory_space<smem>>
    %1743 = vector.broadcast %1742 : f32 to vector<8x256xf32>
    %1744 = arith.mulf %1740, %1743 : vector<8x256xf32>
    %1745 = arith.addf %1738, %1744 : vector<8x256xf32>
    %1746 = vector.extract_strided_slice %1739 {offsets = [1, 0], sizes = [8, 256], strides = [1, 1]} : vector<12x256xf32> to vector<8x256xf32>
    %1747 = arith.index_cast %arg0 : i32 to index
    %c258 = arith.constant 258 : index
    %1748 = memref.load %arg1[%1747, %c258] : memref<3x345xf32, #tpu.memory_space<smem>>
    %1749 = vector.broadcast %1748 : f32 to vector<8x256xf32>
    %1750 = arith.mulf %1746, %1749 : vector<8x256xf32>
    %1751 = arith.addf %1745, %1750 : vector<8x256xf32>
    %1752 = vector.extract_strided_slice %1739 {offsets = [2, 0], sizes = [8, 256], strides = [1, 1]} : vector<12x256xf32> to vector<8x256xf32>
    %1753 = arith.index_cast %arg0 : i32 to index
    %c283 = arith.constant 283 : index
    %1754 = memref.load %arg1[%1753, %c283] : memref<3x345xf32, #tpu.memory_space<smem>>
    %1755 = vector.broadcast %1754 : f32 to vector<8x256xf32>
    %1756 = arith.mulf %1752, %1755 : vector<8x256xf32>
    %1757 = arith.addf %1751, %1756 : vector<8x256xf32>
    %1758 = vector.extract_strided_slice %1739 {offsets = [3, 0], sizes = [8, 256], strides = [1, 1]} : vector<12x256xf32> to vector<8x256xf32>
    %1759 = arith.index_cast %arg0 : i32 to index
    %c308 = arith.constant 308 : index
    %1760 = memref.load %arg1[%1759, %c308] : memref<3x345xf32, #tpu.memory_space<smem>>
    %1761 = vector.broadcast %1760 : f32 to vector<8x256xf32>
    %1762 = arith.mulf %1758, %1761 : vector<8x256xf32>
    %1763 = arith.addf %1757, %1762 : vector<8x256xf32>
    %1764 = vector.extract_strided_slice %1739 {offsets = [4, 0], sizes = [8, 256], strides = [1, 1]} : vector<12x256xf32> to vector<8x256xf32>
    %1765 = arith.index_cast %arg0 : i32 to index
    %c333 = arith.constant 333 : index
    %1766 = memref.load %arg1[%1765, %c333] : memref<3x345xf32, #tpu.memory_space<smem>>
    %1767 = vector.broadcast %1766 : f32 to vector<8x256xf32>
    %1768 = arith.mulf %1764, %1767 : vector<8x256xf32>
    %1769 = arith.addf %1763, %1768 : vector<8x256xf32>
    %c246_i32 = arith.constant 246 : i32
    %1770 = tpu.dynamic_rotate %1305 by %c246_i32 dim 1 : vector<12x256xf32>, i32 -> vector<12x256xf32>
    %1771 = vector.extract_strided_slice %1770 {offsets = [0, 0], sizes = [8, 256], strides = [1, 1]} : vector<12x256xf32> to vector<8x256xf32>
    %1772 = arith.index_cast %arg0 : i32 to index
    %c234 = arith.constant 234 : index
    %1773 = memref.load %arg1[%1772, %c234] : memref<3x345xf32, #tpu.memory_space<smem>>
    %1774 = vector.broadcast %1773 : f32 to vector<8x256xf32>
    %1775 = arith.mulf %1771, %1774 : vector<8x256xf32>
    %1776 = arith.addf %1769, %1775 : vector<8x256xf32>
    %1777 = vector.extract_strided_slice %1770 {offsets = [1, 0], sizes = [8, 256], strides = [1, 1]} : vector<12x256xf32> to vector<8x256xf32>
    %1778 = arith.index_cast %arg0 : i32 to index
    %c259 = arith.constant 259 : index
    %1779 = memref.load %arg1[%1778, %c259] : memref<3x345xf32, #tpu.memory_space<smem>>
    %1780 = vector.broadcast %1779 : f32 to vector<8x256xf32>
    %1781 = arith.mulf %1777, %1780 : vector<8x256xf32>
    %1782 = arith.addf %1776, %1781 : vector<8x256xf32>
    %1783 = vector.extract_strided_slice %1770 {offsets = [2, 0], sizes = [8, 256], strides = [1, 1]} : vector<12x256xf32> to vector<8x256xf32>
    %1784 = arith.index_cast %arg0 : i32 to index
    %c284 = arith.constant 284 : index
    %1785 = memref.load %arg1[%1784, %c284] : memref<3x345xf32, #tpu.memory_space<smem>>
    %1786 = vector.broadcast %1785 : f32 to vector<8x256xf32>
    %1787 = arith.mulf %1783, %1786 : vector<8x256xf32>
    %1788 = arith.addf %1782, %1787 : vector<8x256xf32>
    %1789 = vector.extract_strided_slice %1770 {offsets = [3, 0], sizes = [8, 256], strides = [1, 1]} : vector<12x256xf32> to vector<8x256xf32>
    %1790 = arith.index_cast %arg0 : i32 to index
    %c309 = arith.constant 309 : index
    %1791 = memref.load %arg1[%1790, %c309] : memref<3x345xf32, #tpu.memory_space<smem>>
    %1792 = vector.broadcast %1791 : f32 to vector<8x256xf32>
    %1793 = arith.mulf %1789, %1792 : vector<8x256xf32>
    %1794 = arith.addf %1788, %1793 : vector<8x256xf32>
    %1795 = vector.extract_strided_slice %1770 {offsets = [4, 0], sizes = [8, 256], strides = [1, 1]} : vector<12x256xf32> to vector<8x256xf32>
    %1796 = arith.index_cast %arg0 : i32 to index
    %c334 = arith.constant 334 : index
    %1797 = memref.load %arg1[%1796, %c334] : memref<3x345xf32, #tpu.memory_space<smem>>
    %1798 = vector.broadcast %1797 : f32 to vector<8x256xf32>
    %1799 = arith.mulf %1795, %1798 : vector<8x256xf32>
    %1800 = arith.addf %1794, %1799 : vector<8x256xf32>
    %c245_i32_82 = arith.constant 245 : i32
    %1801 = tpu.dynamic_rotate %1305 by %c245_i32_82 dim 1 : vector<12x256xf32>, i32 -> vector<12x256xf32>
    %1802 = vector.extract_strided_slice %1801 {offsets = [0, 0], sizes = [8, 256], strides = [1, 1]} : vector<12x256xf32> to vector<8x256xf32>
    %1803 = arith.index_cast %arg0 : i32 to index
    %c235 = arith.constant 235 : index
    %1804 = memref.load %arg1[%1803, %c235] : memref<3x345xf32, #tpu.memory_space<smem>>
    %1805 = vector.broadcast %1804 : f32 to vector<8x256xf32>
    %1806 = arith.mulf %1802, %1805 : vector<8x256xf32>
    %1807 = arith.addf %1800, %1806 : vector<8x256xf32>
    %1808 = vector.extract_strided_slice %1801 {offsets = [1, 0], sizes = [8, 256], strides = [1, 1]} : vector<12x256xf32> to vector<8x256xf32>
    %1809 = arith.index_cast %arg0 : i32 to index
    %c260 = arith.constant 260 : index
    %1810 = memref.load %arg1[%1809, %c260] : memref<3x345xf32, #tpu.memory_space<smem>>
    %1811 = vector.broadcast %1810 : f32 to vector<8x256xf32>
    %1812 = arith.mulf %1808, %1811 : vector<8x256xf32>
    %1813 = arith.addf %1807, %1812 : vector<8x256xf32>
    %1814 = vector.extract_strided_slice %1801 {offsets = [2, 0], sizes = [8, 256], strides = [1, 1]} : vector<12x256xf32> to vector<8x256xf32>
    %1815 = arith.index_cast %arg0 : i32 to index
    %c285 = arith.constant 285 : index
    %1816 = memref.load %arg1[%1815, %c285] : memref<3x345xf32, #tpu.memory_space<smem>>
    %1817 = vector.broadcast %1816 : f32 to vector<8x256xf32>
    %1818 = arith.mulf %1814, %1817 : vector<8x256xf32>
    %1819 = arith.addf %1813, %1818 : vector<8x256xf32>
    %1820 = vector.extract_strided_slice %1801 {offsets = [3, 0], sizes = [8, 256], strides = [1, 1]} : vector<12x256xf32> to vector<8x256xf32>
    %1821 = arith.index_cast %arg0 : i32 to index
    %c310 = arith.constant 310 : index
    %1822 = memref.load %arg1[%1821, %c310] : memref<3x345xf32, #tpu.memory_space<smem>>
    %1823 = vector.broadcast %1822 : f32 to vector<8x256xf32>
    %1824 = arith.mulf %1820, %1823 : vector<8x256xf32>
    %1825 = arith.addf %1819, %1824 : vector<8x256xf32>
    %1826 = vector.extract_strided_slice %1801 {offsets = [4, 0], sizes = [8, 256], strides = [1, 1]} : vector<12x256xf32> to vector<8x256xf32>
    %1827 = arith.index_cast %arg0 : i32 to index
    %c335 = arith.constant 335 : index
    %1828 = memref.load %arg1[%1827, %c335] : memref<3x345xf32, #tpu.memory_space<smem>>
    %1829 = vector.broadcast %1828 : f32 to vector<8x256xf32>
    %1830 = arith.mulf %1826, %1829 : vector<8x256xf32>
    %1831 = arith.addf %1825, %1830 : vector<8x256xf32>
    %c244_i32_83 = arith.constant 244 : i32
    %1832 = tpu.dynamic_rotate %1305 by %c244_i32_83 dim 1 : vector<12x256xf32>, i32 -> vector<12x256xf32>
    %1833 = vector.extract_strided_slice %1832 {offsets = [0, 0], sizes = [8, 256], strides = [1, 1]} : vector<12x256xf32> to vector<8x256xf32>
    %1834 = arith.index_cast %arg0 : i32 to index
    %c236 = arith.constant 236 : index
    %1835 = memref.load %arg1[%1834, %c236] : memref<3x345xf32, #tpu.memory_space<smem>>
    %1836 = vector.broadcast %1835 : f32 to vector<8x256xf32>
    %1837 = arith.mulf %1833, %1836 : vector<8x256xf32>
    %1838 = arith.addf %1831, %1837 : vector<8x256xf32>
    %1839 = vector.extract_strided_slice %1832 {offsets = [1, 0], sizes = [8, 256], strides = [1, 1]} : vector<12x256xf32> to vector<8x256xf32>
    %1840 = arith.index_cast %arg0 : i32 to index
    %c261 = arith.constant 261 : index
    %1841 = memref.load %arg1[%1840, %c261] : memref<3x345xf32, #tpu.memory_space<smem>>
    %1842 = vector.broadcast %1841 : f32 to vector<8x256xf32>
    %1843 = arith.mulf %1839, %1842 : vector<8x256xf32>
    %1844 = arith.addf %1838, %1843 : vector<8x256xf32>
    %1845 = vector.extract_strided_slice %1832 {offsets = [2, 0], sizes = [8, 256], strides = [1, 1]} : vector<12x256xf32> to vector<8x256xf32>
    %1846 = arith.index_cast %arg0 : i32 to index
    %c286 = arith.constant 286 : index
    %1847 = memref.load %arg1[%1846, %c286] : memref<3x345xf32, #tpu.memory_space<smem>>
    %1848 = vector.broadcast %1847 : f32 to vector<8x256xf32>
    %1849 = arith.mulf %1845, %1848 : vector<8x256xf32>
    %1850 = arith.addf %1844, %1849 : vector<8x256xf32>
    %1851 = vector.extract_strided_slice %1832 {offsets = [3, 0], sizes = [8, 256], strides = [1, 1]} : vector<12x256xf32> to vector<8x256xf32>
    %1852 = arith.index_cast %arg0 : i32 to index
    %c311 = arith.constant 311 : index
    %1853 = memref.load %arg1[%1852, %c311] : memref<3x345xf32, #tpu.memory_space<smem>>
    %1854 = vector.broadcast %1853 : f32 to vector<8x256xf32>
    %1855 = arith.mulf %1851, %1854 : vector<8x256xf32>
    %1856 = arith.addf %1850, %1855 : vector<8x256xf32>
    %1857 = vector.extract_strided_slice %1832 {offsets = [4, 0], sizes = [8, 256], strides = [1, 1]} : vector<12x256xf32> to vector<8x256xf32>
    %1858 = arith.index_cast %arg0 : i32 to index
    %c336 = arith.constant 336 : index
    %1859 = memref.load %arg1[%1858, %c336] : memref<3x345xf32, #tpu.memory_space<smem>>
    %1860 = vector.broadcast %1859 : f32 to vector<8x256xf32>
    %1861 = arith.mulf %1857, %1860 : vector<8x256xf32>
    %1862 = arith.addf %1856, %1861 : vector<8x256xf32>
    %c243_i32_84 = arith.constant 243 : i32
    %1863 = tpu.dynamic_rotate %1305 by %c243_i32_84 dim 1 : vector<12x256xf32>, i32 -> vector<12x256xf32>
    %1864 = vector.extract_strided_slice %1863 {offsets = [0, 0], sizes = [8, 256], strides = [1, 1]} : vector<12x256xf32> to vector<8x256xf32>
    %1865 = arith.index_cast %arg0 : i32 to index
    %c237 = arith.constant 237 : index
    %1866 = memref.load %arg1[%1865, %c237] : memref<3x345xf32, #tpu.memory_space<smem>>
    %1867 = vector.broadcast %1866 : f32 to vector<8x256xf32>
    %1868 = arith.mulf %1864, %1867 : vector<8x256xf32>
    %1869 = arith.addf %1862, %1868 : vector<8x256xf32>
    %1870 = vector.extract_strided_slice %1863 {offsets = [1, 0], sizes = [8, 256], strides = [1, 1]} : vector<12x256xf32> to vector<8x256xf32>
    %1871 = arith.index_cast %arg0 : i32 to index
    %c262 = arith.constant 262 : index
    %1872 = memref.load %arg1[%1871, %c262] : memref<3x345xf32, #tpu.memory_space<smem>>
    %1873 = vector.broadcast %1872 : f32 to vector<8x256xf32>
    %1874 = arith.mulf %1870, %1873 : vector<8x256xf32>
    %1875 = arith.addf %1869, %1874 : vector<8x256xf32>
    %1876 = vector.extract_strided_slice %1863 {offsets = [2, 0], sizes = [8, 256], strides = [1, 1]} : vector<12x256xf32> to vector<8x256xf32>
    %1877 = arith.index_cast %arg0 : i32 to index
    %c287 = arith.constant 287 : index
    %1878 = memref.load %arg1[%1877, %c287] : memref<3x345xf32, #tpu.memory_space<smem>>
    %1879 = vector.broadcast %1878 : f32 to vector<8x256xf32>
    %1880 = arith.mulf %1876, %1879 : vector<8x256xf32>
    %1881 = arith.addf %1875, %1880 : vector<8x256xf32>
    %1882 = vector.extract_strided_slice %1863 {offsets = [3, 0], sizes = [8, 256], strides = [1, 1]} : vector<12x256xf32> to vector<8x256xf32>
    %1883 = arith.index_cast %arg0 : i32 to index
    %c312 = arith.constant 312 : index
    %1884 = memref.load %arg1[%1883, %c312] : memref<3x345xf32, #tpu.memory_space<smem>>
    %1885 = vector.broadcast %1884 : f32 to vector<8x256xf32>
    %1886 = arith.mulf %1882, %1885 : vector<8x256xf32>
    %1887 = arith.addf %1881, %1886 : vector<8x256xf32>
    %1888 = vector.extract_strided_slice %1863 {offsets = [4, 0], sizes = [8, 256], strides = [1, 1]} : vector<12x256xf32> to vector<8x256xf32>
    %1889 = arith.index_cast %arg0 : i32 to index
    %c337 = arith.constant 337 : index
    %1890 = memref.load %arg1[%1889, %c337] : memref<3x345xf32, #tpu.memory_space<smem>>
    %1891 = vector.broadcast %1890 : f32 to vector<8x256xf32>
    %1892 = arith.mulf %1888, %1891 : vector<8x256xf32>
    %1893 = arith.addf %1887, %1892 : vector<8x256xf32>
    %c242_i32 = arith.constant 242 : i32
    %1894 = tpu.dynamic_rotate %1305 by %c242_i32 dim 1 : vector<12x256xf32>, i32 -> vector<12x256xf32>
    %1895 = vector.extract_strided_slice %1894 {offsets = [0, 0], sizes = [8, 256], strides = [1, 1]} : vector<12x256xf32> to vector<8x256xf32>
    %1896 = arith.index_cast %arg0 : i32 to index
    %c238 = arith.constant 238 : index
    %1897 = memref.load %arg1[%1896, %c238] : memref<3x345xf32, #tpu.memory_space<smem>>
    %1898 = vector.broadcast %1897 : f32 to vector<8x256xf32>
    %1899 = arith.mulf %1895, %1898 : vector<8x256xf32>
    %1900 = arith.addf %1893, %1899 : vector<8x256xf32>
    %1901 = vector.extract_strided_slice %1894 {offsets = [1, 0], sizes = [8, 256], strides = [1, 1]} : vector<12x256xf32> to vector<8x256xf32>
    %1902 = arith.index_cast %arg0 : i32 to index
    %c263 = arith.constant 263 : index
    %1903 = memref.load %arg1[%1902, %c263] : memref<3x345xf32, #tpu.memory_space<smem>>
    %1904 = vector.broadcast %1903 : f32 to vector<8x256xf32>
    %1905 = arith.mulf %1901, %1904 : vector<8x256xf32>
    %1906 = arith.addf %1900, %1905 : vector<8x256xf32>
    %1907 = vector.extract_strided_slice %1894 {offsets = [2, 0], sizes = [8, 256], strides = [1, 1]} : vector<12x256xf32> to vector<8x256xf32>
    %1908 = arith.index_cast %arg0 : i32 to index
    %c288 = arith.constant 288 : index
    %1909 = memref.load %arg1[%1908, %c288] : memref<3x345xf32, #tpu.memory_space<smem>>
    %1910 = vector.broadcast %1909 : f32 to vector<8x256xf32>
    %1911 = arith.mulf %1907, %1910 : vector<8x256xf32>
    %1912 = arith.addf %1906, %1911 : vector<8x256xf32>
    %1913 = vector.extract_strided_slice %1894 {offsets = [3, 0], sizes = [8, 256], strides = [1, 1]} : vector<12x256xf32> to vector<8x256xf32>
    %1914 = arith.index_cast %arg0 : i32 to index
    %c313 = arith.constant 313 : index
    %1915 = memref.load %arg1[%1914, %c313] : memref<3x345xf32, #tpu.memory_space<smem>>
    %1916 = vector.broadcast %1915 : f32 to vector<8x256xf32>
    %1917 = arith.mulf %1913, %1916 : vector<8x256xf32>
    %1918 = arith.addf %1912, %1917 : vector<8x256xf32>
    %1919 = vector.extract_strided_slice %1894 {offsets = [4, 0], sizes = [8, 256], strides = [1, 1]} : vector<12x256xf32> to vector<8x256xf32>
    %1920 = arith.index_cast %arg0 : i32 to index
    %c338 = arith.constant 338 : index
    %1921 = memref.load %arg1[%1920, %c338] : memref<3x345xf32, #tpu.memory_space<smem>>
    %1922 = vector.broadcast %1921 : f32 to vector<8x256xf32>
    %1923 = arith.mulf %1919, %1922 : vector<8x256xf32>
    %1924 = arith.addf %1918, %1923 : vector<8x256xf32>
    %c234_i32 = arith.constant 234 : i32
    %1925 = tpu.dynamic_rotate %1305 by %c234_i32 dim 1 : vector<12x256xf32>, i32 -> vector<12x256xf32>
    %1926 = vector.extract_strided_slice %1925 {offsets = [0, 0], sizes = [8, 256], strides = [1, 1]} : vector<12x256xf32> to vector<8x256xf32>
    %1927 = arith.index_cast %arg0 : i32 to index
    %c239 = arith.constant 239 : index
    %1928 = memref.load %arg1[%1927, %c239] : memref<3x345xf32, #tpu.memory_space<smem>>
    %1929 = vector.broadcast %1928 : f32 to vector<8x256xf32>
    %1930 = arith.mulf %1926, %1929 : vector<8x256xf32>
    %1931 = arith.addf %1924, %1930 : vector<8x256xf32>
    %1932 = vector.extract_strided_slice %1925 {offsets = [1, 0], sizes = [8, 256], strides = [1, 1]} : vector<12x256xf32> to vector<8x256xf32>
    %1933 = arith.index_cast %arg0 : i32 to index
    %c264 = arith.constant 264 : index
    %1934 = memref.load %arg1[%1933, %c264] : memref<3x345xf32, #tpu.memory_space<smem>>
    %1935 = vector.broadcast %1934 : f32 to vector<8x256xf32>
    %1936 = arith.mulf %1932, %1935 : vector<8x256xf32>
    %1937 = arith.addf %1931, %1936 : vector<8x256xf32>
    %1938 = vector.extract_strided_slice %1925 {offsets = [2, 0], sizes = [8, 256], strides = [1, 1]} : vector<12x256xf32> to vector<8x256xf32>
    %1939 = arith.index_cast %arg0 : i32 to index
    %c289 = arith.constant 289 : index
    %1940 = memref.load %arg1[%1939, %c289] : memref<3x345xf32, #tpu.memory_space<smem>>
    %1941 = vector.broadcast %1940 : f32 to vector<8x256xf32>
    %1942 = arith.mulf %1938, %1941 : vector<8x256xf32>
    %1943 = arith.addf %1937, %1942 : vector<8x256xf32>
    %1944 = vector.extract_strided_slice %1925 {offsets = [3, 0], sizes = [8, 256], strides = [1, 1]} : vector<12x256xf32> to vector<8x256xf32>
    %1945 = arith.index_cast %arg0 : i32 to index
    %c314 = arith.constant 314 : index
    %1946 = memref.load %arg1[%1945, %c314] : memref<3x345xf32, #tpu.memory_space<smem>>
    %1947 = vector.broadcast %1946 : f32 to vector<8x256xf32>
    %1948 = arith.mulf %1944, %1947 : vector<8x256xf32>
    %1949 = arith.addf %1943, %1948 : vector<8x256xf32>
    %1950 = vector.extract_strided_slice %1925 {offsets = [4, 0], sizes = [8, 256], strides = [1, 1]} : vector<12x256xf32> to vector<8x256xf32>
    %1951 = arith.index_cast %arg0 : i32 to index
    %c339 = arith.constant 339 : index
    %1952 = memref.load %arg1[%1951, %c339] : memref<3x345xf32, #tpu.memory_space<smem>>
    %1953 = vector.broadcast %1952 : f32 to vector<8x256xf32>
    %1954 = arith.mulf %1950, %1953 : vector<8x256xf32>
    %1955 = arith.addf %1949, %1954 : vector<8x256xf32>
    %c233_i32 = arith.constant 233 : i32
    %1956 = tpu.dynamic_rotate %1305 by %c233_i32 dim 1 : vector<12x256xf32>, i32 -> vector<12x256xf32>
    %1957 = vector.extract_strided_slice %1956 {offsets = [0, 0], sizes = [8, 256], strides = [1, 1]} : vector<12x256xf32> to vector<8x256xf32>
    %1958 = arith.index_cast %arg0 : i32 to index
    %c240 = arith.constant 240 : index
    %1959 = memref.load %arg1[%1958, %c240] : memref<3x345xf32, #tpu.memory_space<smem>>
    %1960 = vector.broadcast %1959 : f32 to vector<8x256xf32>
    %1961 = arith.mulf %1957, %1960 : vector<8x256xf32>
    %1962 = arith.addf %1955, %1961 : vector<8x256xf32>
    %1963 = vector.extract_strided_slice %1956 {offsets = [1, 0], sizes = [8, 256], strides = [1, 1]} : vector<12x256xf32> to vector<8x256xf32>
    %1964 = arith.index_cast %arg0 : i32 to index
    %c265 = arith.constant 265 : index
    %1965 = memref.load %arg1[%1964, %c265] : memref<3x345xf32, #tpu.memory_space<smem>>
    %1966 = vector.broadcast %1965 : f32 to vector<8x256xf32>
    %1967 = arith.mulf %1963, %1966 : vector<8x256xf32>
    %1968 = arith.addf %1962, %1967 : vector<8x256xf32>
    %1969 = vector.extract_strided_slice %1956 {offsets = [2, 0], sizes = [8, 256], strides = [1, 1]} : vector<12x256xf32> to vector<8x256xf32>
    %1970 = arith.index_cast %arg0 : i32 to index
    %c290 = arith.constant 290 : index
    %1971 = memref.load %arg1[%1970, %c290] : memref<3x345xf32, #tpu.memory_space<smem>>
    %1972 = vector.broadcast %1971 : f32 to vector<8x256xf32>
    %1973 = arith.mulf %1969, %1972 : vector<8x256xf32>
    %1974 = arith.addf %1968, %1973 : vector<8x256xf32>
    %1975 = vector.extract_strided_slice %1956 {offsets = [3, 0], sizes = [8, 256], strides = [1, 1]} : vector<12x256xf32> to vector<8x256xf32>
    %1976 = arith.index_cast %arg0 : i32 to index
    %c315 = arith.constant 315 : index
    %1977 = memref.load %arg1[%1976, %c315] : memref<3x345xf32, #tpu.memory_space<smem>>
    %1978 = vector.broadcast %1977 : f32 to vector<8x256xf32>
    %1979 = arith.mulf %1975, %1978 : vector<8x256xf32>
    %1980 = arith.addf %1974, %1979 : vector<8x256xf32>
    %1981 = vector.extract_strided_slice %1956 {offsets = [4, 0], sizes = [8, 256], strides = [1, 1]} : vector<12x256xf32> to vector<8x256xf32>
    %1982 = arith.index_cast %arg0 : i32 to index
    %c340 = arith.constant 340 : index
    %1983 = memref.load %arg1[%1982, %c340] : memref<3x345xf32, #tpu.memory_space<smem>>
    %1984 = vector.broadcast %1983 : f32 to vector<8x256xf32>
    %1985 = arith.mulf %1981, %1984 : vector<8x256xf32>
    %1986 = arith.addf %1980, %1985 : vector<8x256xf32>
    %c232_i32 = arith.constant 232 : i32
    %1987 = tpu.dynamic_rotate %1305 by %c232_i32 dim 1 : vector<12x256xf32>, i32 -> vector<12x256xf32>
    %1988 = vector.extract_strided_slice %1987 {offsets = [0, 0], sizes = [8, 256], strides = [1, 1]} : vector<12x256xf32> to vector<8x256xf32>
    %1989 = arith.index_cast %arg0 : i32 to index
    %c241 = arith.constant 241 : index
    %1990 = memref.load %arg1[%1989, %c241] : memref<3x345xf32, #tpu.memory_space<smem>>
    %1991 = vector.broadcast %1990 : f32 to vector<8x256xf32>
    %1992 = arith.mulf %1988, %1991 : vector<8x256xf32>
    %1993 = arith.addf %1986, %1992 : vector<8x256xf32>
    %1994 = vector.extract_strided_slice %1987 {offsets = [1, 0], sizes = [8, 256], strides = [1, 1]} : vector<12x256xf32> to vector<8x256xf32>
    %1995 = arith.index_cast %arg0 : i32 to index
    %c266 = arith.constant 266 : index
    %1996 = memref.load %arg1[%1995, %c266] : memref<3x345xf32, #tpu.memory_space<smem>>
    %1997 = vector.broadcast %1996 : f32 to vector<8x256xf32>
    %1998 = arith.mulf %1994, %1997 : vector<8x256xf32>
    %1999 = arith.addf %1993, %1998 : vector<8x256xf32>
    %2000 = vector.extract_strided_slice %1987 {offsets = [2, 0], sizes = [8, 256], strides = [1, 1]} : vector<12x256xf32> to vector<8x256xf32>
    %2001 = arith.index_cast %arg0 : i32 to index
    %c291 = arith.constant 291 : index
    %2002 = memref.load %arg1[%2001, %c291] : memref<3x345xf32, #tpu.memory_space<smem>>
    %2003 = vector.broadcast %2002 : f32 to vector<8x256xf32>
    %2004 = arith.mulf %2000, %2003 : vector<8x256xf32>
    %2005 = arith.addf %1999, %2004 : vector<8x256xf32>
    %2006 = vector.extract_strided_slice %1987 {offsets = [3, 0], sizes = [8, 256], strides = [1, 1]} : vector<12x256xf32> to vector<8x256xf32>
    %2007 = arith.index_cast %arg0 : i32 to index
    %c316 = arith.constant 316 : index
    %2008 = memref.load %arg1[%2007, %c316] : memref<3x345xf32, #tpu.memory_space<smem>>
    %2009 = vector.broadcast %2008 : f32 to vector<8x256xf32>
    %2010 = arith.mulf %2006, %2009 : vector<8x256xf32>
    %2011 = arith.addf %2005, %2010 : vector<8x256xf32>
    %2012 = vector.extract_strided_slice %1987 {offsets = [4, 0], sizes = [8, 256], strides = [1, 1]} : vector<12x256xf32> to vector<8x256xf32>
    %2013 = arith.index_cast %arg0 : i32 to index
    %c341 = arith.constant 341 : index
    %2014 = memref.load %arg1[%2013, %c341] : memref<3x345xf32, #tpu.memory_space<smem>>
    %2015 = vector.broadcast %2014 : f32 to vector<8x256xf32>
    %2016 = arith.mulf %2012, %2015 : vector<8x256xf32>
    %2017 = arith.addf %2011, %2016 : vector<8x256xf32>
    %c231_i32 = arith.constant 231 : i32
    %2018 = tpu.dynamic_rotate %1305 by %c231_i32 dim 1 : vector<12x256xf32>, i32 -> vector<12x256xf32>
    %2019 = vector.extract_strided_slice %2018 {offsets = [0, 0], sizes = [8, 256], strides = [1, 1]} : vector<12x256xf32> to vector<8x256xf32>
    %2020 = arith.index_cast %arg0 : i32 to index
    %c242 = arith.constant 242 : index
    %2021 = memref.load %arg1[%2020, %c242] : memref<3x345xf32, #tpu.memory_space<smem>>
    %2022 = vector.broadcast %2021 : f32 to vector<8x256xf32>
    %2023 = arith.mulf %2019, %2022 : vector<8x256xf32>
    %2024 = arith.addf %2017, %2023 : vector<8x256xf32>
    %2025 = vector.extract_strided_slice %2018 {offsets = [1, 0], sizes = [8, 256], strides = [1, 1]} : vector<12x256xf32> to vector<8x256xf32>
    %2026 = arith.index_cast %arg0 : i32 to index
    %c267 = arith.constant 267 : index
    %2027 = memref.load %arg1[%2026, %c267] : memref<3x345xf32, #tpu.memory_space<smem>>
    %2028 = vector.broadcast %2027 : f32 to vector<8x256xf32>
    %2029 = arith.mulf %2025, %2028 : vector<8x256xf32>
    %2030 = arith.addf %2024, %2029 : vector<8x256xf32>
    %2031 = vector.extract_strided_slice %2018 {offsets = [2, 0], sizes = [8, 256], strides = [1, 1]} : vector<12x256xf32> to vector<8x256xf32>
    %2032 = arith.index_cast %arg0 : i32 to index
    %c292 = arith.constant 292 : index
    %2033 = memref.load %arg1[%2032, %c292] : memref<3x345xf32, #tpu.memory_space<smem>>
    %2034 = vector.broadcast %2033 : f32 to vector<8x256xf32>
    %2035 = arith.mulf %2031, %2034 : vector<8x256xf32>
    %2036 = arith.addf %2030, %2035 : vector<8x256xf32>
    %2037 = vector.extract_strided_slice %2018 {offsets = [3, 0], sizes = [8, 256], strides = [1, 1]} : vector<12x256xf32> to vector<8x256xf32>
    %2038 = arith.index_cast %arg0 : i32 to index
    %c317 = arith.constant 317 : index
    %2039 = memref.load %arg1[%2038, %c317] : memref<3x345xf32, #tpu.memory_space<smem>>
    %2040 = vector.broadcast %2039 : f32 to vector<8x256xf32>
    %2041 = arith.mulf %2037, %2040 : vector<8x256xf32>
    %2042 = arith.addf %2036, %2041 : vector<8x256xf32>
    %2043 = vector.extract_strided_slice %2018 {offsets = [4, 0], sizes = [8, 256], strides = [1, 1]} : vector<12x256xf32> to vector<8x256xf32>
    %2044 = arith.index_cast %arg0 : i32 to index
    %c342 = arith.constant 342 : index
    %2045 = memref.load %arg1[%2044, %c342] : memref<3x345xf32, #tpu.memory_space<smem>>
    %2046 = vector.broadcast %2045 : f32 to vector<8x256xf32>
    %2047 = arith.mulf %2043, %2046 : vector<8x256xf32>
    %2048 = arith.addf %2042, %2047 : vector<8x256xf32>
    %c230_i32 = arith.constant 230 : i32
    %2049 = tpu.dynamic_rotate %1305 by %c230_i32 dim 1 : vector<12x256xf32>, i32 -> vector<12x256xf32>
    %2050 = vector.extract_strided_slice %2049 {offsets = [0, 0], sizes = [8, 256], strides = [1, 1]} : vector<12x256xf32> to vector<8x256xf32>
    %2051 = arith.index_cast %arg0 : i32 to index
    %c243 = arith.constant 243 : index
    %2052 = memref.load %arg1[%2051, %c243] : memref<3x345xf32, #tpu.memory_space<smem>>
    %2053 = vector.broadcast %2052 : f32 to vector<8x256xf32>
    %2054 = arith.mulf %2050, %2053 : vector<8x256xf32>
    %2055 = arith.addf %2048, %2054 : vector<8x256xf32>
    %2056 = vector.extract_strided_slice %2049 {offsets = [1, 0], sizes = [8, 256], strides = [1, 1]} : vector<12x256xf32> to vector<8x256xf32>
    %2057 = arith.index_cast %arg0 : i32 to index
    %c268 = arith.constant 268 : index
    %2058 = memref.load %arg1[%2057, %c268] : memref<3x345xf32, #tpu.memory_space<smem>>
    %2059 = vector.broadcast %2058 : f32 to vector<8x256xf32>
    %2060 = arith.mulf %2056, %2059 : vector<8x256xf32>
    %2061 = arith.addf %2055, %2060 : vector<8x256xf32>
    %2062 = vector.extract_strided_slice %2049 {offsets = [2, 0], sizes = [8, 256], strides = [1, 1]} : vector<12x256xf32> to vector<8x256xf32>
    %2063 = arith.index_cast %arg0 : i32 to index
    %c293 = arith.constant 293 : index
    %2064 = memref.load %arg1[%2063, %c293] : memref<3x345xf32, #tpu.memory_space<smem>>
    %2065 = vector.broadcast %2064 : f32 to vector<8x256xf32>
    %2066 = arith.mulf %2062, %2065 : vector<8x256xf32>
    %2067 = arith.addf %2061, %2066 : vector<8x256xf32>
    %2068 = vector.extract_strided_slice %2049 {offsets = [3, 0], sizes = [8, 256], strides = [1, 1]} : vector<12x256xf32> to vector<8x256xf32>
    %2069 = arith.index_cast %arg0 : i32 to index
    %c318 = arith.constant 318 : index
    %2070 = memref.load %arg1[%2069, %c318] : memref<3x345xf32, #tpu.memory_space<smem>>
    %2071 = vector.broadcast %2070 : f32 to vector<8x256xf32>
    %2072 = arith.mulf %2068, %2071 : vector<8x256xf32>
    %2073 = arith.addf %2067, %2072 : vector<8x256xf32>
    %2074 = vector.extract_strided_slice %2049 {offsets = [4, 0], sizes = [8, 256], strides = [1, 1]} : vector<12x256xf32> to vector<8x256xf32>
    %2075 = arith.index_cast %arg0 : i32 to index
    %c343 = arith.constant 343 : index
    %2076 = memref.load %arg1[%2075, %c343] : memref<3x345xf32, #tpu.memory_space<smem>>
    %2077 = vector.broadcast %2076 : f32 to vector<8x256xf32>
    %2078 = arith.mulf %2074, %2077 : vector<8x256xf32>
    %2079 = arith.addf %2073, %2078 : vector<8x256xf32>
    %c0_85 = arith.constant 0 : index
    %c0_86 = arith.constant 0 : index
    %c0_87 = arith.constant 0 : index
    %2080 = vector.load %arg4[%c0_85, %c0_86, %c0_87] : memref<1x8x256xf32, #tpu.memory_space<vmem>>, vector<1x8x256xf32>
    %2081 = vector.shape_cast %2080 : vector<1x8x256xf32> to vector<8x256xf32>
    %2082 = vector.shape_cast %2079 : vector<8x256xf32> to vector<1x8x256xf32>
    tpu.vector_store %arg4[%c0_85, %c0_86, %c0_87], %2082 {strides = array<i32>} : memref<1x8x256xf32, #tpu.memory_space<vmem>>, vector<1x8x256xf32>,
    return
  }
  func.func @transform_0(%arg0: i32) -> (i32, i32) {
    %c0_i32 = arith.constant 0 : i32
    %c0_i32_0 = arith.constant 0 : i32
    %c0_i32_1 = arith.constant 0 : i32
    return %c0_i32, %c0_i32_0 : i32, i32
  }
  func.func @transform_1(%arg0: i32) -> (i32, i32, i32) {
    %c0_i32 = arith.constant 0 : i32
    %c0_i32_0 = arith.constant 0 : i32
    %c0_i32_1 = arith.constant 0 : i32
    %c0_i32_2 = arith.constant 0 : i32
    return %c0_i32, %c0_i32_0, %c0_i32_1 : i32, i32, i32
  }
  func.func @transform_2(%arg0: i32) -> (i32, i32) {
    %c0_i32 = arith.constant 0 : i32
    %c0_i32_0 = arith.constant 0 : i32
    %c0_i32_1 = arith.constant 0 : i32
    return %c0_i32, %c0_i32_0 : i32, i32
  }
  func.func @transform_3(%arg0: i32) -> (i32, i32, i32) {
    %c0_i32 = arith.constant 0 : i32
    %c0_i32_0 = arith.constant 0 : i32
    %c0_i32_1 = arith.constant 0 : i32
    return %arg0, %c0_i32, %c0_i32_0 : i32, i32, i32
  }
}

</mosaic_0001>

<llo_original>
// kernel: tpu_custom_call.1
$region0: #{tpu_custom_call.1}
  #allocation0 [shape = 'u32[]', space=smem, size = 0x4, offset = 0x4, fixed_abs, tag = 'smem constant byte address 0x4 - core index']
  #allocation1 [shape = 'u32[72,128]{1,0:T(1,128)}', space=vmem, size = 0x9000, scoped, tag = 'internal scratch']
  #allocation2 [shape = 'f32[2,24,256]{2,1,0:T(8,128)}', space=vmem, size = 0xc000, scoped, tag = 'scratch operand']
  #allocation3 [shape = 'f32[1,24,256]{2,1,0:T(8,128)}', space=vmem, size = 0x6000, scoped, tag = 'scratch operand']
  %s0 = inlined_call_operand.hbm [shape: f32[3,345], index: 0, kind: input, shape index: {}]
  %s1 = inlined_call_operand.hbm [shape: f32[3,24,256], index: 1, kind: input, shape index: {}]
  %s2 = inlined_call_operand.hbm [shape: f32[1,256], index: 2, kind: input, shape index: {}]
  %s3 = inlined_call_operand.hbm [shape: f32[3,8,256], index: 3, kind: output, shape index: {}]
  %s4 = sld [smem:[#allocation0]]
  $region57: #{tpu_custom_call.1} parent=0
    _
  %s6 = ssub.s32 1, %s4
  %s7 = scalar_select 0, %s6, %s4
  $region1: #{tpu_custom_call.1} parent=0
    #allocation4 [shape = 'u8[6144]{0}', space=smem, size = 0x1800, scoped, tag = 'input window, operand 0, single buffered']
    #allocation5 [shape = 's32[2]{0}', space=sflag, size = 0x8, scoped, tag = 'scoped memory for tpu_custom_call.1']
    #allocation6 [shape = 's32[2]{0}', space=sflag, size = 0x8, scoped, tag = 'scoped memory for tpu_custom_call.1']
    #allocation7 [shape = 's32[2]{0}', space=sflag, size = 0x8, scoped, tag = 'scoped memory for tpu_custom_call.1']
    #allocation8 [shape = 'u8[73728]{0}', space=vmem, size = 0x12000, scoped, tag = 'input window, operand 1, single buffered']
    #allocation9 [shape = 'u8[1024]{0}', space=vmem, size = 0x400, scoped, tag = 'input window, operand 2, single buffered']
    #allocation10 [shape = 's32[1]{0}', space=sflag, size = 0x4, scoped, tag = 'scoped memory for tpu_custom_call.1']
    #allocation11 [shape = 'u8[16384]{0}', space=vmem, size = 0x4000, scoped, tag = 'output window, operand 0']
    %8 = vsyncpa [#allocation7], 0
    %9 = vsyncpa [#allocation5], 0
    %10 = vsyncpa [#allocation10], 0
    %11 = vsyncpa [#allocation6], 0
    %s12 = scalar_lea.sflag [#allocation6], 1
    %13 = vsyncpa %s12, 0
    loop: start=0, step=1, limit=5
    $region2: #{tpu_custom_call.1} parent=1 // loop_pre_header
      _
    $region3: #{tpu_custom_call.1} parent=1 // loop_header
      %s15 = sphi 0, %s19
      %p16 = scmp.ge.s32.totalorder %s15, 5
      %s23 = sphi 0, %s23
      %s25 = sphi 0, %s23
      %s26 = sphi 0, %s25
      %s40 = sphi 0, %s26
      %s44 = sphi 0, %s44
      %s46 = sphi 0, %s44
      %s47 = sphi 0, %s46
      %s61 = sphi 0, %s47
      %s65 = sphi 0, %s65
      %s67 = sphi 0, %s65
      %s68 = sphi 0, %s67
      %s82 = sphi 0, %s68
      %s88 = sphi 0, %s90
      %s91 = sphi 0, %s88
      %s92 = sphi 0, %s91
      %s108 = sphi 0, %s92
    $region4: #{tpu_custom_call.1} parent=1 // loop_header_branch
      %18 = sbr.rel (%p16) target = $region8
    $region5: #{tpu_custom_call.1} parent=1 // loop_body
      %s20 = ssub.s32 %s15, 1
      %s21 = ssub.s32 %s15, 2
      %s22 = sadd.s32 %s15, 1
      %s24 = sadd.s32 %s23, 1
      %p27 = scmp.eq.s32.totalorder %s15, 2
      %p28 = scmp.ne.s32.totalorder %s23, %s25
      %p29 = scmp.eq.s32.totalorder %s15, 0
      %p30 = por %p28, %p29
      %p31 = scmp.ne.s32.totalorder %s23, %s25
      %p32 = scmp.eq.s32.totalorder %s20, 2
      %p33 = por %p31, %p32
      %p34 = scmp.ne.s32.totalorder %s25, %s26
      %p35 = scmp.eq.s32.totalorder %s20, 0
      %p36 = por %p34, %p35
      %p37 = scmp.ne.s32.totalorder %s25, %s26
      %p38 = scmp.eq.s32.totalorder %s21, 2
      %p39 = por %p37, %p38
      %p41 = scmp.ne.s32.totalorder %s26, %s40
      %p42 = scmp.eq.s32.totalorder %s21, 0
      %p43 = por %p41, %p42
      %s45 = sadd.s32 %s44, 1
      %p48 = scmp.eq.s32.totalorder %s15, 2
      %p49 = scmp.ne.s32.totalorder %s44, %s46
      %p50 = scmp.eq.s32.totalorder %s15, 0
      %p51 = por %p49, %p50
      %p52 = scmp.ne.s32.totalorder %s44, %s46
      %p53 = scmp.eq.s32.totalorder %s20, 2
      %p54 = por %p52, %p53
      %p55 = scmp.ne.s32.totalorder %s46, %s47
      %p56 = scmp.eq.s32.totalorder %s20, 0
      %p57 = por %p55, %p56
      %p58 = scmp.ne.s32.totalorder %s46, %s47
      %p59 = scmp.eq.s32.totalorder %s21, 2
      %p60 = por %p58, %p59
      %p62 = scmp.ne.s32.totalorder %s47, %s61
      %p63 = scmp.eq.s32.totalorder %s21, 0
      %p64 = por %p62, %p63
      %s66 = sadd.s32 %s65, 1
      %p69 = scmp.eq.s32.totalorder %s15, 2
      %p70 = scmp.ne.s32.totalorder %s65, %s67
      %p71 = scmp.eq.s32.totalorder %s15, 0
      %p72 = por %p70, %p71
      %p73 = scmp.ne.s32.totalorder %s65, %s67
      %p74 = scmp.eq.s32.totalorder %s20, 2
      %p75 = por %p73, %p74
      %p76 = scmp.ne.s32.totalorder %s67, %s68
      %p77 = scmp.eq.s32.totalorder %s20, 0
      %p78 = por %p76, %p77
      %p79 = scmp.ne.s32.totalorder %s67, %s68
      %p80 = scmp.eq.s32.totalorder %s21, 2
      %p81 = por %p79, %p80
      %p83 = scmp.ne.s32.totalorder %s68, %s82
      %p84 = scmp.eq.s32.totalorder %s21, 0
      %p85 = por %p83, %p84
      %s86 = ssub.s32 %s15, %s22
      %p87 = scmp.eq.s32.totalorder %s86, 0
      %s89 = sadd.s32 %s88, 1
      %s90 = scalar_select %p87, %s88, %s89
      %p93 = pneg %p87
      %p94 = scmp.eq.s32.totalorder %s15, 2
      %p95 = por %p93, %p94
      %p96 = scmp.ne.s32.totalorder %s88, %s91
      %p97 = scmp.eq.s32.totalorder %s15, 0
      %p98 = por %p96, %p97
      %p99 = scmp.ne.s32.totalorder %s88, %s91
      %p100 = scmp.eq.s32.totalorder %s20, 2
      %p101 = por %p99, %p100
      %p102 = scmp.ne.s32.totalorder %s91, %s92
      %p103 = scmp.eq.s32.totalorder %s20, 0
      %p104 = por %p102, %p103
      %p105 = scmp.ne.s32.totalorder %s91, %s92
      %p106 = scmp.eq.s32.totalorder %s21, 2
      %p107 = por %p105, %p106
      %p109 = scmp.ne.s32.totalorder %s92, %s108
      %p110 = scmp.eq.s32.totalorder %s21, 0
      %p111 = por %p109, %p110
      %p112 = scmp.le.s32.totalorder 1, %s15
      %p113 = scmp.lt.s32.totalorder %s15, 4
      %p114 = pnand %p112, %p113
      %p115 = pneg %p114
      // Predicated region
      $region9: #{tpu_custom_call.1} parent=5 // pred_check
        _
      $region10: #{tpu_custom_call.1} parent=5 // pred_check_branch
        %117 = sbr.rel (%p114) target = $region12
      $region11: #{tpu_custom_call.1} parent=5 // pred_region
        %s118 = ssub.s32 %s15, 1
        // Predicated region
        $region13: #{tpu_custom_call.1} parent=11 // pred_check
          %p119 = pneg %p36
        $region14: #{tpu_custom_call.1} parent=11 // pred_check_branch
          %121 = sbr.rel (%p119) target = $region16
        $region15: #{tpu_custom_call.1} parent=11 // pred_region
          %123 = vsyncadd [#allocation7], 0
          %s125 = sshll.u32 %s0, 4
          %s126 = int_to_ptr.hbm [resolvable:$true] %s125
          %128 = dma.hbm_to_smem %s126, 192, [#allocation4], [#allocation7]
        $region16: #{tpu_custom_call.1} parent=11 // pred_fallthru
          _
        // Predicated region
        $region17: #{tpu_custom_call.1} parent=11 // pred_check
          %p129 = pneg %p57
        $region18: #{tpu_custom_call.1} parent=11 // pred_check_branch
          %131 = sbr.rel (%p129) target = $region20
        $region19: #{tpu_custom_call.1} parent=11 // pred_region
          %133 = vsyncadd [#allocation5], 0
          %s134 = sshll.u32 %s1, 4
          %s135 = int_to_ptr.hbm [resolvable:$true] %s134
          %s136 = sshll.u32 [#allocation8], 4
          %s137 = int_to_ptr.vmem [resolvable:$true] %s136
          %142 = dma.hbm_to_vmem [thread:$0]  %s135, 2304, %s137, [#allocation5], 256, 256, 16
        $region20: #{tpu_custom_call.1} parent=11 // pred_fallthru
          _
        // Predicated region
        $region21: #{tpu_custom_call.1} parent=11 // pred_check
          %p143 = pneg %p78
        $region22: #{tpu_custom_call.1} parent=11 // pred_check_branch
          %145 = sbr.rel (%p143) target = $region24
        $region23: #{tpu_custom_call.1} parent=11 // pred_region
          %147 = vsyncadd [#allocation10], 0
          %s149 = sshll.u32 %s2, 4
          %s150 = int_to_ptr.hbm [resolvable:$true] %s149
          %s151 = sshll.u32 [#allocation9], 4
          %s152 = int_to_ptr.vmem [resolvable:$true] %s151
          %154 = dma.hbm_to_vmem [thread:$0]  %s150, 32, %s152, [#allocation10]
        $region24: #{tpu_custom_call.1} parent=11 // pred_fallthru
          _
      $region12: #{tpu_custom_call.1} parent=5 // pred_fallthru
        _
      %p155 = scmp.lt.s32.totalorder %s15, 3
      // Predicated region
      $region25: #{tpu_custom_call.1} parent=5 // pred_check
        %p156 = pneg %p155
      $region26: #{tpu_custom_call.1} parent=5 // pred_check_branch
        %158 = sbr.rel (%p156) target = $region28
      $region27: #{tpu_custom_call.1} parent=5 // pred_region
        _
      $region28: #{tpu_custom_call.1} parent=5 // pred_fallthru
        _
      %p159 = scmp.le.s32.totalorder 1, %s15
      %p160 = scmp.lt.s32.totalorder %s15, 4
      %p161 = pnand %p159, %p160
      %p162 = pneg %p161
      // Predicated region
      $region29: #{tpu_custom_call.1} parent=5 // pred_check
        _
      $region30: #{tpu_custom_call.1} parent=5 // pred_check_branch
        %164 = sbr.rel (%p161) target = $region32
      $region31: #{tpu_custom_call.1} parent=5 // pred_region
        %s165 = ssub.s32 %s15, 1
        // Predicated region
        $region33: #{tpu_custom_call.1} parent=31 // pred_check
          %p166 = pneg %p36
        $region34: #{tpu_custom_call.1} parent=31 // pred_check_branch
          %168 = sbr.rel (%p166) target = $region36
        $region35: #{tpu_custom_call.1} parent=31 // pred_region
          %170 = dma.done [#allocation7], 192
        $region36: #{tpu_custom_call.1} parent=31 // pred_fallthru
          _
        // Predicated region
        $region37: #{tpu_custom_call.1} parent=31 // pred_check
          %p171 = pneg %p57
        $region38: #{tpu_custom_call.1} parent=31 // pred_check_branch
          %173 = sbr.rel (%p171) target = $region40
        $region39: #{tpu_custom_call.1} parent=31 // pred_region
          %175 = dma.done [#allocation5], 2304
        $region40: #{tpu_custom_call.1} parent=31 // pred_fallthru
          _
        // Predicated region
        $region41: #{tpu_custom_call.1} parent=31 // pred_check
          %p176 = pneg %p78
        $region42: #{tpu_custom_call.1} parent=31 // pred_check_branch
          %178 = sbr.rel (%p176) target = $region44
        $region43: #{tpu_custom_call.1} parent=31 // pred_region
          %180 = dma.done [#allocation10], 32
        $region44: #{tpu_custom_call.1} parent=31 // pred_fallthru
          _
        %181 = sfence
        %p182 = pneg %p36
        %p183 = pneg %p33
        %p184 = pneg %p57
        %p185 = pneg %p54
        %p186 = pneg %p78
        %p187 = pneg %p75
        %p188 = pneg %p104
        %p189 = pneg %p101
        %s190 = sand.u32 %s91, 1
        %s191 = scalar_lea.sflag [#allocation6], %s190
        %s192 = sand.u32 %s91, 1
        %s193 = smul.addr %s192, 16
        %s194 = scalar_lea.vmem [#allocation11], %s193
        %v195 = vld [vmem:[#allocation9] sm:$0x3]
        %v197 = vperm.slane %v195, 0
        %v198 = vperm.slane %v195, 1
        %201 = vst [vmem:[#allocation2] sm:$0xc0] 0.0
        %202 = vst [vmem:[#allocation2 + $0x8] sm:$0xc0] 0.0
        %203 = vst [vmem:[#allocation2 + $0x30] sm:$0xc0] 0.0
        %204 = vst [vmem:[#allocation2 + $0x38] sm:$0xc0] 0.0
        %205 = vst [vmem:[#allocation2 + $0x20] sm:$0x3] 0.0
        %206 = vst [vmem:[#allocation2 + $0x28] sm:$0x3] 0.0
        %207 = vst [vmem:[#allocation2 + $0x50] sm:$0x3] 0.0
        %208 = vst [vmem:[#allocation2 + $0x58] sm:$0x3] 0.0
        %209 = vst [vmem:[#allocation3] sm:$0xc0] 0.0
        %210 = vst [vmem:[#allocation3 + $0x8] sm:$0xc0] 0.0
        %211 = vst [vmem:[#allocation3 + $0x20] sm:$0x3] 0.0
        %212 = vst [vmem:[#allocation3 + $0x28] sm:$0x3] 0.0
        %s213 = sshra.s32 %s20, 2
        %s214 = sand.u32 %s20, 3
        %s215 = smul.u32 %s213, 3
        %s216 = sadd.s32 1, %s215
        %s217 = smul.u32 %s216, 512
        %s218 = sshra.s32 %s20, 2
        %s219 = sand.u32 %s20, 3
        %s220 = smul.u32 %s219, 128
        %s221 = sadd.s32 %s220, 34
        %s222 = sadd.s32 %s217, %s221
        %s223 = sld [smem:[#allocation4 + %s222]]
        %v224 = vstv %s223
        %s225 = sadd.s32 %s220, 35
        %s226 = sadd.s32 %s217, %s225
        %s227 = sld [smem:[#allocation4 + %s226]]
        %v228 = vstv %s227
        %v229 = vld [vmem:[#allocation8] sm:$0x80]
        %v230 = vld [vmem:[#allocation8 + $0x8] sm:$0x80]
        %v231 = vld [vmem:[#allocation8 + $0x10] sm:$0xff]
        %v232 = vld [vmem:[#allocation8 + $0x18] sm:$0xff]
        %v233 = vld [vmem:[#allocation8 + $0x20] sm:$0x1]
        %v234 = vld [vmem:[#allocation8 + $0x28] sm:$0x1]
        %vm241 = vcmask 1040384
        %v242 = vrot.slane %v229, 7
        %v243 = vrot.slane %v231, 7
        %v244 = vsel %vm241, %v242, %v243
        %v245 = vrot.slane %v230, 7
        %v246 = vrot.slane %v232, 7
        %v247 = vsel %vm241, %v245, %v246
        %v248 = vrot.slane %v233, 7
        %v249 = vsel %vm241, %v243, %v248
        %v250 = vrot.slane %v234, 7
        %v251 = vsel %vm241, %v246, %v250
        %256 = vrot.lane.b32.xlu0 %v244, 13
        %v257 = vpop.permute.xlu0 %256
        %258 = vrot.lane.b32.xlu0 %v249, 13
        %v259 = vpop.permute.xlu0 %258
        %260 = vrot.lane.b32.xlu0 %v247, 13
        %v261 = vpop.permute.xlu0 %260
        %262 = vrot.lane.b32.xlu0 %v251, 13
        %v263 = vpop.permute.xlu0 %262
        %v264 = vlaneseq
        %v265 = vand.u32 %v264, 127
        %vm266 = vcmp.lt.s32.totalorder %v265, 13
        %v267 = vsel %vm266, %v257, %v261
        %v268 = vsel %vm266, %v259, %v263
        %v269 = vsel %vm266, %v261, %v257
        %v270 = vsel %vm266, %v263, %v259
        %s271 = smul.u32 %s215, 512
        %s272 = sadd.s32 %s271, %s220
        %s273 = sld [smem:[#allocation4 + %s272]]
        %v274 = vstv %s273
        %v275 = vmul.f32 %v269, %v274
        %v276 = vmul.f32 %v267, %v274
        %v277 = vadd.f32 %v224, %v275
        %v278 = vadd.f32 %v224, %v276
        %s279 = sadd.s32 %s220, 81
        %s280 = sadd.s32 %s271, %s279
        %s281 = sld [smem:[#allocation4 + %s280]]
        %v282 = vstv %s281
        %v283 = vmul.f32 %v269, %v282
        %v284 = vmul.f32 %v267, %v282
        %v285 = vadd.f32 %v228, %v283
        %v286 = vadd.f32 %v228, %v284
        %s287 = sadd.s32 %s220, 9
        %s288 = sadd.s32 %s271, %s287
        %s289 = sld [smem:[#allocation4 + %s288]]
        %v290 = vstv %s289
        %v291 = vmul.f32 %v269, %v290
        %v292 = vmul.f32 %v267, %v290
        %v293 = vmul.f32 %v270, %v290
        %v294 = vmul.f32 %v268, %v290
        %vm299 = vcmask 1046528
        %v300 = vrot.slane %v291, 1
        %v301 = vrot.slane %v293, 1
        %v302 = vsel %vm299, %v300, %v301
        %v303 = vrot.slane %v292, 1
        %v304 = vrot.slane %v294, 1
        %v305 = vsel %vm299, %v303, %v304
        %v308 = vadd.f32 %v277, %v302
        %v309 = vadd.f32 %v278, %v305
        %s310 = sadd.s32 %s220, 90
        %s311 = sadd.s32 %s271, %s310
        %s312 = sld [smem:[#allocation4 + %s311]]
        %v313 = vstv %s312
        %v314 = vmul.f32 %v269, %v313
        %v315 = vmul.f32 %v267, %v313
        %v316 = vmul.f32 %v270, %v313
        %v317 = vmul.f32 %v268, %v313
        %v322 = vrot.slane %v314, 1
        %v323 = vrot.slane %v316, 1
        %v324 = vsel %vm299, %v322, %v323
        %v325 = vrot.slane %v315, 1
        %v326 = vrot.slane %v317, 1
        %v327 = vsel %vm299, %v325, %v326
        %v330 = vadd.f32 %v285, %v324
        %v331 = vadd.f32 %v286, %v327
        %s332 = sadd.s32 %s220, 18
        %s333 = sadd.s32 %s271, %s332
        %s334 = sld [smem:[#allocation4 + %s333]]
        %v335 = vstv %s334
        %v336 = vmul.f32 %v269, %v335
        %v337 = vmul.f32 %v267, %v335
        %v338 = vmul.f32 %v270, %v335
        %v339 = vmul.f32 %v268, %v335
        %vm344 = vcmask 1045504
        %v345 = vrot.slane %v336, 2
        %v346 = vrot.slane %v338, 2
        %v347 = vsel %vm344, %v345, %v346
        %v348 = vrot.slane %v337, 2
        %v349 = vrot.slane %v339, 2
        %v350 = vsel %vm344, %v348, %v349
        %v353 = vadd.f32 %v308, %v347
        %v354 = vadd.f32 %v309, %v350
        %s355 = sadd.s32 %s220, 99
        %s356 = sadd.s32 %s271, %s355
        %s357 = sld [smem:[#allocation4 + %s356]]
        %v358 = vstv %s357
        %v359 = vmul.f32 %v269, %v358
        %v360 = vmul.f32 %v267, %v358
        %v361 = vmul.f32 %v270, %v358
        %v362 = vmul.f32 %v268, %v358
        %v367 = vrot.slane %v359, 2
        %v368 = vrot.slane %v361, 2
        %v369 = vsel %vm344, %v367, %v368
        %v370 = vrot.slane %v360, 2
        %v371 = vrot.slane %v362, 2
        %v372 = vsel %vm344, %v370, %v371
        %v375 = vadd.f32 %v330, %v369
        %v376 = vadd.f32 %v331, %v372
        %377 = vrot.lane.b32.xlu0 %v244, 12
        %v378 = vpop.permute.xlu0 %377
        %379 = vrot.lane.b32.xlu0 %v249, 12
        %v380 = vpop.permute.xlu0 %379
        %381 = vrot.lane.b32.xlu0 %v247, 12
        %v382 = vpop.permute.xlu0 %381
        %383 = vrot.lane.b32.xlu0 %v251, 12
        %v384 = vpop.permute.xlu0 %383
        %vm385 = vcmp.lt.s32.totalorder %v265, 12
        %v386 = vsel %vm385, %v378, %v382
        %v387 = vsel %vm385, %v380, %v384
        %v388 = vsel %vm385, %v382, %v378
        %v389 = vsel %vm385, %v384, %v380
        %s390 = sadd.s32 %s220, 1
        %s391 = sadd.s32 %s271, %s390
        %s392 = sld [smem:[#allocation4 + %s391]]
        %v393 = vstv %s392
        %v394 = vmul.f32 %v388, %v393
        %v395 = vmul.f32 %v386, %v393
        %v396 = vadd.f32 %v353, %v394
        %v397 = vadd.f32 %v354, %v395
        %s398 = sadd.s32 %s220, 82
        %s399 = sadd.s32 %s271, %s398
        %s400 = sld [smem:[#allocation4 + %s399]]
        %v401 = vstv %s400
        %v402 = vmul.f32 %v388, %v401
        %v403 = vmul.f32 %v386, %v401
        %v404 = vadd.f32 %v375, %v402
        %v405 = vadd.f32 %v376, %v403
        %s406 = sadd.s32 %s220, 10
        %s407 = sadd.s32 %s271, %s406
        %s408 = sld [smem:[#allocation4 + %s407]]
        %v409 = vstv %s408
        %v410 = vmul.f32 %v388, %v409
        %v411 = vmul.f32 %v386, %v409
        %v412 = vmul.f32 %v389, %v409
        %v413 = vmul.f32 %v387, %v409
        %v418 = vrot.slane %v410, 1
        %v419 = vrot.slane %v412, 1
        %v420 = vsel %vm299, %v418, %v419
        %v421 = vrot.slane %v411, 1
        %v422 = vrot.slane %v413, 1
        %v423 = vsel %vm299, %v421, %v422
        %v426 = vadd.f32 %v396, %v420
        %v427 = vadd.f32 %v397, %v423
        %s428 = sadd.s32 %s220, 91
        %s429 = sadd.s32 %s271, %s428
        %s430 = sld [smem:[#allocation4 + %s429]]
        %v431 = vstv %s430
        %v432 = vmul.f32 %v388, %v431
        %v433 = vmul.f32 %v386, %v431
        %v434 = vmul.f32 %v389, %v431
        %v435 = vmul.f32 %v387, %v431
        %v440 = vrot.slane %v432, 1
        %v441 = vrot.slane %v434, 1
        %v442 = vsel %vm299, %v440, %v441
        %v443 = vrot.slane %v433, 1
        %v444 = vrot.slane %v435, 1
        %v445 = vsel %vm299, %v443, %v444
        %v448 = vadd.f32 %v404, %v442
        %v449 = vadd.f32 %v405, %v445
        %s450 = sadd.s32 %s220, 19
        %s451 = sadd.s32 %s271, %s450
        %s452 = sld [smem:[#allocation4 + %s451]]
        %v453 = vstv %s452
        %v454 = vmul.f32 %v388, %v453
        %v455 = vmul.f32 %v386, %v453
        %v456 = vmul.f32 %v389, %v453
        %v457 = vmul.f32 %v387, %v453
        %v462 = vrot.slane %v454, 2
        %v463 = vrot.slane %v456, 2
        %v464 = vsel %vm344, %v462, %v463
        %v465 = vrot.slane %v455, 2
        %v466 = vrot.slane %v457, 2
        %v467 = vsel %vm344, %v465, %v466
        %v470 = vadd.f32 %v426, %v464
        %v471 = vadd.f32 %v427, %v467
        %s472 = sadd.s32 %s220, 100
        %s473 = sadd.s32 %s271, %s472
        %s474 = sld [smem:[#allocation4 + %s473]]
        %v475 = vstv %s474
        %v476 = vmul.f32 %v388, %v475
        %v477 = vmul.f32 %v386, %v475
        %v478 = vmul.f32 %v389, %v475
        %v479 = vmul.f32 %v387, %v475
        %v484 = vrot.slane %v476, 2
        %v485 = vrot.slane %v478, 2
        %v486 = vsel %vm344, %v484, %v485
        %v487 = vrot.slane %v477, 2
        %v488 = vrot.slane %v479, 2
        %v489 = vsel %vm344, %v487, %v488
        %v492 = vadd.f32 %v448, %v486
        %v493 = vadd.f32 %v449, %v489
        %494 = vrot.lane.b32.xlu0 %v244, 11
        %v495 = vpop.permute.xlu0 %494
        %496 = vrot.lane.b32.xlu0 %v249, 11
        %v497 = vpop.permute.xlu0 %496
        %498 = vrot.lane.b32.xlu0 %v247, 11
        %v499 = vpop.permute.xlu0 %498
        %500 = vrot.lane.b32.xlu0 %v251, 11
        %v501 = vpop.permute.xlu0 %500
        %vm502 = vcmp.lt.s32.totalorder %v265, 11
        %v503 = vsel %vm502, %v495, %v499
        %v504 = vsel %vm502, %v497, %v501
        %v505 = vsel %vm502, %v499, %v495
        %v506 = vsel %vm502, %v501, %v497
        %s507 = sadd.s32 %s220, 2
        %s508 = sadd.s32 %s271, %s507
        %s509 = sld [smem:[#allocation4 + %s508]]
        %v510 = vstv %s509
        %v511 = vmul.f32 %v505, %v510
        %v512 = vmul.f32 %v503, %v510
        %v513 = vadd.f32 %v470, %v511
        %v514 = vadd.f32 %v471, %v512
        %s515 = sadd.s32 %s220, 83
        %s516 = sadd.s32 %s271, %s515
        %s517 = sld [smem:[#allocation4 + %s516]]
        %v518 = vstv %s517
        %v519 = vmul.f32 %v505, %v518
        %v520 = vmul.f32 %v503, %v518
        %v521 = vadd.f32 %v492, %v519
        %v522 = vadd.f32 %v493, %v520
        %s523 = sadd.s32 %s220, 11
        %s524 = sadd.s32 %s271, %s523
        %s525 = sld [smem:[#allocation4 + %s524]]
        %v526 = vstv %s525
        %v527 = vmul.f32 %v505, %v526
        %v528 = vmul.f32 %v503, %v526
        %v529 = vmul.f32 %v506, %v526
        %v530 = vmul.f32 %v504, %v526
        %v535 = vrot.slane %v527, 1
        %v536 = vrot.slane %v529, 1
        %v537 = vsel %vm299, %v535, %v536
        %v538 = vrot.slane %v528, 1
        %v539 = vrot.slane %v530, 1
        %v540 = vsel %vm299, %v538, %v539
        %v543 = vadd.f32 %v513, %v537
        %v544 = vadd.f32 %v514, %v540
        %s545 = sadd.s32 %s220, 92
        %s546 = sadd.s32 %s271, %s545
        %s547 = sld [smem:[#allocation4 + %s546]]
        %v548 = vstv %s547
        %v549 = vmul.f32 %v505, %v548
        %v550 = vmul.f32 %v503, %v548
        %v551 = vmul.f32 %v506, %v548
        %v552 = vmul.f32 %v504, %v548
        %v557 = vrot.slane %v549, 1
        %v558 = vrot.slane %v551, 1
        %v559 = vsel %vm299, %v557, %v558
        %v560 = vrot.slane %v550, 1
        %v561 = vrot.slane %v552, 1
        %v562 = vsel %vm299, %v560, %v561
        %v565 = vadd.f32 %v521, %v559
        %v566 = vadd.f32 %v522, %v562
        %s567 = sadd.s32 %s220, 20
        %s568 = sadd.s32 %s271, %s567
        %s569 = sld [smem:[#allocation4 + %s568]]
        %v570 = vstv %s569
        %v571 = vmul.f32 %v505, %v570
        %v572 = vmul.f32 %v503, %v570
        %v573 = vmul.f32 %v506, %v570
        %v574 = vmul.f32 %v504, %v570
        %v579 = vrot.slane %v571, 2
        %v580 = vrot.slane %v573, 2
        %v581 = vsel %vm344, %v579, %v580
        %v582 = vrot.slane %v572, 2
        %v583 = vrot.slane %v574, 2
        %v584 = vsel %vm344, %v582, %v583
        %v587 = vadd.f32 %v543, %v581
        %v588 = vadd.f32 %v544, %v584
        %s589 = sadd.s32 %s220, 101
        %s590 = sadd.s32 %s271, %s589
        %s591 = sld [smem:[#allocation4 + %s590]]
        %v592 = vstv %s591
        %v593 = vmul.f32 %v505, %v592
        %v594 = vmul.f32 %v503, %v592
        %v595 = vmul.f32 %v506, %v592
        %v596 = vmul.f32 %v504, %v592
        %v601 = vrot.slane %v593, 2
        %v602 = vrot.slane %v595, 2
        %v603 = vsel %vm344, %v601, %v602
        %v604 = vrot.slane %v594, 2
        %v605 = vrot.slane %v596, 2
        %v606 = vsel %vm344, %v604, %v605
        %v609 = vadd.f32 %v565, %v603
        %v610 = vadd.f32 %v566, %v606
        %611 = vrot.lane.b32.xlu0 %v244, 1
        %v612 = vpop.permute.xlu0 %611
        %613 = vrot.lane.b32.xlu0 %v249, 1
        %v614 = vpop.permute.xlu0 %613
        %615 = vrot.lane.b32.xlu0 %v247, 1
        %v616 = vpop.permute.xlu0 %615
        %617 = vrot.lane.b32.xlu0 %v251, 1
        %v618 = vpop.permute.xlu0 %617
        %vm619 = vcmp.lt.s32.totalorder %v265, 1
        %v620 = vsel %vm619, %v612, %v616
        %v621 = vsel %vm619, %v614, %v618
        %v622 = vsel %vm619, %v616, %v612
        %v623 = vsel %vm619, %v618, %v614
        %s624 = sadd.s32 %s220, 3
        %s625 = sadd.s32 %s271, %s624
        %s626 = sld [smem:[#allocation4 + %s625]]
        %v627 = vstv %s626
        %v628 = vmul.f32 %v622, %v627
        %v629 = vmul.f32 %v620, %v627
        %v630 = vadd.f32 %v587, %v628
        %v631 = vadd.f32 %v588, %v629
        %s632 = sadd.s32 %s220, 84
        %s633 = sadd.s32 %s271, %s632
        %s634 = sld [smem:[#allocation4 + %s633]]
        %v635 = vstv %s634
        %v636 = vmul.f32 %v622, %v635
        %v637 = vmul.f32 %v620, %v635
        %v638 = vadd.f32 %v609, %v636
        %v639 = vadd.f32 %v610, %v637
        %s640 = sadd.s32 %s220, 12
        %s641 = sadd.s32 %s271, %s640
        %s642 = sld [smem:[#allocation4 + %s641]]
        %v643 = vstv %s642
        %v644 = vmul.f32 %v622, %v643
        %v645 = vmul.f32 %v620, %v643
        %v646 = vmul.f32 %v623, %v643
        %v647 = vmul.f32 %v621, %v643
        %v652 = vrot.slane %v644, 1
        %v653 = vrot.slane %v646, 1
        %v654 = vsel %vm299, %v652, %v653
        %v655 = vrot.slane %v645, 1
        %v656 = vrot.slane %v647, 1
        %v657 = vsel %vm299, %v655, %v656
        %v660 = vadd.f32 %v630, %v654
        %v661 = vadd.f32 %v631, %v657
        %s662 = sadd.s32 %s220, 93
        %s663 = sadd.s32 %s271, %s662
        %s664 = sld [smem:[#allocation4 + %s663]]
        %v665 = vstv %s664
        %v666 = vmul.f32 %v622, %v665
        %v667 = vmul.f32 %v620, %v665
        %v668 = vmul.f32 %v623, %v665
        %v669 = vmul.f32 %v621, %v665
        %v674 = vrot.slane %v666, 1
        %v675 = vrot.slane %v668, 1
        %v676 = vsel %vm299, %v674, %v675
        %v677 = vrot.slane %v667, 1
        %v678 = vrot.slane %v669, 1
        %v679 = vsel %vm299, %v677, %v678
        %v682 = vadd.f32 %v638, %v676
        %v683 = vadd.f32 %v639, %v679
        %s684 = sadd.s32 %s220, 21
        %s685 = sadd.s32 %s271, %s684
        %s686 = sld [smem:[#allocation4 + %s685]]
        %v687 = vstv %s686
        %v688 = vmul.f32 %v622, %v687
        %v689 = vmul.f32 %v620, %v687
        %v690 = vmul.f32 %v623, %v687
        %v691 = vmul.f32 %v621, %v687
        %v696 = vrot.slane %v688, 2
        %v697 = vrot.slane %v690, 2
        %v698 = vsel %vm344, %v696, %v697
        %v699 = vrot.slane %v689, 2
        %v700 = vrot.slane %v691, 2
        %v701 = vsel %vm344, %v699, %v700
        %v704 = vadd.f32 %v660, %v698
        %v705 = vadd.f32 %v661, %v701
        %s706 = sadd.s32 %s220, 102
        %s707 = sadd.s32 %s271, %s706
        %s708 = sld [smem:[#allocation4 + %s707]]
        %v709 = vstv %s708
        %v710 = vmul.f32 %v622, %v709
        %v711 = vmul.f32 %v620, %v709
        %v712 = vmul.f32 %v623, %v709
        %v713 = vmul.f32 %v621, %v709
        %v718 = vrot.slane %v710, 2
        %v719 = vrot.slane %v712, 2
        %v720 = vsel %vm344, %v718, %v719
        %v721 = vrot.slane %v711, 2
        %v722 = vrot.slane %v713, 2
        %v723 = vsel %vm344, %v721, %v722
        %v726 = vadd.f32 %v682, %v720
        %v727 = vadd.f32 %v683, %v723
        %s728 = sadd.s32 %s220, 4
        %s729 = sadd.s32 %s271, %s728
        %s730 = sld [smem:[#allocation4 + %s729]]
        %v731 = vstv %s730
        %v732 = vmul.f32 %v229, %v731
        %v733 = vmul.f32 %v230, %v731
        %v734 = vmul.f32 %v231, %v731
        %v735 = vmul.f32 %v232, %v731
        %v740 = vrot.slane %v732, 7
        %v741 = vrot.slane %v734, 7
        %v742 = vsel %vm241, %v740, %v741
        %v743 = vrot.slane %v733, 7
        %v744 = vrot.slane %v735, 7
        %v745 = vsel %vm241, %v743, %v744
        %v748 = vadd.f32 %v704, %v742
        %v749 = vadd.f32 %v705, %v745
        %s750 = sadd.s32 %s220, 85
        %s751 = sadd.s32 %s271, %s750
        %s752 = sld [smem:[#allocation4 + %s751]]
        %v753 = vstv %s752
        %v754 = vmul.f32 %v229, %v753
        %v755 = vmul.f32 %v230, %v753
        %v756 = vmul.f32 %v231, %v753
        %v757 = vmul.f32 %v232, %v753
        %v762 = vrot.slane %v754, 7
        %v763 = vrot.slane %v756, 7
        %v764 = vsel %vm241, %v762, %v763
        %v765 = vrot.slane %v755, 7
        %v766 = vrot.slane %v757, 7
        %v767 = vsel %vm241, %v765, %v766
        %v770 = vadd.f32 %v726, %v764
        %v771 = vadd.f32 %v727, %v767
        %s772 = sadd.s32 %s220, 13
        %s773 = sadd.s32 %s271, %s772
        %s774 = sld [smem:[#allocation4 + %s773]]
        %v775 = vstv %s774
        %v776 = vmul.f32 %v231, %v775
        %v777 = vmul.f32 %v232, %v775
        %v778 = vadd.f32 %v748, %v776
        %v779 = vadd.f32 %v749, %v777
        %s780 = sadd.s32 %s220, 94
        %s781 = sadd.s32 %s271, %s780
        %s782 = sld [smem:[#allocation4 + %s781]]
        %v783 = vstv %s782
        %v784 = vmul.f32 %v231, %v783
        %v785 = vmul.f32 %v232, %v783
        %v786 = vadd.f32 %v770, %v784
        %v787 = vadd.f32 %v771, %v785
        %s788 = sadd.s32 %s220, 22
        %s789 = sadd.s32 %s271, %s788
        %s790 = sld [smem:[#allocation4 + %s789]]
        %v791 = vstv %s790
        %v792 = vmul.f32 %v231, %v791
        %v793 = vmul.f32 %v232, %v791
        %v794 = vmul.f32 %v233, %v791
        %v795 = vmul.f32 %v234, %v791
        %v800 = vrot.slane %v792, 1
        %v801 = vrot.slane %v794, 1
        %v802 = vsel %vm299, %v800, %v801
        %v803 = vrot.slane %v793, 1
        %v804 = vrot.slane %v795, 1
        %v805 = vsel %vm299, %v803, %v804
        %v808 = vadd.f32 %v778, %v802
        %v809 = vadd.f32 %v779, %v805
        %s810 = sadd.s32 %s220, 103
        %s811 = sadd.s32 %s271, %s810
        %s812 = sld [smem:[#allocation4 + %s811]]
        %v813 = vstv %s812
        %v814 = vmul.f32 %v231, %v813
        %v815 = vmul.f32 %v232, %v813
        %v816 = vmul.f32 %v233, %v813
        %v817 = vmul.f32 %v234, %v813
        %v822 = vrot.slane %v814, 1
        %v823 = vrot.slane %v816, 1
        %v824 = vsel %vm299, %v822, %v823
        %v825 = vrot.slane %v815, 1
        %v826 = vrot.slane %v817, 1
        %v827 = vsel %vm299, %v825, %v826
        %v830 = vadd.f32 %v786, %v824
        %v831 = vadd.f32 %v787, %v827
        %832 = vrot.lane.b32.xlu0 %v244, 127
        %v833 = vpop.permute.xlu0 %832
        %834 = vrot.lane.b32.xlu0 %v249, 127
        %v835 = vpop.permute.xlu0 %834
        %836 = vrot.lane.b32.xlu0 %v247, 127
        %v837 = vpop.permute.xlu0 %836
        %838 = vrot.lane.b32.xlu0 %v251, 127
        %v839 = vpop.permute.xlu0 %838
        %vm840 = vcmp.lt.s32.totalorder %v265, 127
        %v841 = vsel %vm840, %v833, %v837
        %v842 = vsel %vm840, %v835, %v839
        %v843 = vsel %vm840, %v837, %v833
        %v844 = vsel %vm840, %v839, %v835
        %s845 = sadd.s32 %s220, 5
        %s846 = sadd.s32 %s271, %s845
        %s847 = sld [smem:[#allocation4 + %s846]]
        %v848 = vstv %s847
        %v849 = vmul.f32 %v841, %v848
        %v850 = vmul.f32 %v843, %v848
        %v851 = vadd.f32 %v808, %v849
        %v852 = vadd.f32 %v809, %v850
        %s853 = sadd.s32 %s220, 86
        %s854 = sadd.s32 %s271, %s853
        %s855 = sld [smem:[#allocation4 + %s854]]
        %v856 = vstv %s855
        %v857 = vmul.f32 %v841, %v856
        %v858 = vmul.f32 %v843, %v856
        %v859 = vadd.f32 %v830, %v857
        %v860 = vadd.f32 %v831, %v858
        %s861 = sadd.s32 %s220, 14
        %s862 = sadd.s32 %s271, %s861
        %s863 = sld [smem:[#allocation4 + %s862]]
        %v864 = vstv %s863
        %v865 = vmul.f32 %v841, %v864
        %v866 = vmul.f32 %v843, %v864
        %v867 = vmul.f32 %v842, %v864
        %v868 = vmul.f32 %v844, %v864
        %v873 = vrot.slane %v865, 1
        %v874 = vrot.slane %v867, 1
        %v875 = vsel %vm299, %v873, %v874
        %v876 = vrot.slane %v866, 1
        %v877 = vrot.slane %v868, 1
        %v878 = vsel %vm299, %v876, %v877
        %v881 = vadd.f32 %v851, %v875
        %v882 = vadd.f32 %v852, %v878
        %s883 = sadd.s32 %s220, 95
        %s884 = sadd.s32 %s271, %s883
        %s885 = sld [smem:[#allocation4 + %s884]]
        %v886 = vstv %s885
        %v887 = vmul.f32 %v841, %v886
        %v888 = vmul.f32 %v843, %v886
        %v889 = vmul.f32 %v842, %v886
        %v890 = vmul.f32 %v844, %v886
        %v895 = vrot.slane %v887, 1
        %v896 = vrot.slane %v889, 1
        %v897 = vsel %vm299, %v895, %v896
        %v898 = vrot.slane %v888, 1
        %v899 = vrot.slane %v890, 1
        %v900 = vsel %vm299, %v898, %v899
        %v903 = vadd.f32 %v859, %v897
        %v904 = vadd.f32 %v860, %v900
        %s905 = sadd.s32 %s220, 23
        %s906 = sadd.s32 %s271, %s905
        %s907 = sld [smem:[#allocation4 + %s906]]
        %v908 = vstv %s907
        %v909 = vmul.f32 %v841, %v908
        %v910 = vmul.f32 %v843, %v908
        %v911 = vmul.f32 %v842, %v908
        %v912 = vmul.f32 %v844, %v908
        %v917 = vrot.slane %v909, 2
        %v918 = vrot.slane %v911, 2
        %v919 = vsel %vm344, %v917, %v918
        %v920 = vrot.slane %v910, 2
        %v921 = vrot.slane %v912, 2
        %v922 = vsel %vm344, %v920, %v921
        %v925 = vadd.f32 %v881, %v919
        %v926 = vadd.f32 %v882, %v922
        %s927 = sadd.s32 %s220, 104
        %s928 = sadd.s32 %s271, %s927
        %s929 = sld [smem:[#allocation4 + %s928]]
        %v930 = vstv %s929
        %v931 = vmul.f32 %v841, %v930
        %v932 = vmul.f32 %v843, %v930
        %v933 = vmul.f32 %v842, %v930
        %v934 = vmul.f32 %v844, %v930
        %v939 = vrot.slane %v931, 2
        %v940 = vrot.slane %v933, 2
        %v941 = vsel %vm344, %v939, %v940
        %v942 = vrot.slane %v932, 2
        %v943 = vrot.slane %v934, 2
        %v944 = vsel %vm344, %v942, %v943
        %v947 = vadd.f32 %v903, %v941
        %v948 = vadd.f32 %v904, %v944
        %949 = vrot.lane.b32.xlu0 %v244, 117
        %v950 = vpop.permute.xlu0 %949
        %951 = vrot.lane.b32.xlu0 %v249, 117
        %v952 = vpop.permute.xlu0 %951
        %953 = vrot.lane.b32.xlu0 %v247, 117
        %v954 = vpop.permute.xlu0 %953
        %955 = vrot.lane.b32.xlu0 %v251, 117
        %v956 = vpop.permute.xlu0 %955
        %vm957 = vcmp.lt.s32.totalorder %v265, 117
        %v958 = vsel %vm957, %v950, %v954
        %v959 = vsel %vm957, %v952, %v956
        %v960 = vsel %vm957, %v954, %v950
        %v961 = vsel %vm957, %v956, %v952
        %s962 = sadd.s32 %s220, 6
        %s963 = sadd.s32 %s271, %s962
        %s964 = sld [smem:[#allocation4 + %s963]]
        %v965 = vstv %s964
        %v966 = vmul.f32 %v958, %v965
        %v967 = vmul.f32 %v960, %v965
        %v968 = vadd.f32 %v925, %v966
        %v969 = vadd.f32 %v926, %v967
        %s970 = sadd.s32 %s220, 87
        %s971 = sadd.s32 %s271, %s970
        %s972 = sld [smem:[#allocation4 + %s971]]
        %v973 = vstv %s972
        %v974 = vmul.f32 %v958, %v973
        %v975 = vmul.f32 %v960, %v973
        %v976 = vadd.f32 %v947, %v974
        %v977 = vadd.f32 %v948, %v975
        %s978 = sadd.s32 %s220, 15
        %s979 = sadd.s32 %s271, %s978
        %s980 = sld [smem:[#allocation4 + %s979]]
        %v981 = vstv %s980
        %v982 = vmul.f32 %v958, %v981
        %v983 = vmul.f32 %v960, %v981
        %v984 = vmul.f32 %v959, %v981
        %v985 = vmul.f32 %v961, %v981
        %v990 = vrot.slane %v982, 1
        %v991 = vrot.slane %v984, 1
        %v992 = vsel %vm299, %v990, %v991
        %v993 = vrot.slane %v983, 1
        %v994 = vrot.slane %v985, 1
        %v995 = vsel %vm299, %v993, %v994
        %v998 = vadd.f32 %v968, %v992
        %v999 = vadd.f32 %v969, %v995
        %s1000 = sadd.s32 %s220, 96
        %s1001 = sadd.s32 %s271, %s1000
        %s1002 = sld [smem:[#allocation4 + %s1001]]
        %v1003 = vstv %s1002
        %v1004 = vmul.f32 %v958, %v1003
        %v1005 = vmul.f32 %v960, %v1003
        %v1006 = vmul.f32 %v959, %v1003
        %v1007 = vmul.f32 %v961, %v1003
        %v1012 = vrot.slane %v1004, 1
        %v1013 = vrot.slane %v1006, 1
        %v1014 = vsel %vm299, %v1012, %v1013
        %v1015 = vrot.slane %v1005, 1
        %v1016 = vrot.slane %v1007, 1
        %v1017 = vsel %vm299, %v1015, %v1016
        %v1020 = vadd.f32 %v976, %v1014
        %v1021 = vadd.f32 %v977, %v1017
        %s1022 = sadd.s32 %s220, 24
        %s1023 = sadd.s32 %s271, %s1022
        %s1024 = sld [smem:[#allocation4 + %s1023]]
        %v1025 = vstv %s1024
        %v1026 = vmul.f32 %v958, %v1025
        %v1027 = vmul.f32 %v960, %v1025
        %v1028 = vmul.f32 %v959, %v1025
        %v1029 = vmul.f32 %v961, %v1025
        %v1034 = vrot.slane %v1026, 2
        %v1035 = vrot.slane %v1028, 2
        %v1036 = vsel %vm344, %v1034, %v1035
        %v1037 = vrot.slane %v1027, 2
        %v1038 = vrot.slane %v1029, 2
        %v1039 = vsel %vm344, %v1037, %v1038
        %v1042 = vadd.f32 %v998, %v1036
        %v1043 = vadd.f32 %v999, %v1039
        %s1044 = sadd.s32 %s220, 105
        %s1045 = sadd.s32 %s271, %s1044
        %s1046 = sld [smem:[#allocation4 + %s1045]]
        %v1047 = vstv %s1046
        %v1048 = vmul.f32 %v958, %v1047
        %v1049 = vmul.f32 %v960, %v1047
        %v1050 = vmul.f32 %v959, %v1047
        %v1051 = vmul.f32 %v961, %v1047
        %v1056 = vrot.slane %v1048, 2
        %v1057 = vrot.slane %v1050, 2
        %v1058 = vsel %vm344, %v1056, %v1057
        %v1059 = vrot.slane %v1049, 2
        %v1060 = vrot.slane %v1051, 2
        %v1061 = vsel %vm344, %v1059, %v1060
        %v1064 = vadd.f32 %v1020, %v1058
        %v1065 = vadd.f32 %v1021, %v1061
        %1066 = vrot.lane.b32.xlu0 %v244, 116
        %v1067 = vpop.permute.xlu0 %1066
        %1068 = vrot.lane.b32.xlu0 %v249, 116
        %v1069 = vpop.permute.xlu0 %1068
        %1070 = vrot.lane.b32.xlu0 %v247, 116
        %v1071 = vpop.permute.xlu0 %1070
        %1072 = vrot.lane.b32.xlu0 %v251, 116
        %v1073 = vpop.permute.xlu0 %1072
        %vm1074 = vcmp.lt.s32.totalorder %v265, 116
        %v1075 = vsel %vm1074, %v1067, %v1071
        %v1076 = vsel %vm1074, %v1069, %v1073
        %v1077 = vsel %vm1074, %v1071, %v1067
        %v1078 = vsel %vm1074, %v1073, %v1069
        %s1079 = sadd.s32 %s220, 7
        %s1080 = sadd.s32 %s271, %s1079
        %s1081 = sld [smem:[#allocation4 + %s1080]]
        %v1082 = vstv %s1081
        %v1083 = vmul.f32 %v1075, %v1082
        %v1084 = vmul.f32 %v1077, %v1082
        %v1085 = vadd.f32 %v1042, %v1083
        %v1086 = vadd.f32 %v1043, %v1084
        %s1087 = sadd.s32 %s220, 88
        %s1088 = sadd.s32 %s271, %s1087
        %s1089 = sld [smem:[#allocation4 + %s1088]]
        %v1090 = vstv %s1089
        %v1091 = vmul.f32 %v1075, %v1090
        %v1092 = vmul.f32 %v1077, %v1090
        %v1093 = vadd.f32 %v1064, %v1091
        %v1094 = vadd.f32 %v1065, %v1092
        %s1095 = sadd.s32 %s220, 16
        %s1096 = sadd.s32 %s271, %s1095
        %s1097 = sld [smem:[#allocation4 + %s1096]]
        %v1098 = vstv %s1097
        %v1099 = vmul.f32 %v1075, %v1098
        %v1100 = vmul.f32 %v1077, %v1098
        %v1101 = vmul.f32 %v1076, %v1098
        %v1102 = vmul.f32 %v1078, %v1098
        %v1107 = vrot.slane %v1099, 1
        %v1108 = vrot.slane %v1101, 1
        %v1109 = vsel %vm299, %v1107, %v1108
        %v1110 = vrot.slane %v1100, 1
        %v1111 = vrot.slane %v1102, 1
        %v1112 = vsel %vm299, %v1110, %v1111
        %v1115 = vadd.f32 %v1085, %v1109
        %v1116 = vadd.f32 %v1086, %v1112
        %s1117 = sadd.s32 %s220, 97
        %s1118 = sadd.s32 %s271, %s1117
        %s1119 = sld [smem:[#allocation4 + %s1118]]
        %v1120 = vstv %s1119
        %v1121 = vmul.f32 %v1075, %v1120
        %v1122 = vmul.f32 %v1077, %v1120
        %v1123 = vmul.f32 %v1076, %v1120
        %v1124 = vmul.f32 %v1078, %v1120
        %v1129 = vrot.slane %v1121, 1
        %v1130 = vrot.slane %v1123, 1
        %v1131 = vsel %vm299, %v1129, %v1130
        %v1132 = vrot.slane %v1122, 1
        %v1133 = vrot.slane %v1124, 1
        %v1134 = vsel %vm299, %v1132, %v1133
        %v1137 = vadd.f32 %v1093, %v1131
        %v1138 = vadd.f32 %v1094, %v1134
        %s1139 = sadd.s32 %s220, 25
        %s1140 = sadd.s32 %s271, %s1139
        %s1141 = sld [smem:[#allocation4 + %s1140]]
        %v1142 = vstv %s1141
        %v1143 = vmul.f32 %v1075, %v1142
        %v1144 = vmul.f32 %v1077, %v1142
        %v1145 = vmul.f32 %v1076, %v1142
        %v1146 = vmul.f32 %v1078, %v1142
        %v1151 = vrot.slane %v1143, 2
        %v1152 = vrot.slane %v1145, 2
        %v1153 = vsel %vm344, %v1151, %v1152
        %v1154 = vrot.slane %v1144, 2
        %v1155 = vrot.slane %v1146, 2
        %v1156 = vsel %vm344, %v1154, %v1155
        %v1159 = vadd.f32 %v1115, %v1153
        %v1160 = vadd.f32 %v1116, %v1156
        %s1161 = sadd.s32 %s220, 106
        %s1162 = sadd.s32 %s271, %s1161
        %s1163 = sld [smem:[#allocation4 + %s1162]]
        %v1164 = vstv %s1163
        %v1165 = vmul.f32 %v1075, %v1164
        %v1166 = vmul.f32 %v1077, %v1164
        %v1167 = vmul.f32 %v1076, %v1164
        %v1168 = vmul.f32 %v1078, %v1164
        %v1173 = vrot.slane %v1165, 2
        %v1174 = vrot.slane %v1167, 2
        %v1175 = vsel %vm344, %v1173, %v1174
        %v1176 = vrot.slane %v1166, 2
        %v1177 = vrot.slane %v1168, 2
        %v1178 = vsel %vm344, %v1176, %v1177
        %v1181 = vadd.f32 %v1137, %v1175
        %v1182 = vadd.f32 %v1138, %v1178
        %1183 = vrot.lane.b32.xlu0 %v244, 115
        %v1184 = vpop.permute.xlu0 %1183
        %1185 = vrot.lane.b32.xlu0 %v249, 115
        %v1186 = vpop.permute.xlu0 %1185
        %1187 = vrot.lane.b32.xlu0 %v247, 115
        %v1188 = vpop.permute.xlu0 %1187
        %1189 = vrot.lane.b32.xlu0 %v251, 115
        %v1190 = vpop.permute.xlu0 %1189
        %vm1191 = vcmp.lt.s32.totalorder %v265, 115
        %v1192 = vsel %vm1191, %v1184, %v1188
        %v1193 = vsel %vm1191, %v1186, %v1190
        %v1194 = vsel %vm1191, %v1188, %v1184
        %v1195 = vsel %vm1191, %v1190, %v1186
        %s1196 = sadd.s32 %s220, 8
        %s1197 = sadd.s32 %s271, %s1196
        %s1198 = sld [smem:[#allocation4 + %s1197]]
        %v1199 = vstv %s1198
        %v1200 = vmul.f32 %v1192, %v1199
        %v1201 = vmul.f32 %v1194, %v1199
        %v1202 = vadd.f32 %v1159, %v1200
        %v1203 = vadd.f32 %v1160, %v1201
        %s1204 = sadd.s32 %s220, 89
        %s1205 = sadd.s32 %s271, %s1204
        %s1206 = sld [smem:[#allocation4 + %s1205]]
        %v1207 = vstv %s1206
        %v1208 = vmul.f32 %v1192, %v1207
        %v1209 = vmul.f32 %v1194, %v1207
        %v1210 = vadd.f32 %v1181, %v1208
        %v1211 = vadd.f32 %v1182, %v1209
        %s1212 = sadd.s32 %s220, 17
        %s1213 = sadd.s32 %s271, %s1212
        %s1214 = sld [smem:[#allocation4 + %s1213]]
        %v1215 = vstv %s1214
        %v1216 = vmul.f32 %v1192, %v1215
        %v1217 = vmul.f32 %v1194, %v1215
        %v1218 = vmul.f32 %v1193, %v1215
        %v1219 = vmul.f32 %v1195, %v1215
        %v1224 = vrot.slane %v1216, 1
        %v1225 = vrot.slane %v1218, 1
        %v1226 = vsel %vm299, %v1224, %v1225
        %v1227 = vrot.slane %v1217, 1
        %v1228 = vrot.slane %v1219, 1
        %v1229 = vsel %vm299, %v1227, %v1228
        %v1232 = vadd.f32 %v1202, %v1226
        %v1233 = vadd.f32 %v1203, %v1229
        %s1234 = sadd.s32 %s220, 98
        %s1235 = sadd.s32 %s271, %s1234
        %s1236 = sld [smem:[#allocation4 + %s1235]]
        %v1237 = vstv %s1236
        %v1238 = vmul.f32 %v1192, %v1237
        %v1239 = vmul.f32 %v1194, %v1237
        %v1240 = vmul.f32 %v1193, %v1237
        %v1241 = vmul.f32 %v1195, %v1237
        %v1246 = vrot.slane %v1238, 1
        %v1247 = vrot.slane %v1240, 1
        %v1248 = vsel %vm299, %v1246, %v1247
        %v1249 = vrot.slane %v1239, 1
        %v1250 = vrot.slane %v1241, 1
        %v1251 = vsel %vm299, %v1249, %v1250
        %v1254 = vadd.f32 %v1210, %v1248
        %v1255 = vadd.f32 %v1211, %v1251
        %s1256 = sadd.s32 %s220, 26
        %s1257 = sadd.s32 %s271, %s1256
        %s1258 = sld [smem:[#allocation4 + %s1257]]
        %v1259 = vstv %s1258
        %v1260 = vmul.f32 %v1192, %v1259
        %v1261 = vmul.f32 %v1194, %v1259
        %v1262 = vmul.f32 %v1193, %v1259
        %v1263 = vmul.f32 %v1195, %v1259
        %v1268 = vrot.slane %v1260, 2
        %v1269 = vrot.slane %v1262, 2
        %v1270 = vsel %vm344, %v1268, %v1269
        %v1271 = vrot.slane %v1261, 2
        %v1272 = vrot.slane %v1263, 2
        %v1273 = vsel %vm344, %v1271, %v1272
        %v1276 = vadd.f32 %v1232, %v1270
        %v1277 = vadd.f32 %v1233, %v1273
        %s1278 = sadd.s32 %s220, 107
        %s1279 = sadd.s32 %s271, %s1278
        %s1280 = sld [smem:[#allocation4 + %s1279]]
        %v1281 = vstv %s1280
        %v1282 = vmul.f32 %v1192, %v1281
        %v1283 = vmul.f32 %v1194, %v1281
        %v1284 = vmul.f32 %v1193, %v1281
        %v1285 = vmul.f32 %v1195, %v1281
        %v1290 = vrot.slane %v1282, 2
        %v1291 = vrot.slane %v1284, 2
        %v1292 = vsel %vm344, %v1290, %v1291
        %v1293 = vrot.slane %v1283, 2
        %v1294 = vrot.slane %v1285, 2
        %v1295 = vsel %vm344, %v1293, %v1294
        %v1298 = vadd.f32 %v1254, %v1292
        %v1299 = vadd.f32 %v1255, %v1295
        %s1300 = scalar_lea.vmem [#allocation8], 48
        %v1301 = vld [vmem:[%s1300] sm:$0x80]
        %v1302 = vld [vmem:[%s1300 + $0x8] sm:$0x80]
        %v1303 = vld [vmem:[%s1300 + $0x10] sm:$0xff]
        %v1304 = vld [vmem:[%s1300 + $0x18] sm:$0xff]
        %v1305 = vld [vmem:[%s1300 + $0x20] sm:$0x1]
        %v1306 = vld [vmem:[%s1300 + $0x28] sm:$0x1]
        %v1313 = vrot.slane %v1301, 7
        %v1314 = vrot.slane %v1303, 7
        %v1315 = vsel %vm241, %v1313, %v1314
        %v1316 = vrot.slane %v1302, 7
        %v1317 = vrot.slane %v1304, 7
        %v1318 = vsel %vm241, %v1316, %v1317
        %v1319 = vrot.slane %v1305, 7
        %v1320 = vsel %vm241, %v1314, %v1319
        %v1321 = vrot.slane %v1306, 7
        %v1322 = vsel %vm241, %v1317, %v1321
        %1327 = vrot.lane.b32.xlu0 %v1315, 13
        %v1328 = vpop.permute.xlu0 %1327
        %1329 = vrot.lane.b32.xlu0 %v1320, 13
        %v1330 = vpop.permute.xlu0 %1329
        %1331 = vrot.lane.b32.xlu0 %v1318, 13
        %v1332 = vpop.permute.xlu0 %1331
        %1333 = vrot.lane.b32.xlu0 %v1322, 13
        %v1334 = vpop.permute.xlu0 %1333
        %v1335 = vsel %vm266, %v1328, %v1332
        %v1336 = vsel %vm266, %v1330, %v1334
        %v1337 = vsel %vm266, %v1332, %v1328
        %v1338 = vsel %vm266, %v1334, %v1330
        %s1339 = sadd.s32 %s220, 27
        %s1340 = sadd.s32 %s271, %s1339
        %s1341 = sld [smem:[#allocation4 + %s1340]]
        %v1342 = vstv %s1341
        %v1343 = vmul.f32 %v1337, %v1342
        %v1344 = vmul.f32 %v1335, %v1342
        %v1345 = vadd.f32 %v1276, %v1343
        %v1346 = vadd.f32 %v1277, %v1344
        %s1347 = sadd.s32 %s220, 108
        %s1348 = sadd.s32 %s271, %s1347
        %s1349 = sld [smem:[#allocation4 + %s1348]]
        %v1350 = vstv %s1349
        %v1351 = vmul.f32 %v1337, %v1350
        %v1352 = vmul.f32 %v1335, %v1350
        %v1353 = vadd.f32 %v1298, %v1351
        %v1354 = vadd.f32 %v1299, %v1352
        %s1355 = sadd.s32 %s220, 36
        %s1356 = sadd.s32 %s271, %s1355
        %s1357 = sld [smem:[#allocation4 + %s1356]]
        %v1358 = vstv %s1357
        %v1359 = vmul.f32 %v1337, %v1358
        %v1360 = vmul.f32 %v1335, %v1358
        %v1361 = vmul.f32 %v1338, %v1358
        %v1362 = vmul.f32 %v1336, %v1358
        %v1367 = vrot.slane %v1359, 1
        %v1368 = vrot.slane %v1361, 1
        %v1369 = vsel %vm299, %v1367, %v1368
        %v1370 = vrot.slane %v1360, 1
        %v1371 = vrot.slane %v1362, 1
        %v1372 = vsel %vm299, %v1370, %v1371
        %v1375 = vadd.f32 %v1345, %v1369
        %v1376 = vadd.f32 %v1346, %v1372
        %s1377 = sadd.s32 %s220, 117
        %s1378 = sadd.s32 %s271, %s1377
        %s1379 = sld [smem:[#allocation4 + %s1378]]
        %v1380 = vstv %s1379
        %v1381 = vmul.f32 %v1337, %v1380
        %v1382 = vmul.f32 %v1335, %v1380
        %v1383 = vmul.f32 %v1338, %v1380
        %v1384 = vmul.f32 %v1336, %v1380
        %v1389 = vrot.slane %v1381, 1
        %v1390 = vrot.slane %v1383, 1
        %v1391 = vsel %vm299, %v1389, %v1390
        %v1392 = vrot.slane %v1382, 1
        %v1393 = vrot.slane %v1384, 1
        %v1394 = vsel %vm299, %v1392, %v1393
        %v1397 = vadd.f32 %v1353, %v1391
        %v1398 = vadd.f32 %v1354, %v1394
        %s1399 = sadd.s32 %s220, 45
        %s1400 = sadd.s32 %s271, %s1399
        %s1401 = sld [smem:[#allocation4 + %s1400]]
        %v1402 = vstv %s1401
        %v1403 = vmul.f32 %v1337, %v1402
        %v1404 = vmul.f32 %v1335, %v1402
        %v1405 = vmul.f32 %v1338, %v1402
        %v1406 = vmul.f32 %v1336, %v1402
        %v1411 = vrot.slane %v1403, 2
        %v1412 = vrot.slane %v1405, 2
        %v1413 = vsel %vm344, %v1411, %v1412
        %v1414 = vrot.slane %v1404, 2
        %v1415 = vrot.slane %v1406, 2
        %v1416 = vsel %vm344, %v1414, %v1415
        %v1419 = vadd.f32 %v1375, %v1413
        %v1420 = vadd.f32 %v1376, %v1416
        %s1421 = sadd.s32 %s220, 126
        %s1422 = sadd.s32 %s271, %s1421
        %s1423 = sld [smem:[#allocation4 + %s1422]]
        %v1424 = vstv %s1423
        %v1425 = vmul.f32 %v1337, %v1424
        %v1426 = vmul.f32 %v1335, %v1424
        %v1427 = vmul.f32 %v1338, %v1424
        %v1428 = vmul.f32 %v1336, %v1424
        %v1433 = vrot.slane %v1425, 2
        %v1434 = vrot.slane %v1427, 2
        %v1435 = vsel %vm344, %v1433, %v1434
        %v1436 = vrot.slane %v1426, 2
        %v1437 = vrot.slane %v1428, 2
        %v1438 = vsel %vm344, %v1436, %v1437
        %v1441 = vadd.f32 %v1397, %v1435
        %v1442 = vadd.f32 %v1398, %v1438
        %1443 = vrot.lane.b32.xlu0 %v1315, 12
        %v1444 = vpop.permute.xlu0 %1443
        %1445 = vrot.lane.b32.xlu0 %v1320, 12
        %v1446 = vpop.permute.xlu0 %1445
        %1447 = vrot.lane.b32.xlu0 %v1318, 12
        %v1448 = vpop.permute.xlu0 %1447
        %1449 = vrot.lane.b32.xlu0 %v1322, 12
        %v1450 = vpop.permute.xlu0 %1449
        %v1451 = vsel %vm385, %v1444, %v1448
        %v1452 = vsel %vm385, %v1446, %v1450
        %v1453 = vsel %vm385, %v1448, %v1444
        %v1454 = vsel %vm385, %v1450, %v1446
        %s1455 = sadd.s32 %s220, 28
        %s1456 = sadd.s32 %s271, %s1455
        %s1457 = sld [smem:[#allocation4 + %s1456]]
        %v1458 = vstv %s1457
        %v1459 = vmul.f32 %v1453, %v1458
        %v1460 = vmul.f32 %v1451, %v1458
        %v1461 = vadd.f32 %v1419, %v1459
        %v1462 = vadd.f32 %v1420, %v1460
        %s1463 = sadd.s32 %s220, 109
        %s1464 = sadd.s32 %s271, %s1463
        %s1465 = sld [smem:[#allocation4 + %s1464]]
        %v1466 = vstv %s1465
        %v1467 = vmul.f32 %v1453, %v1466
        %v1468 = vmul.f32 %v1451, %v1466
        %v1469 = vadd.f32 %v1441, %v1467
        %v1470 = vadd.f32 %v1442, %v1468
        %s1471 = sadd.s32 %s220, 37
        %s1472 = sadd.s32 %s271, %s1471
        %s1473 = sld [smem:[#allocation4 + %s1472]]
        %v1474 = vstv %s1473
        %v1475 = vmul.f32 %v1453, %v1474
        %v1476 = vmul.f32 %v1451, %v1474
        %v1477 = vmul.f32 %v1454, %v1474
        %v1478 = vmul.f32 %v1452, %v1474
        %v1483 = vrot.slane %v1475, 1
        %v1484 = vrot.slane %v1477, 1
        %v1485 = vsel %vm299, %v1483, %v1484
        %v1486 = vrot.slane %v1476, 1
        %v1487 = vrot.slane %v1478, 1
        %v1488 = vsel %vm299, %v1486, %v1487
        %v1491 = vadd.f32 %v1461, %v1485
        %v1492 = vadd.f32 %v1462, %v1488
        %s1493 = sadd.s32 %s220, 118
        %s1494 = sadd.s32 %s271, %s1493
        %s1495 = sld [smem:[#allocation4 + %s1494]]
        %v1496 = vstv %s1495
        %v1497 = vmul.f32 %v1453, %v1496
        %v1498 = vmul.f32 %v1451, %v1496
        %v1499 = vmul.f32 %v1454, %v1496
        %v1500 = vmul.f32 %v1452, %v1496
        %v1505 = vrot.slane %v1497, 1
        %v1506 = vrot.slane %v1499, 1
        %v1507 = vsel %vm299, %v1505, %v1506
        %v1508 = vrot.slane %v1498, 1
        %v1509 = vrot.slane %v1500, 1
        %v1510 = vsel %vm299, %v1508, %v1509
        %v1513 = vadd.f32 %v1469, %v1507
        %v1514 = vadd.f32 %v1470, %v1510
        %s1515 = sadd.s32 %s220, 46
        %s1516 = sadd.s32 %s271, %s1515
        %s1517 = sld [smem:[#allocation4 + %s1516]]
        %v1518 = vstv %s1517
        %v1519 = vmul.f32 %v1453, %v1518
        %v1520 = vmul.f32 %v1451, %v1518
        %v1521 = vmul.f32 %v1454, %v1518
        %v1522 = vmul.f32 %v1452, %v1518
        %v1527 = vrot.slane %v1519, 2
        %v1528 = vrot.slane %v1521, 2
        %v1529 = vsel %vm344, %v1527, %v1528
        %v1530 = vrot.slane %v1520, 2
        %v1531 = vrot.slane %v1522, 2
        %v1532 = vsel %vm344, %v1530, %v1531
        %v1535 = vadd.f32 %v1491, %v1529
        %v1536 = vadd.f32 %v1492, %v1532
        %s1537 = sadd.s32 %s220, 127
        %s1538 = sadd.s32 %s271, %s1537
        %s1539 = sld [smem:[#allocation4 + %s1538]]
        %v1540 = vstv %s1539
        %v1541 = vmul.f32 %v1453, %v1540
        %v1542 = vmul.f32 %v1451, %v1540
        %v1543 = vmul.f32 %v1454, %v1540
        %v1544 = vmul.f32 %v1452, %v1540
        %v1549 = vrot.slane %v1541, 2
        %v1550 = vrot.slane %v1543, 2
        %v1551 = vsel %vm344, %v1549, %v1550
        %v1552 = vrot.slane %v1542, 2
        %v1553 = vrot.slane %v1544, 2
        %v1554 = vsel %vm344, %v1552, %v1553
        %v1557 = vadd.f32 %v1513, %v1551
        %v1558 = vadd.f32 %v1514, %v1554
        %1559 = vrot.lane.b32.xlu0 %v1315, 11
        %v1560 = vpop.permute.xlu0 %1559
        %1561 = vrot.lane.b32.xlu0 %v1320, 11
        %v1562 = vpop.permute.xlu0 %1561
        %1563 = vrot.lane.b32.xlu0 %v1318, 11
        %v1564 = vpop.permute.xlu0 %1563
        %1565 = vrot.lane.b32.xlu0 %v1322, 11
        %v1566 = vpop.permute.xlu0 %1565
        %v1567 = vsel %vm502, %v1560, %v1564
        %v1568 = vsel %vm502, %v1562, %v1566
        %v1569 = vsel %vm502, %v1564, %v1560
        %v1570 = vsel %vm502, %v1566, %v1562
        %s1571 = sadd.s32 %s220, 29
        %s1572 = sadd.s32 %s271, %s1571
        %s1573 = sld [smem:[#allocation4 + %s1572]]
        %v1574 = vstv %s1573
        %v1575 = vmul.f32 %v1569, %v1574
        %v1576 = vmul.f32 %v1567, %v1574
        %v1577 = vadd.f32 %v1535, %v1575
        %v1578 = vadd.f32 %v1536, %v1576
        %s1579 = sadd.s32 %s220, 110
        %s1580 = sadd.s32 %s271, %s1579
        %s1581 = sld [smem:[#allocation4 + %s1580]]
        %v1582 = vstv %s1581
        %v1583 = vmul.f32 %v1569, %v1582
        %v1584 = vmul.f32 %v1567, %v1582
        %v1585 = vadd.f32 %v1557, %v1583
        %v1586 = vadd.f32 %v1558, %v1584
        %s1587 = sadd.s32 %s220, 38
        %s1588 = sadd.s32 %s271, %s1587
        %s1589 = sld [smem:[#allocation4 + %s1588]]
        %v1590 = vstv %s1589
        %v1591 = vmul.f32 %v1569, %v1590
        %v1592 = vmul.f32 %v1567, %v1590
        %v1593 = vmul.f32 %v1570, %v1590
        %v1594 = vmul.f32 %v1568, %v1590
        %v1599 = vrot.slane %v1591, 1
        %v1600 = vrot.slane %v1593, 1
        %v1601 = vsel %vm299, %v1599, %v1600
        %v1602 = vrot.slane %v1592, 1
        %v1603 = vrot.slane %v1594, 1
        %v1604 = vsel %vm299, %v1602, %v1603
        %v1607 = vadd.f32 %v1577, %v1601
        %v1608 = vadd.f32 %v1578, %v1604
        %s1609 = sadd.s32 %s220, 119
        %s1610 = sadd.s32 %s271, %s1609
        %s1611 = sld [smem:[#allocation4 + %s1610]]
        %v1612 = vstv %s1611
        %v1613 = vmul.f32 %v1569, %v1612
        %v1614 = vmul.f32 %v1567, %v1612
        %v1615 = vmul.f32 %v1570, %v1612
        %v1616 = vmul.f32 %v1568, %v1612
        %v1621 = vrot.slane %v1613, 1
        %v1622 = vrot.slane %v1615, 1
        %v1623 = vsel %vm299, %v1621, %v1622
        %v1624 = vrot.slane %v1614, 1
        %v1625 = vrot.slane %v1616, 1
        %v1626 = vsel %vm299, %v1624, %v1625
        %v1629 = vadd.f32 %v1585, %v1623
        %v1630 = vadd.f32 %v1586, %v1626
        %s1631 = sadd.s32 %s220, 47
        %s1632 = sadd.s32 %s271, %s1631
        %s1633 = sld [smem:[#allocation4 + %s1632]]
        %v1634 = vstv %s1633
        %v1635 = vmul.f32 %v1569, %v1634
        %v1636 = vmul.f32 %v1567, %v1634
        %v1637 = vmul.f32 %v1570, %v1634
        %v1638 = vmul.f32 %v1568, %v1634
        %v1643 = vrot.slane %v1635, 2
        %v1644 = vrot.slane %v1637, 2
        %v1645 = vsel %vm344, %v1643, %v1644
        %v1646 = vrot.slane %v1636, 2
        %v1647 = vrot.slane %v1638, 2
        %v1648 = vsel %vm344, %v1646, %v1647
        %v1651 = vadd.f32 %v1607, %v1645
        %v1652 = vadd.f32 %v1608, %v1648
        %s1653 = sadd.s32 %s217, %s220
        %s1654 = sld [smem:[#allocation4 + %s1653]]
        %v1655 = vstv %s1654
        %v1656 = vmul.f32 %v1569, %v1655
        %v1657 = vmul.f32 %v1567, %v1655
        %v1658 = vmul.f32 %v1570, %v1655
        %v1659 = vmul.f32 %v1568, %v1655
        %v1664 = vrot.slane %v1656, 2
        %v1665 = vrot.slane %v1658, 2
        %v1666 = vsel %vm344, %v1664, %v1665
        %v1667 = vrot.slane %v1657, 2
        %v1668 = vrot.slane %v1659, 2
        %v1669 = vsel %vm344, %v1667, %v1668
        %v1672 = vadd.f32 %v1629, %v1666
        %v1673 = vadd.f32 %v1630, %v1669
        %1674 = vrot.lane.b32.xlu0 %v1315, 1
        %v1675 = vpop.permute.xlu0 %1674
        %1676 = vrot.lane.b32.xlu0 %v1320, 1
        %v1677 = vpop.permute.xlu0 %1676
        %1678 = vrot.lane.b32.xlu0 %v1318, 1
        %v1679 = vpop.permute.xlu0 %1678
        %1680 = vrot.lane.b32.xlu0 %v1322, 1
        %v1681 = vpop.permute.xlu0 %1680
        %v1682 = vsel %vm619, %v1675, %v1679
        %v1683 = vsel %vm619, %v1677, %v1681
        %v1684 = vsel %vm619, %v1679, %v1675
        %v1685 = vsel %vm619, %v1681, %v1677
        %s1686 = sadd.s32 %s220, 30
        %s1687 = sadd.s32 %s271, %s1686
        %s1688 = sld [smem:[#allocation4 + %s1687]]
        %v1689 = vstv %s1688
        %v1690 = vmul.f32 %v1684, %v1689
        %v1691 = vmul.f32 %v1682, %v1689
        %v1692 = vadd.f32 %v1651, %v1690
        %v1693 = vadd.f32 %v1652, %v1691
        %s1694 = sadd.s32 %s220, 111
        %s1695 = sadd.s32 %s271, %s1694
        %s1696 = sld [smem:[#allocation4 + %s1695]]
        %v1697 = vstv %s1696
        %v1698 = vmul.f32 %v1684, %v1697
        %v1699 = vmul.f32 %v1682, %v1697
        %v1700 = vadd.f32 %v1672, %v1698
        %v1701 = vadd.f32 %v1673, %v1699
        %s1702 = sadd.s32 %s220, 39
        %s1703 = sadd.s32 %s271, %s1702
        %s1704 = sld [smem:[#allocation4 + %s1703]]
        %v1705 = vstv %s1704
        %v1706 = vmul.f32 %v1684, %v1705
        %v1707 = vmul.f32 %v1682, %v1705
        %v1708 = vmul.f32 %v1685, %v1705
        %v1709 = vmul.f32 %v1683, %v1705
        %v1714 = vrot.slane %v1706, 1
        %v1715 = vrot.slane %v1708, 1
        %v1716 = vsel %vm299, %v1714, %v1715
        %v1717 = vrot.slane %v1707, 1
        %v1718 = vrot.slane %v1709, 1
        %v1719 = vsel %vm299, %v1717, %v1718
        %v1722 = vadd.f32 %v1692, %v1716
        %v1723 = vadd.f32 %v1693, %v1719
        %s1724 = sadd.s32 %s220, 120
        %s1725 = sadd.s32 %s271, %s1724
        %s1726 = sld [smem:[#allocation4 + %s1725]]
        %v1727 = vstv %s1726
        %v1728 = vmul.f32 %v1684, %v1727
        %v1729 = vmul.f32 %v1682, %v1727
        %v1730 = vmul.f32 %v1685, %v1727
        %v1731 = vmul.f32 %v1683, %v1727
        %v1736 = vrot.slane %v1728, 1
        %v1737 = vrot.slane %v1730, 1
        %v1738 = vsel %vm299, %v1736, %v1737
        %v1739 = vrot.slane %v1729, 1
        %v1740 = vrot.slane %v1731, 1
        %v1741 = vsel %vm299, %v1739, %v1740
        %v1744 = vadd.f32 %v1700, %v1738
        %v1745 = vadd.f32 %v1701, %v1741
        %s1746 = sadd.s32 %s220, 48
        %s1747 = sadd.s32 %s271, %s1746
        %s1748 = sld [smem:[#allocation4 + %s1747]]
        %v1749 = vstv %s1748
        %v1750 = vmul.f32 %v1684, %v1749
        %v1751 = vmul.f32 %v1682, %v1749
        %v1752 = vmul.f32 %v1685, %v1749
        %v1753 = vmul.f32 %v1683, %v1749
        %v1758 = vrot.slane %v1750, 2
        %v1759 = vrot.slane %v1752, 2
        %v1760 = vsel %vm344, %v1758, %v1759
        %v1761 = vrot.slane %v1751, 2
        %v1762 = vrot.slane %v1753, 2
        %v1763 = vsel %vm344, %v1761, %v1762
        %v1766 = vadd.f32 %v1722, %v1760
        %v1767 = vadd.f32 %v1723, %v1763
        %s1768 = sadd.s32 %s217, %s390
        %s1769 = sld [smem:[#allocation4 + %s1768]]
        %v1770 = vstv %s1769
        %v1771 = vmul.f32 %v1684, %v1770
        %v1772 = vmul.f32 %v1682, %v1770
        %v1773 = vmul.f32 %v1685, %v1770
        %v1774 = vmul.f32 %v1683, %v1770
        %v1779 = vrot.slane %v1771, 2
        %v1780 = vrot.slane %v1773, 2
        %v1781 = vsel %vm344, %v1779, %v1780
        %v1782 = vrot.slane %v1772, 2
        %v1783 = vrot.slane %v1774, 2
        %v1784 = vsel %vm344, %v1782, %v1783
        %v1787 = vadd.f32 %v1744, %v1781
        %v1788 = vadd.f32 %v1745, %v1784
        %s1789 = sadd.s32 %s220, 31
        %s1790 = sadd.s32 %s271, %s1789
        %s1791 = sld [smem:[#allocation4 + %s1790]]
        %v1792 = vstv %s1791
        %v1793 = vmul.f32 %v1301, %v1792
        %v1794 = vmul.f32 %v1302, %v1792
        %v1795 = vmul.f32 %v1303, %v1792
        %v1796 = vmul.f32 %v1304, %v1792
        %v1801 = vrot.slane %v1793, 7
        %v1802 = vrot.slane %v1795, 7
        %v1803 = vsel %vm241, %v1801, %v1802
        %v1804 = vrot.slane %v1794, 7
        %v1805 = vrot.slane %v1796, 7
        %v1806 = vsel %vm241, %v1804, %v1805
        %v1809 = vadd.f32 %v1766, %v1803
        %v1810 = vadd.f32 %v1767, %v1806
        %s1811 = sadd.s32 %s220, 112
        %s1812 = sadd.s32 %s271, %s1811
        %s1813 = sld [smem:[#allocation4 + %s1812]]
        %v1814 = vstv %s1813
        %v1815 = vmul.f32 %v1301, %v1814
        %v1816 = vmul.f32 %v1302, %v1814
        %v1817 = vmul.f32 %v1303, %v1814
        %v1818 = vmul.f32 %v1304, %v1814
        %v1823 = vrot.slane %v1815, 7
        %v1824 = vrot.slane %v1817, 7
        %v1825 = vsel %vm241, %v1823, %v1824
        %v1826 = vrot.slane %v1816, 7
        %v1827 = vrot.slane %v1818, 7
        %v1828 = vsel %vm241, %v1826, %v1827
        %v1831 = vadd.f32 %v1787, %v1825
        %v1832 = vadd.f32 %v1788, %v1828
        %s1833 = sadd.s32 %s220, 40
        %s1834 = sadd.s32 %s271, %s1833
        %s1835 = sld [smem:[#allocation4 + %s1834]]
        %v1836 = vstv %s1835
        %v1837 = vmul.f32 %v1303, %v1836
        %v1838 = vmul.f32 %v1304, %v1836
        %v1839 = vadd.f32 %v1809, %v1837
        %v1840 = vadd.f32 %v1810, %v1838
        %s1841 = sadd.s32 %s220, 121
        %s1842 = sadd.s32 %s271, %s1841
        %s1843 = sld [smem:[#allocation4 + %s1842]]
        %v1844 = vstv %s1843
        %v1845 = vmul.f32 %v1303, %v1844
        %v1846 = vmul.f32 %v1304, %v1844
        %v1847 = vadd.f32 %v1831, %v1845
        %v1848 = vadd.f32 %v1832, %v1846
        %s1849 = sadd.s32 %s220, 49
        %s1850 = sadd.s32 %s271, %s1849
        %s1851 = sld [smem:[#allocation4 + %s1850]]
        %v1852 = vstv %s1851
        %v1853 = vmul.f32 %v1303, %v1852
        %v1854 = vmul.f32 %v1304, %v1852
        %v1855 = vmul.f32 %v1305, %v1852
        %v1856 = vmul.f32 %v1306, %v1852
        %v1861 = vrot.slane %v1853, 1
        %v1862 = vrot.slane %v1855, 1
        %v1863 = vsel %vm299, %v1861, %v1862
        %v1864 = vrot.slane %v1854, 1
        %v1865 = vrot.slane %v1856, 1
        %v1866 = vsel %vm299, %v1864, %v1865
        %v1869 = vadd.f32 %v1839, %v1863
        %v1870 = vadd.f32 %v1840, %v1866
        %s1871 = sadd.s32 %s217, %s507
        %s1872 = sld [smem:[#allocation4 + %s1871]]
        %v1873 = vstv %s1872
        %v1874 = vmul.f32 %v1303, %v1873
        %v1875 = vmul.f32 %v1304, %v1873
        %v1876 = vmul.f32 %v1305, %v1873
        %v1877 = vmul.f32 %v1306, %v1873
        %v1882 = vrot.slane %v1874, 1
        %v1883 = vrot.slane %v1876, 1
        %v1884 = vsel %vm299, %v1882, %v1883
        %v1885 = vrot.slane %v1875, 1
        %v1886 = vrot.slane %v1877, 1
        %v1887 = vsel %vm299, %v1885, %v1886
        %v1890 = vadd.f32 %v1847, %v1884
        %v1891 = vadd.f32 %v1848, %v1887
        %1892 = vrot.lane.b32.xlu0 %v1315, 127
        %v1893 = vpop.permute.xlu0 %1892
        %1894 = vrot.lane.b32.xlu0 %v1320, 127
        %v1895 = vpop.permute.xlu0 %1894
        %1896 = vrot.lane.b32.xlu0 %v1318, 127
        %v1897 = vpop.permute.xlu0 %1896
        %1898 = vrot.lane.b32.xlu0 %v1322, 127
        %v1899 = vpop.permute.xlu0 %1898
        %v1900 = vsel %vm840, %v1893, %v1897
        %v1901 = vsel %vm840, %v1895, %v1899
        %v1902 = vsel %vm840, %v1897, %v1893
        %v1903 = vsel %vm840, %v1899, %v1895
        %s1904 = sadd.s32 %s220, 32
        %s1905 = sadd.s32 %s271, %s1904
        %s1906 = sld [smem:[#allocation4 + %s1905]]
        %v1907 = vstv %s1906
        %v1908 = vmul.f32 %v1900, %v1907
        %v1909 = vmul.f32 %v1902, %v1907
        %v1910 = vadd.f32 %v1869, %v1908
        %v1911 = vadd.f32 %v1870, %v1909
        %s1912 = sadd.s32 %s220, 113
        %s1913 = sadd.s32 %s271, %s1912
        %s1914 = sld [smem:[#allocation4 + %s1913]]
        %v1915 = vstv %s1914
        %v1916 = vmul.f32 %v1900, %v1915
        %v1917 = vmul.f32 %v1902, %v1915
        %v1918 = vadd.f32 %v1890, %v1916
        %v1919 = vadd.f32 %v1891, %v1917
        %s1920 = sadd.s32 %s220, 41
        %s1921 = sadd.s32 %s271, %s1920
        %s1922 = sld [smem:[#allocation4 + %s1921]]
        %v1923 = vstv %s1922
        %v1924 = vmul.f32 %v1900, %v1923
        %v1925 = vmul.f32 %v1902, %v1923
        %v1926 = vmul.f32 %v1901, %v1923
        %v1927 = vmul.f32 %v1903, %v1923
        %v1932 = vrot.slane %v1924, 1
        %v1933 = vrot.slane %v1926, 1
        %v1934 = vsel %vm299, %v1932, %v1933
        %v1935 = vrot.slane %v1925, 1
        %v1936 = vrot.slane %v1927, 1
        %v1937 = vsel %vm299, %v1935, %v1936
        %v1940 = vadd.f32 %v1910, %v1934
        %v1941 = vadd.f32 %v1911, %v1937
        %s1942 = sadd.s32 %s220, 122
        %s1943 = sadd.s32 %s271, %s1942
        %s1944 = sld [smem:[#allocation4 + %s1943]]
        %v1945 = vstv %s1944
        %v1946 = vmul.f32 %v1900, %v1945
        %v1947 = vmul.f32 %v1902, %v1945
        %v1948 = vmul.f32 %v1901, %v1945
        %v1949 = vmul.f32 %v1903, %v1945
        %v1954 = vrot.slane %v1946, 1
        %v1955 = vrot.slane %v1948, 1
        %v1956 = vsel %vm299, %v1954, %v1955
        %v1957 = vrot.slane %v1947, 1
        %v1958 = vrot.slane %v1949, 1
        %v1959 = vsel %vm299, %v1957, %v1958
        %v1962 = vadd.f32 %v1918, %v1956
        %v1963 = vadd.f32 %v1919, %v1959
        %s1964 = sadd.s32 %s220, 50
        %s1965 = sadd.s32 %s271, %s1964
        %s1966 = sld [smem:[#allocation4 + %s1965]]
        %v1967 = vstv %s1966
        %v1968 = vmul.f32 %v1900, %v1967
        %v1969 = vmul.f32 %v1902, %v1967
        %v1970 = vmul.f32 %v1901, %v1967
        %v1971 = vmul.f32 %v1903, %v1967
        %v1976 = vrot.slane %v1968, 2
        %v1977 = vrot.slane %v1970, 2
        %v1978 = vsel %vm344, %v1976, %v1977
        %v1979 = vrot.slane %v1969, 2
        %v1980 = vrot.slane %v1971, 2
        %v1981 = vsel %vm344, %v1979, %v1980
        %v1984 = vadd.f32 %v1940, %v1978
        %v1985 = vadd.f32 %v1941, %v1981
        %s1986 = sadd.s32 %s217, %s624
        %s1987 = sld [smem:[#allocation4 + %s1986]]
        %v1988 = vstv %s1987
        %v1989 = vmul.f32 %v1900, %v1988
        %v1990 = vmul.f32 %v1902, %v1988
        %v1991 = vmul.f32 %v1901, %v1988
        %v1992 = vmul.f32 %v1903, %v1988
        %v1997 = vrot.slane %v1989, 2
        %v1998 = vrot.slane %v1991, 2
        %v1999 = vsel %vm344, %v1997, %v1998
        %v2000 = vrot.slane %v1990, 2
        %v2001 = vrot.slane %v1992, 2
        %v2002 = vsel %vm344, %v2000, %v2001
        %v2005 = vadd.f32 %v1962, %v1999
        %v2006 = vadd.f32 %v1963, %v2002
        %2007 = vrot.lane.b32.xlu0 %v1315, 117
        %v2008 = vpop.permute.xlu0 %2007
        %2009 = vrot.lane.b32.xlu0 %v1320, 117
        %v2010 = vpop.permute.xlu0 %2009
        %2011 = vrot.lane.b32.xlu0 %v1318, 117
        %v2012 = vpop.permute.xlu0 %2011
        %2013 = vrot.lane.b32.xlu0 %v1322, 117
        %v2014 = vpop.permute.xlu0 %2013
        %v2015 = vsel %vm957, %v2008, %v2012
        %v2016 = vsel %vm957, %v2010, %v2014
        %v2017 = vsel %vm957, %v2012, %v2008
        %v2018 = vsel %vm957, %v2014, %v2010
        %s2019 = sadd.s32 %s220, 33
        %s2020 = sadd.s32 %s271, %s2019
        %s2021 = sld [smem:[#allocation4 + %s2020]]
        %v2022 = vstv %s2021
        %v2023 = vmul.f32 %v2015, %v2022
        %v2024 = vmul.f32 %v2017, %v2022
        %v2025 = vadd.f32 %v1984, %v2023
        %v2026 = vadd.f32 %v1985, %v2024
        %s2027 = sadd.s32 %s220, 114
        %s2028 = sadd.s32 %s271, %s2027
        %s2029 = sld [smem:[#allocation4 + %s2028]]
        %v2030 = vstv %s2029
        %v2031 = vmul.f32 %v2015, %v2030
        %v2032 = vmul.f32 %v2017, %v2030
        %v2033 = vadd.f32 %v2005, %v2031
        %v2034 = vadd.f32 %v2006, %v2032
        %s2035 = sadd.s32 %s220, 42
        %s2036 = sadd.s32 %s271, %s2035
        %s2037 = sld [smem:[#allocation4 + %s2036]]
        %v2038 = vstv %s2037
        %v2039 = vmul.f32 %v2015, %v2038
        %v2040 = vmul.f32 %v2017, %v2038
        %v2041 = vmul.f32 %v2016, %v2038
        %v2042 = vmul.f32 %v2018, %v2038
        %v2047 = vrot.slane %v2039, 1
        %v2048 = vrot.slane %v2041, 1
        %v2049 = vsel %vm299, %v2047, %v2048
        %v2050 = vrot.slane %v2040, 1
        %v2051 = vrot.slane %v2042, 1
        %v2052 = vsel %vm299, %v2050, %v2051
        %v2055 = vadd.f32 %v2025, %v2049
        %v2056 = vadd.f32 %v2026, %v2052
        %s2057 = sadd.s32 %s220, 123
        %s2058 = sadd.s32 %s271, %s2057
        %s2059 = sld [smem:[#allocation4 + %s2058]]
        %v2060 = vstv %s2059
        %v2061 = vmul.f32 %v2015, %v2060
        %v2062 = vmul.f32 %v2017, %v2060
        %v2063 = vmul.f32 %v2016, %v2060
        %v2064 = vmul.f32 %v2018, %v2060
        %v2069 = vrot.slane %v2061, 1
        %v2070 = vrot.slane %v2063, 1
        %v2071 = vsel %vm299, %v2069, %v2070
        %v2072 = vrot.slane %v2062, 1
        %v2073 = vrot.slane %v2064, 1
        %v2074 = vsel %vm299, %v2072, %v2073
        %v2077 = vadd.f32 %v2033, %v2071
        %v2078 = vadd.f32 %v2034, %v2074
        %s2079 = sadd.s32 %s220, 51
        %s2080 = sadd.s32 %s271, %s2079
        %s2081 = sld [smem:[#allocation4 + %s2080]]
        %v2082 = vstv %s2081
        %v2083 = vmul.f32 %v2015, %v2082
        %v2084 = vmul.f32 %v2017, %v2082
        %v2085 = vmul.f32 %v2016, %v2082
        %v2086 = vmul.f32 %v2018, %v2082
        %v2091 = vrot.slane %v2083, 2
        %v2092 = vrot.slane %v2085, 2
        %v2093 = vsel %vm344, %v2091, %v2092
        %v2094 = vrot.slane %v2084, 2
        %v2095 = vrot.slane %v2086, 2
        %v2096 = vsel %vm344, %v2094, %v2095
        %v2099 = vadd.f32 %v2055, %v2093
        %v2100 = vadd.f32 %v2056, %v2096
        %s2101 = sadd.s32 %s217, %s728
        %s2102 = sld [smem:[#allocation4 + %s2101]]
        %v2103 = vstv %s2102
        %v2104 = vmul.f32 %v2015, %v2103
        %v2105 = vmul.f32 %v2017, %v2103
        %v2106 = vmul.f32 %v2016, %v2103
        %v2107 = vmul.f32 %v2018, %v2103
        %v2112 = vrot.slane %v2104, 2
        %v2113 = vrot.slane %v2106, 2
        %v2114 = vsel %vm344, %v2112, %v2113
        %v2115 = vrot.slane %v2105, 2
        %v2116 = vrot.slane %v2107, 2
        %v2117 = vsel %vm344, %v2115, %v2116
        %v2120 = vadd.f32 %v2077, %v2114
        %v2121 = vadd.f32 %v2078, %v2117
        %2122 = vrot.lane.b32.xlu0 %v1315, 116
        %v2123 = vpop.permute.xlu0 %2122
        %2124 = vrot.lane.b32.xlu0 %v1320, 116
        %v2125 = vpop.permute.xlu0 %2124
        %2126 = vrot.lane.b32.xlu0 %v1318, 116
        %v2127 = vpop.permute.xlu0 %2126
        %2128 = vrot.lane.b32.xlu0 %v1322, 116
        %v2129 = vpop.permute.xlu0 %2128
        %v2130 = vsel %vm1074, %v2123, %v2127
        %v2131 = vsel %vm1074, %v2125, %v2129
        %v2132 = vsel %vm1074, %v2127, %v2123
        %v2133 = vsel %vm1074, %v2129, %v2125
        %s2134 = sadd.s32 %s271, %s221
        %s2135 = sld [smem:[#allocation4 + %s2134]]
        %v2136 = vstv %s2135
        %v2137 = vmul.f32 %v2130, %v2136
        %v2138 = vmul.f32 %v2132, %v2136
        %v2139 = vadd.f32 %v2099, %v2137
        %v2140 = vadd.f32 %v2100, %v2138
        %s2141 = sadd.s32 %s220, 115
        %s2142 = sadd.s32 %s271, %s2141
        %s2143 = sld [smem:[#allocation4 + %s2142]]
        %v2144 = vstv %s2143
        %v2145 = vmul.f32 %v2130, %v2144
        %v2146 = vmul.f32 %v2132, %v2144
        %v2147 = vadd.f32 %v2120, %v2145
        %v2148 = vadd.f32 %v2121, %v2146
        %s2149 = sadd.s32 %s220, 43
        %s2150 = sadd.s32 %s271, %s2149
        %s2151 = sld [smem:[#allocation4 + %s2150]]
        %v2152 = vstv %s2151
        %v2153 = vmul.f32 %v2130, %v2152
        %v2154 = vmul.f32 %v2132, %v2152
        %v2155 = vmul.f32 %v2131, %v2152
        %v2156 = vmul.f32 %v2133, %v2152
        %v2161 = vrot.slane %v2153, 1
        %v2162 = vrot.slane %v2155, 1
        %v2163 = vsel %vm299, %v2161, %v2162
        %v2164 = vrot.slane %v2154, 1
        %v2165 = vrot.slane %v2156, 1
        %v2166 = vsel %vm299, %v2164, %v2165
        %v2169 = vadd.f32 %v2139, %v2163
        %v2170 = vadd.f32 %v2140, %v2166
        %s2171 = sadd.s32 %s220, 124
        %s2172 = sadd.s32 %s271, %s2171
        %s2173 = sld [smem:[#allocation4 + %s2172]]
        %v2174 = vstv %s2173
        %v2175 = vmul.f32 %v2130, %v2174
        %v2176 = vmul.f32 %v2132, %v2174
        %v2177 = vmul.f32 %v2131, %v2174
        %v2178 = vmul.f32 %v2133, %v2174
        %v2183 = vrot.slane %v2175, 1
        %v2184 = vrot.slane %v2177, 1
        %v2185 = vsel %vm299, %v2183, %v2184
        %v2186 = vrot.slane %v2176, 1
        %v2187 = vrot.slane %v2178, 1
        %v2188 = vsel %vm299, %v2186, %v2187
        %v2191 = vadd.f32 %v2147, %v2185
        %v2192 = vadd.f32 %v2148, %v2188
        %s2193 = sadd.s32 %s220, 52
        %s2194 = sadd.s32 %s271, %s2193
        %s2195 = sld [smem:[#allocation4 + %s2194]]
        %v2196 = vstv %s2195
        %v2197 = vmul.f32 %v2130, %v2196
        %v2198 = vmul.f32 %v2132, %v2196
        %v2199 = vmul.f32 %v2131, %v2196
        %v2200 = vmul.f32 %v2133, %v2196
        %v2205 = vrot.slane %v2197, 2
        %v2206 = vrot.slane %v2199, 2
        %v2207 = vsel %vm344, %v2205, %v2206
        %v2208 = vrot.slane %v2198, 2
        %v2209 = vrot.slane %v2200, 2
        %v2210 = vsel %vm344, %v2208, %v2209
        %v2213 = vadd.f32 %v2169, %v2207
        %v2214 = vadd.f32 %v2170, %v2210
        %s2215 = sadd.s32 %s217, %s845
        %s2216 = sld [smem:[#allocation4 + %s2215]]
        %v2217 = vstv %s2216
        %v2218 = vmul.f32 %v2130, %v2217
        %v2219 = vmul.f32 %v2132, %v2217
        %v2220 = vmul.f32 %v2131, %v2217
        %v2221 = vmul.f32 %v2133, %v2217
        %v2226 = vrot.slane %v2218, 2
        %v2227 = vrot.slane %v2220, 2
        %v2228 = vsel %vm344, %v2226, %v2227
        %v2229 = vrot.slane %v2219, 2
        %v2230 = vrot.slane %v2221, 2
        %v2231 = vsel %vm344, %v2229, %v2230
        %v2234 = vadd.f32 %v2191, %v2228
        %v2235 = vadd.f32 %v2192, %v2231
        %2236 = vrot.lane.b32.xlu0 %v1315, 115
        %v2237 = vpop.permute.xlu0 %2236
        %2238 = vrot.lane.b32.xlu0 %v1320, 115
        %v2239 = vpop.permute.xlu0 %2238
        %2240 = vrot.lane.b32.xlu0 %v1318, 115
        %v2241 = vpop.permute.xlu0 %2240
        %2242 = vrot.lane.b32.xlu0 %v1322, 115
        %v2243 = vpop.permute.xlu0 %2242
        %v2244 = vsel %vm1191, %v2237, %v2241
        %v2245 = vsel %vm1191, %v2239, %v2243
        %v2246 = vsel %vm1191, %v2241, %v2237
        %v2247 = vsel %vm1191, %v2243, %v2239
        %s2248 = sadd.s32 %s271, %s225
        %s2249 = sld [smem:[#allocation4 + %s2248]]
        %v2250 = vstv %s2249
        %v2251 = vmul.f32 %v2244, %v2250
        %v2252 = vmul.f32 %v2246, %v2250
        %v2253 = vadd.f32 %v2213, %v2251
        %v2254 = vadd.f32 %v2214, %v2252
        %s2255 = sadd.s32 %s220, 116
        %s2256 = sadd.s32 %s271, %s2255
        %s2257 = sld [smem:[#allocation4 + %s2256]]
        %v2258 = vstv %s2257
        %v2259 = vmul.f32 %v2244, %v2258
        %v2260 = vmul.f32 %v2246, %v2258
        %v2261 = vadd.f32 %v2234, %v2259
        %v2262 = vadd.f32 %v2235, %v2260
        %s2263 = sadd.s32 %s220, 44
        %s2264 = sadd.s32 %s271, %s2263
        %s2265 = sld [smem:[#allocation4 + %s2264]]
        %v2266 = vstv %s2265
        %v2267 = vmul.f32 %v2244, %v2266
        %v2268 = vmul.f32 %v2246, %v2266
        %v2269 = vmul.f32 %v2245, %v2266
        %v2270 = vmul.f32 %v2247, %v2266
        %v2275 = vrot.slane %v2267, 1
        %v2276 = vrot.slane %v2269, 1
        %v2277 = vsel %vm299, %v2275, %v2276
        %v2278 = vrot.slane %v2268, 1
        %v2279 = vrot.slane %v2270, 1
        %v2280 = vsel %vm299, %v2278, %v2279
        %v2283 = vadd.f32 %v2253, %v2277
        %v2284 = vadd.f32 %v2254, %v2280
        %s2285 = sadd.s32 %s220, 125
        %s2286 = sadd.s32 %s271, %s2285
        %s2287 = sld [smem:[#allocation4 + %s2286]]
        %v2288 = vstv %s2287
        %v2289 = vmul.f32 %v2244, %v2288
        %v2290 = vmul.f32 %v2246, %v2288
        %v2291 = vmul.f32 %v2245, %v2288
        %v2292 = vmul.f32 %v2247, %v2288
        %v2297 = vrot.slane %v2289, 1
        %v2298 = vrot.slane %v2291, 1
        %v2299 = vsel %vm299, %v2297, %v2298
        %v2300 = vrot.slane %v2290, 1
        %v2301 = vrot.slane %v2292, 1
        %v2302 = vsel %vm299, %v2300, %v2301
        %v2305 = vadd.f32 %v2261, %v2299
        %v2306 = vadd.f32 %v2262, %v2302
        %s2307 = sadd.s32 %s220, 53
        %s2308 = sadd.s32 %s271, %s2307
        %s2309 = sld [smem:[#allocation4 + %s2308]]
        %v2310 = vstv %s2309
        %v2311 = vmul.f32 %v2244, %v2310
        %v2312 = vmul.f32 %v2246, %v2310
        %v2313 = vmul.f32 %v2245, %v2310
        %v2314 = vmul.f32 %v2247, %v2310
        %v2319 = vrot.slane %v2311, 2
        %v2320 = vrot.slane %v2313, 2
        %v2321 = vsel %vm344, %v2319, %v2320
        %v2322 = vrot.slane %v2312, 2
        %v2323 = vrot.slane %v2314, 2
        %v2324 = vsel %vm344, %v2322, %v2323
        %v2327 = vadd.f32 %v2283, %v2321
        %v2328 = vadd.f32 %v2284, %v2324
        %s2329 = sadd.s32 %s217, %s962
        %s2330 = sld [smem:[#allocation4 + %s2329]]
        %v2331 = vstv %s2330
        %v2332 = vmul.f32 %v2244, %v2331
        %v2333 = vmul.f32 %v2246, %v2331
        %v2334 = vmul.f32 %v2245, %v2331
        %v2335 = vmul.f32 %v2247, %v2331
        %v2340 = vrot.slane %v2332, 2
        %v2341 = vrot.slane %v2334, 2
        %v2342 = vsel %vm344, %v2340, %v2341
        %v2343 = vrot.slane %v2333, 2
        %v2344 = vrot.slane %v2335, 2
        %v2345 = vsel %vm344, %v2343, %v2344
        %v2348 = vadd.f32 %v2305, %v2342
        %v2349 = vadd.f32 %v2306, %v2345
        %s2350 = scalar_lea.vmem [#allocation8], 96
        %v2351 = vld [vmem:[%s2350] sm:$0x80]
        %v2352 = vld [vmem:[%s2350 + $0x8] sm:$0x80]
        %v2353 = vld [vmem:[%s2350 + $0x10] sm:$0xff]
        %v2354 = vld [vmem:[%s2350 + $0x18] sm:$0xff]
        %v2355 = vld [vmem:[%s2350 + $0x20] sm:$0x1]
        %v2356 = vld [vmem:[%s2350 + $0x28] sm:$0x1]
        %v2363 = vrot.slane %v2351, 7
        %v2364 = vrot.slane %v2353, 7
        %v2365 = vsel %vm241, %v2363, %v2364
        %v2366 = vrot.slane %v2352, 7
        %v2367 = vrot.slane %v2354, 7
        %v2368 = vsel %vm241, %v2366, %v2367
        %v2369 = vrot.slane %v2355, 7
        %v2370 = vsel %vm241, %v2364, %v2369
        %v2371 = vrot.slane %v2356, 7
        %v2372 = vsel %vm241, %v2367, %v2371
        %2377 = vrot.lane.b32.xlu0 %v2365, 13
        %v2378 = vpop.permute.xlu0 %2377
        %2379 = vrot.lane.b32.xlu0 %v2370, 13
        %v2380 = vpop.permute.xlu0 %2379
        %2381 = vrot.lane.b32.xlu0 %v2368, 13
        %v2382 = vpop.permute.xlu0 %2381
        %2383 = vrot.lane.b32.xlu0 %v2372, 13
        %v2384 = vpop.permute.xlu0 %2383
        %v2385 = vsel %vm266, %v2378, %v2382
        %v2386 = vsel %vm266, %v2380, %v2384
        %v2387 = vsel %vm266, %v2382, %v2378
        %v2388 = vsel %vm266, %v2384, %v2380
        %s2389 = sadd.s32 %s220, 54
        %s2390 = sadd.s32 %s271, %s2389
        %s2391 = sld [smem:[#allocation4 + %s2390]]
        %v2392 = vstv %s2391
        %v2393 = vmul.f32 %v2387, %v2392
        %v2394 = vmul.f32 %v2385, %v2392
        %v2395 = vadd.f32 %v2327, %v2393
        %v2396 = vadd.f32 %v2328, %v2394
        %s2397 = sadd.s32 %s217, %s1079
        %s2398 = sld [smem:[#allocation4 + %s2397]]
        %v2399 = vstv %s2398
        %v2400 = vmul.f32 %v2387, %v2399
        %v2401 = vmul.f32 %v2385, %v2399
        %v2402 = vadd.f32 %v2348, %v2400
        %v2403 = vadd.f32 %v2349, %v2401
        %s2404 = sadd.s32 %s220, 63
        %s2405 = sadd.s32 %s271, %s2404
        %s2406 = sld [smem:[#allocation4 + %s2405]]
        %v2407 = vstv %s2406
        %v2408 = vmul.f32 %v2387, %v2407
        %v2409 = vmul.f32 %v2385, %v2407
        %v2410 = vmul.f32 %v2388, %v2407
        %v2411 = vmul.f32 %v2386, %v2407
        %v2416 = vrot.slane %v2408, 1
        %v2417 = vrot.slane %v2410, 1
        %v2418 = vsel %vm299, %v2416, %v2417
        %v2419 = vrot.slane %v2409, 1
        %v2420 = vrot.slane %v2411, 1
        %v2421 = vsel %vm299, %v2419, %v2420
        %v2424 = vadd.f32 %v2395, %v2418
        %v2425 = vadd.f32 %v2396, %v2421
        %s2426 = sadd.s32 %s217, %s1095
        %s2427 = sld [smem:[#allocation4 + %s2426]]
        %v2428 = vstv %s2427
        %v2429 = vmul.f32 %v2387, %v2428
        %v2430 = vmul.f32 %v2385, %v2428
        %v2431 = vmul.f32 %v2388, %v2428
        %v2432 = vmul.f32 %v2386, %v2428
        %v2437 = vrot.slane %v2429, 1
        %v2438 = vrot.slane %v2431, 1
        %v2439 = vsel %vm299, %v2437, %v2438
        %v2440 = vrot.slane %v2430, 1
        %v2441 = vrot.slane %v2432, 1
        %v2442 = vsel %vm299, %v2440, %v2441
        %v2445 = vadd.f32 %v2402, %v2439
        %v2446 = vadd.f32 %v2403, %v2442
        %s2447 = sadd.s32 %s220, 72
        %s2448 = sadd.s32 %s271, %s2447
        %s2449 = sld [smem:[#allocation4 + %s2448]]
        %v2450 = vstv %s2449
        %v2451 = vmul.f32 %v2387, %v2450
        %v2452 = vmul.f32 %v2385, %v2450
        %v2453 = vmul.f32 %v2388, %v2450
        %v2454 = vmul.f32 %v2386, %v2450
        %v2459 = vrot.slane %v2451, 2
        %v2460 = vrot.slane %v2453, 2
        %v2461 = vsel %vm344, %v2459, %v2460
        %v2462 = vrot.slane %v2452, 2
        %v2463 = vrot.slane %v2454, 2
        %v2464 = vsel %vm344, %v2462, %v2463
        %v2467 = vadd.f32 %v2424, %v2461
        %v2468 = vadd.f32 %v2425, %v2464
        %s2469 = sadd.s32 %s217, %s1139
        %s2470 = sld [smem:[#allocation4 + %s2469]]
        %v2471 = vstv %s2470
        %v2472 = vmul.f32 %v2387, %v2471
        %v2473 = vmul.f32 %v2385, %v2471
        %v2474 = vmul.f32 %v2388, %v2471
        %v2475 = vmul.f32 %v2386, %v2471
        %v2480 = vrot.slane %v2472, 2
        %v2481 = vrot.slane %v2474, 2
        %v2482 = vsel %vm344, %v2480, %v2481
        %v2483 = vrot.slane %v2473, 2
        %v2484 = vrot.slane %v2475, 2
        %v2485 = vsel %vm344, %v2483, %v2484
        %v2488 = vadd.f32 %v2445, %v2482
        %v2489 = vadd.f32 %v2446, %v2485
        %2490 = vrot.lane.b32.xlu0 %v2365, 12
        %v2491 = vpop.permute.xlu0 %2490
        %2492 = vrot.lane.b32.xlu0 %v2370, 12
        %v2493 = vpop.permute.xlu0 %2492
        %2494 = vrot.lane.b32.xlu0 %v2368, 12
        %v2495 = vpop.permute.xlu0 %2494
        %2496 = vrot.lane.b32.xlu0 %v2372, 12
        %v2497 = vpop.permute.xlu0 %2496
        %v2498 = vsel %vm385, %v2491, %v2495
        %v2499 = vsel %vm385, %v2493, %v2497
        %v2500 = vsel %vm385, %v2495, %v2491
        %v2501 = vsel %vm385, %v2497, %v2493
        %s2502 = sadd.s32 %s220, 55
        %s2503 = sadd.s32 %s271, %s2502
        %s2504 = sld [smem:[#allocation4 + %s2503]]
        %v2505 = vstv %s2504
        %v2506 = vmul.f32 %v2500, %v2505
        %v2507 = vmul.f32 %v2498, %v2505
        %v2508 = vadd.f32 %v2467, %v2506
        %v2509 = vadd.f32 %v2468, %v2507
        %s2510 = sadd.s32 %s217, %s1196
        %s2511 = sld [smem:[#allocation4 + %s2510]]
        %v2512 = vstv %s2511
        %v2513 = vmul.f32 %v2500, %v2512
        %v2514 = vmul.f32 %v2498, %v2512
        %v2515 = vadd.f32 %v2488, %v2513
        %v2516 = vadd.f32 %v2489, %v2514
        %s2517 = sadd.s32 %s220, 64
        %s2518 = sadd.s32 %s271, %s2517
        %s2519 = sld [smem:[#allocation4 + %s2518]]
        %v2520 = vstv %s2519
        %v2521 = vmul.f32 %v2500, %v2520
        %v2522 = vmul.f32 %v2498, %v2520
        %v2523 = vmul.f32 %v2501, %v2520
        %v2524 = vmul.f32 %v2499, %v2520
        %v2529 = vrot.slane %v2521, 1
        %v2530 = vrot.slane %v2523, 1
        %v2531 = vsel %vm299, %v2529, %v2530
        %v2532 = vrot.slane %v2522, 1
        %v2533 = vrot.slane %v2524, 1
        %v2534 = vsel %vm299, %v2532, %v2533
        %v2537 = vadd.f32 %v2508, %v2531
        %v2538 = vadd.f32 %v2509, %v2534
        %s2539 = sadd.s32 %s217, %s1212
        %s2540 = sld [smem:[#allocation4 + %s2539]]
        %v2541 = vstv %s2540
        %v2542 = vmul.f32 %v2500, %v2541
        %v2543 = vmul.f32 %v2498, %v2541
        %v2544 = vmul.f32 %v2501, %v2541
        %v2545 = vmul.f32 %v2499, %v2541
        %v2550 = vrot.slane %v2542, 1
        %v2551 = vrot.slane %v2544, 1
        %v2552 = vsel %vm299, %v2550, %v2551
        %v2553 = vrot.slane %v2543, 1
        %v2554 = vrot.slane %v2545, 1
        %v2555 = vsel %vm299, %v2553, %v2554
        %v2558 = vadd.f32 %v2515, %v2552
        %v2559 = vadd.f32 %v2516, %v2555
        %s2560 = sadd.s32 %s220, 73
        %s2561 = sadd.s32 %s271, %s2560
        %s2562 = sld [smem:[#allocation4 + %s2561]]
        %v2563 = vstv %s2562
        %v2564 = vmul.f32 %v2500, %v2563
        %v2565 = vmul.f32 %v2498, %v2563
        %v2566 = vmul.f32 %v2501, %v2563
        %v2567 = vmul.f32 %v2499, %v2563
        %v2572 = vrot.slane %v2564, 2
        %v2573 = vrot.slane %v2566, 2
        %v2574 = vsel %vm344, %v2572, %v2573
        %v2575 = vrot.slane %v2565, 2
        %v2576 = vrot.slane %v2567, 2
        %v2577 = vsel %vm344, %v2575, %v2576
        %v2580 = vadd.f32 %v2537, %v2574
        %v2581 = vadd.f32 %v2538, %v2577
        %s2582 = sadd.s32 %s217, %s1256
        %s2583 = sld [smem:[#allocation4 + %s2582]]
        %v2584 = vstv %s2583
        %v2585 = vmul.f32 %v2500, %v2584
        %v2586 = vmul.f32 %v2498, %v2584
        %v2587 = vmul.f32 %v2501, %v2584
        %v2588 = vmul.f32 %v2499, %v2584
        %v2593 = vrot.slane %v2585, 2
        %v2594 = vrot.slane %v2587, 2
        %v2595 = vsel %vm344, %v2593, %v2594
        %v2596 = vrot.slane %v2586, 2
        %v2597 = vrot.slane %v2588, 2
        %v2598 = vsel %vm344, %v2596, %v2597
        %v2601 = vadd.f32 %v2558, %v2595
        %v2602 = vadd.f32 %v2559, %v2598
        %2603 = vrot.lane.b32.xlu0 %v2365, 11
        %v2604 = vpop.permute.xlu0 %2603
        %2605 = vrot.lane.b32.xlu0 %v2370, 11
        %v2606 = vpop.permute.xlu0 %2605
        %2607 = vrot.lane.b32.xlu0 %v2368, 11
        %v2608 = vpop.permute.xlu0 %2607
        %2609 = vrot.lane.b32.xlu0 %v2372, 11
        %v2610 = vpop.permute.xlu0 %2609
        %v2611 = vsel %vm502, %v2604, %v2608
        %v2612 = vsel %vm502, %v2606, %v2610
        %v2613 = vsel %vm502, %v2608, %v2604
        %v2614 = vsel %vm502, %v2610, %v2606
        %s2615 = sadd.s32 %s220, 56
        %s2616 = sadd.s32 %s271, %s2615
        %s2617 = sld [smem:[#allocation4 + %s2616]]
        %v2618 = vstv %s2617
        %v2619 = vmul.f32 %v2613, %v2618
        %v2620 = vmul.f32 %v2611, %v2618
        %v2621 = vadd.f32 %v2580, %v2619
        %v2622 = vadd.f32 %v2581, %v2620
        %s2623 = sadd.s32 %s217, %s287
        %s2624 = sld [smem:[#allocation4 + %s2623]]
        %v2625 = vstv %s2624
        %v2626 = vmul.f32 %v2613, %v2625
        %v2627 = vmul.f32 %v2611, %v2625
        %v2628 = vadd.f32 %v2601, %v2626
        %v2629 = vadd.f32 %v2602, %v2627
        %s2630 = sadd.s32 %s220, 65
        %s2631 = sadd.s32 %s271, %s2630
        %s2632 = sld [smem:[#allocation4 + %s2631]]
        %v2633 = vstv %s2632
        %v2634 = vmul.f32 %v2613, %v2633
        %v2635 = vmul.f32 %v2611, %v2633
        %v2636 = vmul.f32 %v2614, %v2633
        %v2637 = vmul.f32 %v2612, %v2633
        %v2642 = vrot.slane %v2634, 1
        %v2643 = vrot.slane %v2636, 1
        %v2644 = vsel %vm299, %v2642, %v2643
        %v2645 = vrot.slane %v2635, 1
        %v2646 = vrot.slane %v2637, 1
        %v2647 = vsel %vm299, %v2645, %v2646
        %v2650 = vadd.f32 %v2621, %v2644
        %v2651 = vadd.f32 %v2622, %v2647
        %s2652 = sadd.s32 %s217, %s332
        %s2653 = sld [smem:[#allocation4 + %s2652]]
        %v2654 = vstv %s2653
        %v2655 = vmul.f32 %v2613, %v2654
        %v2656 = vmul.f32 %v2611, %v2654
        %v2657 = vmul.f32 %v2614, %v2654
        %v2658 = vmul.f32 %v2612, %v2654
        %v2663 = vrot.slane %v2655, 1
        %v2664 = vrot.slane %v2657, 1
        %v2665 = vsel %vm299, %v2663, %v2664
        %v2666 = vrot.slane %v2656, 1
        %v2667 = vrot.slane %v2658, 1
        %v2668 = vsel %vm299, %v2666, %v2667
        %v2671 = vadd.f32 %v2628, %v2665
        %v2672 = vadd.f32 %v2629, %v2668
        %s2673 = sadd.s32 %s220, 74
        %s2674 = sadd.s32 %s271, %s2673
        %s2675 = sld [smem:[#allocation4 + %s2674]]
        %v2676 = vstv %s2675
        %v2677 = vmul.f32 %v2613, %v2676
        %v2678 = vmul.f32 %v2611, %v2676
        %v2679 = vmul.f32 %v2614, %v2676
        %v2680 = vmul.f32 %v2612, %v2676
        %v2685 = vrot.slane %v2677, 2
        %v2686 = vrot.slane %v2679, 2
        %v2687 = vsel %vm344, %v2685, %v2686
        %v2688 = vrot.slane %v2678, 2
        %v2689 = vrot.slane %v2680, 2
        %v2690 = vsel %vm344, %v2688, %v2689
        %v2693 = vadd.f32 %v2650, %v2687
        %v2694 = vadd.f32 %v2651, %v2690
        %s2695 = sadd.s32 %s217, %s1339
        %s2696 = sld [smem:[#allocation4 + %s2695]]
        %v2697 = vstv %s2696
        %v2698 = vmul.f32 %v2613, %v2697
        %v2699 = vmul.f32 %v2611, %v2697
        %v2700 = vmul.f32 %v2614, %v2697
        %v2701 = vmul.f32 %v2612, %v2697
        %v2706 = vrot.slane %v2698, 2
        %v2707 = vrot.slane %v2700, 2
        %v2708 = vsel %vm344, %v2706, %v2707
        %v2709 = vrot.slane %v2699, 2
        %v2710 = vrot.slane %v2701, 2
        %v2711 = vsel %vm344, %v2709, %v2710
        %v2714 = vadd.f32 %v2671, %v2708
        %v2715 = vadd.f32 %v2672, %v2711
        %2716 = vrot.lane.b32.xlu0 %v2365, 1
        %v2717 = vpop.permute.xlu0 %2716
        %2718 = vrot.lane.b32.xlu0 %v2370, 1
        %v2719 = vpop.permute.xlu0 %2718
        %2720 = vrot.lane.b32.xlu0 %v2368, 1
        %v2721 = vpop.permute.xlu0 %2720
        %2722 = vrot.lane.b32.xlu0 %v2372, 1
        %v2723 = vpop.permute.xlu0 %2722
        %v2724 = vsel %vm619, %v2717, %v2721
        %v2725 = vsel %vm619, %v2719, %v2723
        %v2726 = vsel %vm619, %v2721, %v2717
        %v2727 = vsel %vm619, %v2723, %v2719
        %s2728 = sadd.s32 %s220, 57
        %s2729 = sadd.s32 %s271, %s2728
        %s2730 = sld [smem:[#allocation4 + %s2729]]
        %v2731 = vstv %s2730
        %v2732 = vmul.f32 %v2726, %v2731
        %v2733 = vmul.f32 %v2724, %v2731
        %v2734 = vadd.f32 %v2693, %v2732
        %v2735 = vadd.f32 %v2694, %v2733
        %s2736 = sadd.s32 %s217, %s406
        %s2737 = sld [smem:[#allocation4 + %s2736]]
        %v2738 = vstv %s2737
        %v2739 = vmul.f32 %v2726, %v2738
        %v2740 = vmul.f32 %v2724, %v2738
        %v2741 = vadd.f32 %v2714, %v2739
        %v2742 = vadd.f32 %v2715, %v2740
        %s2743 = sadd.s32 %s220, 66
        %s2744 = sadd.s32 %s271, %s2743
        %s2745 = sld [smem:[#allocation4 + %s2744]]
        %v2746 = vstv %s2745
        %v2747 = vmul.f32 %v2726, %v2746
        %v2748 = vmul.f32 %v2724, %v2746
        %v2749 = vmul.f32 %v2727, %v2746
        %v2750 = vmul.f32 %v2725, %v2746
        %v2755 = vrot.slane %v2747, 1
        %v2756 = vrot.slane %v2749, 1
        %v2757 = vsel %vm299, %v2755, %v2756
        %v2758 = vrot.slane %v2748, 1
        %v2759 = vrot.slane %v2750, 1
        %v2760 = vsel %vm299, %v2758, %v2759
        %v2763 = vadd.f32 %v2734, %v2757
        %v2764 = vadd.f32 %v2735, %v2760
        %s2765 = sadd.s32 %s217, %s450
        %s2766 = sld [smem:[#allocation4 + %s2765]]
        %v2767 = vstv %s2766
        %v2768 = vmul.f32 %v2726, %v2767
        %v2769 = vmul.f32 %v2724, %v2767
        %v2770 = vmul.f32 %v2727, %v2767
        %v2771 = vmul.f32 %v2725, %v2767
        %v2776 = vrot.slane %v2768, 1
        %v2777 = vrot.slane %v2770, 1
        %v2778 = vsel %vm299, %v2776, %v2777
        %v2779 = vrot.slane %v2769, 1
        %v2780 = vrot.slane %v2771, 1
        %v2781 = vsel %vm299, %v2779, %v2780
        %v2784 = vadd.f32 %v2741, %v2778
        %v2785 = vadd.f32 %v2742, %v2781
        %s2786 = sadd.s32 %s220, 75
        %s2787 = sadd.s32 %s271, %s2786
        %s2788 = sld [smem:[#allocation4 + %s2787]]
        %v2789 = vstv %s2788
        %v2790 = vmul.f32 %v2726, %v2789
        %v2791 = vmul.f32 %v2724, %v2789
        %v2792 = vmul.f32 %v2727, %v2789
        %v2793 = vmul.f32 %v2725, %v2789
        %v2798 = vrot.slane %v2790, 2
        %v2799 = vrot.slane %v2792, 2
        %v2800 = vsel %vm344, %v2798, %v2799
        %v2801 = vrot.slane %v2791, 2
        %v2802 = vrot.slane %v2793, 2
        %v2803 = vsel %vm344, %v2801, %v2802
        %v2806 = vadd.f32 %v2763, %v2800
        %v2807 = vadd.f32 %v2764, %v2803
        %s2808 = sadd.s32 %s217, %s1455
        %s2809 = sld [smem:[#allocation4 + %s2808]]
        %v2810 = vstv %s2809
        %v2811 = vmul.f32 %v2726, %v2810
        %v2812 = vmul.f32 %v2724, %v2810
        %v2813 = vmul.f32 %v2727, %v2810
        %v2814 = vmul.f32 %v2725, %v2810
        %v2819 = vrot.slane %v2811, 2
        %v2820 = vrot.slane %v2813, 2
        %v2821 = vsel %vm344, %v2819, %v2820
        %v2822 = vrot.slane %v2812, 2
        %v2823 = vrot.slane %v2814, 2
        %v2824 = vsel %vm344, %v2822, %v2823
        %v2827 = vadd.f32 %v2784, %v2821
        %v2828 = vadd.f32 %v2785, %v2824
        %s2829 = sadd.s32 %s220, 58
        %s2830 = sadd.s32 %s271, %s2829
        %s2831 = sld [smem:[#allocation4 + %s2830]]
        %v2832 = vstv %s2831
        %v2833 = vmul.f32 %v2351, %v2832
        %v2834 = vmul.f32 %v2352, %v2832
        %v2835 = vmul.f32 %v2353, %v2832
        %v2836 = vmul.f32 %v2354, %v2832
        %v2841 = vrot.slane %v2833, 7
        %v2842 = vrot.slane %v2835, 7
        %v2843 = vsel %vm241, %v2841, %v2842
        %v2844 = vrot.slane %v2834, 7
        %v2845 = vrot.slane %v2836, 7
        %v2846 = vsel %vm241, %v2844, %v2845
        %v2849 = vadd.f32 %v2806, %v2843
        %v2850 = vadd.f32 %v2807, %v2846
        %s2851 = sadd.s32 %s217, %s523
        %s2852 = sld [smem:[#allocation4 + %s2851]]
        %v2853 = vstv %s2852
        %v2854 = vmul.f32 %v2351, %v2853
        %v2855 = vmul.f32 %v2352, %v2853
        %v2856 = vmul.f32 %v2353, %v2853
        %v2857 = vmul.f32 %v2354, %v2853
        %v2862 = vrot.slane %v2854, 7
        %v2863 = vrot.slane %v2856, 7
        %v2864 = vsel %vm241, %v2862, %v2863
        %v2865 = vrot.slane %v2855, 7
        %v2866 = vrot.slane %v2857, 7
        %v2867 = vsel %vm241, %v2865, %v2866
        %v2870 = vadd.f32 %v2827, %v2864
        %v2871 = vadd.f32 %v2828, %v2867
        %s2872 = sadd.s32 %s220, 67
        %s2873 = sadd.s32 %s271, %s2872
        %s2874 = sld [smem:[#allocation4 + %s2873]]
        %v2875 = vstv %s2874
        %v2876 = vmul.f32 %v2353, %v2875
        %v2877 = vmul.f32 %v2354, %v2875
        %v2878 = vadd.f32 %v2849, %v2876
        %v2879 = vadd.f32 %v2850, %v2877
        %s2880 = sadd.s32 %s217, %s567
        %s2881 = sld [smem:[#allocation4 + %s2880]]
        %v2882 = vstv %s2881
        %v2883 = vmul.f32 %v2353, %v2882
        %v2884 = vmul.f32 %v2354, %v2882
        %v2885 = vadd.f32 %v2870, %v2883
        %v2886 = vadd.f32 %v2871, %v2884
        %s2887 = sadd.s32 %s220, 76
        %s2888 = sadd.s32 %s271, %s2887
        %s2889 = sld [smem:[#allocation4 + %s2888]]
        %v2890 = vstv %s2889
        %v2891 = vmul.f32 %v2353, %v2890
        %v2892 = vmul.f32 %v2354, %v2890
        %v2893 = vmul.f32 %v2355, %v2890
        %v2894 = vmul.f32 %v2356, %v2890
        %v2899 = vrot.slane %v2891, 1
        %v2900 = vrot.slane %v2893, 1
        %v2901 = vsel %vm299, %v2899, %v2900
        %v2902 = vrot.slane %v2892, 1
        %v2903 = vrot.slane %v2894, 1
        %v2904 = vsel %vm299, %v2902, %v2903
        %v2907 = vadd.f32 %v2878, %v2901
        %v2908 = vadd.f32 %v2879, %v2904
        %s2909 = sadd.s32 %s217, %s1571
        %s2910 = sld [smem:[#allocation4 + %s2909]]
        %v2911 = vstv %s2910
        %v2912 = vmul.f32 %v2353, %v2911
        %v2913 = vmul.f32 %v2354, %v2911
        %v2914 = vmul.f32 %v2355, %v2911
        %v2915 = vmul.f32 %v2356, %v2911
        %v2920 = vrot.slane %v2912, 1
        %v2921 = vrot.slane %v2914, 1
        %v2922 = vsel %vm299, %v2920, %v2921
        %v2923 = vrot.slane %v2913, 1
        %v2924 = vrot.slane %v2915, 1
        %v2925 = vsel %vm299, %v2923, %v2924
        %v2928 = vadd.f32 %v2885, %v2922
        %v2929 = vadd.f32 %v2886, %v2925
        %2930 = vrot.lane.b32.xlu0 %v2365, 127
        %v2931 = vpop.permute.xlu0 %2930
        %2932 = vrot.lane.b32.xlu0 %v2370, 127
        %v2933 = vpop.permute.xlu0 %2932
        %2934 = vrot.lane.b32.xlu0 %v2368, 127
        %v2935 = vpop.permute.xlu0 %2934
        %2936 = vrot.lane.b32.xlu0 %v2372, 127
        %v2937 = vpop.permute.xlu0 %2936
        %v2938 = vsel %vm840, %v2931, %v2935
        %v2939 = vsel %vm840, %v2933, %v2937
        %v2940 = vsel %vm840, %v2935, %v2931
        %v2941 = vsel %vm840, %v2937, %v2933
        %s2942 = sadd.s32 %s220, 59
        %s2943 = sadd.s32 %s271, %s2942
        %s2944 = sld [smem:[#allocation4 + %s2943]]
        %v2945 = vstv %s2944
        %v2946 = vmul.f32 %v2938, %v2945
        %v2947 = vmul.f32 %v2940, %v2945
        %v2948 = vadd.f32 %v2907, %v2946
        %v2949 = vadd.f32 %v2908, %v2947
        %s2950 = sadd.s32 %s217, %s640
        %s2951 = sld [smem:[#allocation4 + %s2950]]
        %v2952 = vstv %s2951
        %v2953 = vmul.f32 %v2938, %v2952
        %v2954 = vmul.f32 %v2940, %v2952
        %v2955 = vadd.f32 %v2928, %v2953
        %v2956 = vadd.f32 %v2929, %v2954
        %s2957 = sadd.s32 %s220, 68
        %s2958 = sadd.s32 %s271, %s2957
        %s2959 = sld [smem:[#allocation4 + %s2958]]
        %v2960 = vstv %s2959
        %v2961 = vmul.f32 %v2938, %v2960
        %v2962 = vmul.f32 %v2940, %v2960
        %v2963 = vmul.f32 %v2939, %v2960
        %v2964 = vmul.f32 %v2941, %v2960
        %v2969 = vrot.slane %v2961, 1
        %v2970 = vrot.slane %v2963, 1
        %v2971 = vsel %vm299, %v2969, %v2970
        %v2972 = vrot.slane %v2962, 1
        %v2973 = vrot.slane %v2964, 1
        %v2974 = vsel %vm299, %v2972, %v2973
        %v2977 = vadd.f32 %v2948, %v2971
        %v2978 = vadd.f32 %v2949, %v2974
        %s2979 = sadd.s32 %s217, %s684
        %s2980 = sld [smem:[#allocation4 + %s2979]]
        %v2981 = vstv %s2980
        %v2982 = vmul.f32 %v2938, %v2981
        %v2983 = vmul.f32 %v2940, %v2981
        %v2984 = vmul.f32 %v2939, %v2981
        %v2985 = vmul.f32 %v2941, %v2981
        %v2990 = vrot.slane %v2982, 1
        %v2991 = vrot.slane %v2984, 1
        %v2992 = vsel %vm299, %v2990, %v2991
        %v2993 = vrot.slane %v2983, 1
        %v2994 = vrot.slane %v2985, 1
        %v2995 = vsel %vm299, %v2993, %v2994
        %v2998 = vadd.f32 %v2955, %v2992
        %v2999 = vadd.f32 %v2956, %v2995
        %s3000 = sadd.s32 %s220, 77
        %s3001 = sadd.s32 %s271, %s3000
        %s3002 = sld [smem:[#allocation4 + %s3001]]
        %v3003 = vstv %s3002
        %v3004 = vmul.f32 %v2938, %v3003
        %v3005 = vmul.f32 %v2940, %v3003
        %v3006 = vmul.f32 %v2939, %v3003
        %v3007 = vmul.f32 %v2941, %v3003
        %v3012 = vrot.slane %v3004, 2
        %v3013 = vrot.slane %v3006, 2
        %v3014 = vsel %vm344, %v3012, %v3013
        %v3015 = vrot.slane %v3005, 2
        %v3016 = vrot.slane %v3007, 2
        %v3017 = vsel %vm344, %v3015, %v3016
        %v3020 = vadd.f32 %v2977, %v3014
        %v3021 = vadd.f32 %v2978, %v3017
        %s3022 = sadd.s32 %s217, %s1686
        %s3023 = sld [smem:[#allocation4 + %s3022]]
        %v3024 = vstv %s3023
        %v3025 = vmul.f32 %v2938, %v3024
        %v3026 = vmul.f32 %v2940, %v3024
        %v3027 = vmul.f32 %v2939, %v3024
        %v3028 = vmul.f32 %v2941, %v3024
        %v3033 = vrot.slane %v3025, 2
        %v3034 = vrot.slane %v3027, 2
        %v3035 = vsel %vm344, %v3033, %v3034
        %v3036 = vrot.slane %v3026, 2
        %v3037 = vrot.slane %v3028, 2
        %v3038 = vsel %vm344, %v3036, %v3037
        %v3041 = vadd.f32 %v2998, %v3035
        %v3042 = vadd.f32 %v2999, %v3038
        %3043 = vrot.lane.b32.xlu0 %v2365, 117
        %v3044 = vpop.permute.xlu0 %3043
        %3045 = vrot.lane.b32.xlu0 %v2370, 117
        %v3046 = vpop.permute.xlu0 %3045
        %3047 = vrot.lane.b32.xlu0 %v2368, 117
        %v3048 = vpop.permute.xlu0 %3047
        %3049 = vrot.lane.b32.xlu0 %v2372, 117
        %v3050 = vpop.permute.xlu0 %3049
        %v3051 = vsel %vm957, %v3044, %v3048
        %v3052 = vsel %vm957, %v3046, %v3050
        %v3053 = vsel %vm957, %v3048, %v3044
        %v3054 = vsel %vm957, %v3050, %v3046
        %s3055 = sadd.s32 %s220, 60
        %s3056 = sadd.s32 %s271, %s3055
        %s3057 = sld [smem:[#allocation4 + %s3056]]
        %v3058 = vstv %s3057
        %v3059 = vmul.f32 %v3051, %v3058
        %v3060 = vmul.f32 %v3053, %v3058
        %v3061 = vadd.f32 %v3020, %v3059
        %v3062 = vadd.f32 %v3021, %v3060
        %s3063 = sadd.s32 %s217, %s772
        %s3064 = sld [smem:[#allocation4 + %s3063]]
        %v3065 = vstv %s3064
        %v3066 = vmul.f32 %v3051, %v3065
        %v3067 = vmul.f32 %v3053, %v3065
        %v3068 = vadd.f32 %v3041, %v3066
        %v3069 = vadd.f32 %v3042, %v3067
        %s3070 = sadd.s32 %s220, 69
        %s3071 = sadd.s32 %s271, %s3070
        %s3072 = sld [smem:[#allocation4 + %s3071]]
        %v3073 = vstv %s3072
        %v3074 = vmul.f32 %v3051, %v3073
        %v3075 = vmul.f32 %v3053, %v3073
        %v3076 = vmul.f32 %v3052, %v3073
        %v3077 = vmul.f32 %v3054, %v3073
        %v3082 = vrot.slane %v3074, 1
        %v3083 = vrot.slane %v3076, 1
        %v3084 = vsel %vm299, %v3082, %v3083
        %v3085 = vrot.slane %v3075, 1
        %v3086 = vrot.slane %v3077, 1
        %v3087 = vsel %vm299, %v3085, %v3086
        %v3090 = vadd.f32 %v3061, %v3084
        %v3091 = vadd.f32 %v3062, %v3087
        %s3092 = sadd.s32 %s217, %s788
        %s3093 = sld [smem:[#allocation4 + %s3092]]
        %v3094 = vstv %s3093
        %v3095 = vmul.f32 %v3051, %v3094
        %v3096 = vmul.f32 %v3053, %v3094
        %v3097 = vmul.f32 %v3052, %v3094
        %v3098 = vmul.f32 %v3054, %v3094
        %v3103 = vrot.slane %v3095, 1
        %v3104 = vrot.slane %v3097, 1
        %v3105 = vsel %vm299, %v3103, %v3104
        %v3106 = vrot.slane %v3096, 1
        %v3107 = vrot.slane %v3098, 1
        %v3108 = vsel %vm299, %v3106, %v3107
        %v3111 = vadd.f32 %v3068, %v3105
        %v3112 = vadd.f32 %v3069, %v3108
        %s3113 = sadd.s32 %s220, 78
        %s3114 = sadd.s32 %s271, %s3113
        %s3115 = sld [smem:[#allocation4 + %s3114]]
        %v3116 = vstv %s3115
        %v3117 = vmul.f32 %v3051, %v3116
        %v3118 = vmul.f32 %v3053, %v3116
        %v3119 = vmul.f32 %v3052, %v3116
        %v3120 = vmul.f32 %v3054, %v3116
        %v3125 = vrot.slane %v3117, 2
        %v3126 = vrot.slane %v3119, 2
        %v3127 = vsel %vm344, %v3125, %v3126
        %v3128 = vrot.slane %v3118, 2
        %v3129 = vrot.slane %v3120, 2
        %v3130 = vsel %vm344, %v3128, %v3129
        %v3133 = vadd.f32 %v3090, %v3127
        %v3134 = vadd.f32 %v3091, %v3130
        %s3135 = sadd.s32 %s217, %s1789
        %s3136 = sld [smem:[#allocation4 + %s3135]]
        %v3137 = vstv %s3136
        %v3138 = vmul.f32 %v3051, %v3137
        %v3139 = vmul.f32 %v3053, %v3137
        %v3140 = vmul.f32 %v3052, %v3137
        %v3141 = vmul.f32 %v3054, %v3137
        %v3146 = vrot.slane %v3138, 2
        %v3147 = vrot.slane %v3140, 2
        %v3148 = vsel %vm344, %v3146, %v3147
        %v3149 = vrot.slane %v3139, 2
        %v3150 = vrot.slane %v3141, 2
        %v3151 = vsel %vm344, %v3149, %v3150
        %v3154 = vadd.f32 %v3111, %v3148
        %v3155 = vadd.f32 %v3112, %v3151
        %3156 = vrot.lane.b32.xlu0 %v2365, 116
        %v3157 = vpop.permute.xlu0 %3156
        %3158 = vrot.lane.b32.xlu0 %v2370, 116
        %v3159 = vpop.permute.xlu0 %3158
        %3160 = vrot.lane.b32.xlu0 %v2368, 116
        %v3161 = vpop.permute.xlu0 %3160
        %3162 = vrot.lane.b32.xlu0 %v2372, 116
        %v3163 = vpop.permute.xlu0 %3162
        %v3164 = vsel %vm1074, %v3157, %v3161
        %v3165 = vsel %vm1074, %v3159, %v3163
        %v3166 = vsel %vm1074, %v3161, %v3157
        %v3167 = vsel %vm1074, %v3163, %v3159
        %s3168 = sadd.s32 %s220, 61
        %s3169 = sadd.s32 %s271, %s3168
        %s3170 = sld [smem:[#allocation4 + %s3169]]
        %v3171 = vstv %s3170
        %v3172 = vmul.f32 %v3164, %v3171
        %v3173 = vmul.f32 %v3166, %v3171
        %v3174 = vadd.f32 %v3133, %v3172
        %v3175 = vadd.f32 %v3134, %v3173
        %s3176 = sadd.s32 %s217, %s861
        %s3177 = sld [smem:[#allocation4 + %s3176]]
        %v3178 = vstv %s3177
        %v3179 = vmul.f32 %v3164, %v3178
        %v3180 = vmul.f32 %v3166, %v3178
        %v3181 = vadd.f32 %v3154, %v3179
        %v3182 = vadd.f32 %v3155, %v3180
        %s3183 = sadd.s32 %s220, 70
        %s3184 = sadd.s32 %s271, %s3183
        %s3185 = sld [smem:[#allocation4 + %s3184]]
        %v3186 = vstv %s3185
        %v3187 = vmul.f32 %v3164, %v3186
        %v3188 = vmul.f32 %v3166, %v3186
        %v3189 = vmul.f32 %v3165, %v3186
        %v3190 = vmul.f32 %v3167, %v3186
        %v3195 = vrot.slane %v3187, 1
        %v3196 = vrot.slane %v3189, 1
        %v3197 = vsel %vm299, %v3195, %v3196
        %v3198 = vrot.slane %v3188, 1
        %v3199 = vrot.slane %v3190, 1
        %v3200 = vsel %vm299, %v3198, %v3199
        %v3203 = vadd.f32 %v3174, %v3197
        %v3204 = vadd.f32 %v3175, %v3200
        %s3205 = sadd.s32 %s217, %s905
        %s3206 = sld [smem:[#allocation4 + %s3205]]
        %v3207 = vstv %s3206
        %v3208 = vmul.f32 %v3164, %v3207
        %v3209 = vmul.f32 %v3166, %v3207
        %v3210 = vmul.f32 %v3165, %v3207
        %v3211 = vmul.f32 %v3167, %v3207
        %v3216 = vrot.slane %v3208, 1
        %v3217 = vrot.slane %v3210, 1
        %v3218 = vsel %vm299, %v3216, %v3217
        %v3219 = vrot.slane %v3209, 1
        %v3220 = vrot.slane %v3211, 1
        %v3221 = vsel %vm299, %v3219, %v3220
        %v3224 = vadd.f32 %v3181, %v3218
        %v3225 = vadd.f32 %v3182, %v3221
        %s3226 = sadd.s32 %s220, 79
        %s3227 = sadd.s32 %s271, %s3226
        %s3228 = sld [smem:[#allocation4 + %s3227]]
        %v3229 = vstv %s3228
        %v3230 = vmul.f32 %v3164, %v3229
        %v3231 = vmul.f32 %v3166, %v3229
        %v3232 = vmul.f32 %v3165, %v3229
        %v3233 = vmul.f32 %v3167, %v3229
        %v3238 = vrot.slane %v3230, 2
        %v3239 = vrot.slane %v3232, 2
        %v3240 = vsel %vm344, %v3238, %v3239
        %v3241 = vrot.slane %v3231, 2
        %v3242 = vrot.slane %v3233, 2
        %v3243 = vsel %vm344, %v3241, %v3242
        %v3246 = vadd.f32 %v3203, %v3240
        %v3247 = vadd.f32 %v3204, %v3243
        %s3248 = sadd.s32 %s217, %s1904
        %s3249 = sld [smem:[#allocation4 + %s3248]]
        %v3250 = vstv %s3249
        %v3251 = vmul.f32 %v3164, %v3250
        %v3252 = vmul.f32 %v3166, %v3250
        %v3253 = vmul.f32 %v3165, %v3250
        %v3254 = vmul.f32 %v3167, %v3250
        %v3259 = vrot.slane %v3251, 2
        %v3260 = vrot.slane %v3253, 2
        %v3261 = vsel %vm344, %v3259, %v3260
        %v3262 = vrot.slane %v3252, 2
        %v3263 = vrot.slane %v3254, 2
        %v3264 = vsel %vm344, %v3262, %v3263
        %v3267 = vadd.f32 %v3224, %v3261
        %v3268 = vadd.f32 %v3225, %v3264
        %3269 = vrot.lane.b32.xlu0 %v2365, 115
        %v3270 = vpop.permute.xlu0 %3269
        %3271 = vrot.lane.b32.xlu0 %v2370, 115
        %v3272 = vpop.permute.xlu0 %3271
        %3273 = vrot.lane.b32.xlu0 %v2368, 115
        %v3274 = vpop.permute.xlu0 %3273
        %3275 = vrot.lane.b32.xlu0 %v2372, 115
        %v3276 = vpop.permute.xlu0 %3275
        %v3277 = vsel %vm1191, %v3270, %v3274
        %v3278 = vsel %vm1191, %v3272, %v3276
        %v3279 = vsel %vm1191, %v3274, %v3270
        %v3280 = vsel %vm1191, %v3276, %v3272
        %s3281 = sadd.s32 %s220, 62
        %s3282 = sadd.s32 %s271, %s3281
        %s3283 = sld [smem:[#allocation4 + %s3282]]
        %v3284 = vstv %s3283
        %v3285 = vmul.f32 %v3277, %v3284
        %v3286 = vmul.f32 %v3279, %v3284
        %v3287 = vadd.f32 %v3246, %v3285
        %v3288 = vadd.f32 %v3247, %v3286
        %s3289 = sadd.s32 %s217, %s978
        %s3290 = sld [smem:[#allocation4 + %s3289]]
        %v3291 = vstv %s3290
        %v3292 = vmul.f32 %v3277, %v3291
        %v3293 = vmul.f32 %v3279, %v3291
        %v3294 = vadd.f32 %v3267, %v3292
        %v3295 = vadd.f32 %v3268, %v3293
        %s3296 = sadd.s32 %s220, 71
        %s3297 = sadd.s32 %s271, %s3296
        %s3298 = sld [smem:[#allocation4 + %s3297]]
        %v3299 = vstv %s3298
        %v3300 = vmul.f32 %v3277, %v3299
        %v3301 = vmul.f32 %v3279, %v3299
        %v3302 = vmul.f32 %v3278, %v3299
        %v3303 = vmul.f32 %v3280, %v3299
        %v3308 = vrot.slane %v3300, 1
        %v3309 = vrot.slane %v3302, 1
        %v3310 = vsel %vm299, %v3308, %v3309
        %v3311 = vrot.slane %v3301, 1
        %v3312 = vrot.slane %v3303, 1
        %v3313 = vsel %vm299, %v3311, %v3312
        %v3316 = vadd.f32 %v3287, %v3310
        %v3317 = vadd.f32 %v3288, %v3313
        %s3318 = sadd.s32 %s217, %s1022
        %s3319 = sld [smem:[#allocation4 + %s3318]]
        %v3320 = vstv %s3319
        %v3321 = vmul.f32 %v3277, %v3320
        %v3322 = vmul.f32 %v3279, %v3320
        %v3323 = vmul.f32 %v3278, %v3320
        %v3324 = vmul.f32 %v3280, %v3320
        %v3329 = vrot.slane %v3321, 1
        %v3330 = vrot.slane %v3323, 1
        %v3331 = vsel %vm299, %v3329, %v3330
        %v3332 = vrot.slane %v3322, 1
        %v3333 = vrot.slane %v3324, 1
        %v3334 = vsel %vm299, %v3332, %v3333
        %v3337 = vadd.f32 %v3294, %v3331
        %v3338 = vadd.f32 %v3295, %v3334
        %s3339 = sadd.s32 %s220, 80
        %s3340 = sadd.s32 %s271, %s3339
        %s3341 = sld [smem:[#allocation4 + %s3340]]
        %v3342 = vstv %s3341
        %v3343 = vmul.f32 %v3277, %v3342
        %v3344 = vmul.f32 %v3279, %v3342
        %v3345 = vmul.f32 %v3278, %v3342
        %v3346 = vmul.f32 %v3280, %v3342
        %v3351 = vrot.slane %v3343, 2
        %v3352 = vrot.slane %v3345, 2
        %v3353 = vsel %vm344, %v3351, %v3352
        %v3354 = vrot.slane %v3344, 2
        %v3355 = vrot.slane %v3346, 2
        %v3356 = vsel %vm344, %v3354, %v3355
        %v3359 = vadd.f32 %v3316, %v3353
        %v3360 = vadd.f32 %v3317, %v3356
        %s3361 = sadd.s32 %s217, %s2019
        %s3362 = sld [smem:[#allocation4 + %s3361]]
        %v3363 = vstv %s3362
        %v3364 = vmul.f32 %v3277, %v3363
        %v3365 = vmul.f32 %v3279, %v3363
        %v3366 = vmul.f32 %v3278, %v3363
        %v3367 = vmul.f32 %v3280, %v3363
        %v3372 = vrot.slane %v3364, 2
        %v3373 = vrot.slane %v3366, 2
        %v3374 = vsel %vm344, %v3372, %v3373
        %v3375 = vrot.slane %v3365, 2
        %v3376 = vrot.slane %v3367, 2
        %v3377 = vsel %vm344, %v3375, %v3376
        %v3380 = vadd.f32 %v3337, %v3374
        %v3381 = vadd.f32 %v3338, %v3377
        %v3382 = vmax.f32 %v3359, 0.0
        %v3383 = vmax.f32 %v3360, 0.0
        %v3384 = vmax.f32 %v3380, 0.0
        %v3385 = vmax.f32 %v3381, 0.0
        %v3386 = vmul.f32 %v3382, %v197
        %v3387 = vmul.f32 %v3383, %v198
        %3388 = vst [vmem:[#allocation2 + $0x10] sm:$0xff] %v3386
        %3389 = vst [vmem:[#allocation2 + $0x18] sm:$0xff] %v3387
        %v3390 = vmul.f32 %v3384, %v197
        %v3391 = vmul.f32 %v3385, %v198
        %s3392 = scalar_lea.vmem [#allocation2], 48
        %3393 = vst [vmem:[%s3392 + $0x10] sm:$0xff] %v3390
        %3394 = vst [vmem:[%s3392 + $0x18] sm:$0xff] %v3391
        %s3395 = sadd.s32 %s217, %s310
        %s3396 = sld [smem:[#allocation4 + %s3395]]
        %v3397 = vstv %s3396
        %v3398 = vld [vmem:[#allocation2] sm:$0x80]
        %v3399 = vld [vmem:[#allocation2 + $0x8] sm:$0x80]
        %v3400 = vld [vmem:[#allocation2 + $0x10] sm:$0xff]
        %v3401 = vld [vmem:[#allocation2 + $0x18] sm:$0xff]
        %v3402 = vld [vmem:[#allocation2 + $0x20] sm:$0x1]
        %v3403 = vld [vmem:[#allocation2 + $0x28] sm:$0x1]
        %v3410 = vrot.slane %v3398, 7
        %v3411 = vrot.slane %v3400, 7
        %v3412 = vsel %vm241, %v3410, %v3411
        %v3413 = vrot.slane %v3399, 7
        %v3414 = vrot.slane %v3401, 7
        %v3415 = vsel %vm241, %v3413, %v3414
        %v3416 = vrot.slane %v3402, 7
        %v3417 = vsel %vm241, %v3411, %v3416
        %v3418 = vrot.slane %v3403, 7
        %v3419 = vsel %vm241, %v3414, %v3418
        %3424 = vrot.lane.b32.xlu0 %v3412, 13
        %v3425 = vpop.permute.xlu0 %3424
        %3426 = vrot.lane.b32.xlu0 %v3417, 13
        %v3427 = vpop.permute.xlu0 %3426
        %3428 = vrot.lane.b32.xlu0 %v3415, 13
        %v3429 = vpop.permute.xlu0 %3428
        %3430 = vrot.lane.b32.xlu0 %v3419, 13
        %v3431 = vpop.permute.xlu0 %3430
        %v3432 = vsel %vm266, %v3425, %v3429
        %v3433 = vsel %vm266, %v3427, %v3431
        %v3434 = vsel %vm266, %v3429, %v3425
        %v3435 = vsel %vm266, %v3431, %v3427
        %s3436 = sadd.s32 %s217, %s1355
        %s3437 = sld [smem:[#allocation4 + %s3436]]
        %v3438 = vstv %s3437
        %v3439 = vmul.f32 %v3434, %v3438
        %v3440 = vmul.f32 %v3432, %v3438
        %v3441 = vadd.f32 %v3397, %v3439
        %v3442 = vadd.f32 %v3397, %v3440
        %s3443 = sadd.s32 %s217, %s1399
        %s3444 = sld [smem:[#allocation4 + %s3443]]
        %v3445 = vstv %s3444
        %v3446 = vmul.f32 %v3434, %v3445
        %v3447 = vmul.f32 %v3432, %v3445
        %v3448 = vmul.f32 %v3435, %v3445
        %v3449 = vmul.f32 %v3433, %v3445
        %v3454 = vrot.slane %v3446, 1
        %v3455 = vrot.slane %v3448, 1
        %v3456 = vsel %vm299, %v3454, %v3455
        %v3457 = vrot.slane %v3447, 1
        %v3458 = vrot.slane %v3449, 1
        %v3459 = vsel %vm299, %v3457, %v3458
        %v3462 = vadd.f32 %v3441, %v3456
        %v3463 = vadd.f32 %v3442, %v3459
        %s3464 = sadd.s32 %s217, %s2389
        %s3465 = sld [smem:[#allocation4 + %s3464]]
        %v3466 = vstv %s3465
        %v3467 = vmul.f32 %v3434, %v3466
        %v3468 = vmul.f32 %v3432, %v3466
        %v3469 = vmul.f32 %v3435, %v3466
        %v3470 = vmul.f32 %v3433, %v3466
        %v3475 = vrot.slane %v3467, 2
        %v3476 = vrot.slane %v3469, 2
        %v3477 = vsel %vm344, %v3475, %v3476
        %v3478 = vrot.slane %v3468, 2
        %v3479 = vrot.slane %v3470, 2
        %v3480 = vsel %vm344, %v3478, %v3479
        %v3483 = vadd.f32 %v3462, %v3477
        %v3484 = vadd.f32 %v3463, %v3480
        %3485 = vrot.lane.b32.xlu0 %v3412, 12
        %v3486 = vpop.permute.xlu0 %3485
        %3487 = vrot.lane.b32.xlu0 %v3417, 12
        %v3488 = vpop.permute.xlu0 %3487
        %3489 = vrot.lane.b32.xlu0 %v3415, 12
        %v3490 = vpop.permute.xlu0 %3489
        %3491 = vrot.lane.b32.xlu0 %v3419, 12
        %v3492 = vpop.permute.xlu0 %3491
        %v3493 = vsel %vm385, %v3486, %v3490
        %v3494 = vsel %vm385, %v3488, %v3492
        %v3495 = vsel %vm385, %v3490, %v3486
        %v3496 = vsel %vm385, %v3492, %v3488
        %s3497 = sadd.s32 %s217, %s1471
        %s3498 = sld [smem:[#allocation4 + %s3497]]
        %v3499 = vstv %s3498
        %v3500 = vmul.f32 %v3495, %v3499
        %v3501 = vmul.f32 %v3493, %v3499
        %v3502 = vadd.f32 %v3483, %v3500
        %v3503 = vadd.f32 %v3484, %v3501
        %s3504 = sadd.s32 %s217, %s1515
        %s3505 = sld [smem:[#allocation4 + %s3504]]
        %v3506 = vstv %s3505
        %v3507 = vmul.f32 %v3495, %v3506
        %v3508 = vmul.f32 %v3493, %v3506
        %v3509 = vmul.f32 %v3496, %v3506
        %v3510 = vmul.f32 %v3494, %v3506
        %v3515 = vrot.slane %v3507, 1
        %v3516 = vrot.slane %v3509, 1
        %v3517 = vsel %vm299, %v3515, %v3516
        %v3518 = vrot.slane %v3508, 1
        %v3519 = vrot.slane %v3510, 1
        %v3520 = vsel %vm299, %v3518, %v3519
        %v3523 = vadd.f32 %v3502, %v3517
        %v3524 = vadd.f32 %v3503, %v3520
        %s3525 = sadd.s32 %s217, %s2502
        %s3526 = sld [smem:[#allocation4 + %s3525]]
        %v3527 = vstv %s3526
        %v3528 = vmul.f32 %v3495, %v3527
        %v3529 = vmul.f32 %v3493, %v3527
        %v3530 = vmul.f32 %v3496, %v3527
        %v3531 = vmul.f32 %v3494, %v3527
        %v3536 = vrot.slane %v3528, 2
        %v3537 = vrot.slane %v3530, 2
        %v3538 = vsel %vm344, %v3536, %v3537
        %v3539 = vrot.slane %v3529, 2
        %v3540 = vrot.slane %v3531, 2
        %v3541 = vsel %vm344, %v3539, %v3540
        %v3544 = vadd.f32 %v3523, %v3538
        %v3545 = vadd.f32 %v3524, %v3541
        %3546 = vrot.lane.b32.xlu0 %v3412, 11
        %v3547 = vpop.permute.xlu0 %3546
        %3548 = vrot.lane.b32.xlu0 %v3417, 11
        %v3549 = vpop.permute.xlu0 %3548
        %3550 = vrot.lane.b32.xlu0 %v3415, 11
        %v3551 = vpop.permute.xlu0 %3550
        %3552 = vrot.lane.b32.xlu0 %v3419, 11
        %v3553 = vpop.permute.xlu0 %3552
        %v3554 = vsel %vm502, %v3547, %v3551
        %v3555 = vsel %vm502, %v3549, %v3553
        %v3556 = vsel %vm502, %v3551, %v3547
        %v3557 = vsel %vm502, %v3553, %v3549
        %s3558 = sadd.s32 %s217, %s1587
        %s3559 = sld [smem:[#allocation4 + %s3558]]
        %v3560 = vstv %s3559
        %v3561 = vmul.f32 %v3556, %v3560
        %v3562 = vmul.f32 %v3554, %v3560
        %v3563 = vadd.f32 %v3544, %v3561
        %v3564 = vadd.f32 %v3545, %v3562
        %s3565 = sadd.s32 %s217, %s1631
        %s3566 = sld [smem:[#allocation4 + %s3565]]
        %v3567 = vstv %s3566
        %v3568 = vmul.f32 %v3556, %v3567
        %v3569 = vmul.f32 %v3554, %v3567
        %v3570 = vmul.f32 %v3557, %v3567
        %v3571 = vmul.f32 %v3555, %v3567
        %v3576 = vrot.slane %v3568, 1
        %v3577 = vrot.slane %v3570, 1
        %v3578 = vsel %vm299, %v3576, %v3577
        %v3579 = vrot.slane %v3569, 1
        %v3580 = vrot.slane %v3571, 1
        %v3581 = vsel %vm299, %v3579, %v3580
        %v3584 = vadd.f32 %v3563, %v3578
        %v3585 = vadd.f32 %v3564, %v3581
        %s3586 = sadd.s32 %s217, %s2615
        %s3587 = sld [smem:[#allocation4 + %s3586]]
        %v3588 = vstv %s3587
        %v3589 = vmul.f32 %v3556, %v3588
        %v3590 = vmul.f32 %v3554, %v3588
        %v3591 = vmul.f32 %v3557, %v3588
        %v3592 = vmul.f32 %v3555, %v3588
        %v3597 = vrot.slane %v3589, 2
        %v3598 = vrot.slane %v3591, 2
        %v3599 = vsel %vm344, %v3597, %v3598
        %v3600 = vrot.slane %v3590, 2
        %v3601 = vrot.slane %v3592, 2
        %v3602 = vsel %vm344, %v3600, %v3601
        %v3605 = vadd.f32 %v3584, %v3599
        %v3606 = vadd.f32 %v3585, %v3602
        %3607 = vrot.lane.b32.xlu0 %v3412, 1
        %v3608 = vpop.permute.xlu0 %3607
        %3609 = vrot.lane.b32.xlu0 %v3417, 1
        %v3610 = vpop.permute.xlu0 %3609
        %3611 = vrot.lane.b32.xlu0 %v3415, 1
        %v3612 = vpop.permute.xlu0 %3611
        %3613 = vrot.lane.b32.xlu0 %v3419, 1
        %v3614 = vpop.permute.xlu0 %3613
        %v3615 = vsel %vm619, %v3608, %v3612
        %v3616 = vsel %vm619, %v3610, %v3614
        %v3617 = vsel %vm619, %v3612, %v3608
        %v3618 = vsel %vm619, %v3614, %v3610
        %s3619 = sadd.s32 %s217, %s1702
        %s3620 = sld [smem:[#allocation4 + %s3619]]
        %v3621 = vstv %s3620
        %v3622 = vmul.f32 %v3617, %v3621
        %v3623 = vmul.f32 %v3615, %v3621
        %v3624 = vadd.f32 %v3605, %v3622
        %v3625 = vadd.f32 %v3606, %v3623
        %s3626 = sadd.s32 %s217, %s1746
        %s3627 = sld [smem:[#allocation4 + %s3626]]
        %v3628 = vstv %s3627
        %v3629 = vmul.f32 %v3617, %v3628
        %v3630 = vmul.f32 %v3615, %v3628
        %v3631 = vmul.f32 %v3618, %v3628
        %v3632 = vmul.f32 %v3616, %v3628
        %v3637 = vrot.slane %v3629, 1
        %v3638 = vrot.slane %v3631, 1
        %v3639 = vsel %vm299, %v3637, %v3638
        %v3640 = vrot.slane %v3630, 1
        %v3641 = vrot.slane %v3632, 1
        %v3642 = vsel %vm299, %v3640, %v3641
        %v3645 = vadd.f32 %v3624, %v3639
        %v3646 = vadd.f32 %v3625, %v3642
        %s3647 = sadd.s32 %s217, %s2728
        %s3648 = sld [smem:[#allocation4 + %s3647]]
        %v3649 = vstv %s3648
        %v3650 = vmul.f32 %v3617, %v3649
        %v3651 = vmul.f32 %v3615, %v3649
        %v3652 = vmul.f32 %v3618, %v3649
        %v3653 = vmul.f32 %v3616, %v3649
        %v3658 = vrot.slane %v3650, 2
        %v3659 = vrot.slane %v3652, 2
        %v3660 = vsel %vm344, %v3658, %v3659
        %v3661 = vrot.slane %v3651, 2
        %v3662 = vrot.slane %v3653, 2
        %v3663 = vsel %vm344, %v3661, %v3662
        %v3666 = vadd.f32 %v3645, %v3660
        %v3667 = vadd.f32 %v3646, %v3663
        %s3668 = sadd.s32 %s217, %s1833
        %s3669 = sld [smem:[#allocation4 + %s3668]]
        %v3670 = vstv %s3669
        %v3671 = vmul.f32 %v3398, %v3670
        %v3672 = vmul.f32 %v3399, %v3670
        %v3673 = vmul.f32 %v3400, %v3670
        %v3674 = vmul.f32 %v3401, %v3670
        %v3679 = vrot.slane %v3671, 7
        %v3680 = vrot.slane %v3673, 7
        %v3681 = vsel %vm241, %v3679, %v3680
        %v3682 = vrot.slane %v3672, 7
        %v3683 = vrot.slane %v3674, 7
        %v3684 = vsel %vm241, %v3682, %v3683
        %v3687 = vadd.f32 %v3666, %v3681
        %v3688 = vadd.f32 %v3667, %v3684
        %s3689 = sadd.s32 %s217, %s1849
        %s3690 = sld [smem:[#allocation4 + %s3689]]
        %v3691 = vstv %s3690
        %v3692 = vmul.f32 %v3400, %v3691
        %v3693 = vmul.f32 %v3401, %v3691
        %v3694 = vadd.f32 %v3687, %v3692
        %v3695 = vadd.f32 %v3688, %v3693
        %s3696 = sadd.s32 %s217, %s2829
        %s3697 = sld [smem:[#allocation4 + %s3696]]
        %v3698 = vstv %s3697
        %v3699 = vmul.f32 %v3400, %v3698
        %v3700 = vmul.f32 %v3401, %v3698
        %v3701 = vmul.f32 %v3402, %v3698
        %v3702 = vmul.f32 %v3403, %v3698
        %v3707 = vrot.slane %v3699, 1
        %v3708 = vrot.slane %v3701, 1
        %v3709 = vsel %vm299, %v3707, %v3708
        %v3710 = vrot.slane %v3700, 1
        %v3711 = vrot.slane %v3702, 1
        %v3712 = vsel %vm299, %v3710, %v3711
        %v3715 = vadd.f32 %v3694, %v3709
        %v3716 = vadd.f32 %v3695, %v3712
        %3717 = vrot.lane.b32.xlu0 %v3412, 127
        %v3718 = vpop.permute.xlu0 %3717
        %3719 = vrot.lane.b32.xlu0 %v3417, 127
        %v3720 = vpop.permute.xlu0 %3719
        %3721 = vrot.lane.b32.xlu0 %v3415, 127
        %v3722 = vpop.permute.xlu0 %3721
        %3723 = vrot.lane.b32.xlu0 %v3419, 127
        %v3724 = vpop.permute.xlu0 %3723
        %v3725 = vsel %vm840, %v3718, %v3722
        %v3726 = vsel %vm840, %v3720, %v3724
        %v3727 = vsel %vm840, %v3722, %v3718
        %v3728 = vsel %vm840, %v3724, %v3720
        %s3729 = sadd.s32 %s217, %s1920
        %s3730 = sld [smem:[#allocation4 + %s3729]]
        %v3731 = vstv %s3730
        %v3732 = vmul.f32 %v3725, %v3731
        %v3733 = vmul.f32 %v3727, %v3731
        %v3734 = vadd.f32 %v3715, %v3732
        %v3735 = vadd.f32 %v3716, %v3733
        %s3736 = sadd.s32 %s217, %s1964
        %s3737 = sld [smem:[#allocation4 + %s3736]]
        %v3738 = vstv %s3737
        %v3739 = vmul.f32 %v3725, %v3738
        %v3740 = vmul.f32 %v3727, %v3738
        %v3741 = vmul.f32 %v3726, %v3738
        %v3742 = vmul.f32 %v3728, %v3738
        %v3747 = vrot.slane %v3739, 1
        %v3748 = vrot.slane %v3741, 1
        %v3749 = vsel %vm299, %v3747, %v3748
        %v3750 = vrot.slane %v3740, 1
        %v3751 = vrot.slane %v3742, 1
        %v3752 = vsel %vm299, %v3750, %v3751
        %v3755 = vadd.f32 %v3734, %v3749
        %v3756 = vadd.f32 %v3735, %v3752
        %s3757 = sadd.s32 %s217, %s2942
        %s3758 = sld [smem:[#allocation4 + %s3757]]
        %v3759 = vstv %s3758
        %v3760 = vmul.f32 %v3725, %v3759
        %v3761 = vmul.f32 %v3727, %v3759
        %v3762 = vmul.f32 %v3726, %v3759
        %v3763 = vmul.f32 %v3728, %v3759
        %v3768 = vrot.slane %v3760, 2
        %v3769 = vrot.slane %v3762, 2
        %v3770 = vsel %vm344, %v3768, %v3769
        %v3771 = vrot.slane %v3761, 2
        %v3772 = vrot.slane %v3763, 2
        %v3773 = vsel %vm344, %v3771, %v3772
        %v3776 = vadd.f32 %v3755, %v3770
        %v3777 = vadd.f32 %v3756, %v3773
        %3778 = vrot.lane.b32.xlu0 %v3412, 117
        %v3779 = vpop.permute.xlu0 %3778
        %3780 = vrot.lane.b32.xlu0 %v3417, 117
        %v3781 = vpop.permute.xlu0 %3780
        %3782 = vrot.lane.b32.xlu0 %v3415, 117
        %v3783 = vpop.permute.xlu0 %3782
        %3784 = vrot.lane.b32.xlu0 %v3419, 117
        %v3785 = vpop.permute.xlu0 %3784
        %v3786 = vsel %vm957, %v3779, %v3783
        %v3787 = vsel %vm957, %v3781, %v3785
        %v3788 = vsel %vm957, %v3783, %v3779
        %v3789 = vsel %vm957, %v3785, %v3781
        %s3790 = sadd.s32 %s217, %s2035
        %s3791 = sld [smem:[#allocation4 + %s3790]]
        %v3792 = vstv %s3791
        %v3793 = vmul.f32 %v3786, %v3792
        %v3794 = vmul.f32 %v3788, %v3792
        %v3795 = vadd.f32 %v3776, %v3793
        %v3796 = vadd.f32 %v3777, %v3794
        %s3797 = sadd.s32 %s217, %s2079
        %s3798 = sld [smem:[#allocation4 + %s3797]]
        %v3799 = vstv %s3798
        %v3800 = vmul.f32 %v3786, %v3799
        %v3801 = vmul.f32 %v3788, %v3799
        %v3802 = vmul.f32 %v3787, %v3799
        %v3803 = vmul.f32 %v3789, %v3799
        %v3808 = vrot.slane %v3800, 1
        %v3809 = vrot.slane %v3802, 1
        %v3810 = vsel %vm299, %v3808, %v3809
        %v3811 = vrot.slane %v3801, 1
        %v3812 = vrot.slane %v3803, 1
        %v3813 = vsel %vm299, %v3811, %v3812
        %v3816 = vadd.f32 %v3795, %v3810
        %v3817 = vadd.f32 %v3796, %v3813
        %s3818 = sadd.s32 %s217, %s3055
        %s3819 = sld [smem:[#allocation4 + %s3818]]
        %v3820 = vstv %s3819
        %v3821 = vmul.f32 %v3786, %v3820
        %v3822 = vmul.f32 %v3788, %v3820
        %v3823 = vmul.f32 %v3787, %v3820
        %v3824 = vmul.f32 %v3789, %v3820
        %v3829 = vrot.slane %v3821, 2
        %v3830 = vrot.slane %v3823, 2
        %v3831 = vsel %vm344, %v3829, %v3830
        %v3832 = vrot.slane %v3822, 2
        %v3833 = vrot.slane %v3824, 2
        %v3834 = vsel %vm344, %v3832, %v3833
        %v3837 = vadd.f32 %v3816, %v3831
        %v3838 = vadd.f32 %v3817, %v3834
        %3839 = vrot.lane.b32.xlu0 %v3412, 116
        %v3840 = vpop.permute.xlu0 %3839
        %3841 = vrot.lane.b32.xlu0 %v3417, 116
        %v3842 = vpop.permute.xlu0 %3841
        %3843 = vrot.lane.b32.xlu0 %v3415, 116
        %v3844 = vpop.permute.xlu0 %3843
        %3845 = vrot.lane.b32.xlu0 %v3419, 116
        %v3846 = vpop.permute.xlu0 %3845
        %v3847 = vsel %vm1074, %v3840, %v3844
        %v3848 = vsel %vm1074, %v3842, %v3846
        %v3849 = vsel %vm1074, %v3844, %v3840
        %v3850 = vsel %vm1074, %v3846, %v3842
        %s3851 = sadd.s32 %s217, %s2149
        %s3852 = sld [smem:[#allocation4 + %s3851]]
        %v3853 = vstv %s3852
        %v3854 = vmul.f32 %v3847, %v3853
        %v3855 = vmul.f32 %v3849, %v3853
        %v3856 = vadd.f32 %v3837, %v3854
        %v3857 = vadd.f32 %v3838, %v3855
        %s3858 = sadd.s32 %s217, %s2193
        %s3859 = sld [smem:[#allocation4 + %s3858]]
        %v3860 = vstv %s3859
        %v3861 = vmul.f32 %v3847, %v3860
        %v3862 = vmul.f32 %v3849, %v3860
        %v3863 = vmul.f32 %v3848, %v3860
        %v3864 = vmul.f32 %v3850, %v3860
        %v3869 = vrot.slane %v3861, 1
        %v3870 = vrot.slane %v3863, 1
        %v3871 = vsel %vm299, %v3869, %v3870
        %v3872 = vrot.slane %v3862, 1
        %v3873 = vrot.slane %v3864, 1
        %v3874 = vsel %vm299, %v3872, %v3873
        %v3877 = vadd.f32 %v3856, %v3871
        %v3878 = vadd.f32 %v3857, %v3874
        %s3879 = sadd.s32 %s217, %s3168
        %s3880 = sld [smem:[#allocation4 + %s3879]]
        %v3881 = vstv %s3880
        %v3882 = vmul.f32 %v3847, %v3881
        %v3883 = vmul.f32 %v3849, %v3881
        %v3884 = vmul.f32 %v3848, %v3881
        %v3885 = vmul.f32 %v3850, %v3881
        %v3890 = vrot.slane %v3882, 2
        %v3891 = vrot.slane %v3884, 2
        %v3892 = vsel %vm344, %v3890, %v3891
        %v3893 = vrot.slane %v3883, 2
        %v3894 = vrot.slane %v3885, 2
        %v3895 = vsel %vm344, %v3893, %v3894
        %v3898 = vadd.f32 %v3877, %v3892
        %v3899 = vadd.f32 %v3878, %v3895
        %3900 = vrot.lane.b32.xlu0 %v3412, 115
        %v3901 = vpop.permute.xlu0 %3900
        %3902 = vrot.lane.b32.xlu0 %v3417, 115
        %v3903 = vpop.permute.xlu0 %3902
        %3904 = vrot.lane.b32.xlu0 %v3415, 115
        %v3905 = vpop.permute.xlu0 %3904
        %3906 = vrot.lane.b32.xlu0 %v3419, 115
        %v3907 = vpop.permute.xlu0 %3906
        %v3908 = vsel %vm1191, %v3901, %v3905
        %v3909 = vsel %vm1191, %v3903, %v3907
        %v3910 = vsel %vm1191, %v3905, %v3901
        %v3911 = vsel %vm1191, %v3907, %v3903
        %s3912 = sadd.s32 %s217, %s2263
        %s3913 = sld [smem:[#allocation4 + %s3912]]
        %v3914 = vstv %s3913
        %v3915 = vmul.f32 %v3908, %v3914
        %v3916 = vmul.f32 %v3910, %v3914
        %v3917 = vadd.f32 %v3898, %v3915
        %v3918 = vadd.f32 %v3899, %v3916
        %s3919 = sadd.s32 %s217, %s2307
        %s3920 = sld [smem:[#allocation4 + %s3919]]
        %v3921 = vstv %s3920
        %v3922 = vmul.f32 %v3908, %v3921
        %v3923 = vmul.f32 %v3910, %v3921
        %v3924 = vmul.f32 %v3909, %v3921
        %v3925 = vmul.f32 %v3911, %v3921
        %v3930 = vrot.slane %v3922, 1
        %v3931 = vrot.slane %v3924, 1
        %v3932 = vsel %vm299, %v3930, %v3931
        %v3933 = vrot.slane %v3923, 1
        %v3934 = vrot.slane %v3925, 1
        %v3935 = vsel %vm299, %v3933, %v3934
        %v3938 = vadd.f32 %v3917, %v3932
        %v3939 = vadd.f32 %v3918, %v3935
        %s3940 = sadd.s32 %s217, %s3281
        %s3941 = sld [smem:[#allocation4 + %s3940]]
        %v3942 = vstv %s3941
        %v3943 = vmul.f32 %v3908, %v3942
        %v3944 = vmul.f32 %v3910, %v3942
        %v3945 = vmul.f32 %v3909, %v3942
        %v3946 = vmul.f32 %v3911, %v3942
        %v3951 = vrot.slane %v3943, 2
        %v3952 = vrot.slane %v3945, 2
        %v3953 = vsel %vm344, %v3951, %v3952
        %v3954 = vrot.slane %v3944, 2
        %v3955 = vrot.slane %v3946, 2
        %v3956 = vsel %vm344, %v3954, %v3955
        %v3959 = vadd.f32 %v3938, %v3953
        %v3960 = vadd.f32 %v3939, %v3956
        %v3961 = vld [vmem:[%s3392] sm:$0x80]
        %v3962 = vld [vmem:[%s3392 + $0x8] sm:$0x80]
        %v3963 = vld [vmem:[%s3392 + $0x10] sm:$0xff]
        %v3964 = vld [vmem:[%s3392 + $0x18] sm:$0xff]
        %v3965 = vld [vmem:[%s3392 + $0x20] sm:$0x1]
        %v3966 = vld [vmem:[%s3392 + $0x28] sm:$0x1]
        %v3973 = vrot.slane %v3961, 7
        %v3974 = vrot.slane %v3963, 7
        %v3975 = vsel %vm241, %v3973, %v3974
        %v3976 = vrot.slane %v3962, 7
        %v3977 = vrot.slane %v3964, 7
        %v3978 = vsel %vm241, %v3976, %v3977
        %v3979 = vrot.slane %v3965, 7
        %v3980 = vsel %vm241, %v3974, %v3979
        %v3981 = vrot.slane %v3966, 7
        %v3982 = vsel %vm241, %v3977, %v3981
        %3987 = vrot.lane.b32.xlu0 %v3975, 13
        %v3988 = vpop.permute.xlu0 %3987
        %3989 = vrot.lane.b32.xlu0 %v3980, 13
        %v3990 = vpop.permute.xlu0 %3989
        %3991 = vrot.lane.b32.xlu0 %v3978, 13
        %v3992 = vpop.permute.xlu0 %3991
        %3993 = vrot.lane.b32.xlu0 %v3982, 13
        %v3994 = vpop.permute.xlu0 %3993
        %v3995 = vsel %vm266, %v3988, %v3992
        %v3996 = vsel %vm266, %v3990, %v3994
        %v3997 = vsel %vm266, %v3992, %v3988
        %v3998 = vsel %vm266, %v3994, %v3990
        %s3999 = sadd.s32 %s217, %s2404
        %s4000 = sld [smem:[#allocation4 + %s3999]]
        %v4001 = vstv %s4000
        %v4002 = vmul.f32 %v3997, %v4001
        %v4003 = vmul.f32 %v3995, %v4001
        %v4004 = vadd.f32 %v3959, %v4002
        %v4005 = vadd.f32 %v3960, %v4003
        %s4006 = sadd.s32 %s217, %s2447
        %s4007 = sld [smem:[#allocation4 + %s4006]]
        %v4008 = vstv %s4007
        %v4009 = vmul.f32 %v3997, %v4008
        %v4010 = vmul.f32 %v3995, %v4008
        %v4011 = vmul.f32 %v3998, %v4008
        %v4012 = vmul.f32 %v3996, %v4008
        %v4017 = vrot.slane %v4009, 1
        %v4018 = vrot.slane %v4011, 1
        %v4019 = vsel %vm299, %v4017, %v4018
        %v4020 = vrot.slane %v4010, 1
        %v4021 = vrot.slane %v4012, 1
        %v4022 = vsel %vm299, %v4020, %v4021
        %v4025 = vadd.f32 %v4004, %v4019
        %v4026 = vadd.f32 %v4005, %v4022
        %s4027 = sadd.s32 %s217, %s279
        %s4028 = sld [smem:[#allocation4 + %s4027]]
        %v4029 = vstv %s4028
        %v4030 = vmul.f32 %v3997, %v4029
        %v4031 = vmul.f32 %v3995, %v4029
        %v4032 = vmul.f32 %v3998, %v4029
        %v4033 = vmul.f32 %v3996, %v4029
        %v4038 = vrot.slane %v4030, 2
        %v4039 = vrot.slane %v4032, 2
        %v4040 = vsel %vm344, %v4038, %v4039
        %v4041 = vrot.slane %v4031, 2
        %v4042 = vrot.slane %v4033, 2
        %v4043 = vsel %vm344, %v4041, %v4042
        %v4046 = vadd.f32 %v4025, %v4040
        %v4047 = vadd.f32 %v4026, %v4043
        %4048 = vrot.lane.b32.xlu0 %v3975, 12
        %v4049 = vpop.permute.xlu0 %4048
        %4050 = vrot.lane.b32.xlu0 %v3980, 12
        %v4051 = vpop.permute.xlu0 %4050
        %4052 = vrot.lane.b32.xlu0 %v3978, 12
        %v4053 = vpop.permute.xlu0 %4052
        %4054 = vrot.lane.b32.xlu0 %v3982, 12
        %v4055 = vpop.permute.xlu0 %4054
        %v4056 = vsel %vm385, %v4049, %v4053
        %v4057 = vsel %vm385, %v4051, %v4055
        %v4058 = vsel %vm385, %v4053, %v4049
        %v4059 = vsel %vm385, %v4055, %v4051
        %s4060 = sadd.s32 %s217, %s2517
        %s4061 = sld [smem:[#allocation4 + %s4060]]
        %v4062 = vstv %s4061
        %v4063 = vmul.f32 %v4058, %v4062
        %v4064 = vmul.f32 %v4056, %v4062
        %v4065 = vadd.f32 %v4046, %v4063
        %v4066 = vadd.f32 %v4047, %v4064
        %s4067 = sadd.s32 %s217, %s2560
        %s4068 = sld [smem:[#allocation4 + %s4067]]
        %v4069 = vstv %s4068
        %v4070 = vmul.f32 %v4058, %v4069
        %v4071 = vmul.f32 %v4056, %v4069
        %v4072 = vmul.f32 %v4059, %v4069
        %v4073 = vmul.f32 %v4057, %v4069
        %v4078 = vrot.slane %v4070, 1
        %v4079 = vrot.slane %v4072, 1
        %v4080 = vsel %vm299, %v4078, %v4079
        %v4081 = vrot.slane %v4071, 1
        %v4082 = vrot.slane %v4073, 1
        %v4083 = vsel %vm299, %v4081, %v4082
        %v4086 = vadd.f32 %v4065, %v4080
        %v4087 = vadd.f32 %v4066, %v4083
        %s4088 = sadd.s32 %s217, %s398
        %s4089 = sld [smem:[#allocation4 + %s4088]]
        %v4090 = vstv %s4089
        %v4091 = vmul.f32 %v4058, %v4090
        %v4092 = vmul.f32 %v4056, %v4090
        %v4093 = vmul.f32 %v4059, %v4090
        %v4094 = vmul.f32 %v4057, %v4090
        %v4099 = vrot.slane %v4091, 2
        %v4100 = vrot.slane %v4093, 2
        %v4101 = vsel %vm344, %v4099, %v4100
        %v4102 = vrot.slane %v4092, 2
        %v4103 = vrot.slane %v4094, 2
        %v4104 = vsel %vm344, %v4102, %v4103
        %v4107 = vadd.f32 %v4086, %v4101
        %v4108 = vadd.f32 %v4087, %v4104
        %4109 = vrot.lane.b32.xlu0 %v3975, 11
        %v4110 = vpop.permute.xlu0 %4109
        %4111 = vrot.lane.b32.xlu0 %v3980, 11
        %v4112 = vpop.permute.xlu0 %4111
        %4113 = vrot.lane.b32.xlu0 %v3978, 11
        %v4114 = vpop.permute.xlu0 %4113
        %4115 = vrot.lane.b32.xlu0 %v3982, 11
        %v4116 = vpop.permute.xlu0 %4115
        %v4117 = vsel %vm502, %v4110, %v4114
        %v4118 = vsel %vm502, %v4112, %v4116
        %v4119 = vsel %vm502, %v4114, %v4110
        %v4120 = vsel %vm502, %v4116, %v4112
        %s4121 = sadd.s32 %s217, %s2630
        %s4122 = sld [smem:[#allocation4 + %s4121]]
        %v4123 = vstv %s4122
        %v4124 = vmul.f32 %v4119, %v4123
        %v4125 = vmul.f32 %v4117, %v4123
        %v4126 = vadd.f32 %v4107, %v4124
        %v4127 = vadd.f32 %v4108, %v4125
        %s4128 = sadd.s32 %s217, %s2673
        %s4129 = sld [smem:[#allocation4 + %s4128]]
        %v4130 = vstv %s4129
        %v4131 = vmul.f32 %v4119, %v4130
        %v4132 = vmul.f32 %v4117, %v4130
        %v4133 = vmul.f32 %v4120, %v4130
        %v4134 = vmul.f32 %v4118, %v4130
        %v4139 = vrot.slane %v4131, 1
        %v4140 = vrot.slane %v4133, 1
        %v4141 = vsel %vm299, %v4139, %v4140
        %v4142 = vrot.slane %v4132, 1
        %v4143 = vrot.slane %v4134, 1
        %v4144 = vsel %vm299, %v4142, %v4143
        %v4147 = vadd.f32 %v4126, %v4141
        %v4148 = vadd.f32 %v4127, %v4144
        %s4149 = sadd.s32 %s217, %s515
        %s4150 = sld [smem:[#allocation4 + %s4149]]
        %v4151 = vstv %s4150
        %v4152 = vmul.f32 %v4119, %v4151
        %v4153 = vmul.f32 %v4117, %v4151
        %v4154 = vmul.f32 %v4120, %v4151
        %v4155 = vmul.f32 %v4118, %v4151
        %v4160 = vrot.slane %v4152, 2
        %v4161 = vrot.slane %v4154, 2
        %v4162 = vsel %vm344, %v4160, %v4161
        %v4163 = vrot.slane %v4153, 2
        %v4164 = vrot.slane %v4155, 2
        %v4165 = vsel %vm344, %v4163, %v4164
        %v4168 = vadd.f32 %v4147, %v4162
        %v4169 = vadd.f32 %v4148, %v4165
        %4170 = vrot.lane.b32.xlu0 %v3975, 1
        %v4171 = vpop.permute.xlu0 %4170
        %4172 = vrot.lane.b32.xlu0 %v3980, 1
        %v4173 = vpop.permute.xlu0 %4172
        %4174 = vrot.lane.b32.xlu0 %v3978, 1
        %v4175 = vpop.permute.xlu0 %4174
        %4176 = vrot.lane.b32.xlu0 %v3982, 1
        %v4177 = vpop.permute.xlu0 %4176
        %v4178 = vsel %vm619, %v4171, %v4175
        %v4179 = vsel %vm619, %v4173, %v4177
        %v4180 = vsel %vm619, %v4175, %v4171
        %v4181 = vsel %vm619, %v4177, %v4173
        %s4182 = sadd.s32 %s217, %s2743
        %s4183 = sld [smem:[#allocation4 + %s4182]]
        %v4184 = vstv %s4183
        %v4185 = vmul.f32 %v4180, %v4184
        %v4186 = vmul.f32 %v4178, %v4184
        %v4187 = vadd.f32 %v4168, %v4185
        %v4188 = vadd.f32 %v4169, %v4186
        %s4189 = sadd.s32 %s217, %s2786
        %s4190 = sld [smem:[#allocation4 + %s4189]]
        %v4191 = vstv %s4190
        %v4192 = vmul.f32 %v4180, %v4191
        %v4193 = vmul.f32 %v4178, %v4191
        %v4194 = vmul.f32 %v4181, %v4191
        %v4195 = vmul.f32 %v4179, %v4191
        %v4200 = vrot.slane %v4192, 1
        %v4201 = vrot.slane %v4194, 1
        %v4202 = vsel %vm299, %v4200, %v4201
        %v4203 = vrot.slane %v4193, 1
        %v4204 = vrot.slane %v4195, 1
        %v4205 = vsel %vm299, %v4203, %v4204
        %v4208 = vadd.f32 %v4187, %v4202
        %v4209 = vadd.f32 %v4188, %v4205
        %s4210 = sadd.s32 %s217, %s632
        %s4211 = sld [smem:[#allocation4 + %s4210]]
        %v4212 = vstv %s4211
        %v4213 = vmul.f32 %v4180, %v4212
        %v4214 = vmul.f32 %v4178, %v4212
        %v4215 = vmul.f32 %v4181, %v4212
        %v4216 = vmul.f32 %v4179, %v4212
        %v4221 = vrot.slane %v4213, 2
        %v4222 = vrot.slane %v4215, 2
        %v4223 = vsel %vm344, %v4221, %v4222
        %v4224 = vrot.slane %v4214, 2
        %v4225 = vrot.slane %v4216, 2
        %v4226 = vsel %vm344, %v4224, %v4225
        %v4229 = vadd.f32 %v4208, %v4223
        %v4230 = vadd.f32 %v4209, %v4226
        %s4231 = sadd.s32 %s217, %s2872
        %s4232 = sld [smem:[#allocation4 + %s4231]]
        %v4233 = vstv %s4232
        %v4234 = vmul.f32 %v3961, %v4233
        %v4235 = vmul.f32 %v3962, %v4233
        %v4236 = vmul.f32 %v3963, %v4233
        %v4237 = vmul.f32 %v3964, %v4233
        %v4242 = vrot.slane %v4234, 7
        %v4243 = vrot.slane %v4236, 7
        %v4244 = vsel %vm241, %v4242, %v4243
        %v4245 = vrot.slane %v4235, 7
        %v4246 = vrot.slane %v4237, 7
        %v4247 = vsel %vm241, %v4245, %v4246
        %v4250 = vadd.f32 %v4229, %v4244
        %v4251 = vadd.f32 %v4230, %v4247
        %s4252 = sadd.s32 %s217, %s2887
        %s4253 = sld [smem:[#allocation4 + %s4252]]
        %v4254 = vstv %s4253
        %v4255 = vmul.f32 %v3963, %v4254
        %v4256 = vmul.f32 %v3964, %v4254
        %v4257 = vadd.f32 %v4250, %v4255
        %v4258 = vadd.f32 %v4251, %v4256
        %s4259 = sadd.s32 %s217, %s750
        %s4260 = sld [smem:[#allocation4 + %s4259]]
        %v4261 = vstv %s4260
        %v4262 = vmul.f32 %v3963, %v4261
        %v4263 = vmul.f32 %v3964, %v4261
        %v4264 = vmul.f32 %v3965, %v4261
        %v4265 = vmul.f32 %v3966, %v4261
        %v4270 = vrot.slane %v4262, 1
        %v4271 = vrot.slane %v4264, 1
        %v4272 = vsel %vm299, %v4270, %v4271
        %v4273 = vrot.slane %v4263, 1
        %v4274 = vrot.slane %v4265, 1
        %v4275 = vsel %vm299, %v4273, %v4274
        %v4278 = vadd.f32 %v4257, %v4272
        %v4279 = vadd.f32 %v4258, %v4275
        %4280 = vrot.lane.b32.xlu0 %v3975, 127
        %v4281 = vpop.permute.xlu0 %4280
        %4282 = vrot.lane.b32.xlu0 %v3980, 127
        %v4283 = vpop.permute.xlu0 %4282
        %4284 = vrot.lane.b32.xlu0 %v3978, 127
        %v4285 = vpop.permute.xlu0 %4284
        %4286 = vrot.lane.b32.xlu0 %v3982, 127
        %v4287 = vpop.permute.xlu0 %4286
        %v4288 = vsel %vm840, %v4281, %v4285
        %v4289 = vsel %vm840, %v4283, %v4287
        %v4290 = vsel %vm840, %v4285, %v4281
        %v4291 = vsel %vm840, %v4287, %v4283
        %s4292 = sadd.s32 %s217, %s2957
        %s4293 = sld [smem:[#allocation4 + %s4292]]
        %v4294 = vstv %s4293
        %v4295 = vmul.f32 %v4288, %v4294
        %v4296 = vmul.f32 %v4290, %v4294
        %v4297 = vadd.f32 %v4278, %v4295
        %v4298 = vadd.f32 %v4279, %v4296
        %s4299 = sadd.s32 %s217, %s3000
        %s4300 = sld [smem:[#allocation4 + %s4299]]
        %v4301 = vstv %s4300
        %v4302 = vmul.f32 %v4288, %v4301
        %v4303 = vmul.f32 %v4290, %v4301
        %v4304 = vmul.f32 %v4289, %v4301
        %v4305 = vmul.f32 %v4291, %v4301
        %v4310 = vrot.slane %v4302, 1
        %v4311 = vrot.slane %v4304, 1
        %v4312 = vsel %vm299, %v4310, %v4311
        %v4313 = vrot.slane %v4303, 1
        %v4314 = vrot.slane %v4305, 1
        %v4315 = vsel %vm299, %v4313, %v4314
        %v4318 = vadd.f32 %v4297, %v4312
        %v4319 = vadd.f32 %v4298, %v4315
        %s4320 = sadd.s32 %s217, %s853
        %s4321 = sld [smem:[#allocation4 + %s4320]]
        %v4322 = vstv %s4321
        %v4323 = vmul.f32 %v4288, %v4322
        %v4324 = vmul.f32 %v4290, %v4322
        %v4325 = vmul.f32 %v4289, %v4322
        %v4326 = vmul.f32 %v4291, %v4322
        %v4331 = vrot.slane %v4323, 2
        %v4332 = vrot.slane %v4325, 2
        %v4333 = vsel %vm344, %v4331, %v4332
        %v4334 = vrot.slane %v4324, 2
        %v4335 = vrot.slane %v4326, 2
        %v4336 = vsel %vm344, %v4334, %v4335
        %v4339 = vadd.f32 %v4318, %v4333
        %v4340 = vadd.f32 %v4319, %v4336
        %4341 = vrot.lane.b32.xlu0 %v3975, 117
        %v4342 = vpop.permute.xlu0 %4341
        %4343 = vrot.lane.b32.xlu0 %v3980, 117
        %v4344 = vpop.permute.xlu0 %4343
        %4345 = vrot.lane.b32.xlu0 %v3978, 117
        %v4346 = vpop.permute.xlu0 %4345
        %4347 = vrot.lane.b32.xlu0 %v3982, 117
        %v4348 = vpop.permute.xlu0 %4347
        %v4349 = vsel %vm957, %v4342, %v4346
        %v4350 = vsel %vm957, %v4344, %v4348
        %v4351 = vsel %vm957, %v4346, %v4342
        %v4352 = vsel %vm957, %v4348, %v4344
        %s4353 = sadd.s32 %s217, %s3070
        %s4354 = sld [smem:[#allocation4 + %s4353]]
        %v4355 = vstv %s4354
        %v4356 = vmul.f32 %v4349, %v4355
        %v4357 = vmul.f32 %v4351, %v4355
        %v4358 = vadd.f32 %v4339, %v4356
        %v4359 = vadd.f32 %v4340, %v4357
        %s4360 = sadd.s32 %s217, %s3113
        %s4361 = sld [smem:[#allocation4 + %s4360]]
        %v4362 = vstv %s4361
        %v4363 = vmul.f32 %v4349, %v4362
        %v4364 = vmul.f32 %v4351, %v4362
        %v4365 = vmul.f32 %v4350, %v4362
        %v4366 = vmul.f32 %v4352, %v4362
        %v4371 = vrot.slane %v4363, 1
        %v4372 = vrot.slane %v4365, 1
        %v4373 = vsel %vm299, %v4371, %v4372
        %v4374 = vrot.slane %v4364, 1
        %v4375 = vrot.slane %v4366, 1
        %v4376 = vsel %vm299, %v4374, %v4375
        %v4379 = vadd.f32 %v4358, %v4373
        %v4380 = vadd.f32 %v4359, %v4376
        %s4381 = sadd.s32 %s217, %s970
        %s4382 = sld [smem:[#allocation4 + %s4381]]
        %v4383 = vstv %s4382
        %v4384 = vmul.f32 %v4349, %v4383
        %v4385 = vmul.f32 %v4351, %v4383
        %v4386 = vmul.f32 %v4350, %v4383
        %v4387 = vmul.f32 %v4352, %v4383
        %v4392 = vrot.slane %v4384, 2
        %v4393 = vrot.slane %v4386, 2
        %v4394 = vsel %vm344, %v4392, %v4393
        %v4395 = vrot.slane %v4385, 2
        %v4396 = vrot.slane %v4387, 2
        %v4397 = vsel %vm344, %v4395, %v4396
        %v4400 = vadd.f32 %v4379, %v4394
        %v4401 = vadd.f32 %v4380, %v4397
        %4402 = vrot.lane.b32.xlu0 %v3975, 116
        %v4403 = vpop.permute.xlu0 %4402
        %4404 = vrot.lane.b32.xlu0 %v3980, 116
        %v4405 = vpop.permute.xlu0 %4404
        %4406 = vrot.lane.b32.xlu0 %v3978, 116
        %v4407 = vpop.permute.xlu0 %4406
        %4408 = vrot.lane.b32.xlu0 %v3982, 116
        %v4409 = vpop.permute.xlu0 %4408
        %v4410 = vsel %vm1074, %v4403, %v4407
        %v4411 = vsel %vm1074, %v4405, %v4409
        %v4412 = vsel %vm1074, %v4407, %v4403
        %v4413 = vsel %vm1074, %v4409, %v4405
        %s4414 = sadd.s32 %s217, %s3183
        %s4415 = sld [smem:[#allocation4 + %s4414]]
        %v4416 = vstv %s4415
        %v4417 = vmul.f32 %v4410, %v4416
        %v4418 = vmul.f32 %v4412, %v4416
        %v4419 = vadd.f32 %v4400, %v4417
        %v4420 = vadd.f32 %v4401, %v4418
        %s4421 = sadd.s32 %s217, %s3226
        %s4422 = sld [smem:[#allocation4 + %s4421]]
        %v4423 = vstv %s4422
        %v4424 = vmul.f32 %v4410, %v4423
        %v4425 = vmul.f32 %v4412, %v4423
        %v4426 = vmul.f32 %v4411, %v4423
        %v4427 = vmul.f32 %v4413, %v4423
        %v4432 = vrot.slane %v4424, 1
        %v4433 = vrot.slane %v4426, 1
        %v4434 = vsel %vm299, %v4432, %v4433
        %v4435 = vrot.slane %v4425, 1
        %v4436 = vrot.slane %v4427, 1
        %v4437 = vsel %vm299, %v4435, %v4436
        %v4440 = vadd.f32 %v4419, %v4434
        %v4441 = vadd.f32 %v4420, %v4437
        %s4442 = sadd.s32 %s217, %s1087
        %s4443 = sld [smem:[#allocation4 + %s4442]]
        %v4444 = vstv %s4443
        %v4445 = vmul.f32 %v4410, %v4444
        %v4446 = vmul.f32 %v4412, %v4444
        %v4447 = vmul.f32 %v4411, %v4444
        %v4448 = vmul.f32 %v4413, %v4444
        %v4453 = vrot.slane %v4445, 2
        %v4454 = vrot.slane %v4447, 2
        %v4455 = vsel %vm344, %v4453, %v4454
        %v4456 = vrot.slane %v4446, 2
        %v4457 = vrot.slane %v4448, 2
        %v4458 = vsel %vm344, %v4456, %v4457
        %v4461 = vadd.f32 %v4440, %v4455
        %v4462 = vadd.f32 %v4441, %v4458
        %4463 = vrot.lane.b32.xlu0 %v3975, 115
        %v4464 = vpop.permute.xlu0 %4463
        %4465 = vrot.lane.b32.xlu0 %v3980, 115
        %v4466 = vpop.permute.xlu0 %4465
        %4467 = vrot.lane.b32.xlu0 %v3978, 115
        %v4468 = vpop.permute.xlu0 %4467
        %4469 = vrot.lane.b32.xlu0 %v3982, 115
        %v4470 = vpop.permute.xlu0 %4469
        %v4471 = vsel %vm1191, %v4464, %v4468
        %v4472 = vsel %vm1191, %v4466, %v4470
        %v4473 = vsel %vm1191, %v4468, %v4464
        %v4474 = vsel %vm1191, %v4470, %v4466
        %s4475 = sadd.s32 %s217, %s3296
        %s4476 = sld [smem:[#allocation4 + %s4475]]
        %v4477 = vstv %s4476
        %v4478 = vmul.f32 %v4471, %v4477
        %v4479 = vmul.f32 %v4473, %v4477
        %v4480 = vadd.f32 %v4461, %v4478
        %v4481 = vadd.f32 %v4462, %v4479
        %s4482 = sadd.s32 %s217, %s3339
        %s4483 = sld [smem:[#allocation4 + %s4482]]
        %v4484 = vstv %s4483
        %v4485 = vmul.f32 %v4471, %v4484
        %v4486 = vmul.f32 %v4473, %v4484
        %v4487 = vmul.f32 %v4472, %v4484
        %v4488 = vmul.f32 %v4474, %v4484
        %v4493 = vrot.slane %v4485, 1
        %v4494 = vrot.slane %v4487, 1
        %v4495 = vsel %vm299, %v4493, %v4494
        %v4496 = vrot.slane %v4486, 1
        %v4497 = vrot.slane %v4488, 1
        %v4498 = vsel %vm299, %v4496, %v4497
        %v4501 = vadd.f32 %v4480, %v4495
        %v4502 = vadd.f32 %v4481, %v4498
        %s4503 = sadd.s32 %s217, %s1204
        %s4504 = sld [smem:[#allocation4 + %s4503]]
        %v4505 = vstv %s4504
        %v4506 = vmul.f32 %v4471, %v4505
        %v4507 = vmul.f32 %v4473, %v4505
        %v4508 = vmul.f32 %v4472, %v4505
        %v4509 = vmul.f32 %v4474, %v4505
        %v4514 = vrot.slane %v4506, 2
        %v4515 = vrot.slane %v4508, 2
        %v4516 = vsel %vm344, %v4514, %v4515
        %v4517 = vrot.slane %v4507, 2
        %v4518 = vrot.slane %v4509, 2
        %v4519 = vsel %vm344, %v4517, %v4518
        %v4522 = vadd.f32 %v4501, %v4516
        %v4523 = vadd.f32 %v4502, %v4519
        %v4524 = vmax.f32 %v4522, 0.0
        %v4525 = vmax.f32 %v4523, 0.0
        %v4526 = vmul.f32 %v4524, %v197
        %v4527 = vmul.f32 %v4525, %v198
        %4528 = vst [vmem:[#allocation3 + $0x10] sm:$0xff] %v4526
        %4529 = vst [vmem:[#allocation3 + $0x18] sm:$0xff] %v4527
        %s4530 = sadd.s32 2, %s215
        %s4531 = smul.u32 %s4530, 512
        %s4532 = sadd.s32 %s4531, %s1087
        %s4533 = sld [smem:[#allocation4 + %s4532]]
        %v4534 = vstv %s4533
        %v4535 = vld [vmem:[#allocation3] sm:$0xc0]
        %v4536 = vld [vmem:[#allocation3 + $0x8] sm:$0xc0]
        %v4537 = vld [vmem:[#allocation3 + $0x10] sm:$0xff]
        %v4538 = vld [vmem:[#allocation3 + $0x18] sm:$0xff]
        %v4539 = vld [vmem:[#allocation3 + $0x20] sm:$0x3]
        %v4540 = vld [vmem:[#allocation3 + $0x28] sm:$0x3]
        %vm4547 = vcmask 1041408
        %v4548 = vrot.slane %v4535, 6
        %v4549 = vrot.slane %v4537, 6
        %v4550 = vsel %vm4547, %v4548, %v4549
        %v4551 = vrot.slane %v4536, 6
        %v4552 = vrot.slane %v4538, 6
        %v4553 = vsel %vm4547, %v4551, %v4552
        %v4554 = vrot.slane %v4539, 6
        %v4555 = vsel %vm4547, %v4549, %v4554
        %v4556 = vrot.slane %v4540, 6
        %v4557 = vsel %vm4547, %v4552, %v4556
        %4562 = vrot.lane.b32.xlu0 %v4550, 26
        %v4563 = vpop.permute.xlu0 %4562
        %4564 = vrot.lane.b32.xlu0 %v4555, 26
        %v4565 = vpop.permute.xlu0 %4564
        %4566 = vrot.lane.b32.xlu0 %v4553, 26
        %v4567 = vpop.permute.xlu0 %4566
        %4568 = vrot.lane.b32.xlu0 %v4557, 26
        %v4569 = vpop.permute.xlu0 %4568
        %vm4570 = vcmp.lt.s32.totalorder %v265, 26
        %v4571 = vsel %vm4570, %v4563, %v4567
        %v4572 = vsel %vm4570, %v4565, %v4569
        %v4573 = vsel %vm4570, %v4567, %v4563
        %v4574 = vsel %vm4570, %v4569, %v4565
        %s4575 = sadd.s32 %s217, %s428
        %s4576 = sld [smem:[#allocation4 + %s4575]]
        %v4577 = vstv %s4576
        %v4578 = vmul.f32 %v4573, %v4577
        %v4579 = vmul.f32 %v4571, %v4577
        %v4580 = vadd.f32 %v4534, %v4578
        %v4581 = vadd.f32 %v4534, %v4579
        %s4582 = sadd.s32 %s217, %s2255
        %s4583 = sld [smem:[#allocation4 + %s4582]]
        %v4584 = vstv %s4583
        %v4585 = vmul.f32 %v4573, %v4584
        %v4586 = vmul.f32 %v4571, %v4584
        %v4587 = vmul.f32 %v4574, %v4584
        %v4588 = vmul.f32 %v4572, %v4584
        %v4593 = vrot.slane %v4585, 1
        %v4594 = vrot.slane %v4587, 1
        %v4595 = vsel %vm299, %v4593, %v4594
        %v4596 = vrot.slane %v4586, 1
        %v4597 = vrot.slane %v4588, 1
        %v4598 = vsel %vm299, %v4596, %v4597
        %v4601 = vadd.f32 %v4580, %v4595
        %v4602 = vadd.f32 %v4581, %v4598
        %s4603 = sadd.s32 %s4531, %s772
        %s4604 = sld [smem:[#allocation4 + %s4603]]
        %v4605 = vstv %s4604
        %v4606 = vmul.f32 %v4573, %v4605
        %v4607 = vmul.f32 %v4571, %v4605
        %v4608 = vmul.f32 %v4574, %v4605
        %v4609 = vmul.f32 %v4572, %v4605
        %v4614 = vrot.slane %v4606, 2
        %v4615 = vrot.slane %v4608, 2
        %v4616 = vsel %vm344, %v4614, %v4615
        %v4617 = vrot.slane %v4607, 2
        %v4618 = vrot.slane %v4609, 2
        %v4619 = vsel %vm344, %v4617, %v4618
        %v4622 = vadd.f32 %v4601, %v4616
        %v4623 = vadd.f32 %v4602, %v4619
        %s4624 = sadd.s32 %s4531, %s1587
        %s4625 = sld [smem:[#allocation4 + %s4624]]
        %v4626 = vstv %s4625
        %v4627 = vmul.f32 %v4573, %v4626
        %v4628 = vmul.f32 %v4571, %v4626
        %v4629 = vmul.f32 %v4574, %v4626
        %v4630 = vmul.f32 %v4572, %v4626
        %vm4635 = vcmask 1044480
        %v4636 = vrot.slane %v4627, 3
        %v4637 = vrot.slane %v4629, 3
        %v4638 = vsel %vm4635, %v4636, %v4637
        %v4639 = vrot.slane %v4628, 3
        %v4640 = vrot.slane %v4630, 3
        %v4641 = vsel %vm4635, %v4639, %v4640
        %v4644 = vadd.f32 %v4622, %v4638
        %v4645 = vadd.f32 %v4623, %v4641
        %s4646 = sadd.s32 %s4531, %s2404
        %s4647 = sld [smem:[#allocation4 + %s4646]]
        %v4648 = vstv %s4647
        %v4649 = vmul.f32 %v4573, %v4648
        %v4650 = vmul.f32 %v4571, %v4648
        %v4651 = vmul.f32 %v4574, %v4648
        %v4652 = vmul.f32 %v4572, %v4648
        %vm4657 = vcmask 1043456
        %v4658 = vrot.slane %v4649, 4
        %v4659 = vrot.slane %v4651, 4
        %v4660 = vsel %vm4657, %v4658, %v4659
        %v4661 = vrot.slane %v4650, 4
        %v4662 = vrot.slane %v4652, 4
        %v4663 = vsel %vm4657, %v4661, %v4662
        %v4666 = vadd.f32 %v4644, %v4660
        %v4667 = vadd.f32 %v4645, %v4663
        %4668 = vrot.lane.b32.xlu0 %v4550, 25
        %v4669 = vpop.permute.xlu0 %4668
        %4670 = vrot.lane.b32.xlu0 %v4555, 25
        %v4671 = vpop.permute.xlu0 %4670
        %4672 = vrot.lane.b32.xlu0 %v4553, 25
        %v4673 = vpop.permute.xlu0 %4672
        %4674 = vrot.lane.b32.xlu0 %v4557, 25
        %v4675 = vpop.permute.xlu0 %4674
        %vm4676 = vcmp.lt.s32.totalorder %v265, 25
        %v4677 = vsel %vm4676, %v4669, %v4673
        %v4678 = vsel %vm4676, %v4671, %v4675
        %v4679 = vsel %vm4676, %v4673, %v4669
        %v4680 = vsel %vm4676, %v4675, %v4671
        %s4681 = sadd.s32 %s217, %s545
        %s4682 = sld [smem:[#allocation4 + %s4681]]
        %v4683 = vstv %s4682
        %v4684 = vmul.f32 %v4679, %v4683
        %v4685 = vmul.f32 %v4677, %v4683
        %v4686 = vadd.f32 %v4666, %v4684
        %v4687 = vadd.f32 %v4667, %v4685
        %s4688 = sadd.s32 %s217, %s1377
        %s4689 = sld [smem:[#allocation4 + %s4688]]
        %v4690 = vstv %s4689
        %v4691 = vmul.f32 %v4679, %v4690
        %v4692 = vmul.f32 %v4677, %v4690
        %v4693 = vmul.f32 %v4680, %v4690
        %v4694 = vmul.f32 %v4678, %v4690
        %v4699 = vrot.slane %v4691, 1
        %v4700 = vrot.slane %v4693, 1
        %v4701 = vsel %vm299, %v4699, %v4700
        %v4702 = vrot.slane %v4692, 1
        %v4703 = vrot.slane %v4694, 1
        %v4704 = vsel %vm299, %v4702, %v4703
        %v4707 = vadd.f32 %v4686, %v4701
        %v4708 = vadd.f32 %v4687, %v4704
        %s4709 = sadd.s32 %s4531, %s861
        %s4710 = sld [smem:[#allocation4 + %s4709]]
        %v4711 = vstv %s4710
        %v4712 = vmul.f32 %v4679, %v4711
        %v4713 = vmul.f32 %v4677, %v4711
        %v4714 = vmul.f32 %v4680, %v4711
        %v4715 = vmul.f32 %v4678, %v4711
        %v4720 = vrot.slane %v4712, 2
        %v4721 = vrot.slane %v4714, 2
        %v4722 = vsel %vm344, %v4720, %v4721
        %v4723 = vrot.slane %v4713, 2
        %v4724 = vrot.slane %v4715, 2
        %v4725 = vsel %vm344, %v4723, %v4724
        %v4728 = vadd.f32 %v4707, %v4722
        %v4729 = vadd.f32 %v4708, %v4725
        %s4730 = sadd.s32 %s4531, %s1702
        %s4731 = sld [smem:[#allocation4 + %s4730]]
        %v4732 = vstv %s4731
        %v4733 = vmul.f32 %v4679, %v4732
        %v4734 = vmul.f32 %v4677, %v4732
        %v4735 = vmul.f32 %v4680, %v4732
        %v4736 = vmul.f32 %v4678, %v4732
        %v4741 = vrot.slane %v4733, 3
        %v4742 = vrot.slane %v4735, 3
        %v4743 = vsel %vm4635, %v4741, %v4742
        %v4744 = vrot.slane %v4734, 3
        %v4745 = vrot.slane %v4736, 3
        %v4746 = vsel %vm4635, %v4744, %v4745
        %v4749 = vadd.f32 %v4728, %v4743
        %v4750 = vadd.f32 %v4729, %v4746
        %s4751 = sadd.s32 %s4531, %s2517
        %s4752 = sld [smem:[#allocation4 + %s4751]]
        %v4753 = vstv %s4752
        %v4754 = vmul.f32 %v4679, %v4753
        %v4755 = vmul.f32 %v4677, %v4753
        %v4756 = vmul.f32 %v4680, %v4753
        %v4757 = vmul.f32 %v4678, %v4753
        %v4762 = vrot.slane %v4754, 4
        %v4763 = vrot.slane %v4756, 4
        %v4764 = vsel %vm4657, %v4762, %v4763
        %v4765 = vrot.slane %v4755, 4
        %v4766 = vrot.slane %v4757, 4
        %v4767 = vsel %vm4657, %v4765, %v4766
        %v4770 = vadd.f32 %v4749, %v4764
        %v4771 = vadd.f32 %v4750, %v4767
        %4772 = vrot.lane.b32.xlu0 %v4550, 24
        %v4773 = vpop.permute.xlu0 %4772
        %4774 = vrot.lane.b32.xlu0 %v4555, 24
        %v4775 = vpop.permute.xlu0 %4774
        %4776 = vrot.lane.b32.xlu0 %v4553, 24
        %v4777 = vpop.permute.xlu0 %4776
        %4778 = vrot.lane.b32.xlu0 %v4557, 24
        %v4779 = vpop.permute.xlu0 %4778
        %vm4780 = vcmp.lt.s32.totalorder %v265, 24
        %v4781 = vsel %vm4780, %v4773, %v4777
        %v4782 = vsel %vm4780, %v4775, %v4779
        %v4783 = vsel %vm4780, %v4777, %v4773
        %v4784 = vsel %vm4780, %v4779, %v4775
        %s4785 = sadd.s32 %s217, %s662
        %s4786 = sld [smem:[#allocation4 + %s4785]]
        %v4787 = vstv %s4786
        %v4788 = vmul.f32 %v4783, %v4787
        %v4789 = vmul.f32 %v4781, %v4787
        %v4790 = vadd.f32 %v4770, %v4788
        %v4791 = vadd.f32 %v4771, %v4789
        %s4792 = sadd.s32 %s217, %s1493
        %s4793 = sld [smem:[#allocation4 + %s4792]]
        %v4794 = vstv %s4793
        %v4795 = vmul.f32 %v4783, %v4794
        %v4796 = vmul.f32 %v4781, %v4794
        %v4797 = vmul.f32 %v4784, %v4794
        %v4798 = vmul.f32 %v4782, %v4794
        %v4803 = vrot.slane %v4795, 1
        %v4804 = vrot.slane %v4797, 1
        %v4805 = vsel %vm299, %v4803, %v4804
        %v4806 = vrot.slane %v4796, 1
        %v4807 = vrot.slane %v4798, 1
        %v4808 = vsel %vm299, %v4806, %v4807
        %v4811 = vadd.f32 %v4790, %v4805
        %v4812 = vadd.f32 %v4791, %v4808
        %s4813 = sadd.s32 %s4531, %s978
        %s4814 = sld [smem:[#allocation4 + %s4813]]
        %v4815 = vstv %s4814
        %v4816 = vmul.f32 %v4783, %v4815
        %v4817 = vmul.f32 %v4781, %v4815
        %v4818 = vmul.f32 %v4784, %v4815
        %v4819 = vmul.f32 %v4782, %v4815
        %v4824 = vrot.slane %v4816, 2
        %v4825 = vrot.slane %v4818, 2
        %v4826 = vsel %vm344, %v4824, %v4825
        %v4827 = vrot.slane %v4817, 2
        %v4828 = vrot.slane %v4819, 2
        %v4829 = vsel %vm344, %v4827, %v4828
        %v4832 = vadd.f32 %v4811, %v4826
        %v4833 = vadd.f32 %v4812, %v4829
        %s4834 = sadd.s32 %s4531, %s1833
        %s4835 = sld [smem:[#allocation4 + %s4834]]
        %v4836 = vstv %s4835
        %v4837 = vmul.f32 %v4783, %v4836
        %v4838 = vmul.f32 %v4781, %v4836
        %v4839 = vmul.f32 %v4784, %v4836
        %v4840 = vmul.f32 %v4782, %v4836
        %v4845 = vrot.slane %v4837, 3
        %v4846 = vrot.slane %v4839, 3
        %v4847 = vsel %vm4635, %v4845, %v4846
        %v4848 = vrot.slane %v4838, 3
        %v4849 = vrot.slane %v4840, 3
        %v4850 = vsel %vm4635, %v4848, %v4849
        %v4853 = vadd.f32 %v4832, %v4847
        %v4854 = vadd.f32 %v4833, %v4850
        %s4855 = sadd.s32 %s4531, %s2630
        %s4856 = sld [smem:[#allocation4 + %s4855]]
        %v4857 = vstv %s4856
        %v4858 = vmul.f32 %v4783, %v4857
        %v4859 = vmul.f32 %v4781, %v4857
        %v4860 = vmul.f32 %v4784, %v4857
        %v4861 = vmul.f32 %v4782, %v4857
        %v4866 = vrot.slane %v4858, 4
        %v4867 = vrot.slane %v4860, 4
        %v4868 = vsel %vm4657, %v4866, %v4867
        %v4869 = vrot.slane %v4859, 4
        %v4870 = vrot.slane %v4861, 4
        %v4871 = vsel %vm4657, %v4869, %v4870
        %v4874 = vadd.f32 %v4853, %v4868
        %v4875 = vadd.f32 %v4854, %v4871
        %4876 = vrot.lane.b32.xlu0 %v4550, 23
        %v4877 = vpop.permute.xlu0 %4876
        %4878 = vrot.lane.b32.xlu0 %v4555, 23
        %v4879 = vpop.permute.xlu0 %4878
        %4880 = vrot.lane.b32.xlu0 %v4553, 23
        %v4881 = vpop.permute.xlu0 %4880
        %4882 = vrot.lane.b32.xlu0 %v4557, 23
        %v4883 = vpop.permute.xlu0 %4882
        %vm4884 = vcmp.lt.s32.totalorder %v265, 23
        %v4885 = vsel %vm4884, %v4877, %v4881
        %v4886 = vsel %vm4884, %v4879, %v4883
        %v4887 = vsel %vm4884, %v4881, %v4877
        %v4888 = vsel %vm4884, %v4883, %v4879
        %s4889 = sadd.s32 %s217, %s780
        %s4890 = sld [smem:[#allocation4 + %s4889]]
        %v4891 = vstv %s4890
        %v4892 = vmul.f32 %v4887, %v4891
        %v4893 = vmul.f32 %v4885, %v4891
        %v4894 = vadd.f32 %v4874, %v4892
        %v4895 = vadd.f32 %v4875, %v4893
        %s4896 = sadd.s32 %s217, %s1609
        %s4897 = sld [smem:[#allocation4 + %s4896]]
        %v4898 = vstv %s4897
        %v4899 = vmul.f32 %v4887, %v4898
        %v4900 = vmul.f32 %v4885, %v4898
        %v4901 = vmul.f32 %v4888, %v4898
        %v4902 = vmul.f32 %v4886, %v4898
        %v4907 = vrot.slane %v4899, 1
        %v4908 = vrot.slane %v4901, 1
        %v4909 = vsel %vm299, %v4907, %v4908
        %v4910 = vrot.slane %v4900, 1
        %v4911 = vrot.slane %v4902, 1
        %v4912 = vsel %vm299, %v4910, %v4911
        %v4915 = vadd.f32 %v4894, %v4909
        %v4916 = vadd.f32 %v4895, %v4912
        %s4917 = sadd.s32 %s4531, %s1095
        %s4918 = sld [smem:[#allocation4 + %s4917]]
        %v4919 = vstv %s4918
        %v4920 = vmul.f32 %v4887, %v4919
        %v4921 = vmul.f32 %v4885, %v4919
        %v4922 = vmul.f32 %v4888, %v4919
        %v4923 = vmul.f32 %v4886, %v4919
        %v4928 = vrot.slane %v4920, 2
        %v4929 = vrot.slane %v4922, 2
        %v4930 = vsel %vm344, %v4928, %v4929
        %v4931 = vrot.slane %v4921, 2
        %v4932 = vrot.slane %v4923, 2
        %v4933 = vsel %vm344, %v4931, %v4932
        %v4936 = vadd.f32 %v4915, %v4930
        %v4937 = vadd.f32 %v4916, %v4933
        %s4938 = sadd.s32 %s4531, %s1920
        %s4939 = sld [smem:[#allocation4 + %s4938]]
        %v4940 = vstv %s4939
        %v4941 = vmul.f32 %v4887, %v4940
        %v4942 = vmul.f32 %v4885, %v4940
        %v4943 = vmul.f32 %v4888, %v4940
        %v4944 = vmul.f32 %v4886, %v4940
        %v4949 = vrot.slane %v4941, 3
        %v4950 = vrot.slane %v4943, 3
        %v4951 = vsel %vm4635, %v4949, %v4950
        %v4952 = vrot.slane %v4942, 3
        %v4953 = vrot.slane %v4944, 3
        %v4954 = vsel %vm4635, %v4952, %v4953
        %v4957 = vadd.f32 %v4936, %v4951
        %v4958 = vadd.f32 %v4937, %v4954
        %s4959 = sadd.s32 %s4531, %s2743
        %s4960 = sld [smem:[#allocation4 + %s4959]]
        %v4961 = vstv %s4960
        %v4962 = vmul.f32 %v4887, %v4961
        %v4963 = vmul.f32 %v4885, %v4961
        %v4964 = vmul.f32 %v4888, %v4961
        %v4965 = vmul.f32 %v4886, %v4961
        %v4970 = vrot.slane %v4962, 4
        %v4971 = vrot.slane %v4964, 4
        %v4972 = vsel %vm4657, %v4970, %v4971
        %v4973 = vrot.slane %v4963, 4
        %v4974 = vrot.slane %v4965, 4
        %v4975 = vsel %vm4657, %v4973, %v4974
        %v4978 = vadd.f32 %v4957, %v4972
        %v4979 = vadd.f32 %v4958, %v4975
        %4980 = vrot.lane.b32.xlu0 %v4550, 22
        %v4981 = vpop.permute.xlu0 %4980
        %4982 = vrot.lane.b32.xlu0 %v4555, 22
        %v4983 = vpop.permute.xlu0 %4982
        %4984 = vrot.lane.b32.xlu0 %v4553, 22
        %v4985 = vpop.permute.xlu0 %4984
        %4986 = vrot.lane.b32.xlu0 %v4557, 22
        %v4987 = vpop.permute.xlu0 %4986
        %vm4988 = vcmp.lt.s32.totalorder %v265, 22
        %v4989 = vsel %vm4988, %v4981, %v4985
        %v4990 = vsel %vm4988, %v4983, %v4987
        %v4991 = vsel %vm4988, %v4985, %v4981
        %v4992 = vsel %vm4988, %v4987, %v4983
        %s4993 = sadd.s32 %s217, %s883
        %s4994 = sld [smem:[#allocation4 + %s4993]]
        %v4995 = vstv %s4994
        %v4996 = vmul.f32 %v4991, %v4995
        %v4997 = vmul.f32 %v4989, %v4995
        %v4998 = vadd.f32 %v4978, %v4996
        %v4999 = vadd.f32 %v4979, %v4997
        %s5000 = sadd.s32 %s217, %s1724
        %s5001 = sld [smem:[#allocation4 + %s5000]]
        %v5002 = vstv %s5001
        %v5003 = vmul.f32 %v4991, %v5002
        %v5004 = vmul.f32 %v4989, %v5002
        %v5005 = vmul.f32 %v4992, %v5002
        %v5006 = vmul.f32 %v4990, %v5002
        %v5011 = vrot.slane %v5003, 1
        %v5012 = vrot.slane %v5005, 1
        %v5013 = vsel %vm299, %v5011, %v5012
        %v5014 = vrot.slane %v5004, 1
        %v5015 = vrot.slane %v5006, 1
        %v5016 = vsel %vm299, %v5014, %v5015
        %v5019 = vadd.f32 %v4998, %v5013
        %v5020 = vadd.f32 %v4999, %v5016
        %s5021 = sadd.s32 %s4531, %s1212
        %s5022 = sld [smem:[#allocation4 + %s5021]]
        %v5023 = vstv %s5022
        %v5024 = vmul.f32 %v4991, %v5023
        %v5025 = vmul.f32 %v4989, %v5023
        %v5026 = vmul.f32 %v4992, %v5023
        %v5027 = vmul.f32 %v4990, %v5023
        %v5032 = vrot.slane %v5024, 2
        %v5033 = vrot.slane %v5026, 2
        %v5034 = vsel %vm344, %v5032, %v5033
        %v5035 = vrot.slane %v5025, 2
        %v5036 = vrot.slane %v5027, 2
        %v5037 = vsel %vm344, %v5035, %v5036
        %v5040 = vadd.f32 %v5019, %v5034
        %v5041 = vadd.f32 %v5020, %v5037
        %s5042 = sadd.s32 %s4531, %s2035
        %s5043 = sld [smem:[#allocation4 + %s5042]]
        %v5044 = vstv %s5043
        %v5045 = vmul.f32 %v4991, %v5044
        %v5046 = vmul.f32 %v4989, %v5044
        %v5047 = vmul.f32 %v4992, %v5044
        %v5048 = vmul.f32 %v4990, %v5044
        %v5053 = vrot.slane %v5045, 3
        %v5054 = vrot.slane %v5047, 3
        %v5055 = vsel %vm4635, %v5053, %v5054
        %v5056 = vrot.slane %v5046, 3
        %v5057 = vrot.slane %v5048, 3
        %v5058 = vsel %vm4635, %v5056, %v5057
        %v5061 = vadd.f32 %v5040, %v5055
        %v5062 = vadd.f32 %v5041, %v5058
        %s5063 = sadd.s32 %s4531, %s2872
        %s5064 = sld [smem:[#allocation4 + %s5063]]
        %v5065 = vstv %s5064
        %v5066 = vmul.f32 %v4991, %v5065
        %v5067 = vmul.f32 %v4989, %v5065
        %v5068 = vmul.f32 %v4992, %v5065
        %v5069 = vmul.f32 %v4990, %v5065
        %v5074 = vrot.slane %v5066, 4
        %v5075 = vrot.slane %v5068, 4
        %v5076 = vsel %vm4657, %v5074, %v5075
        %v5077 = vrot.slane %v5067, 4
        %v5078 = vrot.slane %v5069, 4
        %v5079 = vsel %vm4657, %v5077, %v5078
        %v5082 = vadd.f32 %v5061, %v5076
        %v5083 = vadd.f32 %v5062, %v5079
        %5084 = vrot.lane.b32.xlu0 %v4550, 14
        %v5085 = vpop.permute.xlu0 %5084
        %5086 = vrot.lane.b32.xlu0 %v4555, 14
        %v5087 = vpop.permute.xlu0 %5086
        %5088 = vrot.lane.b32.xlu0 %v4553, 14
        %v5089 = vpop.permute.xlu0 %5088
        %5090 = vrot.lane.b32.xlu0 %v4557, 14
        %v5091 = vpop.permute.xlu0 %5090
        %vm5092 = vcmp.lt.s32.totalorder %v265, 14
        %v5093 = vsel %vm5092, %v5085, %v5089
        %v5094 = vsel %vm5092, %v5087, %v5091
        %v5095 = vsel %vm5092, %v5089, %v5085
        %v5096 = vsel %vm5092, %v5091, %v5087
        %s5097 = sadd.s32 %s217, %s1000
        %s5098 = sld [smem:[#allocation4 + %s5097]]
        %v5099 = vstv %s5098
        %v5100 = vmul.f32 %v5095, %v5099
        %v5101 = vmul.f32 %v5093, %v5099
        %v5102 = vadd.f32 %v5082, %v5100
        %v5103 = vadd.f32 %v5083, %v5101
        %s5104 = sadd.s32 %s217, %s1841
        %s5105 = sld [smem:[#allocation4 + %s5104]]
        %v5106 = vstv %s5105
        %v5107 = vmul.f32 %v5095, %v5106
        %v5108 = vmul.f32 %v5093, %v5106
        %v5109 = vmul.f32 %v5096, %v5106
        %v5110 = vmul.f32 %v5094, %v5106
        %v5115 = vrot.slane %v5107, 1
        %v5116 = vrot.slane %v5109, 1
        %v5117 = vsel %vm299, %v5115, %v5116
        %v5118 = vrot.slane %v5108, 1
        %v5119 = vrot.slane %v5110, 1
        %v5120 = vsel %vm299, %v5118, %v5119
        %v5123 = vadd.f32 %v5102, %v5117
        %v5124 = vadd.f32 %v5103, %v5120
        %s5125 = sadd.s32 %s4531, %s332
        %s5126 = sld [smem:[#allocation4 + %s5125]]
        %v5127 = vstv %s5126
        %v5128 = vmul.f32 %v5095, %v5127
        %v5129 = vmul.f32 %v5093, %v5127
        %v5130 = vmul.f32 %v5096, %v5127
        %v5131 = vmul.f32 %v5094, %v5127
        %v5136 = vrot.slane %v5128, 2
        %v5137 = vrot.slane %v5130, 2
        %v5138 = vsel %vm344, %v5136, %v5137
        %v5139 = vrot.slane %v5129, 2
        %v5140 = vrot.slane %v5131, 2
        %v5141 = vsel %vm344, %v5139, %v5140
        %v5144 = vadd.f32 %v5123, %v5138
        %v5145 = vadd.f32 %v5124, %v5141
        %s5146 = sadd.s32 %s4531, %s2149
        %s5147 = sld [smem:[#allocation4 + %s5146]]
        %v5148 = vstv %s5147
        %v5149 = vmul.f32 %v5095, %v5148
        %v5150 = vmul.f32 %v5093, %v5148
        %v5151 = vmul.f32 %v5096, %v5148
        %v5152 = vmul.f32 %v5094, %v5148
        %v5157 = vrot.slane %v5149, 3
        %v5158 = vrot.slane %v5151, 3
        %v5159 = vsel %vm4635, %v5157, %v5158
        %v5160 = vrot.slane %v5150, 3
        %v5161 = vrot.slane %v5152, 3
        %v5162 = vsel %vm4635, %v5160, %v5161
        %v5165 = vadd.f32 %v5144, %v5159
        %v5166 = vadd.f32 %v5145, %v5162
        %s5167 = sadd.s32 %s4531, %s2957
        %s5168 = sld [smem:[#allocation4 + %s5167]]
        %v5169 = vstv %s5168
        %v5170 = vmul.f32 %v5095, %v5169
        %v5171 = vmul.f32 %v5093, %v5169
        %v5172 = vmul.f32 %v5096, %v5169
        %v5173 = vmul.f32 %v5094, %v5169
        %v5178 = vrot.slane %v5170, 4
        %v5179 = vrot.slane %v5172, 4
        %v5180 = vsel %vm4657, %v5178, %v5179
        %v5181 = vrot.slane %v5171, 4
        %v5182 = vrot.slane %v5173, 4
        %v5183 = vsel %vm4657, %v5181, %v5182
        %v5186 = vadd.f32 %v5165, %v5180
        %v5187 = vadd.f32 %v5166, %v5183
        %5188 = vrot.lane.b32.xlu0 %v4550, 13
        %v5189 = vpop.permute.xlu0 %5188
        %5190 = vrot.lane.b32.xlu0 %v4555, 13
        %v5191 = vpop.permute.xlu0 %5190
        %5192 = vrot.lane.b32.xlu0 %v4553, 13
        %v5193 = vpop.permute.xlu0 %5192
        %5194 = vrot.lane.b32.xlu0 %v4557, 13
        %v5195 = vpop.permute.xlu0 %5194
        %v5196 = vsel %vm266, %v5189, %v5193
        %v5197 = vsel %vm266, %v5191, %v5195
        %v5198 = vsel %vm266, %v5193, %v5189
        %v5199 = vsel %vm266, %v5195, %v5191
        %s5200 = sadd.s32 %s217, %s1117
        %s5201 = sld [smem:[#allocation4 + %s5200]]
        %v5202 = vstv %s5201
        %v5203 = vmul.f32 %v5198, %v5202
        %v5204 = vmul.f32 %v5196, %v5202
        %v5205 = vadd.f32 %v5186, %v5203
        %v5206 = vadd.f32 %v5187, %v5204
        %s5207 = sadd.s32 %s217, %s1942
        %s5208 = sld [smem:[#allocation4 + %s5207]]
        %v5209 = vstv %s5208
        %v5210 = vmul.f32 %v5198, %v5209
        %v5211 = vmul.f32 %v5196, %v5209
        %v5212 = vmul.f32 %v5199, %v5209
        %v5213 = vmul.f32 %v5197, %v5209
        %v5218 = vrot.slane %v5210, 1
        %v5219 = vrot.slane %v5212, 1
        %v5220 = vsel %vm299, %v5218, %v5219
        %v5221 = vrot.slane %v5211, 1
        %v5222 = vrot.slane %v5213, 1
        %v5223 = vsel %vm299, %v5221, %v5222
        %v5226 = vadd.f32 %v5205, %v5220
        %v5227 = vadd.f32 %v5206, %v5223
        %s5228 = sadd.s32 %s4531, %s450
        %s5229 = sld [smem:[#allocation4 + %s5228]]
        %v5230 = vstv %s5229
        %v5231 = vmul.f32 %v5198, %v5230
        %v5232 = vmul.f32 %v5196, %v5230
        %v5233 = vmul.f32 %v5199, %v5230
        %v5234 = vmul.f32 %v5197, %v5230
        %v5239 = vrot.slane %v5231, 2
        %v5240 = vrot.slane %v5233, 2
        %v5241 = vsel %vm344, %v5239, %v5240
        %v5242 = vrot.slane %v5232, 2
        %v5243 = vrot.slane %v5234, 2
        %v5244 = vsel %vm344, %v5242, %v5243
        %v5247 = vadd.f32 %v5226, %v5241
        %v5248 = vadd.f32 %v5227, %v5244
        %s5249 = sadd.s32 %s4531, %s2263
        %s5250 = sld [smem:[#allocation4 + %s5249]]
        %v5251 = vstv %s5250
        %v5252 = vmul.f32 %v5198, %v5251
        %v5253 = vmul.f32 %v5196, %v5251
        %v5254 = vmul.f32 %v5199, %v5251
        %v5255 = vmul.f32 %v5197, %v5251
        %v5260 = vrot.slane %v5252, 3
        %v5261 = vrot.slane %v5254, 3
        %v5262 = vsel %vm4635, %v5260, %v5261
        %v5263 = vrot.slane %v5253, 3
        %v5264 = vrot.slane %v5255, 3
        %v5265 = vsel %vm4635, %v5263, %v5264
        %v5268 = vadd.f32 %v5247, %v5262
        %v5269 = vadd.f32 %v5248, %v5265
        %s5270 = sadd.s32 %s4531, %s3070
        %s5271 = sld [smem:[#allocation4 + %s5270]]
        %v5272 = vstv %s5271
        %v5273 = vmul.f32 %v5198, %v5272
        %v5274 = vmul.f32 %v5196, %v5272
        %v5275 = vmul.f32 %v5199, %v5272
        %v5276 = vmul.f32 %v5197, %v5272
        %v5281 = vrot.slane %v5273, 4
        %v5282 = vrot.slane %v5275, 4
        %v5283 = vsel %vm4657, %v5281, %v5282
        %v5284 = vrot.slane %v5274, 4
        %v5285 = vrot.slane %v5276, 4
        %v5286 = vsel %vm4657, %v5284, %v5285
        %v5289 = vadd.f32 %v5268, %v5283
        %v5290 = vadd.f32 %v5269, %v5286
        %5291 = vrot.lane.b32.xlu0 %v4550, 12
        %v5292 = vpop.permute.xlu0 %5291
        %5293 = vrot.lane.b32.xlu0 %v4555, 12
        %v5294 = vpop.permute.xlu0 %5293
        %5295 = vrot.lane.b32.xlu0 %v4553, 12
        %v5296 = vpop.permute.xlu0 %5295
        %5297 = vrot.lane.b32.xlu0 %v4557, 12
        %v5298 = vpop.permute.xlu0 %5297
        %v5299 = vsel %vm385, %v5292, %v5296
        %v5300 = vsel %vm385, %v5294, %v5298
        %v5301 = vsel %vm385, %v5296, %v5292
        %v5302 = vsel %vm385, %v5298, %v5294
        %s5303 = sadd.s32 %s217, %s1234
        %s5304 = sld [smem:[#allocation4 + %s5303]]
        %v5305 = vstv %s5304
        %v5306 = vmul.f32 %v5301, %v5305
        %v5307 = vmul.f32 %v5299, %v5305
        %v5308 = vadd.f32 %v5289, %v5306
        %v5309 = vadd.f32 %v5290, %v5307
        %s5310 = sadd.s32 %s217, %s2057
        %s5311 = sld [smem:[#allocation4 + %s5310]]
        %v5312 = vstv %s5311
        %v5313 = vmul.f32 %v5301, %v5312
        %v5314 = vmul.f32 %v5299, %v5312
        %v5315 = vmul.f32 %v5302, %v5312
        %v5316 = vmul.f32 %v5300, %v5312
        %v5321 = vrot.slane %v5313, 1
        %v5322 = vrot.slane %v5315, 1
        %v5323 = vsel %vm299, %v5321, %v5322
        %v5324 = vrot.slane %v5314, 1
        %v5325 = vrot.slane %v5316, 1
        %v5326 = vsel %vm299, %v5324, %v5325
        %v5329 = vadd.f32 %v5308, %v5323
        %v5330 = vadd.f32 %v5309, %v5326
        %s5331 = sadd.s32 %s4531, %s567
        %s5332 = sld [smem:[#allocation4 + %s5331]]
        %v5333 = vstv %s5332
        %v5334 = vmul.f32 %v5301, %v5333
        %v5335 = vmul.f32 %v5299, %v5333
        %v5336 = vmul.f32 %v5302, %v5333
        %v5337 = vmul.f32 %v5300, %v5333
        %v5342 = vrot.slane %v5334, 2
        %v5343 = vrot.slane %v5336, 2
        %v5344 = vsel %vm344, %v5342, %v5343
        %v5345 = vrot.slane %v5335, 2
        %v5346 = vrot.slane %v5337, 2
        %v5347 = vsel %vm344, %v5345, %v5346
        %v5350 = vadd.f32 %v5329, %v5344
        %v5351 = vadd.f32 %v5330, %v5347
        %s5352 = sadd.s32 %s4531, %s1399
        %s5353 = sld [smem:[#allocation4 + %s5352]]
        %v5354 = vstv %s5353
        %v5355 = vmul.f32 %v5301, %v5354
        %v5356 = vmul.f32 %v5299, %v5354
        %v5357 = vmul.f32 %v5302, %v5354
        %v5358 = vmul.f32 %v5300, %v5354
        %v5363 = vrot.slane %v5355, 3
        %v5364 = vrot.slane %v5357, 3
        %v5365 = vsel %vm4635, %v5363, %v5364
        %v5366 = vrot.slane %v5356, 3
        %v5367 = vrot.slane %v5358, 3
        %v5368 = vsel %vm4635, %v5366, %v5367
        %v5371 = vadd.f32 %v5350, %v5365
        %v5372 = vadd.f32 %v5351, %v5368
        %s5373 = sadd.s32 %s4531, %s3183
        %s5374 = sld [smem:[#allocation4 + %s5373]]
        %v5375 = vstv %s5374
        %v5376 = vmul.f32 %v5301, %v5375
        %v5377 = vmul.f32 %v5299, %v5375
        %v5378 = vmul.f32 %v5302, %v5375
        %v5379 = vmul.f32 %v5300, %v5375
        %v5384 = vrot.slane %v5376, 4
        %v5385 = vrot.slane %v5378, 4
        %v5386 = vsel %vm4657, %v5384, %v5385
        %v5387 = vrot.slane %v5377, 4
        %v5388 = vrot.slane %v5379, 4
        %v5389 = vsel %vm4657, %v5387, %v5388
        %v5392 = vadd.f32 %v5371, %v5386
        %v5393 = vadd.f32 %v5372, %v5389
        %5394 = vrot.lane.b32.xlu0 %v4550, 11
        %v5395 = vpop.permute.xlu0 %5394
        %5396 = vrot.lane.b32.xlu0 %v4555, 11
        %v5397 = vpop.permute.xlu0 %5396
        %5398 = vrot.lane.b32.xlu0 %v4553, 11
        %v5399 = vpop.permute.xlu0 %5398
        %5400 = vrot.lane.b32.xlu0 %v4557, 11
        %v5401 = vpop.permute.xlu0 %5400
        %v5402 = vsel %vm502, %v5395, %v5399
        %v5403 = vsel %vm502, %v5397, %v5401
        %v5404 = vsel %vm502, %v5399, %v5395
        %v5405 = vsel %vm502, %v5401, %v5397
        %s5406 = sadd.s32 %s217, %s355
        %s5407 = sld [smem:[#allocation4 + %s5406]]
        %v5408 = vstv %s5407
        %v5409 = vmul.f32 %v5404, %v5408
        %v5410 = vmul.f32 %v5402, %v5408
        %v5411 = vadd.f32 %v5392, %v5409
        %v5412 = vadd.f32 %v5393, %v5410
        %s5413 = sadd.s32 %s217, %s2171
        %s5414 = sld [smem:[#allocation4 + %s5413]]
        %v5415 = vstv %s5414
        %v5416 = vmul.f32 %v5404, %v5415
        %v5417 = vmul.f32 %v5402, %v5415
        %v5418 = vmul.f32 %v5405, %v5415
        %v5419 = vmul.f32 %v5403, %v5415
        %v5424 = vrot.slane %v5416, 1
        %v5425 = vrot.slane %v5418, 1
        %v5426 = vsel %vm299, %v5424, %v5425
        %v5427 = vrot.slane %v5417, 1
        %v5428 = vrot.slane %v5419, 1
        %v5429 = vsel %vm299, %v5427, %v5428
        %v5432 = vadd.f32 %v5411, %v5426
        %v5433 = vadd.f32 %v5412, %v5429
        %s5434 = sadd.s32 %s4531, %s684
        %s5435 = sld [smem:[#allocation4 + %s5434]]
        %v5436 = vstv %s5435
        %v5437 = vmul.f32 %v5404, %v5436
        %v5438 = vmul.f32 %v5402, %v5436
        %v5439 = vmul.f32 %v5405, %v5436
        %v5440 = vmul.f32 %v5403, %v5436
        %v5445 = vrot.slane %v5437, 2
        %v5446 = vrot.slane %v5439, 2
        %v5447 = vsel %vm344, %v5445, %v5446
        %v5448 = vrot.slane %v5438, 2
        %v5449 = vrot.slane %v5440, 2
        %v5450 = vsel %vm344, %v5448, %v5449
        %v5453 = vadd.f32 %v5432, %v5447
        %v5454 = vadd.f32 %v5433, %v5450
        %s5455 = sadd.s32 %s4531, %s1515
        %s5456 = sld [smem:[#allocation4 + %s5455]]
        %v5457 = vstv %s5456
        %v5458 = vmul.f32 %v5404, %v5457
        %v5459 = vmul.f32 %v5402, %v5457
        %v5460 = vmul.f32 %v5405, %v5457
        %v5461 = vmul.f32 %v5403, %v5457
        %v5466 = vrot.slane %v5458, 3
        %v5467 = vrot.slane %v5460, 3
        %v5468 = vsel %vm4635, %v5466, %v5467
        %v5469 = vrot.slane %v5459, 3
        %v5470 = vrot.slane %v5461, 3
        %v5471 = vsel %vm4635, %v5469, %v5470
        %v5474 = vadd.f32 %v5453, %v5468
        %v5475 = vadd.f32 %v5454, %v5471
        %s5476 = sadd.s32 %s4531, %s3296
        %s5477 = sld [smem:[#allocation4 + %s5476]]
        %v5478 = vstv %s5477
        %v5479 = vmul.f32 %v5404, %v5478
        %v5480 = vmul.f32 %v5402, %v5478
        %v5481 = vmul.f32 %v5405, %v5478
        %v5482 = vmul.f32 %v5403, %v5478
        %v5487 = vrot.slane %v5479, 4
        %v5488 = vrot.slane %v5481, 4
        %v5489 = vsel %vm4657, %v5487, %v5488
        %v5490 = vrot.slane %v5480, 4
        %v5491 = vrot.slane %v5482, 4
        %v5492 = vsel %vm4657, %v5490, %v5491
        %v5495 = vadd.f32 %v5474, %v5489
        %v5496 = vadd.f32 %v5475, %v5492
        %5497 = vrot.lane.b32.xlu0 %v4550, 10
        %v5498 = vpop.permute.xlu0 %5497
        %5499 = vrot.lane.b32.xlu0 %v4555, 10
        %v5500 = vpop.permute.xlu0 %5499
        %5501 = vrot.lane.b32.xlu0 %v4553, 10
        %v5502 = vpop.permute.xlu0 %5501
        %5503 = vrot.lane.b32.xlu0 %v4557, 10
        %v5504 = vpop.permute.xlu0 %5503
        %vm5505 = vcmp.lt.s32.totalorder %v265, 10
        %v5506 = vsel %vm5505, %v5498, %v5502
        %v5507 = vsel %vm5505, %v5500, %v5504
        %v5508 = vsel %vm5505, %v5502, %v5498
        %v5509 = vsel %vm5505, %v5504, %v5500
        %s5510 = sadd.s32 %s217, %s472
        %s5511 = sld [smem:[#allocation4 + %s5510]]
        %v5512 = vstv %s5511
        %v5513 = vmul.f32 %v5508, %v5512
        %v5514 = vmul.f32 %v5506, %v5512
        %v5515 = vadd.f32 %v5495, %v5513
        %v5516 = vadd.f32 %v5496, %v5514
        %s5517 = sadd.s32 %s217, %s2285
        %s5518 = sld [smem:[#allocation4 + %s5517]]
        %v5519 = vstv %s5518
        %v5520 = vmul.f32 %v5508, %v5519
        %v5521 = vmul.f32 %v5506, %v5519
        %v5522 = vmul.f32 %v5509, %v5519
        %v5523 = vmul.f32 %v5507, %v5519
        %v5528 = vrot.slane %v5520, 1
        %v5529 = vrot.slane %v5522, 1
        %v5530 = vsel %vm299, %v5528, %v5529
        %v5531 = vrot.slane %v5521, 1
        %v5532 = vrot.slane %v5523, 1
        %v5533 = vsel %vm299, %v5531, %v5532
        %v5536 = vadd.f32 %v5515, %v5530
        %v5537 = vadd.f32 %v5516, %v5533
        %s5538 = sadd.s32 %s4531, %s788
        %s5539 = sld [smem:[#allocation4 + %s5538]]
        %v5540 = vstv %s5539
        %v5541 = vmul.f32 %v5508, %v5540
        %v5542 = vmul.f32 %v5506, %v5540
        %v5543 = vmul.f32 %v5509, %v5540
        %v5544 = vmul.f32 %v5507, %v5540
        %v5549 = vrot.slane %v5541, 2
        %v5550 = vrot.slane %v5543, 2
        %v5551 = vsel %vm344, %v5549, %v5550
        %v5552 = vrot.slane %v5542, 2
        %v5553 = vrot.slane %v5544, 2
        %v5554 = vsel %vm344, %v5552, %v5553
        %v5557 = vadd.f32 %v5536, %v5551
        %v5558 = vadd.f32 %v5537, %v5554
        %s5559 = sadd.s32 %s4531, %s1631
        %s5560 = sld [smem:[#allocation4 + %s5559]]
        %v5561 = vstv %s5560
        %v5562 = vmul.f32 %v5508, %v5561
        %v5563 = vmul.f32 %v5506, %v5561
        %v5564 = vmul.f32 %v5509, %v5561
        %v5565 = vmul.f32 %v5507, %v5561
        %v5570 = vrot.slane %v5562, 3
        %v5571 = vrot.slane %v5564, 3
        %v5572 = vsel %vm4635, %v5570, %v5571
        %v5573 = vrot.slane %v5563, 3
        %v5574 = vrot.slane %v5565, 3
        %v5575 = vsel %vm4635, %v5573, %v5574
        %v5578 = vadd.f32 %v5557, %v5572
        %v5579 = vadd.f32 %v5558, %v5575
        %s5580 = sadd.s32 %s4531, %s2447
        %s5581 = sld [smem:[#allocation4 + %s5580]]
        %v5582 = vstv %s5581
        %v5583 = vmul.f32 %v5508, %v5582
        %v5584 = vmul.f32 %v5506, %v5582
        %v5585 = vmul.f32 %v5509, %v5582
        %v5586 = vmul.f32 %v5507, %v5582
        %v5591 = vrot.slane %v5583, 4
        %v5592 = vrot.slane %v5585, 4
        %v5593 = vsel %vm4657, %v5591, %v5592
        %v5594 = vrot.slane %v5584, 4
        %v5595 = vrot.slane %v5586, 4
        %v5596 = vsel %vm4657, %v5594, %v5595
        %v5599 = vadd.f32 %v5578, %v5593
        %v5600 = vadd.f32 %v5579, %v5596
        %5601 = vrot.lane.b32.xlu0 %v4550, 2
        %v5602 = vpop.permute.xlu0 %5601
        %5603 = vrot.lane.b32.xlu0 %v4555, 2
        %v5604 = vpop.permute.xlu0 %5603
        %5605 = vrot.lane.b32.xlu0 %v4553, 2
        %v5606 = vpop.permute.xlu0 %5605
        %5607 = vrot.lane.b32.xlu0 %v4557, 2
        %v5608 = vpop.permute.xlu0 %5607
        %vm5609 = vcmp.lt.s32.totalorder %v265, 2
        %v5610 = vsel %vm5609, %v5602, %v5606
        %v5611 = vsel %vm5609, %v5604, %v5608
        %v5612 = vsel %vm5609, %v5606, %v5602
        %v5613 = vsel %vm5609, %v5608, %v5604
        %s5614 = sadd.s32 %s217, %s589
        %s5615 = sld [smem:[#allocation4 + %s5614]]
        %v5616 = vstv %s5615
        %v5617 = vmul.f32 %v5612, %v5616
        %v5618 = vmul.f32 %v5610, %v5616
        %v5619 = vadd.f32 %v5599, %v5617
        %v5620 = vadd.f32 %v5600, %v5618
        %s5621 = sadd.s32 %s217, %s1421
        %s5622 = sld [smem:[#allocation4 + %s5621]]
        %v5623 = vstv %s5622
        %v5624 = vmul.f32 %v5612, %v5623
        %v5625 = vmul.f32 %v5610, %v5623
        %v5626 = vmul.f32 %v5613, %v5623
        %v5627 = vmul.f32 %v5611, %v5623
        %v5632 = vrot.slane %v5624, 1
        %v5633 = vrot.slane %v5626, 1
        %v5634 = vsel %vm299, %v5632, %v5633
        %v5635 = vrot.slane %v5625, 1
        %v5636 = vrot.slane %v5627, 1
        %v5637 = vsel %vm299, %v5635, %v5636
        %v5640 = vadd.f32 %v5619, %v5634
        %v5641 = vadd.f32 %v5620, %v5637
        %s5642 = sadd.s32 %s4531, %s905
        %s5643 = sld [smem:[#allocation4 + %s5642]]
        %v5644 = vstv %s5643
        %v5645 = vmul.f32 %v5612, %v5644
        %v5646 = vmul.f32 %v5610, %v5644
        %v5647 = vmul.f32 %v5613, %v5644
        %v5648 = vmul.f32 %v5611, %v5644
        %v5653 = vrot.slane %v5645, 2
        %v5654 = vrot.slane %v5647, 2
        %v5655 = vsel %vm344, %v5653, %v5654
        %v5656 = vrot.slane %v5646, 2
        %v5657 = vrot.slane %v5648, 2
        %v5658 = vsel %vm344, %v5656, %v5657
        %v5661 = vadd.f32 %v5640, %v5655
        %v5662 = vadd.f32 %v5641, %v5658
        %s5663 = sadd.s32 %s4531, %s1746
        %s5664 = sld [smem:[#allocation4 + %s5663]]
        %v5665 = vstv %s5664
        %v5666 = vmul.f32 %v5612, %v5665
        %v5667 = vmul.f32 %v5610, %v5665
        %v5668 = vmul.f32 %v5613, %v5665
        %v5669 = vmul.f32 %v5611, %v5665
        %v5674 = vrot.slane %v5666, 3
        %v5675 = vrot.slane %v5668, 3
        %v5676 = vsel %vm4635, %v5674, %v5675
        %v5677 = vrot.slane %v5667, 3
        %v5678 = vrot.slane %v5669, 3
        %v5679 = vsel %vm4635, %v5677, %v5678
        %v5682 = vadd.f32 %v5661, %v5676
        %v5683 = vadd.f32 %v5662, %v5679
        %s5684 = sadd.s32 %s4531, %s2560
        %s5685 = sld [smem:[#allocation4 + %s5684]]
        %v5686 = vstv %s5685
        %v5687 = vmul.f32 %v5612, %v5686
        %v5688 = vmul.f32 %v5610, %v5686
        %v5689 = vmul.f32 %v5613, %v5686
        %v5690 = vmul.f32 %v5611, %v5686
        %v5695 = vrot.slane %v5687, 4
        %v5696 = vrot.slane %v5689, 4
        %v5697 = vsel %vm4657, %v5695, %v5696
        %v5698 = vrot.slane %v5688, 4
        %v5699 = vrot.slane %v5690, 4
        %v5700 = vsel %vm4657, %v5698, %v5699
        %v5703 = vadd.f32 %v5682, %v5697
        %v5704 = vadd.f32 %v5683, %v5700
        %5705 = vrot.lane.b32.xlu0 %v4550, 1
        %v5706 = vpop.permute.xlu0 %5705
        %5707 = vrot.lane.b32.xlu0 %v4555, 1
        %v5708 = vpop.permute.xlu0 %5707
        %5709 = vrot.lane.b32.xlu0 %v4553, 1
        %v5710 = vpop.permute.xlu0 %5709
        %5711 = vrot.lane.b32.xlu0 %v4557, 1
        %v5712 = vpop.permute.xlu0 %5711
        %v5713 = vsel %vm619, %v5706, %v5710
        %v5714 = vsel %vm619, %v5708, %v5712
        %v5715 = vsel %vm619, %v5710, %v5706
        %v5716 = vsel %vm619, %v5712, %v5708
        %s5717 = sadd.s32 %s217, %s706
        %s5718 = sld [smem:[#allocation4 + %s5717]]
        %v5719 = vstv %s5718
        %v5720 = vmul.f32 %v5715, %v5719
        %v5721 = vmul.f32 %v5713, %v5719
        %v5722 = vadd.f32 %v5703, %v5720
        %v5723 = vadd.f32 %v5704, %v5721
        %s5724 = sadd.s32 %s217, %s1537
        %s5725 = sld [smem:[#allocation4 + %s5724]]
        %v5726 = vstv %s5725
        %v5727 = vmul.f32 %v5715, %v5726
        %v5728 = vmul.f32 %v5713, %v5726
        %v5729 = vmul.f32 %v5716, %v5726
        %v5730 = vmul.f32 %v5714, %v5726
        %v5735 = vrot.slane %v5727, 1
        %v5736 = vrot.slane %v5729, 1
        %v5737 = vsel %vm299, %v5735, %v5736
        %v5738 = vrot.slane %v5728, 1
        %v5739 = vrot.slane %v5730, 1
        %v5740 = vsel %vm299, %v5738, %v5739
        %v5743 = vadd.f32 %v5722, %v5737
        %v5744 = vadd.f32 %v5723, %v5740
        %s5745 = sadd.s32 %s4531, %s1022
        %s5746 = sld [smem:[#allocation4 + %s5745]]
        %v5747 = vstv %s5746
        %v5748 = vmul.f32 %v5715, %v5747
        %v5749 = vmul.f32 %v5713, %v5747
        %v5750 = vmul.f32 %v5716, %v5747
        %v5751 = vmul.f32 %v5714, %v5747
        %v5756 = vrot.slane %v5748, 2
        %v5757 = vrot.slane %v5750, 2
        %v5758 = vsel %vm344, %v5756, %v5757
        %v5759 = vrot.slane %v5749, 2
        %v5760 = vrot.slane %v5751, 2
        %v5761 = vsel %vm344, %v5759, %v5760
        %v5764 = vadd.f32 %v5743, %v5758
        %v5765 = vadd.f32 %v5744, %v5761
        %s5766 = sadd.s32 %s4531, %s1849
        %s5767 = sld [smem:[#allocation4 + %s5766]]
        %v5768 = vstv %s5767
        %v5769 = vmul.f32 %v5715, %v5768
        %v5770 = vmul.f32 %v5713, %v5768
        %v5771 = vmul.f32 %v5716, %v5768
        %v5772 = vmul.f32 %v5714, %v5768
        %v5777 = vrot.slane %v5769, 3
        %v5778 = vrot.slane %v5771, 3
        %v5779 = vsel %vm4635, %v5777, %v5778
        %v5780 = vrot.slane %v5770, 3
        %v5781 = vrot.slane %v5772, 3
        %v5782 = vsel %vm4635, %v5780, %v5781
        %v5785 = vadd.f32 %v5764, %v5779
        %v5786 = vadd.f32 %v5765, %v5782
        %s5787 = sadd.s32 %s4531, %s2673
        %s5788 = sld [smem:[#allocation4 + %s5787]]
        %v5789 = vstv %s5788
        %v5790 = vmul.f32 %v5715, %v5789
        %v5791 = vmul.f32 %v5713, %v5789
        %v5792 = vmul.f32 %v5716, %v5789
        %v5793 = vmul.f32 %v5714, %v5789
        %v5798 = vrot.slane %v5790, 4
        %v5799 = vrot.slane %v5792, 4
        %v5800 = vsel %vm4657, %v5798, %v5799
        %v5801 = vrot.slane %v5791, 4
        %v5802 = vrot.slane %v5793, 4
        %v5803 = vsel %vm4657, %v5801, %v5802
        %v5806 = vadd.f32 %v5785, %v5800
        %v5807 = vadd.f32 %v5786, %v5803
        %s5808 = sadd.s32 %s217, %s810
        %s5809 = sld [smem:[#allocation4 + %s5808]]
        %v5810 = vstv %s5809
        %v5811 = vmul.f32 %v4535, %v5810
        %v5812 = vmul.f32 %v4536, %v5810
        %v5813 = vmul.f32 %v4537, %v5810
        %v5814 = vmul.f32 %v4538, %v5810
        %v5819 = vrot.slane %v5811, 6
        %v5820 = vrot.slane %v5813, 6
        %v5821 = vsel %vm4547, %v5819, %v5820
        %v5822 = vrot.slane %v5812, 6
        %v5823 = vrot.slane %v5814, 6
        %v5824 = vsel %vm4547, %v5822, %v5823
        %v5827 = vadd.f32 %v5806, %v5821
        %v5828 = vadd.f32 %v5807, %v5824
        %s5829 = sadd.s32 %s4531, %s220
        %s5830 = sld [smem:[#allocation4 + %s5829]]
        %v5831 = vstv %s5830
        %v5832 = vmul.f32 %v4535, %v5831
        %v5833 = vmul.f32 %v4536, %v5831
        %v5834 = vmul.f32 %v4537, %v5831
        %v5835 = vmul.f32 %v4538, %v5831
        %v5840 = vrot.slane %v5832, 7
        %v5841 = vrot.slane %v5834, 7
        %v5842 = vsel %vm241, %v5840, %v5841
        %v5843 = vrot.slane %v5833, 7
        %v5844 = vrot.slane %v5835, 7
        %v5845 = vsel %vm241, %v5843, %v5844
        %v5848 = vadd.f32 %v5827, %v5842
        %v5849 = vadd.f32 %v5828, %v5845
        %s5850 = sadd.s32 %s4531, %s1139
        %s5851 = sld [smem:[#allocation4 + %s5850]]
        %v5852 = vstv %s5851
        %v5853 = vmul.f32 %v4537, %v5852
        %v5854 = vmul.f32 %v4538, %v5852
        %v5855 = vadd.f32 %v5848, %v5853
        %v5856 = vadd.f32 %v5849, %v5854
        %s5857 = sadd.s32 %s4531, %s1964
        %s5858 = sld [smem:[#allocation4 + %s5857]]
        %v5859 = vstv %s5858
        %v5860 = vmul.f32 %v4537, %v5859
        %v5861 = vmul.f32 %v4538, %v5859
        %v5862 = vmul.f32 %v4539, %v5859
        %v5863 = vmul.f32 %v4540, %v5859
        %v5868 = vrot.slane %v5860, 1
        %v5869 = vrot.slane %v5862, 1
        %v5870 = vsel %vm299, %v5868, %v5869
        %v5871 = vrot.slane %v5861, 1
        %v5872 = vrot.slane %v5863, 1
        %v5873 = vsel %vm299, %v5871, %v5872
        %v5876 = vadd.f32 %v5855, %v5870
        %v5877 = vadd.f32 %v5856, %v5873
        %s5878 = sadd.s32 %s4531, %s2786
        %s5879 = sld [smem:[#allocation4 + %s5878]]
        %v5880 = vstv %s5879
        %v5881 = vmul.f32 %v4537, %v5880
        %v5882 = vmul.f32 %v4538, %v5880
        %v5883 = vmul.f32 %v4539, %v5880
        %v5884 = vmul.f32 %v4540, %v5880
        %v5889 = vrot.slane %v5881, 2
        %v5890 = vrot.slane %v5883, 2
        %v5891 = vsel %vm344, %v5889, %v5890
        %v5892 = vrot.slane %v5882, 2
        %v5893 = vrot.slane %v5884, 2
        %v5894 = vsel %vm344, %v5892, %v5893
        %v5897 = vadd.f32 %v5876, %v5891
        %v5898 = vadd.f32 %v5877, %v5894
        %5899 = vrot.lane.b32.xlu0 %v4550, 127
        %v5900 = vpop.permute.xlu0 %5899
        %5901 = vrot.lane.b32.xlu0 %v4555, 127
        %v5902 = vpop.permute.xlu0 %5901
        %5903 = vrot.lane.b32.xlu0 %v4553, 127
        %v5904 = vpop.permute.xlu0 %5903
        %5905 = vrot.lane.b32.xlu0 %v4557, 127
        %v5906 = vpop.permute.xlu0 %5905
        %v5907 = vsel %vm840, %v5900, %v5904
        %v5908 = vsel %vm840, %v5902, %v5906
        %v5909 = vsel %vm840, %v5904, %v5900
        %v5910 = vsel %vm840, %v5906, %v5902
        %s5911 = sadd.s32 %s217, %s927
        %s5912 = sld [smem:[#allocation4 + %s5911]]
        %v5913 = vstv %s5912
        %v5914 = vmul.f32 %v5907, %v5913
        %v5915 = vmul.f32 %v5909, %v5913
        %v5916 = vadd.f32 %v5897, %v5914
        %v5917 = vadd.f32 %v5898, %v5915
        %s5918 = sadd.s32 %s4531, %s390
        %s5919 = sld [smem:[#allocation4 + %s5918]]
        %v5920 = vstv %s5919
        %v5921 = vmul.f32 %v5907, %v5920
        %v5922 = vmul.f32 %v5909, %v5920
        %v5923 = vmul.f32 %v5908, %v5920
        %v5924 = vmul.f32 %v5910, %v5920
        %v5929 = vrot.slane %v5921, 1
        %v5930 = vrot.slane %v5923, 1
        %v5931 = vsel %vm299, %v5929, %v5930
        %v5932 = vrot.slane %v5922, 1
        %v5933 = vrot.slane %v5924, 1
        %v5934 = vsel %vm299, %v5932, %v5933
        %v5937 = vadd.f32 %v5916, %v5931
        %v5938 = vadd.f32 %v5917, %v5934
        %s5939 = sadd.s32 %s4531, %s1256
        %s5940 = sld [smem:[#allocation4 + %s5939]]
        %v5941 = vstv %s5940
        %v5942 = vmul.f32 %v5907, %v5941
        %v5943 = vmul.f32 %v5909, %v5941
        %v5944 = vmul.f32 %v5908, %v5941
        %v5945 = vmul.f32 %v5910, %v5941
        %v5950 = vrot.slane %v5942, 2
        %v5951 = vrot.slane %v5944, 2
        %v5952 = vsel %vm344, %v5950, %v5951
        %v5953 = vrot.slane %v5943, 2
        %v5954 = vrot.slane %v5945, 2
        %v5955 = vsel %vm344, %v5953, %v5954
        %v5958 = vadd.f32 %v5937, %v5952
        %v5959 = vadd.f32 %v5938, %v5955
        %s5960 = sadd.s32 %s4531, %s2079
        %s5961 = sld [smem:[#allocation4 + %s5960]]
        %v5962 = vstv %s5961
        %v5963 = vmul.f32 %v5907, %v5962
        %v5964 = vmul.f32 %v5909, %v5962
        %v5965 = vmul.f32 %v5908, %v5962
        %v5966 = vmul.f32 %v5910, %v5962
        %v5971 = vrot.slane %v5963, 3
        %v5972 = vrot.slane %v5965, 3
        %v5973 = vsel %vm4635, %v5971, %v5972
        %v5974 = vrot.slane %v5964, 3
        %v5975 = vrot.slane %v5966, 3
        %v5976 = vsel %vm4635, %v5974, %v5975
        %v5979 = vadd.f32 %v5958, %v5973
        %v5980 = vadd.f32 %v5959, %v5976
        %s5981 = sadd.s32 %s4531, %s2887
        %s5982 = sld [smem:[#allocation4 + %s5981]]
        %v5983 = vstv %s5982
        %v5984 = vmul.f32 %v5907, %v5983
        %v5985 = vmul.f32 %v5909, %v5983
        %v5986 = vmul.f32 %v5908, %v5983
        %v5987 = vmul.f32 %v5910, %v5983
        %v5992 = vrot.slane %v5984, 4
        %v5993 = vrot.slane %v5986, 4
        %v5994 = vsel %vm4657, %v5992, %v5993
        %v5995 = vrot.slane %v5985, 4
        %v5996 = vrot.slane %v5987, 4
        %v5997 = vsel %vm4657, %v5995, %v5996
        %v6000 = vadd.f32 %v5979, %v5994
        %v6001 = vadd.f32 %v5980, %v5997
        %6002 = vrot.lane.b32.xlu0 %v4550, 126
        %v6003 = vpop.permute.xlu0 %6002
        %6004 = vrot.lane.b32.xlu0 %v4555, 126
        %v6005 = vpop.permute.xlu0 %6004
        %6006 = vrot.lane.b32.xlu0 %v4553, 126
        %v6007 = vpop.permute.xlu0 %6006
        %6008 = vrot.lane.b32.xlu0 %v4557, 126
        %v6009 = vpop.permute.xlu0 %6008
        %vm6010 = vcmp.lt.s32.totalorder %v265, 126
        %v6011 = vsel %vm6010, %v6003, %v6007
        %v6012 = vsel %vm6010, %v6005, %v6009
        %v6013 = vsel %vm6010, %v6007, %v6003
        %v6014 = vsel %vm6010, %v6009, %v6005
        %s6015 = sadd.s32 %s217, %s1044
        %s6016 = sld [smem:[#allocation4 + %s6015]]
        %v6017 = vstv %s6016
        %v6018 = vmul.f32 %v6011, %v6017
        %v6019 = vmul.f32 %v6013, %v6017
        %v6020 = vadd.f32 %v6000, %v6018
        %v6021 = vadd.f32 %v6001, %v6019
        %s6022 = sadd.s32 %s4531, %s507
        %s6023 = sld [smem:[#allocation4 + %s6022]]
        %v6024 = vstv %s6023
        %v6025 = vmul.f32 %v6011, %v6024
        %v6026 = vmul.f32 %v6013, %v6024
        %v6027 = vmul.f32 %v6012, %v6024
        %v6028 = vmul.f32 %v6014, %v6024
        %v6033 = vrot.slane %v6025, 1
        %v6034 = vrot.slane %v6027, 1
        %v6035 = vsel %vm299, %v6033, %v6034
        %v6036 = vrot.slane %v6026, 1
        %v6037 = vrot.slane %v6028, 1
        %v6038 = vsel %vm299, %v6036, %v6037
        %v6041 = vadd.f32 %v6020, %v6035
        %v6042 = vadd.f32 %v6021, %v6038
        %s6043 = sadd.s32 %s4531, %s1339
        %s6044 = sld [smem:[#allocation4 + %s6043]]
        %v6045 = vstv %s6044
        %v6046 = vmul.f32 %v6011, %v6045
        %v6047 = vmul.f32 %v6013, %v6045
        %v6048 = vmul.f32 %v6012, %v6045
        %v6049 = vmul.f32 %v6014, %v6045
        %v6054 = vrot.slane %v6046, 2
        %v6055 = vrot.slane %v6048, 2
        %v6056 = vsel %vm344, %v6054, %v6055
        %v6057 = vrot.slane %v6047, 2
        %v6058 = vrot.slane %v6049, 2
        %v6059 = vsel %vm344, %v6057, %v6058
        %v6062 = vadd.f32 %v6041, %v6056
        %v6063 = vadd.f32 %v6042, %v6059
        %s6064 = sadd.s32 %s4531, %s2193
        %s6065 = sld [smem:[#allocation4 + %s6064]]
        %v6066 = vstv %s6065
        %v6067 = vmul.f32 %v6011, %v6066
        %v6068 = vmul.f32 %v6013, %v6066
        %v6069 = vmul.f32 %v6012, %v6066
        %v6070 = vmul.f32 %v6014, %v6066
        %v6075 = vrot.slane %v6067, 3
        %v6076 = vrot.slane %v6069, 3
        %v6077 = vsel %vm4635, %v6075, %v6076
        %v6078 = vrot.slane %v6068, 3
        %v6079 = vrot.slane %v6070, 3
        %v6080 = vsel %vm4635, %v6078, %v6079
        %v6083 = vadd.f32 %v6062, %v6077
        %v6084 = vadd.f32 %v6063, %v6080
        %s6085 = sadd.s32 %s4531, %s3000
        %s6086 = sld [smem:[#allocation4 + %s6085]]
        %v6087 = vstv %s6086
        %v6088 = vmul.f32 %v6011, %v6087
        %v6089 = vmul.f32 %v6013, %v6087
        %v6090 = vmul.f32 %v6012, %v6087
        %v6091 = vmul.f32 %v6014, %v6087
        %v6096 = vrot.slane %v6088, 4
        %v6097 = vrot.slane %v6090, 4
        %v6098 = vsel %vm4657, %v6096, %v6097
        %v6099 = vrot.slane %v6089, 4
        %v6100 = vrot.slane %v6091, 4
        %v6101 = vsel %vm4657, %v6099, %v6100
        %v6104 = vadd.f32 %v6083, %v6098
        %v6105 = vadd.f32 %v6084, %v6101
        %6106 = vrot.lane.b32.xlu0 %v4550, 118
        %v6107 = vpop.permute.xlu0 %6106
        %6108 = vrot.lane.b32.xlu0 %v4555, 118
        %v6109 = vpop.permute.xlu0 %6108
        %6110 = vrot.lane.b32.xlu0 %v4553, 118
        %v6111 = vpop.permute.xlu0 %6110
        %6112 = vrot.lane.b32.xlu0 %v4557, 118
        %v6113 = vpop.permute.xlu0 %6112
        %vm6114 = vcmp.lt.s32.totalorder %v265, 118
        %v6115 = vsel %vm6114, %v6107, %v6111
        %v6116 = vsel %vm6114, %v6109, %v6113
        %v6117 = vsel %vm6114, %v6111, %v6107
        %v6118 = vsel %vm6114, %v6113, %v6109
        %s6119 = sadd.s32 %s217, %s1161
        %s6120 = sld [smem:[#allocation4 + %s6119]]
        %v6121 = vstv %s6120
        %v6122 = vmul.f32 %v6115, %v6121
        %v6123 = vmul.f32 %v6117, %v6121
        %v6124 = vadd.f32 %v6104, %v6122
        %v6125 = vadd.f32 %v6105, %v6123
        %s6126 = sadd.s32 %s4531, %s624
        %s6127 = sld [smem:[#allocation4 + %s6126]]
        %v6128 = vstv %s6127
        %v6129 = vmul.f32 %v6115, %v6128
        %v6130 = vmul.f32 %v6117, %v6128
        %v6131 = vmul.f32 %v6116, %v6128
        %v6132 = vmul.f32 %v6118, %v6128
        %v6137 = vrot.slane %v6129, 1
        %v6138 = vrot.slane %v6131, 1
        %v6139 = vsel %vm299, %v6137, %v6138
        %v6140 = vrot.slane %v6130, 1
        %v6141 = vrot.slane %v6132, 1
        %v6142 = vsel %vm299, %v6140, %v6141
        %v6145 = vadd.f32 %v6124, %v6139
        %v6146 = vadd.f32 %v6125, %v6142
        %s6147 = sadd.s32 %s4531, %s1455
        %s6148 = sld [smem:[#allocation4 + %s6147]]
        %v6149 = vstv %s6148
        %v6150 = vmul.f32 %v6115, %v6149
        %v6151 = vmul.f32 %v6117, %v6149
        %v6152 = vmul.f32 %v6116, %v6149
        %v6153 = vmul.f32 %v6118, %v6149
        %v6158 = vrot.slane %v6150, 2
        %v6159 = vrot.slane %v6152, 2
        %v6160 = vsel %vm344, %v6158, %v6159
        %v6161 = vrot.slane %v6151, 2
        %v6162 = vrot.slane %v6153, 2
        %v6163 = vsel %vm344, %v6161, %v6162
        %v6166 = vadd.f32 %v6145, %v6160
        %v6167 = vadd.f32 %v6146, %v6163
        %s6168 = sadd.s32 %s4531, %s2307
        %s6169 = sld [smem:[#allocation4 + %s6168]]
        %v6170 = vstv %s6169
        %v6171 = vmul.f32 %v6115, %v6170
        %v6172 = vmul.f32 %v6117, %v6170
        %v6173 = vmul.f32 %v6116, %v6170
        %v6174 = vmul.f32 %v6118, %v6170
        %v6179 = vrot.slane %v6171, 3
        %v6180 = vrot.slane %v6173, 3
        %v6181 = vsel %vm4635, %v6179, %v6180
        %v6182 = vrot.slane %v6172, 3
        %v6183 = vrot.slane %v6174, 3
        %v6184 = vsel %vm4635, %v6182, %v6183
        %v6187 = vadd.f32 %v6166, %v6181
        %v6188 = vadd.f32 %v6167, %v6184
        %s6189 = sadd.s32 %s4531, %s3113
        %s6190 = sld [smem:[#allocation4 + %s6189]]
        %v6191 = vstv %s6190
        %v6192 = vmul.f32 %v6115, %v6191
        %v6193 = vmul.f32 %v6117, %v6191
        %v6194 = vmul.f32 %v6116, %v6191
        %v6195 = vmul.f32 %v6118, %v6191
        %v6200 = vrot.slane %v6192, 4
        %v6201 = vrot.slane %v6194, 4
        %v6202 = vsel %vm4657, %v6200, %v6201
        %v6203 = vrot.slane %v6193, 4
        %v6204 = vrot.slane %v6195, 4
        %v6205 = vsel %vm4657, %v6203, %v6204
        %v6208 = vadd.f32 %v6187, %v6202
        %v6209 = vadd.f32 %v6188, %v6205
        %6210 = vrot.lane.b32.xlu0 %v4550, 117
        %v6211 = vpop.permute.xlu0 %6210
        %6212 = vrot.lane.b32.xlu0 %v4555, 117
        %v6213 = vpop.permute.xlu0 %6212
        %6214 = vrot.lane.b32.xlu0 %v4553, 117
        %v6215 = vpop.permute.xlu0 %6214
        %6216 = vrot.lane.b32.xlu0 %v4557, 117
        %v6217 = vpop.permute.xlu0 %6216
        %v6218 = vsel %vm957, %v6211, %v6215
        %v6219 = vsel %vm957, %v6213, %v6217
        %v6220 = vsel %vm957, %v6215, %v6211
        %v6221 = vsel %vm957, %v6217, %v6213
        %s6222 = sadd.s32 %s217, %s1278
        %s6223 = sld [smem:[#allocation4 + %s6222]]
        %v6224 = vstv %s6223
        %v6225 = vmul.f32 %v6218, %v6224
        %v6226 = vmul.f32 %v6220, %v6224
        %v6227 = vadd.f32 %v6208, %v6225
        %v6228 = vadd.f32 %v6209, %v6226
        %s6229 = sadd.s32 %s4531, %s728
        %s6230 = sld [smem:[#allocation4 + %s6229]]
        %v6231 = vstv %s6230
        %v6232 = vmul.f32 %v6218, %v6231
        %v6233 = vmul.f32 %v6220, %v6231
        %v6234 = vmul.f32 %v6219, %v6231
        %v6235 = vmul.f32 %v6221, %v6231
        %v6240 = vrot.slane %v6232, 1
        %v6241 = vrot.slane %v6234, 1
        %v6242 = vsel %vm299, %v6240, %v6241
        %v6243 = vrot.slane %v6233, 1
        %v6244 = vrot.slane %v6235, 1
        %v6245 = vsel %vm299, %v6243, %v6244
        %v6248 = vadd.f32 %v6227, %v6242
        %v6249 = vadd.f32 %v6228, %v6245
        %s6250 = sadd.s32 %s4531, %s1571
        %s6251 = sld [smem:[#allocation4 + %s6250]]
        %v6252 = vstv %s6251
        %v6253 = vmul.f32 %v6218, %v6252
        %v6254 = vmul.f32 %v6220, %v6252
        %v6255 = vmul.f32 %v6219, %v6252
        %v6256 = vmul.f32 %v6221, %v6252
        %v6261 = vrot.slane %v6253, 2
        %v6262 = vrot.slane %v6255, 2
        %v6263 = vsel %vm344, %v6261, %v6262
        %v6264 = vrot.slane %v6254, 2
        %v6265 = vrot.slane %v6256, 2
        %v6266 = vsel %vm344, %v6264, %v6265
        %v6269 = vadd.f32 %v6248, %v6263
        %v6270 = vadd.f32 %v6249, %v6266
        %s6271 = sadd.s32 %s4531, %s2389
        %s6272 = sld [smem:[#allocation4 + %s6271]]
        %v6273 = vstv %s6272
        %v6274 = vmul.f32 %v6218, %v6273
        %v6275 = vmul.f32 %v6220, %v6273
        %v6276 = vmul.f32 %v6219, %v6273
        %v6277 = vmul.f32 %v6221, %v6273
        %v6282 = vrot.slane %v6274, 3
        %v6283 = vrot.slane %v6276, 3
        %v6284 = vsel %vm4635, %v6282, %v6283
        %v6285 = vrot.slane %v6275, 3
        %v6286 = vrot.slane %v6277, 3
        %v6287 = vsel %vm4635, %v6285, %v6286
        %v6290 = vadd.f32 %v6269, %v6284
        %v6291 = vadd.f32 %v6270, %v6287
        %s6292 = sadd.s32 %s4531, %s3226
        %s6293 = sld [smem:[#allocation4 + %s6292]]
        %v6294 = vstv %s6293
        %v6295 = vmul.f32 %v6218, %v6294
        %v6296 = vmul.f32 %v6220, %v6294
        %v6297 = vmul.f32 %v6219, %v6294
        %v6298 = vmul.f32 %v6221, %v6294
        %v6303 = vrot.slane %v6295, 4
        %v6304 = vrot.slane %v6297, 4
        %v6305 = vsel %vm4657, %v6303, %v6304
        %v6306 = vrot.slane %v6296, 4
        %v6307 = vrot.slane %v6298, 4
        %v6308 = vsel %vm4657, %v6306, %v6307
        %v6311 = vadd.f32 %v6290, %v6305
        %v6312 = vadd.f32 %v6291, %v6308
        %6313 = vrot.lane.b32.xlu0 %v4550, 116
        %v6314 = vpop.permute.xlu0 %6313
        %6315 = vrot.lane.b32.xlu0 %v4555, 116
        %v6316 = vpop.permute.xlu0 %6315
        %6317 = vrot.lane.b32.xlu0 %v4553, 116
        %v6318 = vpop.permute.xlu0 %6317
        %6319 = vrot.lane.b32.xlu0 %v4557, 116
        %v6320 = vpop.permute.xlu0 %6319
        %v6321 = vsel %vm1074, %v6314, %v6318
        %v6322 = vsel %vm1074, %v6316, %v6320
        %v6323 = vsel %vm1074, %v6318, %v6314
        %v6324 = vsel %vm1074, %v6320, %v6316
        %s6325 = sadd.s32 %s217, %s1347
        %s6326 = sld [smem:[#allocation4 + %s6325]]
        %v6327 = vstv %s6326
        %v6328 = vmul.f32 %v6321, %v6327
        %v6329 = vmul.f32 %v6323, %v6327
        %v6330 = vadd.f32 %v6311, %v6328
        %v6331 = vadd.f32 %v6312, %v6329
        %s6332 = sadd.s32 %s4531, %s845
        %s6333 = sld [smem:[#allocation4 + %s6332]]
        %v6334 = vstv %s6333
        %v6335 = vmul.f32 %v6321, %v6334
        %v6336 = vmul.f32 %v6323, %v6334
        %v6337 = vmul.f32 %v6322, %v6334
        %v6338 = vmul.f32 %v6324, %v6334
        %v6343 = vrot.slane %v6335, 1
        %v6344 = vrot.slane %v6337, 1
        %v6345 = vsel %vm299, %v6343, %v6344
        %v6346 = vrot.slane %v6336, 1
        %v6347 = vrot.slane %v6338, 1
        %v6348 = vsel %vm299, %v6346, %v6347
        %v6351 = vadd.f32 %v6330, %v6345
        %v6352 = vadd.f32 %v6331, %v6348
        %s6353 = sadd.s32 %s4531, %s1686
        %s6354 = sld [smem:[#allocation4 + %s6353]]
        %v6355 = vstv %s6354
        %v6356 = vmul.f32 %v6321, %v6355
        %v6357 = vmul.f32 %v6323, %v6355
        %v6358 = vmul.f32 %v6322, %v6355
        %v6359 = vmul.f32 %v6324, %v6355
        %v6364 = vrot.slane %v6356, 2
        %v6365 = vrot.slane %v6358, 2
        %v6366 = vsel %vm344, %v6364, %v6365
        %v6367 = vrot.slane %v6357, 2
        %v6368 = vrot.slane %v6359, 2
        %v6369 = vsel %vm344, %v6367, %v6368
        %v6372 = vadd.f32 %v6351, %v6366
        %v6373 = vadd.f32 %v6352, %v6369
        %s6374 = sadd.s32 %s4531, %s2502
        %s6375 = sld [smem:[#allocation4 + %s6374]]
        %v6376 = vstv %s6375
        %v6377 = vmul.f32 %v6321, %v6376
        %v6378 = vmul.f32 %v6323, %v6376
        %v6379 = vmul.f32 %v6322, %v6376
        %v6380 = vmul.f32 %v6324, %v6376
        %v6385 = vrot.slane %v6377, 3
        %v6386 = vrot.slane %v6379, 3
        %v6387 = vsel %vm4635, %v6385, %v6386
        %v6388 = vrot.slane %v6378, 3
        %v6389 = vrot.slane %v6380, 3
        %v6390 = vsel %vm4635, %v6388, %v6389
        %v6393 = vadd.f32 %v6372, %v6387
        %v6394 = vadd.f32 %v6373, %v6390
        %s6395 = sadd.s32 %s4531, %s3339
        %s6396 = sld [smem:[#allocation4 + %s6395]]
        %v6397 = vstv %s6396
        %v6398 = vmul.f32 %v6321, %v6397
        %v6399 = vmul.f32 %v6323, %v6397
        %v6400 = vmul.f32 %v6322, %v6397
        %v6401 = vmul.f32 %v6324, %v6397
        %v6406 = vrot.slane %v6398, 4
        %v6407 = vrot.slane %v6400, 4
        %v6408 = vsel %vm4657, %v6406, %v6407
        %v6409 = vrot.slane %v6399, 4
        %v6410 = vrot.slane %v6401, 4
        %v6411 = vsel %vm4657, %v6409, %v6410
        %v6414 = vadd.f32 %v6393, %v6408
        %v6415 = vadd.f32 %v6394, %v6411
        %6416 = vrot.lane.b32.xlu0 %v4550, 115
        %v6417 = vpop.permute.xlu0 %6416
        %6418 = vrot.lane.b32.xlu0 %v4555, 115
        %v6419 = vpop.permute.xlu0 %6418
        %6420 = vrot.lane.b32.xlu0 %v4553, 115
        %v6421 = vpop.permute.xlu0 %6420
        %6422 = vrot.lane.b32.xlu0 %v4557, 115
        %v6423 = vpop.permute.xlu0 %6422
        %v6424 = vsel %vm1191, %v6417, %v6421
        %v6425 = vsel %vm1191, %v6419, %v6423
        %v6426 = vsel %vm1191, %v6421, %v6417
        %v6427 = vsel %vm1191, %v6423, %v6419
        %s6428 = sadd.s32 %s217, %s1463
        %s6429 = sld [smem:[#allocation4 + %s6428]]
        %v6430 = vstv %s6429
        %v6431 = vmul.f32 %v6424, %v6430
        %v6432 = vmul.f32 %v6426, %v6430
        %v6433 = vadd.f32 %v6414, %v6431
        %v6434 = vadd.f32 %v6415, %v6432
        %s6435 = sadd.s32 %s4531, %s962
        %s6436 = sld [smem:[#allocation4 + %s6435]]
        %v6437 = vstv %s6436
        %v6438 = vmul.f32 %v6424, %v6437
        %v6439 = vmul.f32 %v6426, %v6437
        %v6440 = vmul.f32 %v6425, %v6437
        %v6441 = vmul.f32 %v6427, %v6437
        %v6446 = vrot.slane %v6438, 1
        %v6447 = vrot.slane %v6440, 1
        %v6448 = vsel %vm299, %v6446, %v6447
        %v6449 = vrot.slane %v6439, 1
        %v6450 = vrot.slane %v6441, 1
        %v6451 = vsel %vm299, %v6449, %v6450
        %v6454 = vadd.f32 %v6433, %v6448
        %v6455 = vadd.f32 %v6434, %v6451
        %s6456 = sadd.s32 %s4531, %s1789
        %s6457 = sld [smem:[#allocation4 + %s6456]]
        %v6458 = vstv %s6457
        %v6459 = vmul.f32 %v6424, %v6458
        %v6460 = vmul.f32 %v6426, %v6458
        %v6461 = vmul.f32 %v6425, %v6458
        %v6462 = vmul.f32 %v6427, %v6458
        %v6467 = vrot.slane %v6459, 2
        %v6468 = vrot.slane %v6461, 2
        %v6469 = vsel %vm344, %v6467, %v6468
        %v6470 = vrot.slane %v6460, 2
        %v6471 = vrot.slane %v6462, 2
        %v6472 = vsel %vm344, %v6470, %v6471
        %v6475 = vadd.f32 %v6454, %v6469
        %v6476 = vadd.f32 %v6455, %v6472
        %s6477 = sadd.s32 %s4531, %s2615
        %s6478 = sld [smem:[#allocation4 + %s6477]]
        %v6479 = vstv %s6478
        %v6480 = vmul.f32 %v6424, %v6479
        %v6481 = vmul.f32 %v6426, %v6479
        %v6482 = vmul.f32 %v6425, %v6479
        %v6483 = vmul.f32 %v6427, %v6479
        %v6488 = vrot.slane %v6480, 3
        %v6489 = vrot.slane %v6482, 3
        %v6490 = vsel %vm4635, %v6488, %v6489
        %v6491 = vrot.slane %v6481, 3
        %v6492 = vrot.slane %v6483, 3
        %v6493 = vsel %vm4635, %v6491, %v6492
        %v6496 = vadd.f32 %v6475, %v6490
        %v6497 = vadd.f32 %v6476, %v6493
        %s6498 = sadd.s32 %s4531, %s279
        %s6499 = sld [smem:[#allocation4 + %s6498]]
        %v6500 = vstv %s6499
        %v6501 = vmul.f32 %v6424, %v6500
        %v6502 = vmul.f32 %v6426, %v6500
        %v6503 = vmul.f32 %v6425, %v6500
        %v6504 = vmul.f32 %v6427, %v6500
        %v6509 = vrot.slane %v6501, 4
        %v6510 = vrot.slane %v6503, 4
        %v6511 = vsel %vm4657, %v6509, %v6510
        %v6512 = vrot.slane %v6502, 4
        %v6513 = vrot.slane %v6504, 4
        %v6514 = vsel %vm4657, %v6512, %v6513
        %v6517 = vadd.f32 %v6496, %v6511
        %v6518 = vadd.f32 %v6497, %v6514
        %6519 = vrot.lane.b32.xlu0 %v4550, 114
        %v6520 = vpop.permute.xlu0 %6519
        %6521 = vrot.lane.b32.xlu0 %v4555, 114
        %v6522 = vpop.permute.xlu0 %6521
        %6523 = vrot.lane.b32.xlu0 %v4553, 114
        %v6524 = vpop.permute.xlu0 %6523
        %6525 = vrot.lane.b32.xlu0 %v4557, 114
        %v6526 = vpop.permute.xlu0 %6525
        %vm6527 = vcmp.lt.s32.totalorder %v265, 114
        %v6528 = vsel %vm6527, %v6520, %v6524
        %v6529 = vsel %vm6527, %v6522, %v6526
        %v6530 = vsel %vm6527, %v6524, %v6520
        %v6531 = vsel %vm6527, %v6526, %v6522
        %s6532 = sadd.s32 %s217, %s1579
        %s6533 = sld [smem:[#allocation4 + %s6532]]
        %v6534 = vstv %s6533
        %v6535 = vmul.f32 %v6528, %v6534
        %v6536 = vmul.f32 %v6530, %v6534
        %v6537 = vadd.f32 %v6517, %v6535
        %v6538 = vadd.f32 %v6518, %v6536
        %s6539 = sadd.s32 %s4531, %s1079
        %s6540 = sld [smem:[#allocation4 + %s6539]]
        %v6541 = vstv %s6540
        %v6542 = vmul.f32 %v6528, %v6541
        %v6543 = vmul.f32 %v6530, %v6541
        %v6544 = vmul.f32 %v6529, %v6541
        %v6545 = vmul.f32 %v6531, %v6541
        %v6550 = vrot.slane %v6542, 1
        %v6551 = vrot.slane %v6544, 1
        %v6552 = vsel %vm299, %v6550, %v6551
        %v6553 = vrot.slane %v6543, 1
        %v6554 = vrot.slane %v6545, 1
        %v6555 = vsel %vm299, %v6553, %v6554
        %v6558 = vadd.f32 %v6537, %v6552
        %v6559 = vadd.f32 %v6538, %v6555
        %s6560 = sadd.s32 %s4531, %s1904
        %s6561 = sld [smem:[#allocation4 + %s6560]]
        %v6562 = vstv %s6561
        %v6563 = vmul.f32 %v6528, %v6562
        %v6564 = vmul.f32 %v6530, %v6562
        %v6565 = vmul.f32 %v6529, %v6562
        %v6566 = vmul.f32 %v6531, %v6562
        %v6571 = vrot.slane %v6563, 2
        %v6572 = vrot.slane %v6565, 2
        %v6573 = vsel %vm344, %v6571, %v6572
        %v6574 = vrot.slane %v6564, 2
        %v6575 = vrot.slane %v6566, 2
        %v6576 = vsel %vm344, %v6574, %v6575
        %v6579 = vadd.f32 %v6558, %v6573
        %v6580 = vadd.f32 %v6559, %v6576
        %s6581 = sadd.s32 %s4531, %s2728
        %s6582 = sld [smem:[#allocation4 + %s6581]]
        %v6583 = vstv %s6582
        %v6584 = vmul.f32 %v6528, %v6583
        %v6585 = vmul.f32 %v6530, %v6583
        %v6586 = vmul.f32 %v6529, %v6583
        %v6587 = vmul.f32 %v6531, %v6583
        %v6592 = vrot.slane %v6584, 3
        %v6593 = vrot.slane %v6586, 3
        %v6594 = vsel %vm4635, %v6592, %v6593
        %v6595 = vrot.slane %v6585, 3
        %v6596 = vrot.slane %v6587, 3
        %v6597 = vsel %vm4635, %v6595, %v6596
        %v6600 = vadd.f32 %v6579, %v6594
        %v6601 = vadd.f32 %v6580, %v6597
        %s6602 = sadd.s32 %s4531, %s398
        %s6603 = sld [smem:[#allocation4 + %s6602]]
        %v6604 = vstv %s6603
        %v6605 = vmul.f32 %v6528, %v6604
        %v6606 = vmul.f32 %v6530, %v6604
        %v6607 = vmul.f32 %v6529, %v6604
        %v6608 = vmul.f32 %v6531, %v6604
        %v6613 = vrot.slane %v6605, 4
        %v6614 = vrot.slane %v6607, 4
        %v6615 = vsel %vm4657, %v6613, %v6614
        %v6616 = vrot.slane %v6606, 4
        %v6617 = vrot.slane %v6608, 4
        %v6618 = vsel %vm4657, %v6616, %v6617
        %v6621 = vadd.f32 %v6600, %v6615
        %v6622 = vadd.f32 %v6601, %v6618
        %6623 = vrot.lane.b32.xlu0 %v4550, 106
        %v6624 = vpop.permute.xlu0 %6623
        %6625 = vrot.lane.b32.xlu0 %v4555, 106
        %v6626 = vpop.permute.xlu0 %6625
        %6627 = vrot.lane.b32.xlu0 %v4553, 106
        %v6628 = vpop.permute.xlu0 %6627
        %6629 = vrot.lane.b32.xlu0 %v4557, 106
        %v6630 = vpop.permute.xlu0 %6629
        %vm6631 = vcmp.lt.s32.totalorder %v265, 106
        %v6632 = vsel %vm6631, %v6624, %v6628
        %v6633 = vsel %vm6631, %v6626, %v6630
        %v6634 = vsel %vm6631, %v6628, %v6624
        %v6635 = vsel %vm6631, %v6630, %v6626
        %s6636 = sadd.s32 %s217, %s1694
        %s6637 = sld [smem:[#allocation4 + %s6636]]
        %v6638 = vstv %s6637
        %v6639 = vmul.f32 %v6632, %v6638
        %v6640 = vmul.f32 %v6634, %v6638
        %v6641 = vadd.f32 %v6621, %v6639
        %v6642 = vadd.f32 %v6622, %v6640
        %s6643 = sadd.s32 %s4531, %s1196
        %s6644 = sld [smem:[#allocation4 + %s6643]]
        %v6645 = vstv %s6644
        %v6646 = vmul.f32 %v6632, %v6645
        %v6647 = vmul.f32 %v6634, %v6645
        %v6648 = vmul.f32 %v6633, %v6645
        %v6649 = vmul.f32 %v6635, %v6645
        %v6654 = vrot.slane %v6646, 1
        %v6655 = vrot.slane %v6648, 1
        %v6656 = vsel %vm299, %v6654, %v6655
        %v6657 = vrot.slane %v6647, 1
        %v6658 = vrot.slane %v6649, 1
        %v6659 = vsel %vm299, %v6657, %v6658
        %v6662 = vadd.f32 %v6641, %v6656
        %v6663 = vadd.f32 %v6642, %v6659
        %s6664 = sadd.s32 %s4531, %s2019
        %s6665 = sld [smem:[#allocation4 + %s6664]]
        %v6666 = vstv %s6665
        %v6667 = vmul.f32 %v6632, %v6666
        %v6668 = vmul.f32 %v6634, %v6666
        %v6669 = vmul.f32 %v6633, %v6666
        %v6670 = vmul.f32 %v6635, %v6666
        %v6675 = vrot.slane %v6667, 2
        %v6676 = vrot.slane %v6669, 2
        %v6677 = vsel %vm344, %v6675, %v6676
        %v6678 = vrot.slane %v6668, 2
        %v6679 = vrot.slane %v6670, 2
        %v6680 = vsel %vm344, %v6678, %v6679
        %v6683 = vadd.f32 %v6662, %v6677
        %v6684 = vadd.f32 %v6663, %v6680
        %s6685 = sadd.s32 %s4531, %s2829
        %s6686 = sld [smem:[#allocation4 + %s6685]]
        %v6687 = vstv %s6686
        %v6688 = vmul.f32 %v6632, %v6687
        %v6689 = vmul.f32 %v6634, %v6687
        %v6690 = vmul.f32 %v6633, %v6687
        %v6691 = vmul.f32 %v6635, %v6687
        %v6696 = vrot.slane %v6688, 3
        %v6697 = vrot.slane %v6690, 3
        %v6698 = vsel %vm4635, %v6696, %v6697
        %v6699 = vrot.slane %v6689, 3
        %v6700 = vrot.slane %v6691, 3
        %v6701 = vsel %vm4635, %v6699, %v6700
        %v6704 = vadd.f32 %v6683, %v6698
        %v6705 = vadd.f32 %v6684, %v6701
        %s6706 = sadd.s32 %s4531, %s515
        %s6707 = sld [smem:[#allocation4 + %s6706]]
        %v6708 = vstv %s6707
        %v6709 = vmul.f32 %v6632, %v6708
        %v6710 = vmul.f32 %v6634, %v6708
        %v6711 = vmul.f32 %v6633, %v6708
        %v6712 = vmul.f32 %v6635, %v6708
        %v6717 = vrot.slane %v6709, 4
        %v6718 = vrot.slane %v6711, 4
        %v6719 = vsel %vm4657, %v6717, %v6718
        %v6720 = vrot.slane %v6710, 4
        %v6721 = vrot.slane %v6712, 4
        %v6722 = vsel %vm4657, %v6720, %v6721
        %v6725 = vadd.f32 %v6704, %v6719
        %v6726 = vadd.f32 %v6705, %v6722
        %6727 = vrot.lane.b32.xlu0 %v4550, 105
        %v6728 = vpop.permute.xlu0 %6727
        %6729 = vrot.lane.b32.xlu0 %v4555, 105
        %v6730 = vpop.permute.xlu0 %6729
        %6731 = vrot.lane.b32.xlu0 %v4553, 105
        %v6732 = vpop.permute.xlu0 %6731
        %6733 = vrot.lane.b32.xlu0 %v4557, 105
        %v6734 = vpop.permute.xlu0 %6733
        %vm6735 = vcmp.lt.s32.totalorder %v265, 105
        %v6736 = vsel %vm6735, %v6728, %v6732
        %v6737 = vsel %vm6735, %v6730, %v6734
        %v6738 = vsel %vm6735, %v6732, %v6728
        %v6739 = vsel %vm6735, %v6734, %v6730
        %s6740 = sadd.s32 %s217, %s1811
        %s6741 = sld [smem:[#allocation4 + %s6740]]
        %v6742 = vstv %s6741
        %v6743 = vmul.f32 %v6736, %v6742
        %v6744 = vmul.f32 %v6738, %v6742
        %v6745 = vadd.f32 %v6725, %v6743
        %v6746 = vadd.f32 %v6726, %v6744
        %s6747 = sadd.s32 %s4531, %s287
        %s6748 = sld [smem:[#allocation4 + %s6747]]
        %v6749 = vstv %s6748
        %v6750 = vmul.f32 %v6736, %v6749
        %v6751 = vmul.f32 %v6738, %v6749
        %v6752 = vmul.f32 %v6737, %v6749
        %v6753 = vmul.f32 %v6739, %v6749
        %v6758 = vrot.slane %v6750, 1
        %v6759 = vrot.slane %v6752, 1
        %v6760 = vsel %vm299, %v6758, %v6759
        %v6761 = vrot.slane %v6751, 1
        %v6762 = vrot.slane %v6753, 1
        %v6763 = vsel %vm299, %v6761, %v6762
        %v6766 = vadd.f32 %v6745, %v6760
        %v6767 = vadd.f32 %v6746, %v6763
        %s6768 = sadd.s32 %s4531, %s221
        %s6769 = sld [smem:[#allocation4 + %s6768]]
        %v6770 = vstv %s6769
        %v6771 = vmul.f32 %v6736, %v6770
        %v6772 = vmul.f32 %v6738, %v6770
        %v6773 = vmul.f32 %v6737, %v6770
        %v6774 = vmul.f32 %v6739, %v6770
        %v6779 = vrot.slane %v6771, 2
        %v6780 = vrot.slane %v6773, 2
        %v6781 = vsel %vm344, %v6779, %v6780
        %v6782 = vrot.slane %v6772, 2
        %v6783 = vrot.slane %v6774, 2
        %v6784 = vsel %vm344, %v6782, %v6783
        %v6787 = vadd.f32 %v6766, %v6781
        %v6788 = vadd.f32 %v6767, %v6784
        %s6789 = sadd.s32 %s4531, %s2942
        %s6790 = sld [smem:[#allocation4 + %s6789]]
        %v6791 = vstv %s6790
        %v6792 = vmul.f32 %v6736, %v6791
        %v6793 = vmul.f32 %v6738, %v6791
        %v6794 = vmul.f32 %v6737, %v6791
        %v6795 = vmul.f32 %v6739, %v6791
        %v6800 = vrot.slane %v6792, 3
        %v6801 = vrot.slane %v6794, 3
        %v6802 = vsel %vm4635, %v6800, %v6801
        %v6803 = vrot.slane %v6793, 3
        %v6804 = vrot.slane %v6795, 3
        %v6805 = vsel %vm4635, %v6803, %v6804
        %v6808 = vadd.f32 %v6787, %v6802
        %v6809 = vadd.f32 %v6788, %v6805
        %s6810 = sadd.s32 %s4531, %s632
        %s6811 = sld [smem:[#allocation4 + %s6810]]
        %v6812 = vstv %s6811
        %v6813 = vmul.f32 %v6736, %v6812
        %v6814 = vmul.f32 %v6738, %v6812
        %v6815 = vmul.f32 %v6737, %v6812
        %v6816 = vmul.f32 %v6739, %v6812
        %v6821 = vrot.slane %v6813, 4
        %v6822 = vrot.slane %v6815, 4
        %v6823 = vsel %vm4657, %v6821, %v6822
        %v6824 = vrot.slane %v6814, 4
        %v6825 = vrot.slane %v6816, 4
        %v6826 = vsel %vm4657, %v6824, %v6825
        %v6829 = vadd.f32 %v6808, %v6823
        %v6830 = vadd.f32 %v6809, %v6826
        %6831 = vrot.lane.b32.xlu0 %v4550, 104
        %v6832 = vpop.permute.xlu0 %6831
        %6833 = vrot.lane.b32.xlu0 %v4555, 104
        %v6834 = vpop.permute.xlu0 %6833
        %6835 = vrot.lane.b32.xlu0 %v4553, 104
        %v6836 = vpop.permute.xlu0 %6835
        %6837 = vrot.lane.b32.xlu0 %v4557, 104
        %v6838 = vpop.permute.xlu0 %6837
        %vm6839 = vcmp.lt.s32.totalorder %v265, 104
        %v6840 = vsel %vm6839, %v6832, %v6836
        %v6841 = vsel %vm6839, %v6834, %v6838
        %v6842 = vsel %vm6839, %v6836, %v6832
        %v6843 = vsel %vm6839, %v6838, %v6834
        %s6844 = sadd.s32 %s217, %s1912
        %s6845 = sld [smem:[#allocation4 + %s6844]]
        %v6846 = vstv %s6845
        %v6847 = vmul.f32 %v6840, %v6846
        %v6848 = vmul.f32 %v6842, %v6846
        %v6849 = vadd.f32 %v6829, %v6847
        %v6850 = vadd.f32 %v6830, %v6848
        %s6851 = sadd.s32 %s4531, %s406
        %s6852 = sld [smem:[#allocation4 + %s6851]]
        %v6853 = vstv %s6852
        %v6854 = vmul.f32 %v6840, %v6853
        %v6855 = vmul.f32 %v6842, %v6853
        %v6856 = vmul.f32 %v6841, %v6853
        %v6857 = vmul.f32 %v6843, %v6853
        %v6862 = vrot.slane %v6854, 1
        %v6863 = vrot.slane %v6856, 1
        %v6864 = vsel %vm299, %v6862, %v6863
        %v6865 = vrot.slane %v6855, 1
        %v6866 = vrot.slane %v6857, 1
        %v6867 = vsel %vm299, %v6865, %v6866
        %v6870 = vadd.f32 %v6849, %v6864
        %v6871 = vadd.f32 %v6850, %v6867
        %s6872 = sadd.s32 %s4531, %s225
        %s6873 = sld [smem:[#allocation4 + %s6872]]
        %v6874 = vstv %s6873
        %v6875 = vmul.f32 %v6840, %v6874
        %v6876 = vmul.f32 %v6842, %v6874
        %v6877 = vmul.f32 %v6841, %v6874
        %v6878 = vmul.f32 %v6843, %v6874
        %v6883 = vrot.slane %v6875, 2
        %v6884 = vrot.slane %v6877, 2
        %v6885 = vsel %vm344, %v6883, %v6884
        %v6886 = vrot.slane %v6876, 2
        %v6887 = vrot.slane %v6878, 2
        %v6888 = vsel %vm344, %v6886, %v6887
        %v6891 = vadd.f32 %v6870, %v6885
        %v6892 = vadd.f32 %v6871, %v6888
        %s6893 = sadd.s32 %s4531, %s3055
        %s6894 = sld [smem:[#allocation4 + %s6893]]
        %v6895 = vstv %s6894
        %v6896 = vmul.f32 %v6840, %v6895
        %v6897 = vmul.f32 %v6842, %v6895
        %v6898 = vmul.f32 %v6841, %v6895
        %v6899 = vmul.f32 %v6843, %v6895
        %v6904 = vrot.slane %v6896, 3
        %v6905 = vrot.slane %v6898, 3
        %v6906 = vsel %vm4635, %v6904, %v6905
        %v6907 = vrot.slane %v6897, 3
        %v6908 = vrot.slane %v6899, 3
        %v6909 = vsel %vm4635, %v6907, %v6908
        %v6912 = vadd.f32 %v6891, %v6906
        %v6913 = vadd.f32 %v6892, %v6909
        %s6914 = sadd.s32 %s4531, %s750
        %s6915 = sld [smem:[#allocation4 + %s6914]]
        %v6916 = vstv %s6915
        %v6917 = vmul.f32 %v6840, %v6916
        %v6918 = vmul.f32 %v6842, %v6916
        %v6919 = vmul.f32 %v6841, %v6916
        %v6920 = vmul.f32 %v6843, %v6916
        %v6925 = vrot.slane %v6917, 4
        %v6926 = vrot.slane %v6919, 4
        %v6927 = vsel %vm4657, %v6925, %v6926
        %v6928 = vrot.slane %v6918, 4
        %v6929 = vrot.slane %v6920, 4
        %v6930 = vsel %vm4657, %v6928, %v6929
        %v6933 = vadd.f32 %v6912, %v6927
        %v6934 = vadd.f32 %v6913, %v6930
        %6935 = vrot.lane.b32.xlu0 %v4550, 103
        %v6936 = vpop.permute.xlu0 %6935
        %6937 = vrot.lane.b32.xlu0 %v4555, 103
        %v6938 = vpop.permute.xlu0 %6937
        %6939 = vrot.lane.b32.xlu0 %v4553, 103
        %v6940 = vpop.permute.xlu0 %6939
        %6941 = vrot.lane.b32.xlu0 %v4557, 103
        %v6942 = vpop.permute.xlu0 %6941
        %vm6943 = vcmp.lt.s32.totalorder %v265, 103
        %v6944 = vsel %vm6943, %v6936, %v6940
        %v6945 = vsel %vm6943, %v6938, %v6942
        %v6946 = vsel %vm6943, %v6940, %v6936
        %v6947 = vsel %vm6943, %v6942, %v6938
        %s6948 = sadd.s32 %s217, %s2027
        %s6949 = sld [smem:[#allocation4 + %s6948]]
        %v6950 = vstv %s6949
        %v6951 = vmul.f32 %v6944, %v6950
        %v6952 = vmul.f32 %v6946, %v6950
        %v6953 = vadd.f32 %v6933, %v6951
        %v6954 = vadd.f32 %v6934, %v6952
        %s6955 = sadd.s32 %s4531, %s523
        %s6956 = sld [smem:[#allocation4 + %s6955]]
        %v6957 = vstv %s6956
        %v6958 = vmul.f32 %v6944, %v6957
        %v6959 = vmul.f32 %v6946, %v6957
        %v6960 = vmul.f32 %v6945, %v6957
        %v6961 = vmul.f32 %v6947, %v6957
        %v6966 = vrot.slane %v6958, 1
        %v6967 = vrot.slane %v6960, 1
        %v6968 = vsel %vm299, %v6966, %v6967
        %v6969 = vrot.slane %v6959, 1
        %v6970 = vrot.slane %v6961, 1
        %v6971 = vsel %vm299, %v6969, %v6970
        %v6974 = vadd.f32 %v6953, %v6968
        %v6975 = vadd.f32 %v6954, %v6971
        %s6976 = sadd.s32 %s4531, %s1355
        %s6977 = sld [smem:[#allocation4 + %s6976]]
        %v6978 = vstv %s6977
        %v6979 = vmul.f32 %v6944, %v6978
        %v6980 = vmul.f32 %v6946, %v6978
        %v6981 = vmul.f32 %v6945, %v6978
        %v6982 = vmul.f32 %v6947, %v6978
        %v6987 = vrot.slane %v6979, 2
        %v6988 = vrot.slane %v6981, 2
        %v6989 = vsel %vm344, %v6987, %v6988
        %v6990 = vrot.slane %v6980, 2
        %v6991 = vrot.slane %v6982, 2
        %v6992 = vsel %vm344, %v6990, %v6991
        %v6995 = vadd.f32 %v6974, %v6989
        %v6996 = vadd.f32 %v6975, %v6992
        %s6997 = sadd.s32 %s4531, %s3168
        %s6998 = sld [smem:[#allocation4 + %s6997]]
        %v6999 = vstv %s6998
        %v7000 = vmul.f32 %v6944, %v6999
        %v7001 = vmul.f32 %v6946, %v6999
        %v7002 = vmul.f32 %v6945, %v6999
        %v7003 = vmul.f32 %v6947, %v6999
        %v7008 = vrot.slane %v7000, 3
        %v7009 = vrot.slane %v7002, 3
        %v7010 = vsel %vm4635, %v7008, %v7009
        %v7011 = vrot.slane %v7001, 3
        %v7012 = vrot.slane %v7003, 3
        %v7013 = vsel %vm4635, %v7011, %v7012
        %v7016 = vadd.f32 %v6995, %v7010
        %v7017 = vadd.f32 %v6996, %v7013
        %s7018 = sadd.s32 %s4531, %s853
        %s7019 = sld [smem:[#allocation4 + %s7018]]
        %v7020 = vstv %s7019
        %v7021 = vmul.f32 %v6944, %v7020
        %v7022 = vmul.f32 %v6946, %v7020
        %v7023 = vmul.f32 %v6945, %v7020
        %v7024 = vmul.f32 %v6947, %v7020
        %v7029 = vrot.slane %v7021, 4
        %v7030 = vrot.slane %v7023, 4
        %v7031 = vsel %vm4657, %v7029, %v7030
        %v7032 = vrot.slane %v7022, 4
        %v7033 = vrot.slane %v7024, 4
        %v7034 = vsel %vm4657, %v7032, %v7033
        %v7037 = vadd.f32 %v7016, %v7031
        %v7038 = vadd.f32 %v7017, %v7034
        %7039 = vrot.lane.b32.xlu0 %v4550, 102
        %v7040 = vpop.permute.xlu0 %7039
        %7041 = vrot.lane.b32.xlu0 %v4555, 102
        %v7042 = vpop.permute.xlu0 %7041
        %7043 = vrot.lane.b32.xlu0 %v4553, 102
        %v7044 = vpop.permute.xlu0 %7043
        %7045 = vrot.lane.b32.xlu0 %v4557, 102
        %v7046 = vpop.permute.xlu0 %7045
        %vm7047 = vcmp.lt.s32.totalorder %v265, 102
        %v7048 = vsel %vm7047, %v7040, %v7044
        %v7049 = vsel %vm7047, %v7042, %v7046
        %v7050 = vsel %vm7047, %v7044, %v7040
        %v7051 = vsel %vm7047, %v7046, %v7042
        %s7052 = sadd.s32 %s217, %s2141
        %s7053 = sld [smem:[#allocation4 + %s7052]]
        %v7054 = vstv %s7053
        %v7055 = vmul.f32 %v7048, %v7054
        %v7056 = vmul.f32 %v7050, %v7054
        %v7057 = vadd.f32 %v7037, %v7055
        %v7058 = vadd.f32 %v7038, %v7056
        %s7059 = sadd.s32 %s4531, %s640
        %s7060 = sld [smem:[#allocation4 + %s7059]]
        %v7061 = vstv %s7060
        %v7062 = vmul.f32 %v7048, %v7061
        %v7063 = vmul.f32 %v7050, %v7061
        %v7064 = vmul.f32 %v7049, %v7061
        %v7065 = vmul.f32 %v7051, %v7061
        %v7070 = vrot.slane %v7062, 1
        %v7071 = vrot.slane %v7064, 1
        %v7072 = vsel %vm299, %v7070, %v7071
        %v7073 = vrot.slane %v7063, 1
        %v7074 = vrot.slane %v7065, 1
        %v7075 = vsel %vm299, %v7073, %v7074
        %v7078 = vadd.f32 %v7057, %v7072
        %v7079 = vadd.f32 %v7058, %v7075
        %s7080 = sadd.s32 %s4531, %s1471
        %s7081 = sld [smem:[#allocation4 + %s7080]]
        %v7082 = vstv %s7081
        %v7083 = vmul.f32 %v7048, %v7082
        %v7084 = vmul.f32 %v7050, %v7082
        %v7085 = vmul.f32 %v7049, %v7082
        %v7086 = vmul.f32 %v7051, %v7082
        %v7091 = vrot.slane %v7083, 2
        %v7092 = vrot.slane %v7085, 2
        %v7093 = vsel %vm344, %v7091, %v7092
        %v7094 = vrot.slane %v7084, 2
        %v7095 = vrot.slane %v7086, 2
        %v7096 = vsel %vm344, %v7094, %v7095
        %v7099 = vadd.f32 %v7078, %v7093
        %v7100 = vadd.f32 %v7079, %v7096
        %s7101 = sadd.s32 %s4531, %s3281
        %s7102 = sld [smem:[#allocation4 + %s7101]]
        %v7103 = vstv %s7102
        %v7104 = vmul.f32 %v7048, %v7103
        %v7105 = vmul.f32 %v7050, %v7103
        %v7106 = vmul.f32 %v7049, %v7103
        %v7107 = vmul.f32 %v7051, %v7103
        %v7112 = vrot.slane %v7104, 3
        %v7113 = vrot.slane %v7106, 3
        %v7114 = vsel %vm4635, %v7112, %v7113
        %v7115 = vrot.slane %v7105, 3
        %v7116 = vrot.slane %v7107, 3
        %v7117 = vsel %vm4635, %v7115, %v7116
        %v7120 = vadd.f32 %v7099, %v7114
        %v7121 = vadd.f32 %v7100, %v7117
        %s7122 = sadd.s32 %s4531, %s970
        %s7123 = sld [smem:[#allocation4 + %s7122]]
        %v7124 = vstv %s7123
        %v7125 = vmul.f32 %v7048, %v7124
        %v7126 = vmul.f32 %v7050, %v7124
        %v7127 = vmul.f32 %v7049, %v7124
        %v7128 = vmul.f32 %v7051, %v7124
        %v7133 = vrot.slane %v7125, 4
        %v7134 = vrot.slane %v7127, 4
        %v7135 = vsel %vm4657, %v7133, %v7134
        %v7136 = vrot.slane %v7126, 4
        %v7137 = vrot.slane %v7128, 4
        %v7138 = vsel %vm4657, %v7136, %v7137
        %v7141 = vadd.f32 %v7120, %v7135
        %v7142 = vadd.f32 %v7121, %v7138
        %7143 = vst [vmem:[%s194] sm:$0xff] %v7141
        %7144 = vst [vmem:[%s194 + $0x8] sm:$0xff] %v7142
        %s7145 = sand.u32 %s91, 1
        %s7146 = scalar_lea.sflag [#allocation6], %s7145
        %s7147 = sand.u32 %s91, 1
        %s7148 = smul.addr %s7147, 16
        %s7149 = scalar_lea.vmem [#allocation11], %s7148
        // Predicated region
        $region45: #{tpu_custom_call.1} parent=31 // pred_check
          %p7150 = pneg %p101
        $region46: #{tpu_custom_call.1} parent=31 // pred_check_branch
          %7152 = sbr.rel (%p7150) target = $region48
        $region47: #{tpu_custom_call.1} parent=31 // pred_region
          %7154 = vsyncadd %s7146, 0
          %s7155 = smul.addr %s20, 2
          %s7156 = smul.addr %s7155, 8
          %s7157 = scalar_lea.hbm %s3, %s7156
          %s7159 = sshll.u32 %s7149, 4
          %s7160 = int_to_ptr.vmem [resolvable:$true] %s7159
          %s7161 = sshll.u32 %s7157, 4
          %s7162 = int_to_ptr.hbm [resolvable:$true] %s7161
          %7164 = dma.vmem_to_hbm [thread:$0]  %s7160, 256, %s7162, %s7146
        $region48: #{tpu_custom_call.1} parent=31 // pred_fallthru
          _
      $region32: #{tpu_custom_call.1} parent=5 // pred_fallthru
        _
      %p7165 = scmp.le.s32.totalorder 2, %s15
      // Predicated region
      $region49: #{tpu_custom_call.1} parent=5 // pred_check
        %p7166 = pneg %p7165
      $region50: #{tpu_custom_call.1} parent=5 // pred_check_branch
        %7168 = sbr.rel (%p7166) target = $region52
      $region51: #{tpu_custom_call.1} parent=5 // pred_region
        %s7169 = ssub.s32 %s15, 2
        // Predicated region
        $region53: #{tpu_custom_call.1} parent=51 // pred_check
          %p7170 = pneg %p107
        $region54: #{tpu_custom_call.1} parent=51 // pred_check_branch
          %7172 = sbr.rel (%p7170) target = $region56
        $region55: #{tpu_custom_call.1} parent=51 // pred_region
          %s7173 = sand.u32 %s92, 1
          %s7174 = scalar_lea.sflag [#allocation6], %s7173
          %s7175 = sand.u32 %s92, 1
          %s7176 = smul.addr %s7175, 16
          %s7177 = scalar_lea.vmem [#allocation11], %s7176
          %7179 = dma.done %s7174, 256
        $region56: #{tpu_custom_call.1} parent=51 // pred_fallthru
          _
      $region52: #{tpu_custom_call.1} parent=5 // pred_fallthru
        _
    $region6: #{tpu_custom_call.1} parent=1 // loop_footer
      %s19 = sadd.s32 1, %s15
    $region7: #{tpu_custom_call.1} parent=1 // loop_footer_branch
      %14 = sbr.rel target = $region3
    $region8: #{tpu_custom_call.1} parent=1 // loop_exit
      _
    %7180 = vsyncpa [#allocation5], 1
    %s7181 = scalar_lea.sflag [#allocation5], 1
    %7182 = vsyncpa %s7181, 1
    %7183 = vsyncpa [#allocation10], 1
    %7184 = vsyncpa [#allocation6], 1
    %s7185 = scalar_lea.sflag [#allocation6], 1
    %7186 = vsyncpa %s7185, 1
    %7187 = vsyncpa [#allocation7], 1
    %s7188 = scalar_lea.sflag [#allocation7], 1
    %7189 = vsyncpa %s7188, 1

</llo_original>
